<compile_context>
chip_gen: v7x
topology: tpu7x:2x2x1
jax: 0.10.0
libtpu: 0.0.40
codegen_flags: <defaults>
</compile_context>

<pallas_src>
import functools

import jax
import jax.numpy as jnp
from jax.experimental import pallas as pl
from jax.experimental.pallas import tpu as pltpu

HIDDEN = 768
NUM_LAYERS = 12
NUM_PAIRS = NUM_LAYERS // 2  # (Linear, ReLU) pairs


def prune_stack_kernel(omh_ref, x_ref, w_ref, b_ref, o_ref):
    """Grid = (row_blocks,).

    omh_ref : SMEM (12,)  f32  -- precomputed (1 - sigmoid(m)) per layer
    x_ref   : VMEM (tm, 768) f32 -- input row block
    w_ref   : VMEM (6, 768, 768) bf16 -- gate-folded weights h*W, resident
    b_ref   : VMEM (6, 768) f32 -- gate-folded biases h*b, resident
    o_ref   : VMEM (tm, 768) f32
    """
    x = x_ref[...]  # (tm, HIDDEN) f32 running activation

    # Statically unrolled loop over the 6 (Linear+gate, ReLU+gate) pairs.
    for j in range(NUM_PAIRS):
        omh_lin = omh_ref[2 * j]      # (1 - h) for the Linear layer
        omh_act = omh_ref[2 * j + 1]  # (1 - h) for the ReLU layer

        # --- PruneLayer(Linear): h*(xW+b) + (1-h)*x == (x @ hW + hb) + (1-h)*x
        y = jnp.dot(
            x.astype(jnp.bfloat16), w_ref[j], preferred_element_type=jnp.float32
        ) + b_ref[j]
        x = y + omh_lin * x

        # --- PruneLayer(ReLU): h*relu(x) + (1-h)*x == max(x, (1-h)*x)
        #     (exact because h = sigmoid(m) is strictly in (0, 1))
        x = jnp.maximum(x, omh_act * x)

    o_ref[...] = x


def prepare_params(w_stack, b_stack, m_all):
    """One-time parameter preparation. Keep this OUT of the per-call path.

    Returns:
      one_minus_h : (12,) f32  -- (1 - sigmoid(m)) per layer
      w_folded    : (6, 768, 768) bf16 -- h * W (folded in f32, single bf16 cast)
      b_folded    : (6, 768) f32       -- h * b
    """
    h_all = jax.nn.sigmoid(m_all.astype(jnp.float32))  # (12,)
    one_minus_h = (1.0 - h_all).astype(jnp.float32)
    h_lin = h_all[0::2]  # (6,) gates for the Linear layers
    w_folded = (h_lin[:, None, None] * w_stack.astype(jnp.float32)).astype(
        jnp.bfloat16
    )
    b_folded = h_lin[:, None] * b_stack.astype(jnp.float32)
    return one_minus_h, w_folded, b_folded


@functools.partial(jax.jit, static_argnames=("tm",))
def prune_model_forward(x, one_minus_h, w_folded, b_folded, *, tm=512):
    """x: (M, 768) f32. Remaining args are the pre-folded parameters from
    `prepare_params` (so no weight cast / sigmoid happens per call)."""
    M, D = x.shape
    assert D == HIDDEN

    # Effective row tile: multiple of 8, capped by (padded) M.
    m_min = ((M + 7) // 8) * 8
    tm_eff = min(tm, m_min)
    m_pad = ((M + tm_eff - 1) // tm_eff) * tm_eff
    x_in = x.astype(jnp.float32)
    if m_pad != M:
        x_in = jnp.pad(x_in, ((0, m_pad - M), (0, 0)))

    grid = (m_pad // tm_eff,)
    out = pl.pallas_call(
        prune_stack_kernel,
        out_shape=jax.ShapeDtypeStruct((m_pad, HIDDEN), jnp.float32),
        grid_spec=pltpu.PrefetchScalarGridSpec(
            num_scalar_prefetch=0,
            grid=grid,
            in_specs=[
                # (1 - h) gates (12,) in SMEM, read as scalars
                pl.BlockSpec(memory_space=pltpu.MemorySpace.SMEM),
                # input rows
                pl.BlockSpec((tm_eff, HIDDEN), lambda i: (i, 0)),
                # full gate-folded weight stack, constant block index => one DMA
                pl.BlockSpec((NUM_PAIRS, HIDDEN, HIDDEN), lambda i: (0, 0, 0)),
                # full gate-folded bias stack, resident
                pl.BlockSpec((NUM_PAIRS, HIDDEN), lambda i: (0, 0)),
            ],
            out_specs=pl.BlockSpec((tm_eff, HIDDEN), lambda i: (i, 0)),
        ),
        compiler_params=pltpu.CompilerParams(
            dimension_semantics=("parallel",),
            # bf16 folded weights (6.75 MiB, possibly double-buffered) + 512-row
            # in/out tiles: 48 MiB exceeds the small default scoped limits on
            # v5e/v6e while leaving headroom under v7x's 64 MiB physical VMEM.
            vmem_limit_bytes=48 * 1024 * 1024,
        ),
    )(one_minus_h, x_in, w_folded, b_folded)

    return out[:M]


def reference_forward(x, w_stack, b_stack, m_all):
    """Pure-JAX f32 reference mirroring the PyTorch module."""
    x = x.astype(jnp.float32)
    for i in range(NUM_LAYERS):
        h = jax.nn.sigmoid(m_all[i])
        if i % 2 == 0:
            y = x @ w_stack[i // 2] + b_stack[i // 2]
        else:
            y = jnp.maximum(x, 0.0)
        x = h * y + (1.0 - h) * x
    return x


if __name__ == "__main__":
    key = jax.random.PRNGKey(0)
    k_x, k_w, k_b, k_m = jax.random.split(key, 4)

    # Small shapes consistent with the module: batch=2, seq=4, hidden=768 (fixed).
    B, S = 2, 4
    x3 = jax.random.normal(k_x, (B, S, HIDDEN), dtype=jnp.float32)
    x = x3.reshape(B * S, HIDDEN)

    # Deterministic synthetic parameters (scale ~ 1/sqrt(768)).
    w_stack = jax.random.normal(k_w, (NUM_PAIRS, HIDDEN, HIDDEN), dtype=jnp.float32) * (
        1.0 / jnp.sqrt(jnp.float32(HIDDEN))
    )
    b_stack = jax.random.normal(k_b, (NUM_PAIRS, HIDDEN), dtype=jnp.float32) * 0.02
    # m initialized to 1.0 in the PyTorch module; perturb slightly but deterministically.
    m_all = jnp.ones((NUM_LAYERS,), dtype=jnp.float32) + 0.01 * jax.random.normal(
        k_m, (NUM_LAYERS,), dtype=jnp.float32
    )

    # One-time parameter prep (hoisted out of the per-call path).
    one_minus_h, w_folded, b_folded = prepare_params(w_stack, b_stack, m_all)
    one_minus_h, w_folded, b_folded = jax.block_until_ready(
        (one_minus_h, w_folded, b_folded)
    )

    out = prune_model_forward(x, one_minus_h, w_folded, b_folded)
    out = jax.block_until_ready(out)
    out3 = out.reshape(B, S, HIDDEN)

    ref = reference_forward(x, w_stack, b_stack, m_all)
    assert out.shape == (B * S, HIDDEN)
    # bf16 folded weights in the kernel => slightly looser tolerance than pure f32.
    assert jnp.allclose(out, ref, atol=5e-2, rtol=5e-2), "mismatch vs JAX reference"

    print("KERNEL_OK")
</pallas_src>

<mosaic_0001>
module attributes {stable_mosaic.version = 11 : i64} {
  func.func @prune_stack_kernel(%arg0: i32, %arg1: memref<12xf32, #tpu.memory_space<smem>>, %arg2: memref<8x768xf32, #tpu.memory_space<vmem>>, %arg3: memref<6x768x768xbf16, #tpu.memory_space<vmem>>, %arg4: memref<6x768xf32, #tpu.memory_space<vmem>>, %arg5: memref<8x768xf32, #tpu.memory_space<vmem>>) attributes {dimension_semantics = [#tpu.dimension_semantics<parallel>], iteration_bounds = array<i64: 1>, scalar_prefetch = 0 : i64, scratch_operands = 0 : i64, tpu.core_type = #tpu.core_type<tc>, window_params = [{transform_indices = @transform_0, window_bounds = array<i64: 12>}, {transform_indices = @transform_1, window_bounds = array<i64: 8, 768>}, {pipeline_mode = #tpu.pipeline_mode<synchronous>, transform_indices = @transform_2, window_bounds = array<i64: 6, 768, 768>}, {pipeline_mode = #tpu.pipeline_mode<synchronous>, transform_indices = @transform_3, window_bounds = array<i64: 6, 768>}, {transform_indices = @transform_4, window_bounds = array<i64: 8, 768>}]} {
    %c0 = arith.constant 0 : index
    %c0_0 = arith.constant 0 : index
    %0 = vector.load %arg2[%c0, %c0_0] : memref<8x768xf32, #tpu.memory_space<vmem>>, vector<8x768xf32>
    %c0_1 = arith.constant 0 : index
    %1 = memref.load %arg1[%c0_1] : memref<12xf32, #tpu.memory_space<smem>>
    %c1 = arith.constant 1 : index
    %2 = memref.load %arg1[%c1] : memref<12xf32, #tpu.memory_space<smem>>
    %3 = arith.truncf %0 : vector<8x768xf32> to vector<8x768xbf16>
    %c0_2 = arith.constant 0 : index
    %c0_3 = arith.constant 0 : index
    %c0_4 = arith.constant 0 : index
    %4 = vector.load %arg3[%c0_2, %c0_3, %c0_4] : memref<6x768x768xbf16, #tpu.memory_space<vmem>>, vector<1x768x768xbf16>
    %5 = vector.shape_cast %4 : vector<1x768x768xbf16> to vector<768x768xbf16>
    %cst = arith.constant dense<0.000000e+00> : vector<8x768xf32>
    %6 = tpu.matmul %3, %5, %cst {dimension_numbers = #tpu.dot_dimension_numbers<[1], [0], [0], [1], [0, 0, 1, 1], [], []>} : vector<8x768xbf16>, vector<768x768xbf16>, vector<8x768xf32> -> vector<8x768xf32>
    %c0_5 = arith.constant 0 : index
    %c0_6 = arith.constant 0 : index
    %7 = vector.load %arg4[%c0_5, %c0_6] : memref<6x768xf32, #tpu.memory_space<vmem>>, vector<1x768xf32>
    %8 = vector.shape_cast %7 : vector<1x768xf32> to vector<768xf32>
    %9 = vector.shape_cast %8 : vector<768xf32> to vector<1x768xf32>
    %10 = vector.broadcast %9 : vector<1x768xf32> to vector<8x768xf32>
    %11 = arith.addf %6, %10 : vector<8x768xf32>
    %12 = vector.broadcast %1 : f32 to vector<8x768xf32>
    %13 = arith.mulf %12, %0 : vector<8x768xf32>
    %14 = arith.addf %11, %13 : vector<8x768xf32>
    %15 = vector.broadcast %2 : f32 to vector<8x768xf32>
    %16 = arith.mulf %15, %14 : vector<8x768xf32>
    %17 = arith.maximumf %14, %16 : vector<8x768xf32>
    %c2 = arith.constant 2 : index
    %18 = memref.load %arg1[%c2] : memref<12xf32, #tpu.memory_space<smem>>
    %c3 = arith.constant 3 : index
    %19 = memref.load %arg1[%c3] : memref<12xf32, #tpu.memory_space<smem>>
    %20 = arith.truncf %17 : vector<8x768xf32> to vector<8x768xbf16>
    %c1_7 = arith.constant 1 : index
    %c0_8 = arith.constant 0 : index
    %c0_9 = arith.constant 0 : index
    %21 = vector.load %arg3[%c1_7, %c0_8, %c0_9] : memref<6x768x768xbf16, #tpu.memory_space<vmem>>, vector<1x768x768xbf16>
    %22 = vector.shape_cast %21 : vector<1x768x768xbf16> to vector<768x768xbf16>
    %cst_10 = arith.constant dense<0.000000e+00> : vector<8x768xf32>
    %23 = tpu.matmul %20, %22, %cst_10 {dimension_numbers = #tpu.dot_dimension_numbers<[1], [0], [0], [1], [0, 0, 1, 1], [], []>} : vector<8x768xbf16>, vector<768x768xbf16>, vector<8x768xf32> -> vector<8x768xf32>
    %c1_11 = arith.constant 1 : index
    %c0_12 = arith.constant 0 : index
    %24 = vector.load %arg4[%c1_11, %c0_12] : memref<6x768xf32, #tpu.memory_space<vmem>>, vector<1x768xf32>
    %25 = vector.shape_cast %24 : vector<1x768xf32> to vector<768xf32>
    %26 = vector.shape_cast %25 : vector<768xf32> to vector<1x768xf32>
    %27 = vector.broadcast %26 : vector<1x768xf32> to vector<8x768xf32>
    %28 = arith.addf %23, %27 : vector<8x768xf32>
    %29 = vector.broadcast %18 : f32 to vector<8x768xf32>
    %30 = arith.mulf %29, %17 : vector<8x768xf32>
    %31 = arith.addf %28, %30 : vector<8x768xf32>
    %32 = vector.broadcast %19 : f32 to vector<8x768xf32>
    %33 = arith.mulf %32, %31 : vector<8x768xf32>
    %34 = arith.maximumf %31, %33 : vector<8x768xf32>
    %c4 = arith.constant 4 : index
    %35 = memref.load %arg1[%c4] : memref<12xf32, #tpu.memory_space<smem>>
    %c5 = arith.constant 5 : index
    %36 = memref.load %arg1[%c5] : memref<12xf32, #tpu.memory_space<smem>>
    %37 = arith.truncf %34 : vector<8x768xf32> to vector<8x768xbf16>
    %c2_13 = arith.constant 2 : index
    %c0_14 = arith.constant 0 : index
    %c0_15 = arith.constant 0 : index
    %38 = vector.load %arg3[%c2_13, %c0_14, %c0_15] : memref<6x768x768xbf16, #tpu.memory_space<vmem>>, vector<1x768x768xbf16>
    %39 = vector.shape_cast %38 : vector<1x768x768xbf16> to vector<768x768xbf16>
    %cst_16 = arith.constant dense<0.000000e+00> : vector<8x768xf32>
    %40 = tpu.matmul %37, %39, %cst_16 {dimension_numbers = #tpu.dot_dimension_numbers<[1], [0], [0], [1], [0, 0, 1, 1], [], []>} : vector<8x768xbf16>, vector<768x768xbf16>, vector<8x768xf32> -> vector<8x768xf32>
    %c2_17 = arith.constant 2 : index
    %c0_18 = arith.constant 0 : index
    %41 = vector.load %arg4[%c2_17, %c0_18] : memref<6x768xf32, #tpu.memory_space<vmem>>, vector<1x768xf32>
    %42 = vector.shape_cast %41 : vector<1x768xf32> to vector<768xf32>
    %43 = vector.shape_cast %42 : vector<768xf32> to vector<1x768xf32>
    %44 = vector.broadcast %43 : vector<1x768xf32> to vector<8x768xf32>
    %45 = arith.addf %40, %44 : vector<8x768xf32>
    %46 = vector.broadcast %35 : f32 to vector<8x768xf32>
    %47 = arith.mulf %46, %34 : vector<8x768xf32>
    %48 = arith.addf %45, %47 : vector<8x768xf32>
    %49 = vector.broadcast %36 : f32 to vector<8x768xf32>
    %50 = arith.mulf %49, %48 : vector<8x768xf32>
    %51 = arith.maximumf %48, %50 : vector<8x768xf32>
    %c6 = arith.constant 6 : index
    %52 = memref.load %arg1[%c6] : memref<12xf32, #tpu.memory_space<smem>>
    %c7 = arith.constant 7 : index
    %53 = memref.load %arg1[%c7] : memref<12xf32, #tpu.memory_space<smem>>
    %54 = arith.truncf %51 : vector<8x768xf32> to vector<8x768xbf16>
    %c3_19 = arith.constant 3 : index
    %c0_20 = arith.constant 0 : index
    %c0_21 = arith.constant 0 : index
    %55 = vector.load %arg3[%c3_19, %c0_20, %c0_21] : memref<6x768x768xbf16, #tpu.memory_space<vmem>>, vector<1x768x768xbf16>
    %56 = vector.shape_cast %55 : vector<1x768x768xbf16> to vector<768x768xbf16>
    %cst_22 = arith.constant dense<0.000000e+00> : vector<8x768xf32>
    %57 = tpu.matmul %54, %56, %cst_22 {dimension_numbers = #tpu.dot_dimension_numbers<[1], [0], [0], [1], [0, 0, 1, 1], [], []>} : vector<8x768xbf16>, vector<768x768xbf16>, vector<8x768xf32> -> vector<8x768xf32>
    %c3_23 = arith.constant 3 : index
    %c0_24 = arith.constant 0 : index
    %58 = vector.load %arg4[%c3_23, %c0_24] : memref<6x768xf32, #tpu.memory_space<vmem>>, vector<1x768xf32>
    %59 = vector.shape_cast %58 : vector<1x768xf32> to vector<768xf32>
    %60 = vector.shape_cast %59 : vector<768xf32> to vector<1x768xf32>
    %61 = vector.broadcast %60 : vector<1x768xf32> to vector<8x768xf32>
    %62 = arith.addf %57, %61 : vector<8x768xf32>
    %63 = vector.broadcast %52 : f32 to vector<8x768xf32>
    %64 = arith.mulf %63, %51 : vector<8x768xf32>
    %65 = arith.addf %62, %64 : vector<8x768xf32>
    %66 = vector.broadcast %53 : f32 to vector<8x768xf32>
    %67 = arith.mulf %66, %65 : vector<8x768xf32>
    %68 = arith.maximumf %65, %67 : vector<8x768xf32>
    %c8 = arith.constant 8 : index
    %69 = memref.load %arg1[%c8] : memref<12xf32, #tpu.memory_space<smem>>
    %c9 = arith.constant 9 : index
    %70 = memref.load %arg1[%c9] : memref<12xf32, #tpu.memory_space<smem>>
    %71 = arith.truncf %68 : vector<8x768xf32> to vector<8x768xbf16>
    %c4_25 = arith.constant 4 : index
    %c0_26 = arith.constant 0 : index
    %c0_27 = arith.constant 0 : index
    %72 = vector.load %arg3[%c4_25, %c0_26, %c0_27] : memref<6x768x768xbf16, #tpu.memory_space<vmem>>, vector<1x768x768xbf16>
    %73 = vector.shape_cast %72 : vector<1x768x768xbf16> to vector<768x768xbf16>
    %cst_28 = arith.constant dense<0.000000e+00> : vector<8x768xf32>
    %74 = tpu.matmul %71, %73, %cst_28 {dimension_numbers = #tpu.dot_dimension_numbers<[1], [0], [0], [1], [0, 0, 1, 1], [], []>} : vector<8x768xbf16>, vector<768x768xbf16>, vector<8x768xf32> -> vector<8x768xf32>
    %c4_29 = arith.constant 4 : index
    %c0_30 = arith.constant 0 : index
    %75 = vector.load %arg4[%c4_29, %c0_30] : memref<6x768xf32, #tpu.memory_space<vmem>>, vector<1x768xf32>
    %76 = vector.shape_cast %75 : vector<1x768xf32> to vector<768xf32>
    %77 = vector.shape_cast %76 : vector<768xf32> to vector<1x768xf32>
    %78 = vector.broadcast %77 : vector<1x768xf32> to vector<8x768xf32>
    %79 = arith.addf %74, %78 : vector<8x768xf32>
    %80 = vector.broadcast %69 : f32 to vector<8x768xf32>
    %81 = arith.mulf %80, %68 : vector<8x768xf32>
    %82 = arith.addf %79, %81 : vector<8x768xf32>
    %83 = vector.broadcast %70 : f32 to vector<8x768xf32>
    %84 = arith.mulf %83, %82 : vector<8x768xf32>
    %85 = arith.maximumf %82, %84 : vector<8x768xf32>
    %c10 = arith.constant 10 : index
    %86 = memref.load %arg1[%c10] : memref<12xf32, #tpu.memory_space<smem>>
    %c11 = arith.constant 11 : index
    %87 = memref.load %arg1[%c11] : memref<12xf32, #tpu.memory_space<smem>>
    %88 = arith.truncf %85 : vector<8x768xf32> to vector<8x768xbf16>
    %c5_31 = arith.constant 5 : index
    %c0_32 = arith.constant 0 : index
    %c0_33 = arith.constant 0 : index
    %89 = vector.load %arg3[%c5_31, %c0_32, %c0_33] : memref<6x768x768xbf16, #tpu.memory_space<vmem>>, vector<1x768x768xbf16>
    %90 = vector.shape_cast %89 : vector<1x768x768xbf16> to vector<768x768xbf16>
    %cst_34 = arith.constant dense<0.000000e+00> : vector<8x768xf32>
    %91 = tpu.matmul %88, %90, %cst_34 {dimension_numbers = #tpu.dot_dimension_numbers<[1], [0], [0], [1], [0, 0, 1, 1], [], []>} : vector<8x768xbf16>, vector<768x768xbf16>, vector<8x768xf32> -> vector<8x768xf32>
    %c5_35 = arith.constant 5 : index
    %c0_36 = arith.constant 0 : index
    %92 = vector.load %arg4[%c5_35, %c0_36] : memref<6x768xf32, #tpu.memory_space<vmem>>, vector<1x768xf32>
    %93 = vector.shape_cast %92 : vector<1x768xf32> to vector<768xf32>
    %94 = vector.shape_cast %93 : vector<768xf32> to vector<1x768xf32>
    %95 = vector.broadcast %94 : vector<1x768xf32> to vector<8x768xf32>
    %96 = arith.addf %91, %95 : vector<8x768xf32>
    %97 = vector.broadcast %86 : f32 to vector<8x768xf32>
    %98 = arith.mulf %97, %85 : vector<8x768xf32>
    %99 = arith.addf %96, %98 : vector<8x768xf32>
    %100 = vector.broadcast %87 : f32 to vector<8x768xf32>
    %101 = arith.mulf %100, %99 : vector<8x768xf32>
    %102 = arith.maximumf %99, %101 : vector<8x768xf32>
    %c0_37 = arith.constant 0 : index
    %c0_38 = arith.constant 0 : index
    %103 = vector.load %arg5[%c0_37, %c0_38] : memref<8x768xf32, #tpu.memory_space<vmem>>, vector<8x768xf32>
    tpu.vector_store %arg5[%c0_37, %c0_38], %102 {strides = array<i32>} : memref<8x768xf32, #tpu.memory_space<vmem>>, vector<8x768xf32>,
    return
  }
  func.func @transform_0(%arg0: i32) -> i32 {
    %c0_i32 = arith.constant 0 : i32
    %c0_i32_0 = arith.constant 0 : i32
    return %c0_i32 : i32
  }
  func.func @transform_1(%arg0: i32) -> (i32, i32) {
    %c0_i32 = arith.constant 0 : i32
    %c0_i32_0 = arith.constant 0 : i32
    return %arg0, %c0_i32 : i32, i32
  }
  func.func @transform_2(%arg0: i32) -> (i32, i32, i32) {
    %c0_i32 = arith.constant 0 : i32
    %c0_i32_0 = arith.constant 0 : i32
    %c0_i32_1 = arith.constant 0 : i32
    %c0_i32_2 = arith.constant 0 : i32
    return %c0_i32, %c0_i32_0, %c0_i32_1 : i32, i32, i32
  }
  func.func @transform_3(%arg0: i32) -> (i32, i32) {
    %c0_i32 = arith.constant 0 : i32
    %c0_i32_0 = arith.constant 0 : i32
    %c0_i32_1 = arith.constant 0 : i32
    return %c0_i32, %c0_i32_0 : i32, i32
  }
  func.func @transform_4(%arg0: i32) -> (i32, i32) {
    %c0_i32 = arith.constant 0 : i32
    %c0_i32_0 = arith.constant 0 : i32
    return %arg0, %c0_i32 : i32, i32
  }
}

</mosaic_0001>

<llo_original>
// kernel: prune_model_forward.1
$region0: #{prune_model_forward.1}
  #allocation0 [shape = 'u32[]', space=smem, size = 0x4, offset = 0x4, fixed_abs, tag = 'smem constant byte address 0x4 - core index']
  #allocation1 [shape = 'u32[144,128]{1,0:T(1,128)}', space=vmem, size = 0x12000, scoped, tag = 'internal scratch']
  %s0 = inlined_call_operand.hbm [shape: f32[12], index: 0, kind: input, shape index: {}]
  %s1 = inlined_call_operand.hbm [shape: f32[8,768], index: 1, kind: input, shape index: {}]
  %s2 = inlined_call_operand.hbm [shape: bf16[6,768,768], index: 2, kind: input, shape index: {}]
  %s3 = inlined_call_operand.hbm [shape: f32[6,768], index: 3, kind: input, shape index: {}]
  %s4 = inlined_call_operand.hbm [shape: f32[8,768], index: 4, kind: output, shape index: {}]
  %s5 = sld [smem:[#allocation0]]
  $region42: #{prune_model_forward.1} parent=0
    _
  %s7 = ssub.s32 1, %s5
  %s8 = scalar_select 0, %s7, %s5
  $region1: #{prune_model_forward.1} parent=0
    #allocation2 [shape = 'u8[512]{0}', space=smem, size = 0x200, scoped, tag = 'input window, operand 0, single buffered']
    #allocation3 [shape = 's32[1]{0}', space=sflag, size = 0x4, scoped, tag = 'scoped memory for prune_model_forward.1']
    #allocation4 [shape = 's32[1]{0}', space=sflag, size = 0x4, scoped, tag = 'scoped memory for prune_model_forward.1']
    #allocation5 [shape = 's32[1]{0}', space=sflag, size = 0x4, scoped, tag = 'scoped memory for prune_model_forward.1']
    #allocation6 [shape = 'u8[24576]{0}', space=vmem, size = 0x6000, scoped, tag = 'input window, operand 1, single buffered']
    #allocation7 [shape = 'u8[7077888]{0}', space=vmem, size = 0x6c0000, scoped, tag = 'input window, operand 2, single buffered']
    #allocation8 [shape = 's32[1]{0}', space=sflag, size = 0x4, scoped, tag = 'scoped memory for prune_model_forward.1']
    #allocation9 [shape = 'u8[24576]{0}', space=vmem, size = 0x6000, scoped, tag = 'input window, operand 3, single buffered']
    #allocation10 [shape = 'u8[24576]{0}', space=vmem, size = 0x6000, scoped, tag = 'output window, operand 0, single buffered']
    %9 = vsyncpa [#allocation5], 0
    %10 = vsyncpa [#allocation3], 0
    %11 = vsyncpa [#allocation8], 0
    %12 = vsyncpa [#allocation4], 0
    // Predicated region
    $region2: #{prune_model_forward.1} parent=1 // pred_check
      _
    $region3: #{prune_model_forward.1} parent=1 // pred_check_branch
      %14 = sbr.rel (0) target = $region5
    $region4: #{prune_model_forward.1} parent=1 // pred_region
      %s16 = ssub.s32 16, 16
      %17 = vsyncadd [#allocation5], %s16
      %20 = dma.hbm_to_smem %s0, 16, [#allocation2], [#allocation5]
    $region5: #{prune_model_forward.1} parent=1 // pred_fallthru
      _
    // Predicated region
    $region6: #{prune_model_forward.1} parent=1 // pred_check
      _
    $region7: #{prune_model_forward.1} parent=1 // pred_check_branch
      %22 = sbr.rel (0) target = $region9
    $region8: #{prune_model_forward.1} parent=1 // pred_region
      %s24 = ssub.s32 768, 768
      %25 = vsyncadd [#allocation3], %s24
      %s27 = sshll.u32 [#allocation6], 4
      %s28 = int_to_ptr.vmem [resolvable:$true] %s27
      %30 = dma.hbm_to_vmem [thread:$0]  %s1, 768, %s28, [#allocation3]
    $region9: #{prune_model_forward.1} parent=1 // pred_fallthru
      _
    // Predicated region
    $region10: #{prune_model_forward.1} parent=1 // pred_check
      _
    $region11: #{prune_model_forward.1} parent=1 // pred_check_branch
      %32 = sbr.rel (0) target = $region13
    $region12: #{prune_model_forward.1} parent=1 // pred_region
      %s34 = ssub.s32 221184, 221184
      %35 = vsyncadd [#allocation8], %s34
      %s36 = sshll.u32 [#allocation7], 4
      %s37 = int_to_ptr.vmem [resolvable:$true] %s36
      %42 = dma.hbm_to_vmem [thread:$0]  %s2, 221184, %s37, [#allocation8], 384, 384, 24
    $region13: #{prune_model_forward.1} parent=1 // pred_fallthru
      _
    // Predicated region
    $region14: #{prune_model_forward.1} parent=1 // pred_check
      _
    $region15: #{prune_model_forward.1} parent=1 // pred_check_branch
      %44 = sbr.rel (0) target = $region17
    $region16: #{prune_model_forward.1} parent=1 // pred_region
      %s46 = ssub.s32 768, 768
      %47 = vsyncadd [#allocation8], %s46
      %s49 = sshll.u32 [#allocation9], 4
      %s50 = int_to_ptr.vmem [resolvable:$true] %s49
      %52 = dma.hbm_to_vmem [thread:$0]  %s3, 768, %s50, [#allocation8]
    $region17: #{prune_model_forward.1} parent=1 // pred_fallthru
      _
    // Predicated region
    $region18: #{prune_model_forward.1} parent=1 // pred_check
      _
    $region19: #{prune_model_forward.1} parent=1 // pred_check_branch
      %54 = sbr.rel (0) target = $region21
    $region20: #{prune_model_forward.1} parent=1 // pred_region
      %55 = dma.done [#allocation5], 16
    $region21: #{prune_model_forward.1} parent=1 // pred_fallthru
      _
    // Predicated region
    $region22: #{prune_model_forward.1} parent=1 // pred_check
      _
    $region23: #{prune_model_forward.1} parent=1 // pred_check_branch
      %57 = sbr.rel (0) target = $region25
    $region24: #{prune_model_forward.1} parent=1 // pred_region
      %58 = dma.done [#allocation3], 768
    $region25: #{prune_model_forward.1} parent=1 // pred_fallthru
      _
    // Predicated region
    $region26: #{prune_model_forward.1} parent=1 // pred_check
      _
    $region27: #{prune_model_forward.1} parent=1 // pred_check_branch
      %60 = sbr.rel (0) target = $region29
    $region28: #{prune_model_forward.1} parent=1 // pred_region
      %61 = dma.done [#allocation8], 221184
    $region29: #{prune_model_forward.1} parent=1 // pred_fallthru
      _
    // Predicated region
    $region30: #{prune_model_forward.1} parent=1 // pred_check
      _
    $region31: #{prune_model_forward.1} parent=1 // pred_check_branch
      %63 = sbr.rel (0) target = $region33
    $region32: #{prune_model_forward.1} parent=1 // pred_region
      %64 = dma.done [#allocation8], 768
    $region33: #{prune_model_forward.1} parent=1 // pred_fallthru
      _
    %65 = sfence
    %v66 = vld [vmem:[#allocation6] sm:$0xff]
    %v67 = vld [vmem:[#allocation6 + $0x8] sm:$0xff]
    %v68 = vld [vmem:[#allocation6 + $0x10] sm:$0xff]
    %v69 = vld [vmem:[#allocation6 + $0x18] sm:$0xff]
    %v70 = vld [vmem:[#allocation6 + $0x20] sm:$0xff]
    %v71 = vld [vmem:[#allocation6 + $0x28] sm:$0xff]
    %s72 = sld [smem:[#allocation2]]
    %s73 = sld [smem:[#allocation2 + $0x1]]
    %v74 = vpack.c.bf16 %v66, %v66
    %v75 = vpack.c.bf16 %v67, %v67
    %v76 = vpack.c.bf16 %v68, %v68
    %v77 = vpack.c.bf16 %v69, %v69
    %v78 = vpack.c.bf16 %v70, %v70
    %v79 = vpack.c.bf16 %v71, %v71
    %v80 = vld [vmem:[#allocation7] sm:$0xff]
    %v81 = vld [vmem:[#allocation7 + $0x8] sm:$0xff]
    %v82 = vld [vmem:[#allocation7 + $0x10] sm:$0xff]
    %v83 = vld [vmem:[#allocation7 + $0x18] sm:$0xff]
    %v84 = vld [vmem:[#allocation7 + $0x20] sm:$0xff]
    %v85 = vld [vmem:[#allocation7 + $0x28] sm:$0xff]
    %v86 = vld [vmem:[#allocation7 + $0x30] sm:$0xff]
    %v87 = vld [vmem:[#allocation7 + $0x38] sm:$0xff]
    %v88 = vld [vmem:[#allocation7 + $0x40] sm:$0xff]
    %v89 = vld [vmem:[#allocation7 + $0x48] sm:$0xff]
    %v90 = vld [vmem:[#allocation7 + $0x50] sm:$0xff]
    %v91 = vld [vmem:[#allocation7 + $0x58] sm:$0xff]
    %v92 = vld [vmem:[#allocation7 + $0x60] sm:$0xff]
    %v93 = vld [vmem:[#allocation7 + $0x68] sm:$0xff]
    %v94 = vld [vmem:[#allocation7 + $0x70] sm:$0xff]
    %v95 = vld [vmem:[#allocation7 + $0x78] sm:$0xff]
    %v96 = vld [vmem:[#allocation7 + $0x80] sm:$0xff]
    %v97 = vld [vmem:[#allocation7 + $0x88] sm:$0xff]
    %v98 = vld [vmem:[#allocation7 + $0x90] sm:$0xff]
    %v99 = vld [vmem:[#allocation7 + $0x98] sm:$0xff]
    %v100 = vld [vmem:[#allocation7 + $0xa0] sm:$0xff]
    %v101 = vld [vmem:[#allocation7 + $0xa8] sm:$0xff]
    %v102 = vld [vmem:[#allocation7 + $0xb0] sm:$0xff]
    %v103 = vld [vmem:[#allocation7 + $0xb8] sm:$0xff]
    %v104 = vld [vmem:[#allocation7 + $0xc0] sm:$0xff]
    %v105 = vld [vmem:[#allocation7 + $0xc8] sm:$0xff]
    %v106 = vld [vmem:[#allocation7 + $0xd0] sm:$0xff]
    %v107 = vld [vmem:[#allocation7 + $0xd8] sm:$0xff]
    %v108 = vld [vmem:[#allocation7 + $0xe0] sm:$0xff]
    %v109 = vld [vmem:[#allocation7 + $0xe8] sm:$0xff]
    %v110 = vld [vmem:[#allocation7 + $0xf0] sm:$0xff]
    %v111 = vld [vmem:[#allocation7 + $0xf8] sm:$0xff]
    %v112 = vld [vmem:[#allocation7 + $0x100] sm:$0xff]
    %v113 = vld [vmem:[#allocation7 + $0x108] sm:$0xff]
    %v114 = vld [vmem:[#allocation7 + $0x110] sm:$0xff]
    %v115 = vld [vmem:[#allocation7 + $0x118] sm:$0xff]
    %v116 = vld [vmem:[#allocation7 + $0x120] sm:$0xff]
    %v117 = vld [vmem:[#allocation7 + $0x128] sm:$0xff]
    %v118 = vld [vmem:[#allocation7 + $0x130] sm:$0xff]
    %v119 = vld [vmem:[#allocation7 + $0x138] sm:$0xff]
    %v120 = vld [vmem:[#allocation7 + $0x140] sm:$0xff]
    %v121 = vld [vmem:[#allocation7 + $0x148] sm:$0xff]
    %v122 = vld [vmem:[#allocation7 + $0x150] sm:$0xff]
    %v123 = vld [vmem:[#allocation7 + $0x158] sm:$0xff]
    %v124 = vld [vmem:[#allocation7 + $0x160] sm:$0xff]
    %v125 = vld [vmem:[#allocation7 + $0x168] sm:$0xff]
    %v126 = vld [vmem:[#allocation7 + $0x170] sm:$0xff]
    %v127 = vld [vmem:[#allocation7 + $0x178] sm:$0xff]
    %v128 = vld [vmem:[#allocation7 + $0x180] sm:$0xff]
    %v129 = vld [vmem:[#allocation7 + $0x188] sm:$0xff]
    %v130 = vld [vmem:[#allocation7 + $0x190] sm:$0xff]
    %v131 = vld [vmem:[#allocation7 + $0x198] sm:$0xff]
    %v132 = vld [vmem:[#allocation7 + $0x1a0] sm:$0xff]
    %v133 = vld [vmem:[#allocation7 + $0x1a8] sm:$0xff]
    %v134 = vld [vmem:[#allocation7 + $0x1b0] sm:$0xff]
    %v135 = vld [vmem:[#allocation7 + $0x1b8] sm:$0xff]
    %v136 = vld [vmem:[#allocation7 + $0x1c0] sm:$0xff]
    %v137 = vld [vmem:[#allocation7 + $0x1c8] sm:$0xff]
    %v138 = vld [vmem:[#allocation7 + $0x1d0] sm:$0xff]
    %v139 = vld [vmem:[#allocation7 + $0x1d8] sm:$0xff]
    %v140 = vld [vmem:[#allocation7 + $0x1e0] sm:$0xff]
    %v141 = vld [vmem:[#allocation7 + $0x1e8] sm:$0xff]
    %v142 = vld [vmem:[#allocation7 + $0x1f0] sm:$0xff]
    %v143 = vld [vmem:[#allocation7 + $0x1f8] sm:$0xff]
    %v144 = vld [vmem:[#allocation7 + $0x200] sm:$0xff]
    %v145 = vld [vmem:[#allocation7 + $0x208] sm:$0xff]
    %v146 = vld [vmem:[#allocation7 + $0x210] sm:$0xff]
    %v147 = vld [vmem:[#allocation7 + $0x218] sm:$0xff]
    %v148 = vld [vmem:[#allocation7 + $0x220] sm:$0xff]
    %v149 = vld [vmem:[#allocation7 + $0x228] sm:$0xff]
    %v150 = vld [vmem:[#allocation7 + $0x230] sm:$0xff]
    %v151 = vld [vmem:[#allocation7 + $0x238] sm:$0xff]
    %v152 = vld [vmem:[#allocation7 + $0x240] sm:$0xff]
    %v153 = vld [vmem:[#allocation7 + $0x248] sm:$0xff]
    %v154 = vld [vmem:[#allocation7 + $0x250] sm:$0xff]
    %v155 = vld [vmem:[#allocation7 + $0x258] sm:$0xff]
    %v156 = vld [vmem:[#allocation7 + $0x260] sm:$0xff]
    %v157 = vld [vmem:[#allocation7 + $0x268] sm:$0xff]
    %v158 = vld [vmem:[#allocation7 + $0x270] sm:$0xff]
    %v159 = vld [vmem:[#allocation7 + $0x278] sm:$0xff]
    %v160 = vld [vmem:[#allocation7 + $0x280] sm:$0xff]
    %v161 = vld [vmem:[#allocation7 + $0x288] sm:$0xff]
    %v162 = vld [vmem:[#allocation7 + $0x290] sm:$0xff]
    %v163 = vld [vmem:[#allocation7 + $0x298] sm:$0xff]
    %v164 = vld [vmem:[#allocation7 + $0x2a0] sm:$0xff]
    %v165 = vld [vmem:[#allocation7 + $0x2a8] sm:$0xff]
    %v166 = vld [vmem:[#allocation7 + $0x2b0] sm:$0xff]
    %v167 = vld [vmem:[#allocation7 + $0x2b8] sm:$0xff]
    %v168 = vld [vmem:[#allocation7 + $0x2c0] sm:$0xff]
    %v169 = vld [vmem:[#allocation7 + $0x2c8] sm:$0xff]
    %v170 = vld [vmem:[#allocation7 + $0x2d0] sm:$0xff]
    %v171 = vld [vmem:[#allocation7 + $0x2d8] sm:$0xff]
    %v172 = vld [vmem:[#allocation7 + $0x2e0] sm:$0xff]
    %v173 = vld [vmem:[#allocation7 + $0x2e8] sm:$0xff]
    %v174 = vld [vmem:[#allocation7 + $0x2f0] sm:$0xff]
    %v175 = vld [vmem:[#allocation7 + $0x2f8] sm:$0xff]
    %v176 = vld [vmem:[#allocation7 + $0x300] sm:$0xff]
    %v177 = vld [vmem:[#allocation7 + $0x308] sm:$0xff]
    %v178 = vld [vmem:[#allocation7 + $0x310] sm:$0xff]
    %v179 = vld [vmem:[#allocation7 + $0x318] sm:$0xff]
    %v180 = vld [vmem:[#allocation7 + $0x320] sm:$0xff]
    %v181 = vld [vmem:[#allocation7 + $0x328] sm:$0xff]
    %v182 = vld [vmem:[#allocation7 + $0x330] sm:$0xff]
    %v183 = vld [vmem:[#allocation7 + $0x338] sm:$0xff]
    %v184 = vld [vmem:[#allocation7 + $0x340] sm:$0xff]
    %v185 = vld [vmem:[#allocation7 + $0x348] sm:$0xff]
    %v186 = vld [vmem:[#allocation7 + $0x350] sm:$0xff]
    %v187 = vld [vmem:[#allocation7 + $0x358] sm:$0xff]
    %v188 = vld [vmem:[#allocation7 + $0x360] sm:$0xff]
    %v189 = vld [vmem:[#allocation7 + $0x368] sm:$0xff]
    %v190 = vld [vmem:[#allocation7 + $0x370] sm:$0xff]
    %v191 = vld [vmem:[#allocation7 + $0x378] sm:$0xff]
    %v192 = vld [vmem:[#allocation7 + $0x380] sm:$0xff]
    %v193 = vld [vmem:[#allocation7 + $0x388] sm:$0xff]
    %v194 = vld [vmem:[#allocation7 + $0x390] sm:$0xff]
    %v195 = vld [vmem:[#allocation7 + $0x398] sm:$0xff]
    %v196 = vld [vmem:[#allocation7 + $0x3a0] sm:$0xff]
    %v197 = vld [vmem:[#allocation7 + $0x3a8] sm:$0xff]
    %v198 = vld [vmem:[#allocation7 + $0x3b0] sm:$0xff]
    %v199 = vld [vmem:[#allocation7 + $0x3b8] sm:$0xff]
    %v200 = vld [vmem:[#allocation7 + $0x3c0] sm:$0xff]
    %v201 = vld [vmem:[#allocation7 + $0x3c8] sm:$0xff]
    %v202 = vld [vmem:[#allocation7 + $0x3d0] sm:$0xff]
    %v203 = vld [vmem:[#allocation7 + $0x3d8] sm:$0xff]
    %v204 = vld [vmem:[#allocation7 + $0x3e0] sm:$0xff]
    %v205 = vld [vmem:[#allocation7 + $0x3e8] sm:$0xff]
    %v206 = vld [vmem:[#allocation7 + $0x3f0] sm:$0xff]
    %v207 = vld [vmem:[#allocation7 + $0x3f8] sm:$0xff]
    %v208 = vld [vmem:[#allocation7 + $0x400] sm:$0xff]
    %v209 = vld [vmem:[#allocation7 + $0x408] sm:$0xff]
    %v210 = vld [vmem:[#allocation7 + $0x410] sm:$0xff]
    %v211 = vld [vmem:[#allocation7 + $0x418] sm:$0xff]
    %v212 = vld [vmem:[#allocation7 + $0x420] sm:$0xff]
    %v213 = vld [vmem:[#allocation7 + $0x428] sm:$0xff]
    %v214 = vld [vmem:[#allocation7 + $0x430] sm:$0xff]
    %v215 = vld [vmem:[#allocation7 + $0x438] sm:$0xff]
    %v216 = vld [vmem:[#allocation7 + $0x440] sm:$0xff]
    %v217 = vld [vmem:[#allocation7 + $0x448] sm:$0xff]
    %v218 = vld [vmem:[#allocation7 + $0x450] sm:$0xff]
    %v219 = vld [vmem:[#allocation7 + $0x458] sm:$0xff]
    %v220 = vld [vmem:[#allocation7 + $0x460] sm:$0xff]
    %v221 = vld [vmem:[#allocation7 + $0x468] sm:$0xff]
    %v222 = vld [vmem:[#allocation7 + $0x470] sm:$0xff]
    %v223 = vld [vmem:[#allocation7 + $0x478] sm:$0xff]
    %v224 = vld [vmem:[#allocation7 + $0x480] sm:$0xff]
    %v225 = vld [vmem:[#allocation7 + $0x488] sm:$0xff]
    %v226 = vld [vmem:[#allocation7 + $0x490] sm:$0xff]
    %v227 = vld [vmem:[#allocation7 + $0x498] sm:$0xff]
    %v228 = vld [vmem:[#allocation7 + $0x4a0] sm:$0xff]
    %v229 = vld [vmem:[#allocation7 + $0x4a8] sm:$0xff]
    %v230 = vld [vmem:[#allocation7 + $0x4b0] sm:$0xff]
    %v231 = vld [vmem:[#allocation7 + $0x4b8] sm:$0xff]
    %v232 = vld [vmem:[#allocation7 + $0x4c0] sm:$0xff]
    %v233 = vld [vmem:[#allocation7 + $0x4c8] sm:$0xff]
    %v234 = vld [vmem:[#allocation7 + $0x4d0] sm:$0xff]
    %v235 = vld [vmem:[#allocation7 + $0x4d8] sm:$0xff]
    %v236 = vld [vmem:[#allocation7 + $0x4e0] sm:$0xff]
    %v237 = vld [vmem:[#allocation7 + $0x4e8] sm:$0xff]
    %v238 = vld [vmem:[#allocation7 + $0x4f0] sm:$0xff]
    %v239 = vld [vmem:[#allocation7 + $0x4f8] sm:$0xff]
    %v240 = vld [vmem:[#allocation7 + $0x500] sm:$0xff]
    %v241 = vld [vmem:[#allocation7 + $0x508] sm:$0xff]
    %v242 = vld [vmem:[#allocation7 + $0x510] sm:$0xff]
    %v243 = vld [vmem:[#allocation7 + $0x518] sm:$0xff]
    %v244 = vld [vmem:[#allocation7 + $0x520] sm:$0xff]
    %v245 = vld [vmem:[#allocation7 + $0x528] sm:$0xff]
    %v246 = vld [vmem:[#allocation7 + $0x530] sm:$0xff]
    %v247 = vld [vmem:[#allocation7 + $0x538] sm:$0xff]
    %v248 = vld [vmem:[#allocation7 + $0x540] sm:$0xff]
    %v249 = vld [vmem:[#allocation7 + $0x548] sm:$0xff]
    %v250 = vld [vmem:[#allocation7 + $0x550] sm:$0xff]
    %v251 = vld [vmem:[#allocation7 + $0x558] sm:$0xff]
    %v252 = vld [vmem:[#allocation7 + $0x560] sm:$0xff]
    %v253 = vld [vmem:[#allocation7 + $0x568] sm:$0xff]
    %v254 = vld [vmem:[#allocation7 + $0x570] sm:$0xff]
    %v255 = vld [vmem:[#allocation7 + $0x578] sm:$0xff]
    %v256 = vld [vmem:[#allocation7 + $0x580] sm:$0xff]
    %v257 = vld [vmem:[#allocation7 + $0x588] sm:$0xff]
    %v258 = vld [vmem:[#allocation7 + $0x590] sm:$0xff]
    %v259 = vld [vmem:[#allocation7 + $0x598] sm:$0xff]
    %v260 = vld [vmem:[#allocation7 + $0x5a0] sm:$0xff]
    %v261 = vld [vmem:[#allocation7 + $0x5a8] sm:$0xff]
    %v262 = vld [vmem:[#allocation7 + $0x5b0] sm:$0xff]
    %v263 = vld [vmem:[#allocation7 + $0x5b8] sm:$0xff]
    %v264 = vld [vmem:[#allocation7 + $0x5c0] sm:$0xff]
    %v265 = vld [vmem:[#allocation7 + $0x5c8] sm:$0xff]
    %v266 = vld [vmem:[#allocation7 + $0x5d0] sm:$0xff]
    %v267 = vld [vmem:[#allocation7 + $0x5d8] sm:$0xff]
    %v268 = vld [vmem:[#allocation7 + $0x5e0] sm:$0xff]
    %v269 = vld [vmem:[#allocation7 + $0x5e8] sm:$0xff]
    %v270 = vld [vmem:[#allocation7 + $0x5f0] sm:$0xff]
    %v271 = vld [vmem:[#allocation7 + $0x5f8] sm:$0xff]
    %v272 = vld [vmem:[#allocation7 + $0x600] sm:$0xff]
    %v273 = vld [vmem:[#allocation7 + $0x608] sm:$0xff]
    %v274 = vld [vmem:[#allocation7 + $0x610] sm:$0xff]
    %v275 = vld [vmem:[#allocation7 + $0x618] sm:$0xff]
    %v276 = vld [vmem:[#allocation7 + $0x620] sm:$0xff]
    %v277 = vld [vmem:[#allocation7 + $0x628] sm:$0xff]
    %v278 = vld [vmem:[#allocation7 + $0x630] sm:$0xff]
    %v279 = vld [vmem:[#allocation7 + $0x638] sm:$0xff]
    %v280 = vld [vmem:[#allocation7 + $0x640] sm:$0xff]
    %v281 = vld [vmem:[#allocation7 + $0x648] sm:$0xff]
    %v282 = vld [vmem:[#allocation7 + $0x650] sm:$0xff]
    %v283 = vld [vmem:[#allocation7 + $0x658] sm:$0xff]
    %v284 = vld [vmem:[#allocation7 + $0x660] sm:$0xff]
    %v285 = vld [vmem:[#allocation7 + $0x668] sm:$0xff]
    %v286 = vld [vmem:[#allocation7 + $0x670] sm:$0xff]
    %v287 = vld [vmem:[#allocation7 + $0x678] sm:$0xff]
    %v288 = vld [vmem:[#allocation7 + $0x680] sm:$0xff]
    %v289 = vld [vmem:[#allocation7 + $0x688] sm:$0xff]
    %v290 = vld [vmem:[#allocation7 + $0x690] sm:$0xff]
    %v291 = vld [vmem:[#allocation7 + $0x698] sm:$0xff]
    %v292 = vld [vmem:[#allocation7 + $0x6a0] sm:$0xff]
    %v293 = vld [vmem:[#allocation7 + $0x6a8] sm:$0xff]
    %v294 = vld [vmem:[#allocation7 + $0x6b0] sm:$0xff]
    %v295 = vld [vmem:[#allocation7 + $0x6b8] sm:$0xff]
    %v296 = vld [vmem:[#allocation7 + $0x6c0] sm:$0xff]
    %v297 = vld [vmem:[#allocation7 + $0x6c8] sm:$0xff]
    %v298 = vld [vmem:[#allocation7 + $0x6d0] sm:$0xff]
    %v299 = vld [vmem:[#allocation7 + $0x6d8] sm:$0xff]
    %v300 = vld [vmem:[#allocation7 + $0x6e0] sm:$0xff]
    %v301 = vld [vmem:[#allocation7 + $0x6e8] sm:$0xff]
    %v302 = vld [vmem:[#allocation7 + $0x6f0] sm:$0xff]
    %v303 = vld [vmem:[#allocation7 + $0x6f8] sm:$0xff]
    %v304 = vld [vmem:[#allocation7 + $0x700] sm:$0xff]
    %v305 = vld [vmem:[#allocation7 + $0x708] sm:$0xff]
    %v306 = vld [vmem:[#allocation7 + $0x710] sm:$0xff]
    %v307 = vld [vmem:[#allocation7 + $0x718] sm:$0xff]
    %v308 = vld [vmem:[#allocation7 + $0x720] sm:$0xff]
    %v309 = vld [vmem:[#allocation7 + $0x728] sm:$0xff]
    %v310 = vld [vmem:[#allocation7 + $0x730] sm:$0xff]
    %v311 = vld [vmem:[#allocation7 + $0x738] sm:$0xff]
    %v312 = vld [vmem:[#allocation7 + $0x740] sm:$0xff]
    %v313 = vld [vmem:[#allocation7 + $0x748] sm:$0xff]
    %v314 = vld [vmem:[#allocation7 + $0x750] sm:$0xff]
    %v315 = vld [vmem:[#allocation7 + $0x758] sm:$0xff]
    %v316 = vld [vmem:[#allocation7 + $0x760] sm:$0xff]
    %v317 = vld [vmem:[#allocation7 + $0x768] sm:$0xff]
    %v318 = vld [vmem:[#allocation7 + $0x770] sm:$0xff]
    %v319 = vld [vmem:[#allocation7 + $0x778] sm:$0xff]
    %v320 = vld [vmem:[#allocation7 + $0x780] sm:$0xff]
    %v321 = vld [vmem:[#allocation7 + $0x788] sm:$0xff]
    %v322 = vld [vmem:[#allocation7 + $0x790] sm:$0xff]
    %v323 = vld [vmem:[#allocation7 + $0x798] sm:$0xff]
    %v324 = vld [vmem:[#allocation7 + $0x7a0] sm:$0xff]
    %v325 = vld [vmem:[#allocation7 + $0x7a8] sm:$0xff]
    %v326 = vld [vmem:[#allocation7 + $0x7b0] sm:$0xff]
    %v327 = vld [vmem:[#allocation7 + $0x7b8] sm:$0xff]
    %v328 = vld [vmem:[#allocation7 + $0x7c0] sm:$0xff]
    %v329 = vld [vmem:[#allocation7 + $0x7c8] sm:$0xff]
    %v330 = vld [vmem:[#allocation7 + $0x7d0] sm:$0xff]
    %v331 = vld [vmem:[#allocation7 + $0x7d8] sm:$0xff]
    %v332 = vld [vmem:[#allocation7 + $0x7e0] sm:$0xff]
    %v333 = vld [vmem:[#allocation7 + $0x7e8] sm:$0xff]
    %v334 = vld [vmem:[#allocation7 + $0x7f0] sm:$0xff]
    %v335 = vld [vmem:[#allocation7 + $0x7f8] sm:$0xff]
    %v336 = vld [vmem:[#allocation7 + $0x800] sm:$0xff]
    %v337 = vld [vmem:[#allocation7 + $0x808] sm:$0xff]
    %v338 = vld [vmem:[#allocation7 + $0x810] sm:$0xff]
    %v339 = vld [vmem:[#allocation7 + $0x818] sm:$0xff]
    %v340 = vld [vmem:[#allocation7 + $0x820] sm:$0xff]
    %v341 = vld [vmem:[#allocation7 + $0x828] sm:$0xff]
    %v342 = vld [vmem:[#allocation7 + $0x830] sm:$0xff]
    %v343 = vld [vmem:[#allocation7 + $0x838] sm:$0xff]
    %v344 = vld [vmem:[#allocation7 + $0x840] sm:$0xff]
    %v345 = vld [vmem:[#allocation7 + $0x848] sm:$0xff]
    %v346 = vld [vmem:[#allocation7 + $0x850] sm:$0xff]
    %v347 = vld [vmem:[#allocation7 + $0x858] sm:$0xff]
    %v348 = vld [vmem:[#allocation7 + $0x860] sm:$0xff]
    %v349 = vld [vmem:[#allocation7 + $0x868] sm:$0xff]
    %v350 = vld [vmem:[#allocation7 + $0x870] sm:$0xff]
    %v351 = vld [vmem:[#allocation7 + $0x878] sm:$0xff]
    %v352 = vld [vmem:[#allocation7 + $0x880] sm:$0xff]
    %v353 = vld [vmem:[#allocation7 + $0x888] sm:$0xff]
    %v354 = vld [vmem:[#allocation7 + $0x890] sm:$0xff]
    %v355 = vld [vmem:[#allocation7 + $0x898] sm:$0xff]
    %v356 = vld [vmem:[#allocation7 + $0x8a0] sm:$0xff]
    %v357 = vld [vmem:[#allocation7 + $0x8a8] sm:$0xff]
    %v358 = vld [vmem:[#allocation7 + $0x8b0] sm:$0xff]
    %v359 = vld [vmem:[#allocation7 + $0x8b8] sm:$0xff]
    %v360 = vld [vmem:[#allocation7 + $0x8c0] sm:$0xff]
    %v361 = vld [vmem:[#allocation7 + $0x8c8] sm:$0xff]
    %v362 = vld [vmem:[#allocation7 + $0x8d0] sm:$0xff]
    %v363 = vld [vmem:[#allocation7 + $0x8d8] sm:$0xff]
    %v364 = vld [vmem:[#allocation7 + $0x8e0] sm:$0xff]
    %v365 = vld [vmem:[#allocation7 + $0x8e8] sm:$0xff]
    %v366 = vld [vmem:[#allocation7 + $0x8f0] sm:$0xff]
    %v367 = vld [vmem:[#allocation7 + $0x8f8] sm:$0xff]
    %v368 = vld [vmem:[#allocation9] ss:$8 sm:$0xf]
    %v369 = vld [vmem:[#allocation9] ss:$8 sm:$0x30]
    %v370 = vor.u32 %v368, %v369
    %v372 = vlaneseq
    %v373 = vshrl.u32 %v372, 7
    %v374 = vsub.s32 0, %v373
    %v375 = vrot.slane %v370, %v374
    %v376 = vlaneseq
    %v377 = vshrl.u32 %v376, 7
    %v378 = vsub.s32 1, %v377
    %v379 = vrot.slane %v370, %v378
    %v380 = vlaneseq
    %v381 = vshrl.u32 %v380, 7
    %v382 = vsub.s32 2, %v381
    %v383 = vrot.slane %v370, %v382
    %v384 = vlaneseq
    %v385 = vshrl.u32 %v384, 7
    %v386 = vsub.s32 3, %v385
    %v387 = vrot.slane %v370, %v386
    %v388 = vlaneseq
    %v389 = vshrl.u32 %v388, 7
    %v390 = vsub.s32 4, %v389
    %v391 = vrot.slane %v370, %v390
    %v392 = vlaneseq
    %v393 = vshrl.u32 %v392, 7
    %v394 = vsub.s32 5, %v393
    %v395 = vrot.slane %v370, %v394
    %v690 = vunpack.c.l.b16 %v80
    %v691 = vunpack.c.h.b16 %v80
    %v692 = vunpack.c.l.b16 %v81
    %v693 = vunpack.c.h.b16 %v81
    %v694 = vunpack.c.l.b16 %v82
    %v695 = vunpack.c.h.b16 %v82
    %v696 = vunpack.c.l.b16 %v83
    %v697 = vunpack.c.h.b16 %v83
    %v698 = vunpack.c.l.b16 %v84
    %v699 = vunpack.c.h.b16 %v84
    %v700 = vunpack.c.l.b16 %v85
    %v701 = vunpack.c.h.b16 %v85
    %v702 = vunpack.c.l.b16 %v86
    %v703 = vunpack.c.h.b16 %v86
    %v704 = vunpack.c.l.b16 %v87
    %v705 = vunpack.c.h.b16 %v87
    %v706 = vunpack.c.l.b16 %v88
    %v707 = vunpack.c.h.b16 %v88
    %v708 = vunpack.c.l.b16 %v89
    %v709 = vunpack.c.h.b16 %v89
    %v710 = vunpack.c.l.b16 %v90
    %v711 = vunpack.c.h.b16 %v90
    %v712 = vunpack.c.l.b16 %v91
    %v713 = vunpack.c.h.b16 %v91
    %v714 = vunpack.c.l.b16 %v92
    %v715 = vunpack.c.h.b16 %v92
    %v716 = vunpack.c.l.b16 %v93
    %v717 = vunpack.c.h.b16 %v93
    %v718 = vunpack.c.l.b16 %v94
    %v719 = vunpack.c.h.b16 %v94
    %v720 = vunpack.c.l.b16 %v95
    %v721 = vunpack.c.h.b16 %v95
    %v722 = vunpack.c.l.b16 %v96
    %v723 = vunpack.c.h.b16 %v96
    %v724 = vunpack.c.l.b16 %v97
    %v725 = vunpack.c.h.b16 %v97
    %v726 = vunpack.c.l.b16 %v98
    %v727 = vunpack.c.h.b16 %v98
    %v728 = vunpack.c.l.b16 %v99
    %v729 = vunpack.c.h.b16 %v99
    %v730 = vunpack.c.l.b16 %v100
    %v731 = vunpack.c.h.b16 %v100
    %v732 = vunpack.c.l.b16 %v101
    %v733 = vunpack.c.h.b16 %v101
    %v734 = vunpack.c.l.b16 %v102
    %v735 = vunpack.c.h.b16 %v102
    %v736 = vunpack.c.l.b16 %v103
    %v737 = vunpack.c.h.b16 %v103
    %v738 = vunpack.c.l.b16 %v104
    %v739 = vunpack.c.h.b16 %v104
    %v740 = vunpack.c.l.b16 %v105
    %v741 = vunpack.c.h.b16 %v105
    %v742 = vunpack.c.l.b16 %v106
    %v743 = vunpack.c.h.b16 %v106
    %v744 = vunpack.c.l.b16 %v107
    %v745 = vunpack.c.h.b16 %v107
    %v746 = vunpack.c.l.b16 %v108
    %v747 = vunpack.c.h.b16 %v108
    %v748 = vunpack.c.l.b16 %v109
    %v749 = vunpack.c.h.b16 %v109
    %v750 = vunpack.c.l.b16 %v110
    %v751 = vunpack.c.h.b16 %v110
    %v752 = vunpack.c.l.b16 %v111
    %v753 = vunpack.c.h.b16 %v111
    %v754 = vunpack.c.l.b16 %v112
    %v755 = vunpack.c.h.b16 %v112
    %v756 = vunpack.c.l.b16 %v113
    %v757 = vunpack.c.h.b16 %v113
    %v758 = vunpack.c.l.b16 %v114
    %v759 = vunpack.c.h.b16 %v114
    %v760 = vunpack.c.l.b16 %v115
    %v761 = vunpack.c.h.b16 %v115
    %v762 = vunpack.c.l.b16 %v116
    %v763 = vunpack.c.h.b16 %v116
    %v764 = vunpack.c.l.b16 %v117
    %v765 = vunpack.c.h.b16 %v117
    %v766 = vunpack.c.l.b16 %v118
    %v767 = vunpack.c.h.b16 %v118
    %v768 = vunpack.c.l.b16 %v119
    %v769 = vunpack.c.h.b16 %v119
    %v770 = vunpack.c.l.b16 %v120
    %v771 = vunpack.c.h.b16 %v120
    %v772 = vunpack.c.l.b16 %v121
    %v773 = vunpack.c.h.b16 %v121
    %v774 = vunpack.c.l.b16 %v122
    %v775 = vunpack.c.h.b16 %v122
    %v776 = vunpack.c.l.b16 %v123
    %v777 = vunpack.c.h.b16 %v123
    %v778 = vunpack.c.l.b16 %v124
    %v779 = vunpack.c.h.b16 %v124
    %v780 = vunpack.c.l.b16 %v125
    %v781 = vunpack.c.h.b16 %v125
    %v782 = vunpack.c.l.b16 %v126
    %v783 = vunpack.c.h.b16 %v126
    %v784 = vunpack.c.l.b16 %v127
    %v785 = vunpack.c.h.b16 %v127
    %v786 = vunpack.c.l.b16 %v128
    %v787 = vunpack.c.h.b16 %v128
    %v788 = vunpack.c.l.b16 %v129
    %v789 = vunpack.c.h.b16 %v129
    %v790 = vunpack.c.l.b16 %v130
    %v791 = vunpack.c.h.b16 %v130
    %v792 = vunpack.c.l.b16 %v131
    %v793 = vunpack.c.h.b16 %v131
    %v794 = vunpack.c.l.b16 %v132
    %v795 = vunpack.c.h.b16 %v132
    %v796 = vunpack.c.l.b16 %v133
    %v797 = vunpack.c.h.b16 %v133
    %v798 = vunpack.c.l.b16 %v134
    %v799 = vunpack.c.h.b16 %v134
    %v800 = vunpack.c.l.b16 %v135
    %v801 = vunpack.c.h.b16 %v135
    %v802 = vunpack.c.l.b16 %v136
    %v803 = vunpack.c.h.b16 %v136
    %v804 = vunpack.c.l.b16 %v137
    %v805 = vunpack.c.h.b16 %v137
    %v806 = vunpack.c.l.b16 %v138
    %v807 = vunpack.c.h.b16 %v138
    %v808 = vunpack.c.l.b16 %v139
    %v809 = vunpack.c.h.b16 %v139
    %v810 = vunpack.c.l.b16 %v140
    %v811 = vunpack.c.h.b16 %v140
    %v812 = vunpack.c.l.b16 %v141
    %v813 = vunpack.c.h.b16 %v141
    %v814 = vunpack.c.l.b16 %v142
    %v815 = vunpack.c.h.b16 %v142
    %v816 = vunpack.c.l.b16 %v143
    %v817 = vunpack.c.h.b16 %v143
    %v818 = vunpack.c.l.b16 %v144
    %v819 = vunpack.c.h.b16 %v144
    %v820 = vunpack.c.l.b16 %v145
    %v821 = vunpack.c.h.b16 %v145
    %v822 = vunpack.c.l.b16 %v146
    %v823 = vunpack.c.h.b16 %v146
    %v824 = vunpack.c.l.b16 %v147
    %v825 = vunpack.c.h.b16 %v147
    %v826 = vunpack.c.l.b16 %v148
    %v827 = vunpack.c.h.b16 %v148
    %v828 = vunpack.c.l.b16 %v149
    %v829 = vunpack.c.h.b16 %v149
    %v830 = vunpack.c.l.b16 %v150
    %v831 = vunpack.c.h.b16 %v150
    %v832 = vunpack.c.l.b16 %v151
    %v833 = vunpack.c.h.b16 %v151
    %v834 = vunpack.c.l.b16 %v152
    %v835 = vunpack.c.h.b16 %v152
    %v836 = vunpack.c.l.b16 %v153
    %v837 = vunpack.c.h.b16 %v153
    %v838 = vunpack.c.l.b16 %v154
    %v839 = vunpack.c.h.b16 %v154
    %v840 = vunpack.c.l.b16 %v155
    %v841 = vunpack.c.h.b16 %v155
    %v842 = vunpack.c.l.b16 %v156
    %v843 = vunpack.c.h.b16 %v156
    %v844 = vunpack.c.l.b16 %v157
    %v845 = vunpack.c.h.b16 %v157
    %v846 = vunpack.c.l.b16 %v158
    %v847 = vunpack.c.h.b16 %v158
    %v848 = vunpack.c.l.b16 %v159
    %v849 = vunpack.c.h.b16 %v159
    %v850 = vunpack.c.l.b16 %v160
    %v851 = vunpack.c.h.b16 %v160
    %v852 = vunpack.c.l.b16 %v161
    %v853 = vunpack.c.h.b16 %v161
    %v854 = vunpack.c.l.b16 %v162
    %v855 = vunpack.c.h.b16 %v162
    %v856 = vunpack.c.l.b16 %v163
    %v857 = vunpack.c.h.b16 %v163
    %v858 = vunpack.c.l.b16 %v164
    %v859 = vunpack.c.h.b16 %v164
    %v860 = vunpack.c.l.b16 %v165
    %v861 = vunpack.c.h.b16 %v165
    %v862 = vunpack.c.l.b16 %v166
    %v863 = vunpack.c.h.b16 %v166
    %v864 = vunpack.c.l.b16 %v167
    %v865 = vunpack.c.h.b16 %v167
    %v866 = vunpack.c.l.b16 %v168
    %v867 = vunpack.c.h.b16 %v168
    %v868 = vunpack.c.l.b16 %v169
    %v869 = vunpack.c.h.b16 %v169
    %v870 = vunpack.c.l.b16 %v170
    %v871 = vunpack.c.h.b16 %v170
    %v872 = vunpack.c.l.b16 %v171
    %v873 = vunpack.c.h.b16 %v171
    %v874 = vunpack.c.l.b16 %v172
    %v875 = vunpack.c.h.b16 %v172
    %v876 = vunpack.c.l.b16 %v173
    %v877 = vunpack.c.h.b16 %v173
    %v878 = vunpack.c.l.b16 %v174
    %v879 = vunpack.c.h.b16 %v174
    %v880 = vunpack.c.l.b16 %v175
    %v881 = vunpack.c.h.b16 %v175
    %v882 = vunpack.c.l.b16 %v176
    %v883 = vunpack.c.h.b16 %v176
    %v884 = vunpack.c.l.b16 %v177
    %v885 = vunpack.c.h.b16 %v177
    %v886 = vunpack.c.l.b16 %v178
    %v887 = vunpack.c.h.b16 %v178
    %v888 = vunpack.c.l.b16 %v179
    %v889 = vunpack.c.h.b16 %v179
    %v890 = vunpack.c.l.b16 %v180
    %v891 = vunpack.c.h.b16 %v180
    %v892 = vunpack.c.l.b16 %v181
    %v893 = vunpack.c.h.b16 %v181
    %v894 = vunpack.c.l.b16 %v182
    %v895 = vunpack.c.h.b16 %v182
    %v896 = vunpack.c.l.b16 %v183
    %v897 = vunpack.c.h.b16 %v183
    %v898 = vunpack.c.l.b16 %v184
    %v899 = vunpack.c.h.b16 %v184
    %v900 = vunpack.c.l.b16 %v185
    %v901 = vunpack.c.h.b16 %v185
    %v902 = vunpack.c.l.b16 %v186
    %v903 = vunpack.c.h.b16 %v186
    %v904 = vunpack.c.l.b16 %v187
    %v905 = vunpack.c.h.b16 %v187
    %v906 = vunpack.c.l.b16 %v188
    %v907 = vunpack.c.h.b16 %v188
    %v908 = vunpack.c.l.b16 %v189
    %v909 = vunpack.c.h.b16 %v189
    %v910 = vunpack.c.l.b16 %v190
    %v911 = vunpack.c.h.b16 %v190
    %v912 = vunpack.c.l.b16 %v191
    %v913 = vunpack.c.h.b16 %v191
    %v914 = vunpack.c.l.b16 %v192
    %v915 = vunpack.c.h.b16 %v192
    %v916 = vunpack.c.l.b16 %v193
    %v917 = vunpack.c.h.b16 %v193
    %v918 = vunpack.c.l.b16 %v194
    %v919 = vunpack.c.h.b16 %v194
    %v920 = vunpack.c.l.b16 %v195
    %v921 = vunpack.c.h.b16 %v195
    %v922 = vunpack.c.l.b16 %v196
    %v923 = vunpack.c.h.b16 %v196
    %v924 = vunpack.c.l.b16 %v197
    %v925 = vunpack.c.h.b16 %v197
    %v926 = vunpack.c.l.b16 %v198
    %v927 = vunpack.c.h.b16 %v198
    %v928 = vunpack.c.l.b16 %v199
    %v929 = vunpack.c.h.b16 %v199
    %v930 = vunpack.c.l.b16 %v200
    %v931 = vunpack.c.h.b16 %v200
    %v932 = vunpack.c.l.b16 %v201
    %v933 = vunpack.c.h.b16 %v201
    %v934 = vunpack.c.l.b16 %v202
    %v935 = vunpack.c.h.b16 %v202
    %v936 = vunpack.c.l.b16 %v203
    %v937 = vunpack.c.h.b16 %v203
    %v938 = vunpack.c.l.b16 %v204
    %v939 = vunpack.c.h.b16 %v204
    %v940 = vunpack.c.l.b16 %v205
    %v941 = vunpack.c.h.b16 %v205
    %v942 = vunpack.c.l.b16 %v206
    %v943 = vunpack.c.h.b16 %v206
    %v944 = vunpack.c.l.b16 %v207
    %v945 = vunpack.c.h.b16 %v207
    %v946 = vunpack.c.l.b16 %v208
    %v947 = vunpack.c.h.b16 %v208
    %v948 = vunpack.c.l.b16 %v209
    %v949 = vunpack.c.h.b16 %v209
    %v950 = vunpack.c.l.b16 %v210
    %v951 = vunpack.c.h.b16 %v210
    %v952 = vunpack.c.l.b16 %v211
    %v953 = vunpack.c.h.b16 %v211
    %v954 = vunpack.c.l.b16 %v212
    %v955 = vunpack.c.h.b16 %v212
    %v956 = vunpack.c.l.b16 %v213
    %v957 = vunpack.c.h.b16 %v213
    %v958 = vunpack.c.l.b16 %v214
    %v959 = vunpack.c.h.b16 %v214
    %v960 = vunpack.c.l.b16 %v215
    %v961 = vunpack.c.h.b16 %v215
    %v962 = vunpack.c.l.b16 %v216
    %v963 = vunpack.c.h.b16 %v216
    %v964 = vunpack.c.l.b16 %v217
    %v965 = vunpack.c.h.b16 %v217
    %v966 = vunpack.c.l.b16 %v218
    %v967 = vunpack.c.h.b16 %v218
    %v968 = vunpack.c.l.b16 %v219
    %v969 = vunpack.c.h.b16 %v219
    %v970 = vunpack.c.l.b16 %v220
    %v971 = vunpack.c.h.b16 %v220
    %v972 = vunpack.c.l.b16 %v221
    %v973 = vunpack.c.h.b16 %v221
    %v974 = vunpack.c.l.b16 %v222
    %v975 = vunpack.c.h.b16 %v222
    %v976 = vunpack.c.l.b16 %v223
    %v977 = vunpack.c.h.b16 %v223
    %v978 = vunpack.c.l.b16 %v224
    %v979 = vunpack.c.h.b16 %v224
    %v980 = vunpack.c.l.b16 %v225
    %v981 = vunpack.c.h.b16 %v225
    %v982 = vunpack.c.l.b16 %v226
    %v983 = vunpack.c.h.b16 %v226
    %v984 = vunpack.c.l.b16 %v227
    %v985 = vunpack.c.h.b16 %v227
    %v986 = vunpack.c.l.b16 %v228
    %v987 = vunpack.c.h.b16 %v228
    %v988 = vunpack.c.l.b16 %v229
    %v989 = vunpack.c.h.b16 %v229
    %v990 = vunpack.c.l.b16 %v230
    %v991 = vunpack.c.h.b16 %v230
    %v992 = vunpack.c.l.b16 %v231
    %v993 = vunpack.c.h.b16 %v231
    %v994 = vunpack.c.l.b16 %v232
    %v995 = vunpack.c.h.b16 %v232
    %v996 = vunpack.c.l.b16 %v233
    %v997 = vunpack.c.h.b16 %v233
    %v998 = vunpack.c.l.b16 %v234
    %v999 = vunpack.c.h.b16 %v234
    %v1000 = vunpack.c.l.b16 %v235
    %v1001 = vunpack.c.h.b16 %v235
    %v1002 = vunpack.c.l.b16 %v236
    %v1003 = vunpack.c.h.b16 %v236
    %v1004 = vunpack.c.l.b16 %v237
    %v1005 = vunpack.c.h.b16 %v237
    %v1006 = vunpack.c.l.b16 %v238
    %v1007 = vunpack.c.h.b16 %v238
    %v1008 = vunpack.c.l.b16 %v239
    %v1009 = vunpack.c.h.b16 %v239
    %v1010 = vunpack.c.l.b16 %v240
    %v1011 = vunpack.c.h.b16 %v240
    %v1012 = vunpack.c.l.b16 %v241
    %v1013 = vunpack.c.h.b16 %v241
    %v1014 = vunpack.c.l.b16 %v242
    %v1015 = vunpack.c.h.b16 %v242
    %v1016 = vunpack.c.l.b16 %v243
    %v1017 = vunpack.c.h.b16 %v243
    %v1018 = vunpack.c.l.b16 %v244
    %v1019 = vunpack.c.h.b16 %v244
    %v1020 = vunpack.c.l.b16 %v245
    %v1021 = vunpack.c.h.b16 %v245
    %v1022 = vunpack.c.l.b16 %v246
    %v1023 = vunpack.c.h.b16 %v246
    %v1024 = vunpack.c.l.b16 %v247
    %v1025 = vunpack.c.h.b16 %v247
    %v1026 = vunpack.c.l.b16 %v248
    %v1027 = vunpack.c.h.b16 %v248
    %v1028 = vunpack.c.l.b16 %v249
    %v1029 = vunpack.c.h.b16 %v249
    %v1030 = vunpack.c.l.b16 %v250
    %v1031 = vunpack.c.h.b16 %v250
    %v1032 = vunpack.c.l.b16 %v251
    %v1033 = vunpack.c.h.b16 %v251
    %v1034 = vunpack.c.l.b16 %v252
    %v1035 = vunpack.c.h.b16 %v252
    %v1036 = vunpack.c.l.b16 %v253
    %v1037 = vunpack.c.h.b16 %v253
    %v1038 = vunpack.c.l.b16 %v254
    %v1039 = vunpack.c.h.b16 %v254
    %v1040 = vunpack.c.l.b16 %v255
    %v1041 = vunpack.c.h.b16 %v255
    %v1042 = vunpack.c.l.b16 %v256
    %v1043 = vunpack.c.h.b16 %v256
    %v1044 = vunpack.c.l.b16 %v257
    %v1045 = vunpack.c.h.b16 %v257
    %v1046 = vunpack.c.l.b16 %v258
    %v1047 = vunpack.c.h.b16 %v258
    %v1048 = vunpack.c.l.b16 %v259
    %v1049 = vunpack.c.h.b16 %v259
    %v1050 = vunpack.c.l.b16 %v260
    %v1051 = vunpack.c.h.b16 %v260
    %v1052 = vunpack.c.l.b16 %v261
    %v1053 = vunpack.c.h.b16 %v261
    %v1054 = vunpack.c.l.b16 %v262
    %v1055 = vunpack.c.h.b16 %v262
    %v1056 = vunpack.c.l.b16 %v263
    %v1057 = vunpack.c.h.b16 %v263
    %v1058 = vunpack.c.l.b16 %v264
    %v1059 = vunpack.c.h.b16 %v264
    %v1060 = vunpack.c.l.b16 %v265
    %v1061 = vunpack.c.h.b16 %v265
    %v1062 = vunpack.c.l.b16 %v266
    %v1063 = vunpack.c.h.b16 %v266
    %v1064 = vunpack.c.l.b16 %v267
    %v1065 = vunpack.c.h.b16 %v267
    %v1066 = vunpack.c.l.b16 %v268
    %v1067 = vunpack.c.h.b16 %v268
    %v1068 = vunpack.c.l.b16 %v269
    %v1069 = vunpack.c.h.b16 %v269
    %v1070 = vunpack.c.l.b16 %v270
    %v1071 = vunpack.c.h.b16 %v270
    %v1072 = vunpack.c.l.b16 %v271
    %v1073 = vunpack.c.h.b16 %v271
    %v1074 = vunpack.c.l.b16 %v272
    %v1075 = vunpack.c.h.b16 %v272
    %v1076 = vunpack.c.l.b16 %v273
    %v1077 = vunpack.c.h.b16 %v273
    %v1078 = vunpack.c.l.b16 %v274
    %v1079 = vunpack.c.h.b16 %v274
    %v1080 = vunpack.c.l.b16 %v275
    %v1081 = vunpack.c.h.b16 %v275
    %v1082 = vunpack.c.l.b16 %v276
    %v1083 = vunpack.c.h.b16 %v276
    %v1084 = vunpack.c.l.b16 %v277
    %v1085 = vunpack.c.h.b16 %v277
    %v1086 = vunpack.c.l.b16 %v278
    %v1087 = vunpack.c.h.b16 %v278
    %v1088 = vunpack.c.l.b16 %v279
    %v1089 = vunpack.c.h.b16 %v279
    %v1090 = vunpack.c.l.b16 %v280
    %v1091 = vunpack.c.h.b16 %v280
    %v1092 = vunpack.c.l.b16 %v281
    %v1093 = vunpack.c.h.b16 %v281
    %v1094 = vunpack.c.l.b16 %v282
    %v1095 = vunpack.c.h.b16 %v282
    %v1096 = vunpack.c.l.b16 %v283
    %v1097 = vunpack.c.h.b16 %v283
    %v1098 = vunpack.c.l.b16 %v284
    %v1099 = vunpack.c.h.b16 %v284
    %v1100 = vunpack.c.l.b16 %v285
    %v1101 = vunpack.c.h.b16 %v285
    %v1102 = vunpack.c.l.b16 %v286
    %v1103 = vunpack.c.h.b16 %v286
    %v1104 = vunpack.c.l.b16 %v287
    %v1105 = vunpack.c.h.b16 %v287
    %v1106 = vunpack.c.l.b16 %v288
    %v1107 = vunpack.c.h.b16 %v288
    %v1108 = vunpack.c.l.b16 %v289
    %v1109 = vunpack.c.h.b16 %v289
    %v1110 = vunpack.c.l.b16 %v290
    %v1111 = vunpack.c.h.b16 %v290
    %v1112 = vunpack.c.l.b16 %v291
    %v1113 = vunpack.c.h.b16 %v291
    %v1114 = vunpack.c.l.b16 %v292
    %v1115 = vunpack.c.h.b16 %v292
    %v1116 = vunpack.c.l.b16 %v293
    %v1117 = vunpack.c.h.b16 %v293
    %v1118 = vunpack.c.l.b16 %v294
    %v1119 = vunpack.c.h.b16 %v294
    %v1120 = vunpack.c.l.b16 %v295
    %v1121 = vunpack.c.h.b16 %v295
    %v1122 = vunpack.c.l.b16 %v296
    %v1123 = vunpack.c.h.b16 %v296
    %v1124 = vunpack.c.l.b16 %v297
    %v1125 = vunpack.c.h.b16 %v297
    %v1126 = vunpack.c.l.b16 %v298
    %v1127 = vunpack.c.h.b16 %v298
    %v1128 = vunpack.c.l.b16 %v299
    %v1129 = vunpack.c.h.b16 %v299
    %v1130 = vunpack.c.l.b16 %v300
    %v1131 = vunpack.c.h.b16 %v300
    %v1132 = vunpack.c.l.b16 %v301
    %v1133 = vunpack.c.h.b16 %v301
    %v1134 = vunpack.c.l.b16 %v302
    %v1135 = vunpack.c.h.b16 %v302
    %v1136 = vunpack.c.l.b16 %v303
    %v1137 = vunpack.c.h.b16 %v303
    %v1138 = vunpack.c.l.b16 %v304
    %v1139 = vunpack.c.h.b16 %v304
    %v1140 = vunpack.c.l.b16 %v305
    %v1141 = vunpack.c.h.b16 %v305
    %v1142 = vunpack.c.l.b16 %v306
    %v1143 = vunpack.c.h.b16 %v306
    %v1144 = vunpack.c.l.b16 %v307
    %v1145 = vunpack.c.h.b16 %v307
    %v1146 = vunpack.c.l.b16 %v308
    %v1147 = vunpack.c.h.b16 %v308
    %v1148 = vunpack.c.l.b16 %v309
    %v1149 = vunpack.c.h.b16 %v309
    %v1150 = vunpack.c.l.b16 %v310
    %v1151 = vunpack.c.h.b16 %v310
    %v1152 = vunpack.c.l.b16 %v311
    %v1153 = vunpack.c.h.b16 %v311
    %v1154 = vunpack.c.l.b16 %v312
    %v1155 = vunpack.c.h.b16 %v312
    %v1156 = vunpack.c.l.b16 %v313
    %v1157 = vunpack.c.h.b16 %v313
    %v1158 = vunpack.c.l.b16 %v314
    %v1159 = vunpack.c.h.b16 %v314
    %v1160 = vunpack.c.l.b16 %v315
    %v1161 = vunpack.c.h.b16 %v315
    %v1162 = vunpack.c.l.b16 %v316
    %v1163 = vunpack.c.h.b16 %v316
    %v1164 = vunpack.c.l.b16 %v317
    %v1165 = vunpack.c.h.b16 %v317
    %v1166 = vunpack.c.l.b16 %v318
    %v1167 = vunpack.c.h.b16 %v318
    %v1168 = vunpack.c.l.b16 %v319
    %v1169 = vunpack.c.h.b16 %v319
    %v1170 = vunpack.c.l.b16 %v320
    %v1171 = vunpack.c.h.b16 %v320
    %v1172 = vunpack.c.l.b16 %v321
    %v1173 = vunpack.c.h.b16 %v321
    %v1174 = vunpack.c.l.b16 %v322
    %v1175 = vunpack.c.h.b16 %v322
    %v1176 = vunpack.c.l.b16 %v323
    %v1177 = vunpack.c.h.b16 %v323
    %v1178 = vunpack.c.l.b16 %v324
    %v1179 = vunpack.c.h.b16 %v324
    %v1180 = vunpack.c.l.b16 %v325
    %v1181 = vunpack.c.h.b16 %v325
    %v1182 = vunpack.c.l.b16 %v326
    %v1183 = vunpack.c.h.b16 %v326
    %v1184 = vunpack.c.l.b16 %v327
    %v1185 = vunpack.c.h.b16 %v327
    %v1186 = vunpack.c.l.b16 %v328
    %v1187 = vunpack.c.h.b16 %v328
    %v1188 = vunpack.c.l.b16 %v329
    %v1189 = vunpack.c.h.b16 %v329
    %v1190 = vunpack.c.l.b16 %v330
    %v1191 = vunpack.c.h.b16 %v330
    %v1192 = vunpack.c.l.b16 %v331
    %v1193 = vunpack.c.h.b16 %v331
    %v1194 = vunpack.c.l.b16 %v332
    %v1195 = vunpack.c.h.b16 %v332
    %v1196 = vunpack.c.l.b16 %v333
    %v1197 = vunpack.c.h.b16 %v333
    %v1198 = vunpack.c.l.b16 %v334
    %v1199 = vunpack.c.h.b16 %v334
    %v1200 = vunpack.c.l.b16 %v335
    %v1201 = vunpack.c.h.b16 %v335
    %v1202 = vunpack.c.l.b16 %v336
    %v1203 = vunpack.c.h.b16 %v336
    %v1204 = vunpack.c.l.b16 %v337
    %v1205 = vunpack.c.h.b16 %v337
    %v1206 = vunpack.c.l.b16 %v338
    %v1207 = vunpack.c.h.b16 %v338
    %v1208 = vunpack.c.l.b16 %v339
    %v1209 = vunpack.c.h.b16 %v339
    %v1210 = vunpack.c.l.b16 %v340
    %v1211 = vunpack.c.h.b16 %v340
    %v1212 = vunpack.c.l.b16 %v341
    %v1213 = vunpack.c.h.b16 %v341
    %v1214 = vunpack.c.l.b16 %v342
    %v1215 = vunpack.c.h.b16 %v342
    %v1216 = vunpack.c.l.b16 %v343
    %v1217 = vunpack.c.h.b16 %v343
    %v1218 = vunpack.c.l.b16 %v344
    %v1219 = vunpack.c.h.b16 %v344
    %v1220 = vunpack.c.l.b16 %v345
    %v1221 = vunpack.c.h.b16 %v345
    %v1222 = vunpack.c.l.b16 %v346
    %v1223 = vunpack.c.h.b16 %v346
    %v1224 = vunpack.c.l.b16 %v347
    %v1225 = vunpack.c.h.b16 %v347
    %v1226 = vunpack.c.l.b16 %v348
    %v1227 = vunpack.c.h.b16 %v348
    %v1228 = vunpack.c.l.b16 %v349
    %v1229 = vunpack.c.h.b16 %v349
    %v1230 = vunpack.c.l.b16 %v350
    %v1231 = vunpack.c.h.b16 %v350
    %v1232 = vunpack.c.l.b16 %v351
    %v1233 = vunpack.c.h.b16 %v351
    %v1234 = vunpack.c.l.b16 %v352
    %v1235 = vunpack.c.h.b16 %v352
    %v1236 = vunpack.c.l.b16 %v353
    %v1237 = vunpack.c.h.b16 %v353
    %v1238 = vunpack.c.l.b16 %v354
    %v1239 = vunpack.c.h.b16 %v354
    %v1240 = vunpack.c.l.b16 %v355
    %v1241 = vunpack.c.h.b16 %v355
    %v1242 = vunpack.c.l.b16 %v356
    %v1243 = vunpack.c.h.b16 %v356
    %v1244 = vunpack.c.l.b16 %v357
    %v1245 = vunpack.c.h.b16 %v357
    %v1246 = vunpack.c.l.b16 %v358
    %v1247 = vunpack.c.h.b16 %v358
    %v1248 = vunpack.c.l.b16 %v359
    %v1249 = vunpack.c.h.b16 %v359
    %v1250 = vunpack.c.l.b16 %v360
    %v1251 = vunpack.c.h.b16 %v360
    %v1252 = vunpack.c.l.b16 %v361
    %v1253 = vunpack.c.h.b16 %v361
    %v1254 = vunpack.c.l.b16 %v362
    %v1255 = vunpack.c.h.b16 %v362
    %v1256 = vunpack.c.l.b16 %v363
    %v1257 = vunpack.c.h.b16 %v363
    %v1258 = vunpack.c.l.b16 %v364
    %v1259 = vunpack.c.h.b16 %v364
    %v1260 = vunpack.c.l.b16 %v365
    %v1261 = vunpack.c.h.b16 %v365
    %v1262 = vunpack.c.l.b16 %v366
    %v1263 = vunpack.c.h.b16 %v366
    %v1264 = vunpack.c.l.b16 %v367
    %v1265 = vunpack.c.h.b16 %v367
    %v1266 = vpack.c.b16 %v696, %v690
    %v1267 = vpack.c.b16 %v697, %v691
    %v1268 = vpack.c.b16 %v698, %v692
    %v1269 = vpack.c.b16 %v699, %v693
    %v1270 = vpack.c.b16 %v700, %v694
    %v1271 = vpack.c.b16 %v701, %v695
    %v1272 = vpack.c.b16 %v708, %v702
    %v1273 = vpack.c.b16 %v709, %v703
    %v1274 = vpack.c.b16 %v710, %v704
    %v1275 = vpack.c.b16 %v711, %v705
    %v1276 = vpack.c.b16 %v712, %v706
    %v1277 = vpack.c.b16 %v713, %v707
    %v1278 = vpack.c.b16 %v720, %v714
    %v1279 = vpack.c.b16 %v721, %v715
    %v1280 = vpack.c.b16 %v722, %v716
    %v1281 = vpack.c.b16 %v723, %v717
    %v1282 = vpack.c.b16 %v724, %v718
    %v1283 = vpack.c.b16 %v725, %v719
    %v1284 = vpack.c.b16 %v732, %v726
    %v1285 = vpack.c.b16 %v733, %v727
    %v1286 = vpack.c.b16 %v734, %v728
    %v1287 = vpack.c.b16 %v735, %v729
    %v1288 = vpack.c.b16 %v736, %v730
    %v1289 = vpack.c.b16 %v737, %v731
    %v1290 = vpack.c.b16 %v744, %v738
    %v1291 = vpack.c.b16 %v745, %v739
    %v1292 = vpack.c.b16 %v746, %v740
    %v1293 = vpack.c.b16 %v747, %v741
    %v1294 = vpack.c.b16 %v748, %v742
    %v1295 = vpack.c.b16 %v749, %v743
    %v1296 = vpack.c.b16 %v756, %v750
    %v1297 = vpack.c.b16 %v757, %v751
    %v1298 = vpack.c.b16 %v758, %v752
    %v1299 = vpack.c.b16 %v759, %v753
    %v1300 = vpack.c.b16 %v760, %v754
    %v1301 = vpack.c.b16 %v761, %v755
    %v1302 = vpack.c.b16 %v768, %v762
    %v1303 = vpack.c.b16 %v769, %v763
    %v1304 = vpack.c.b16 %v770, %v764
    %v1305 = vpack.c.b16 %v771, %v765
    %v1306 = vpack.c.b16 %v772, %v766
    %v1307 = vpack.c.b16 %v773, %v767
    %v1308 = vpack.c.b16 %v780, %v774
    %v1309 = vpack.c.b16 %v781, %v775
    %v1310 = vpack.c.b16 %v782, %v776
    %v1311 = vpack.c.b16 %v783, %v777
    %v1312 = vpack.c.b16 %v784, %v778
    %v1313 = vpack.c.b16 %v785, %v779
    %v1314 = vpack.c.b16 %v792, %v786
    %v1315 = vpack.c.b16 %v793, %v787
    %v1316 = vpack.c.b16 %v794, %v788
    %v1317 = vpack.c.b16 %v795, %v789
    %v1318 = vpack.c.b16 %v796, %v790
    %v1319 = vpack.c.b16 %v797, %v791
    %v1320 = vpack.c.b16 %v804, %v798
    %v1321 = vpack.c.b16 %v805, %v799
    %v1322 = vpack.c.b16 %v806, %v800
    %v1323 = vpack.c.b16 %v807, %v801
    %v1324 = vpack.c.b16 %v808, %v802
    %v1325 = vpack.c.b16 %v809, %v803
    %v1326 = vpack.c.b16 %v816, %v810
    %v1327 = vpack.c.b16 %v817, %v811
    %v1328 = vpack.c.b16 %v818, %v812
    %v1329 = vpack.c.b16 %v819, %v813
    %v1330 = vpack.c.b16 %v820, %v814
    %v1331 = vpack.c.b16 %v821, %v815
    %v1332 = vpack.c.b16 %v828, %v822
    %v1333 = vpack.c.b16 %v829, %v823
    %v1334 = vpack.c.b16 %v830, %v824
    %v1335 = vpack.c.b16 %v831, %v825
    %v1336 = vpack.c.b16 %v832, %v826
    %v1337 = vpack.c.b16 %v833, %v827
    %v1338 = vpack.c.b16 %v840, %v834
    %v1339 = vpack.c.b16 %v841, %v835
    %v1340 = vpack.c.b16 %v842, %v836
    %v1341 = vpack.c.b16 %v843, %v837
    %v1342 = vpack.c.b16 %v844, %v838
    %v1343 = vpack.c.b16 %v845, %v839
    %v1344 = vpack.c.b16 %v852, %v846
    %v1345 = vpack.c.b16 %v853, %v847
    %v1346 = vpack.c.b16 %v854, %v848
    %v1347 = vpack.c.b16 %v855, %v849
    %v1348 = vpack.c.b16 %v856, %v850
    %v1349 = vpack.c.b16 %v857, %v851
    %v1350 = vpack.c.b16 %v864, %v858
    %v1351 = vpack.c.b16 %v865, %v859
    %v1352 = vpack.c.b16 %v866, %v860
    %v1353 = vpack.c.b16 %v867, %v861
    %v1354 = vpack.c.b16 %v868, %v862
    %v1355 = vpack.c.b16 %v869, %v863
    %v1356 = vpack.c.b16 %v876, %v870
    %v1357 = vpack.c.b16 %v877, %v871
    %v1358 = vpack.c.b16 %v878, %v872
    %v1359 = vpack.c.b16 %v879, %v873
    %v1360 = vpack.c.b16 %v880, %v874
    %v1361 = vpack.c.b16 %v881, %v875
    %v1362 = vpack.c.b16 %v888, %v882
    %v1363 = vpack.c.b16 %v889, %v883
    %v1364 = vpack.c.b16 %v890, %v884
    %v1365 = vpack.c.b16 %v891, %v885
    %v1366 = vpack.c.b16 %v892, %v886
    %v1367 = vpack.c.b16 %v893, %v887
    %v1368 = vpack.c.b16 %v900, %v894
    %v1369 = vpack.c.b16 %v901, %v895
    %v1370 = vpack.c.b16 %v902, %v896
    %v1371 = vpack.c.b16 %v903, %v897
    %v1372 = vpack.c.b16 %v904, %v898
    %v1373 = vpack.c.b16 %v905, %v899
    %v1374 = vpack.c.b16 %v912, %v906
    %v1375 = vpack.c.b16 %v913, %v907
    %v1376 = vpack.c.b16 %v914, %v908
    %v1377 = vpack.c.b16 %v915, %v909
    %v1378 = vpack.c.b16 %v916, %v910
    %v1379 = vpack.c.b16 %v917, %v911
    %v1380 = vpack.c.b16 %v924, %v918
    %v1381 = vpack.c.b16 %v925, %v919
    %v1382 = vpack.c.b16 %v926, %v920
    %v1383 = vpack.c.b16 %v927, %v921
    %v1384 = vpack.c.b16 %v928, %v922
    %v1385 = vpack.c.b16 %v929, %v923
    %v1386 = vpack.c.b16 %v936, %v930
    %v1387 = vpack.c.b16 %v937, %v931
    %v1388 = vpack.c.b16 %v938, %v932
    %v1389 = vpack.c.b16 %v939, %v933
    %v1390 = vpack.c.b16 %v940, %v934
    %v1391 = vpack.c.b16 %v941, %v935
    %v1392 = vpack.c.b16 %v948, %v942
    %v1393 = vpack.c.b16 %v949, %v943
    %v1394 = vpack.c.b16 %v950, %v944
    %v1395 = vpack.c.b16 %v951, %v945
    %v1396 = vpack.c.b16 %v952, %v946
    %v1397 = vpack.c.b16 %v953, %v947
    %v1398 = vpack.c.b16 %v960, %v954
    %v1399 = vpack.c.b16 %v961, %v955
    %v1400 = vpack.c.b16 %v962, %v956
    %v1401 = vpack.c.b16 %v963, %v957
    %v1402 = vpack.c.b16 %v964, %v958
    %v1403 = vpack.c.b16 %v965, %v959
    %v1404 = vpack.c.b16 %v972, %v966
    %v1405 = vpack.c.b16 %v973, %v967
    %v1406 = vpack.c.b16 %v974, %v968
    %v1407 = vpack.c.b16 %v975, %v969
    %v1408 = vpack.c.b16 %v976, %v970
    %v1409 = vpack.c.b16 %v977, %v971
    %v1410 = vpack.c.b16 %v984, %v978
    %v1411 = vpack.c.b16 %v985, %v979
    %v1412 = vpack.c.b16 %v986, %v980
    %v1413 = vpack.c.b16 %v987, %v981
    %v1414 = vpack.c.b16 %v988, %v982
    %v1415 = vpack.c.b16 %v989, %v983
    %v1416 = vpack.c.b16 %v996, %v990
    %v1417 = vpack.c.b16 %v997, %v991
    %v1418 = vpack.c.b16 %v998, %v992
    %v1419 = vpack.c.b16 %v999, %v993
    %v1420 = vpack.c.b16 %v1000, %v994
    %v1421 = vpack.c.b16 %v1001, %v995
    %v1422 = vpack.c.b16 %v1008, %v1002
    %v1423 = vpack.c.b16 %v1009, %v1003
    %v1424 = vpack.c.b16 %v1010, %v1004
    %v1425 = vpack.c.b16 %v1011, %v1005
    %v1426 = vpack.c.b16 %v1012, %v1006
    %v1427 = vpack.c.b16 %v1013, %v1007
    %v1428 = vpack.c.b16 %v1020, %v1014
    %v1429 = vpack.c.b16 %v1021, %v1015
    %v1430 = vpack.c.b16 %v1022, %v1016
    %v1431 = vpack.c.b16 %v1023, %v1017
    %v1432 = vpack.c.b16 %v1024, %v1018
    %v1433 = vpack.c.b16 %v1025, %v1019
    %v1434 = vpack.c.b16 %v1032, %v1026
    %v1435 = vpack.c.b16 %v1033, %v1027
    %v1436 = vpack.c.b16 %v1034, %v1028
    %v1437 = vpack.c.b16 %v1035, %v1029
    %v1438 = vpack.c.b16 %v1036, %v1030
    %v1439 = vpack.c.b16 %v1037, %v1031
    %v1440 = vpack.c.b16 %v1044, %v1038
    %v1441 = vpack.c.b16 %v1045, %v1039
    %v1442 = vpack.c.b16 %v1046, %v1040
    %v1443 = vpack.c.b16 %v1047, %v1041
    %v1444 = vpack.c.b16 %v1048, %v1042
    %v1445 = vpack.c.b16 %v1049, %v1043
    %v1446 = vpack.c.b16 %v1056, %v1050
    %v1447 = vpack.c.b16 %v1057, %v1051
    %v1448 = vpack.c.b16 %v1058, %v1052
    %v1449 = vpack.c.b16 %v1059, %v1053
    %v1450 = vpack.c.b16 %v1060, %v1054
    %v1451 = vpack.c.b16 %v1061, %v1055
    %v1452 = vpack.c.b16 %v1068, %v1062
    %v1453 = vpack.c.b16 %v1069, %v1063
    %v1454 = vpack.c.b16 %v1070, %v1064
    %v1455 = vpack.c.b16 %v1071, %v1065
    %v1456 = vpack.c.b16 %v1072, %v1066
    %v1457 = vpack.c.b16 %v1073, %v1067
    %v1458 = vpack.c.b16 %v1080, %v1074
    %v1459 = vpack.c.b16 %v1081, %v1075
    %v1460 = vpack.c.b16 %v1082, %v1076
    %v1461 = vpack.c.b16 %v1083, %v1077
    %v1462 = vpack.c.b16 %v1084, %v1078
    %v1463 = vpack.c.b16 %v1085, %v1079
    %v1464 = vpack.c.b16 %v1092, %v1086
    %v1465 = vpack.c.b16 %v1093, %v1087
    %v1466 = vpack.c.b16 %v1094, %v1088
    %v1467 = vpack.c.b16 %v1095, %v1089
    %v1468 = vpack.c.b16 %v1096, %v1090
    %v1469 = vpack.c.b16 %v1097, %v1091
    %v1470 = vpack.c.b16 %v1104, %v1098
    %v1471 = vpack.c.b16 %v1105, %v1099
    %v1472 = vpack.c.b16 %v1106, %v1100
    %v1473 = vpack.c.b16 %v1107, %v1101
    %v1474 = vpack.c.b16 %v1108, %v1102
    %v1475 = vpack.c.b16 %v1109, %v1103
    %v1476 = vpack.c.b16 %v1116, %v1110
    %v1477 = vpack.c.b16 %v1117, %v1111
    %v1478 = vpack.c.b16 %v1118, %v1112
    %v1479 = vpack.c.b16 %v1119, %v1113
    %v1480 = vpack.c.b16 %v1120, %v1114
    %v1481 = vpack.c.b16 %v1121, %v1115
    %v1482 = vpack.c.b16 %v1128, %v1122
    %v1483 = vpack.c.b16 %v1129, %v1123
    %v1484 = vpack.c.b16 %v1130, %v1124
    %v1485 = vpack.c.b16 %v1131, %v1125
    %v1486 = vpack.c.b16 %v1132, %v1126
    %v1487 = vpack.c.b16 %v1133, %v1127
    %v1488 = vpack.c.b16 %v1140, %v1134
    %v1489 = vpack.c.b16 %v1141, %v1135
    %v1490 = vpack.c.b16 %v1142, %v1136
    %v1491 = vpack.c.b16 %v1143, %v1137
    %v1492 = vpack.c.b16 %v1144, %v1138
    %v1493 = vpack.c.b16 %v1145, %v1139
    %v1494 = vpack.c.b16 %v1152, %v1146
    %v1495 = vpack.c.b16 %v1153, %v1147
    %v1496 = vpack.c.b16 %v1154, %v1148
    %v1497 = vpack.c.b16 %v1155, %v1149
    %v1498 = vpack.c.b16 %v1156, %v1150
    %v1499 = vpack.c.b16 %v1157, %v1151
    %v1500 = vpack.c.b16 %v1164, %v1158
    %v1501 = vpack.c.b16 %v1165, %v1159
    %v1502 = vpack.c.b16 %v1166, %v1160
    %v1503 = vpack.c.b16 %v1167, %v1161
    %v1504 = vpack.c.b16 %v1168, %v1162
    %v1505 = vpack.c.b16 %v1169, %v1163
    %v1506 = vpack.c.b16 %v1176, %v1170
    %v1507 = vpack.c.b16 %v1177, %v1171
    %v1508 = vpack.c.b16 %v1178, %v1172
    %v1509 = vpack.c.b16 %v1179, %v1173
    %v1510 = vpack.c.b16 %v1180, %v1174
    %v1511 = vpack.c.b16 %v1181, %v1175
    %v1512 = vpack.c.b16 %v1188, %v1182
    %v1513 = vpack.c.b16 %v1189, %v1183
    %v1514 = vpack.c.b16 %v1190, %v1184
    %v1515 = vpack.c.b16 %v1191, %v1185
    %v1516 = vpack.c.b16 %v1192, %v1186
    %v1517 = vpack.c.b16 %v1193, %v1187
    %v1518 = vpack.c.b16 %v1200, %v1194
    %v1519 = vpack.c.b16 %v1201, %v1195
    %v1520 = vpack.c.b16 %v1202, %v1196
    %v1521 = vpack.c.b16 %v1203, %v1197
    %v1522 = vpack.c.b16 %v1204, %v1198
    %v1523 = vpack.c.b16 %v1205, %v1199
    %v1524 = vpack.c.b16 %v1212, %v1206
    %v1525 = vpack.c.b16 %v1213, %v1207
    %v1526 = vpack.c.b16 %v1214, %v1208
    %v1527 = vpack.c.b16 %v1215, %v1209
    %v1528 = vpack.c.b16 %v1216, %v1210
    %v1529 = vpack.c.b16 %v1217, %v1211
    %v1530 = vpack.c.b16 %v1224, %v1218
    %v1531 = vpack.c.b16 %v1225, %v1219
    %v1532 = vpack.c.b16 %v1226, %v1220
    %v1533 = vpack.c.b16 %v1227, %v1221
    %v1534 = vpack.c.b16 %v1228, %v1222
    %v1535 = vpack.c.b16 %v1229, %v1223
    %v1536 = vpack.c.b16 %v1236, %v1230
    %v1537 = vpack.c.b16 %v1237, %v1231
    %v1538 = vpack.c.b16 %v1238, %v1232
    %v1539 = vpack.c.b16 %v1239, %v1233
    %v1540 = vpack.c.b16 %v1240, %v1234
    %v1541 = vpack.c.b16 %v1241, %v1235
    %v1542 = vpack.c.b16 %v1248, %v1242
    %v1543 = vpack.c.b16 %v1249, %v1243
    %v1544 = vpack.c.b16 %v1250, %v1244
    %v1545 = vpack.c.b16 %v1251, %v1245
    %v1546 = vpack.c.b16 %v1252, %v1246
    %v1547 = vpack.c.b16 %v1253, %v1247
    %v1548 = vpack.c.b16 %v1260, %v1254
    %v1549 = vpack.c.b16 %v1261, %v1255
    %v1550 = vpack.c.b16 %v1262, %v1256
    %v1551 = vpack.c.b16 %v1263, %v1257
    %v1552 = vpack.c.b16 %v1264, %v1258
    %v1553 = vpack.c.b16 %v1265, %v1259
    %1842 = vmatprep.subr.bf16.mxu0 %v1267
    %1843 = vmatpush1.bf16.msra.mxu0 %v1266
    %1844 = vmatprep.subr.bf16.mxu0 %v1273
    %1845 = vmatpush1.bf16.msra.mxu0 %v1272
    %1846 = vmatprep.subr.bf16.mxu0 %v1279
    %1847 = vmatpush1.bf16.msra.mxu0 %v1278
    %1848 = vmatprep.subr.bf16.mxu0 %v1285
    %1849 = vmatpush1.bf16.msra.mxu0 %v1284
    %1850 = vmatprep.subr.bf16.mxu0 %v1291
    %1851 = vmatpush1.bf16.msra.mxu0 %v1290
    %1852 = vmatprep.subr.bf16.mxu0 %v1297
    %1853 = vmatpush1.bf16.msra.mxu0 %v1296
    %1854 = vmatprep.subr.bf16.mxu0 %v1303
    %1855 = vmatpush1.bf16.msra.mxu0 %v1302
    %1856 = vmatprep.subr.bf16.mxu0 %v1309
    %1857 = vmatpush1.bf16.msra.mxu0 %v1308
    %1858 = vmatprep.subr.bf16.mxu0 %v1315
    %1859 = vmatpush1.bf16.msra.mxu0 %v1314
    %1860 = vmatprep.subr.bf16.mxu0 %v1321
    %1861 = vmatpush1.bf16.msra.mxu0 %v1320
    %1862 = vmatprep.subr.bf16.mxu0 %v1327
    %1863 = vmatpush1.bf16.msra.mxu0 %v1326
    %1864 = vmatprep.subr.bf16.mxu0 %v1333
    %1865 = vmatpush1.bf16.msra.mxu0 %v1332
    %1866 = vmatprep.subr.bf16.mxu0 %v1339
    %1867 = vmatpush1.bf16.msra.mxu0 %v1338
    %1868 = vmatprep.subr.bf16.mxu0 %v1345
    %1869 = vmatpush1.bf16.msra.mxu0 %v1344
    %1870 = vmatprep.subr.bf16.mxu0 %v1351
    %1871 = vmatpush1.bf16.msra.mxu0 %v1350
    %1872 = vmatprep.subr.bf16.mxu0 %v1357
    %1873 = vmatpush1.bf16.msra.mxu0 %v1356
    %1874 = vmatprep.mubr.bf16.mxu0 %v75
    %1875 = vmatmul.mubr.bf16.gmra.mrb[0].mxu0 %v74
    %v1876 = vpop.f32.mrb[0].mxu0
    %v1877 = vadd.f32 %v375, %v1876
    %v1878 = vpop.f32.mrb[0].mxu0
    %v1879 = vadd.f32 %v379, %v1878
    %v1880 = vpop.f32.mrb[0].mxu0
    %v1881 = vpop.f32.mrb[0].mxu0
    %1882 = vdwg.mxu0
    %1883 = vmatprep.subr.bf16.mxu0 %v1363
    %1884 = vmatpush1.bf16.msra.mxu0 %v1362
    %1885 = vmatprep.subr.bf16.mxu0 %v1369
    %1886 = vmatpush1.bf16.msra.mxu0 %v1368
    %1887 = vmatprep.subr.bf16.mxu0 %v1375
    %1888 = vmatpush1.bf16.msra.mxu0 %v1374
    %1889 = vmatprep.subr.bf16.mxu0 %v1381
    %1890 = vmatpush1.bf16.msra.mxu0 %v1380
    %1891 = vmatprep.subr.bf16.mxu0 %v1387
    %1892 = vmatpush1.bf16.msra.mxu0 %v1386
    %1893 = vmatprep.subr.bf16.mxu0 %v1393
    %1894 = vmatpush1.bf16.msra.mxu0 %v1392
    %1895 = vmatprep.subr.bf16.mxu0 %v1399
    %1896 = vmatpush1.bf16.msra.mxu0 %v1398
    %1897 = vmatprep.subr.bf16.mxu0 %v1405
    %1898 = vmatpush1.bf16.msra.mxu0 %v1404
    %1899 = vmatprep.subr.bf16.mxu0 %v1411
    %1900 = vmatpush1.bf16.msra.mxu0 %v1410
    %1901 = vmatprep.subr.bf16.mxu0 %v1417
    %1902 = vmatpush1.bf16.msra.mxu0 %v1416
    %1903 = vmatprep.subr.bf16.mxu0 %v1423
    %1904 = vmatpush1.bf16.msra.mxu0 %v1422
    %1905 = vmatprep.subr.bf16.mxu0 %v1429
    %1906 = vmatpush1.bf16.msra.mxu0 %v1428
    %1907 = vmatprep.subr.bf16.mxu0 %v1435
    %1908 = vmatpush1.bf16.msra.mxu0 %v1434
    %1909 = vmatprep.subr.bf16.mxu0 %v1441
    %1910 = vmatpush1.bf16.msra.mxu0 %v1440
    %1911 = vmatprep.subr.bf16.mxu0 %v1447
    %1912 = vmatpush1.bf16.msra.mxu0 %v1446
    %1913 = vmatprep.subr.bf16.mxu0 %v1453
    %1914 = vmatpush1.bf16.msra.mxu0 %v1452
    %1915 = vmatprep.mubr.bf16.mxu0 %v77
    %1916 = vmatmul.mubr.bf16.gmra.mrb[0].mxu0 %v76
    %v1917 = vpop.f32.mrb[0].mxu0
    %v1918 = vadd.f32 %v1877, %v1917
    %v1919 = vpop.f32.mrb[0].mxu0
    %v1920 = vadd.f32 %v1879, %v1919
    %v1921 = vpop.f32.mrb[0].mxu0
    %v1922 = vpop.f32.mrb[0].mxu0
    %1923 = vdwg.mxu0
    %1924 = vmatprep.subr.bf16.mxu0 %v1459
    %1925 = vmatpush1.bf16.msra.mxu0 %v1458
    %1926 = vmatprep.subr.bf16.mxu0 %v1465
    %1927 = vmatpush1.bf16.msra.mxu0 %v1464
    %1928 = vmatprep.subr.bf16.mxu0 %v1471
    %1929 = vmatpush1.bf16.msra.mxu0 %v1470
    %1930 = vmatprep.subr.bf16.mxu0 %v1477
    %1931 = vmatpush1.bf16.msra.mxu0 %v1476
    %1932 = vmatprep.subr.bf16.mxu0 %v1483
    %1933 = vmatpush1.bf16.msra.mxu0 %v1482
    %1934 = vmatprep.subr.bf16.mxu0 %v1489
    %1935 = vmatpush1.bf16.msra.mxu0 %v1488
    %1936 = vmatprep.subr.bf16.mxu0 %v1495
    %1937 = vmatpush1.bf16.msra.mxu0 %v1494
    %1938 = vmatprep.subr.bf16.mxu0 %v1501
    %1939 = vmatpush1.bf16.msra.mxu0 %v1500
    %1940 = vmatprep.subr.bf16.mxu0 %v1507
    %1941 = vmatpush1.bf16.msra.mxu0 %v1506
    %1942 = vmatprep.subr.bf16.mxu0 %v1513
    %1943 = vmatpush1.bf16.msra.mxu0 %v1512
    %1944 = vmatprep.subr.bf16.mxu0 %v1519
    %1945 = vmatpush1.bf16.msra.mxu0 %v1518
    %1946 = vmatprep.subr.bf16.mxu0 %v1525
    %1947 = vmatpush1.bf16.msra.mxu0 %v1524
    %1948 = vmatprep.subr.bf16.mxu0 %v1531
    %1949 = vmatpush1.bf16.msra.mxu0 %v1530
    %1950 = vmatprep.subr.bf16.mxu0 %v1537
    %1951 = vmatpush1.bf16.msra.mxu0 %v1536
    %1952 = vmatprep.subr.bf16.mxu0 %v1543
    %1953 = vmatpush1.bf16.msra.mxu0 %v1542
    %1954 = vmatprep.subr.bf16.mxu0 %v1549
    %1955 = vmatpush1.bf16.msra.mxu0 %v1548
    %1956 = vmatprep.mubr.bf16.mxu0 %v79
    %1957 = vmatmul.mubr.bf16.gmra.mrb[0].mxu0 %v78
    %v1958 = vpop.f32.mrb[0].mxu0
    %v1959 = vadd.f32 %v1918, %v1958
    %v1960 = vpop.f32.mrb[0].mxu0
    %v1961 = vadd.f32 %v1920, %v1960
    %v1962 = vpop.f32.mrb[0].mxu0
    %v1963 = vpop.f32.mrb[0].mxu0
    %1964 = vdwg.mxu0
    %1965 = vmatprep.subr.bf16.mxu0 %v1269
    %1966 = vmatpush1.bf16.msra.mxu0 %v1268
    %1967 = vmatprep.subr.bf16.mxu0 %v1275
    %1968 = vmatpush1.bf16.msra.mxu0 %v1274
    %1969 = vmatprep.subr.bf16.mxu0 %v1281
    %1970 = vmatpush1.bf16.msra.mxu0 %v1280
    %1971 = vmatprep.subr.bf16.mxu0 %v1287
    %1972 = vmatpush1.bf16.msra.mxu0 %v1286
    %1973 = vmatprep.subr.bf16.mxu0 %v1293
    %1974 = vmatpush1.bf16.msra.mxu0 %v1292
    %1975 = vmatprep.subr.bf16.mxu0 %v1299
    %1976 = vmatpush1.bf16.msra.mxu0 %v1298
    %1977 = vmatprep.subr.bf16.mxu0 %v1305
    %1978 = vmatpush1.bf16.msra.mxu0 %v1304
    %1979 = vmatprep.subr.bf16.mxu0 %v1311
    %1980 = vmatpush1.bf16.msra.mxu0 %v1310
    %1981 = vmatprep.subr.bf16.mxu0 %v1317
    %1982 = vmatpush1.bf16.msra.mxu0 %v1316
    %1983 = vmatprep.subr.bf16.mxu0 %v1323
    %1984 = vmatpush1.bf16.msra.mxu0 %v1322
    %1985 = vmatprep.subr.bf16.mxu0 %v1329
    %1986 = vmatpush1.bf16.msra.mxu0 %v1328
    %1987 = vmatprep.subr.bf16.mxu0 %v1335
    %1988 = vmatpush1.bf16.msra.mxu0 %v1334
    %1989 = vmatprep.subr.bf16.mxu0 %v1341
    %1990 = vmatpush1.bf16.msra.mxu0 %v1340
    %1991 = vmatprep.subr.bf16.mxu0 %v1347
    %1992 = vmatpush1.bf16.msra.mxu0 %v1346
    %1993 = vmatprep.subr.bf16.mxu0 %v1353
    %1994 = vmatpush1.bf16.msra.mxu0 %v1352
    %1995 = vmatprep.subr.bf16.mxu0 %v1359
    %1996 = vmatpush1.bf16.msra.mxu0 %v1358
    %1997 = vmatprep.mubr.bf16.mxu0 %v75
    %1998 = vmatmul.mubr.bf16.gmra.mrb[0].mxu0 %v74
    %v1999 = vpop.f32.mrb[0].mxu0
    %v2000 = vadd.f32 %v383, %v1999
    %v2001 = vpop.f32.mrb[0].mxu0
    %v2002 = vadd.f32 %v387, %v2001
    %v2003 = vpop.f32.mrb[0].mxu0
    %v2004 = vpop.f32.mrb[0].mxu0
    %2005 = vdwg.mxu0
    %2006 = vmatprep.subr.bf16.mxu0 %v1365
    %2007 = vmatpush1.bf16.msra.mxu0 %v1364
    %2008 = vmatprep.subr.bf16.mxu0 %v1371
    %2009 = vmatpush1.bf16.msra.mxu0 %v1370
    %2010 = vmatprep.subr.bf16.mxu0 %v1377
    %2011 = vmatpush1.bf16.msra.mxu0 %v1376
    %2012 = vmatprep.subr.bf16.mxu0 %v1383
    %2013 = vmatpush1.bf16.msra.mxu0 %v1382
    %2014 = vmatprep.subr.bf16.mxu0 %v1389
    %2015 = vmatpush1.bf16.msra.mxu0 %v1388
    %2016 = vmatprep.subr.bf16.mxu0 %v1395
    %2017 = vmatpush1.bf16.msra.mxu0 %v1394
    %2018 = vmatprep.subr.bf16.mxu0 %v1401
    %2019 = vmatpush1.bf16.msra.mxu0 %v1400
    %2020 = vmatprep.subr.bf16.mxu0 %v1407
    %2021 = vmatpush1.bf16.msra.mxu0 %v1406
    %2022 = vmatprep.subr.bf16.mxu0 %v1413
    %2023 = vmatpush1.bf16.msra.mxu0 %v1412
    %2024 = vmatprep.subr.bf16.mxu0 %v1419
    %2025 = vmatpush1.bf16.msra.mxu0 %v1418
    %2026 = vmatprep.subr.bf16.mxu0 %v1425
    %2027 = vmatpush1.bf16.msra.mxu0 %v1424
    %2028 = vmatprep.subr.bf16.mxu0 %v1431
    %2029 = vmatpush1.bf16.msra.mxu0 %v1430
    %2030 = vmatprep.subr.bf16.mxu0 %v1437
    %2031 = vmatpush1.bf16.msra.mxu0 %v1436
    %2032 = vmatprep.subr.bf16.mxu0 %v1443
    %2033 = vmatpush1.bf16.msra.mxu0 %v1442
    %2034 = vmatprep.subr.bf16.mxu0 %v1449
    %2035 = vmatpush1.bf16.msra.mxu0 %v1448
    %2036 = vmatprep.subr.bf16.mxu0 %v1455
    %2037 = vmatpush1.bf16.msra.mxu0 %v1454
    %2038 = vmatprep.mubr.bf16.mxu0 %v77
    %2039 = vmatmul.mubr.bf16.gmra.mrb[0].mxu0 %v76
    %v2040 = vpop.f32.mrb[0].mxu0
    %v2041 = vadd.f32 %v2000, %v2040
    %v2042 = vpop.f32.mrb[0].mxu0
    %v2043 = vadd.f32 %v2002, %v2042
    %v2044 = vpop.f32.mrb[0].mxu0
    %v2045 = vpop.f32.mrb[0].mxu0
    %2046 = vdwg.mxu0
    %2047 = vmatprep.subr.bf16.mxu0 %v1461
    %2048 = vmatpush1.bf16.msra.mxu0 %v1460
    %2049 = vmatprep.subr.bf16.mxu0 %v1467
    %2050 = vmatpush1.bf16.msra.mxu0 %v1466
    %2051 = vmatprep.subr.bf16.mxu0 %v1473
    %2052 = vmatpush1.bf16.msra.mxu0 %v1472
    %2053 = vmatprep.subr.bf16.mxu0 %v1479
    %2054 = vmatpush1.bf16.msra.mxu0 %v1478
    %2055 = vmatprep.subr.bf16.mxu0 %v1485
    %2056 = vmatpush1.bf16.msra.mxu0 %v1484
    %2057 = vmatprep.subr.bf16.mxu0 %v1491
    %2058 = vmatpush1.bf16.msra.mxu0 %v1490
    %2059 = vmatprep.subr.bf16.mxu0 %v1497
    %2060 = vmatpush1.bf16.msra.mxu0 %v1496
    %2061 = vmatprep.subr.bf16.mxu0 %v1503
    %2062 = vmatpush1.bf16.msra.mxu0 %v1502
    %2063 = vmatprep.subr.bf16.mxu0 %v1509
    %2064 = vmatpush1.bf16.msra.mxu0 %v1508
    %2065 = vmatprep.subr.bf16.mxu0 %v1515
    %2066 = vmatpush1.bf16.msra.mxu0 %v1514
    %2067 = vmatprep.subr.bf16.mxu0 %v1521
    %2068 = vmatpush1.bf16.msra.mxu0 %v1520
    %2069 = vmatprep.subr.bf16.mxu0 %v1527
    %2070 = vmatpush1.bf16.msra.mxu0 %v1526
    %2071 = vmatprep.subr.bf16.mxu0 %v1533
    %2072 = vmatpush1.bf16.msra.mxu0 %v1532
    %2073 = vmatprep.subr.bf16.mxu0 %v1539
    %2074 = vmatpush1.bf16.msra.mxu0 %v1538
    %2075 = vmatprep.subr.bf16.mxu0 %v1545
    %2076 = vmatpush1.bf16.msra.mxu0 %v1544
    %2077 = vmatprep.subr.bf16.mxu0 %v1551
    %2078 = vmatpush1.bf16.msra.mxu0 %v1550
    %2079 = vmatprep.mubr.bf16.mxu0 %v79
    %2080 = vmatmul.mubr.bf16.gmra.mrb[0].mxu0 %v78
    %v2081 = vpop.f32.mrb[0].mxu0
    %v2082 = vadd.f32 %v2041, %v2081
    %v2083 = vpop.f32.mrb[0].mxu0
    %v2084 = vadd.f32 %v2043, %v2083
    %v2085 = vpop.f32.mrb[0].mxu0
    %v2086 = vpop.f32.mrb[0].mxu0
    %2087 = vdwg.mxu0
    %2088 = vmatprep.subr.bf16.mxu0 %v1271
    %2089 = vmatpush1.bf16.msra.mxu0 %v1270
    %2090 = vmatprep.subr.bf16.mxu0 %v1277
    %2091 = vmatpush1.bf16.msra.mxu0 %v1276
    %2092 = vmatprep.subr.bf16.mxu0 %v1283
    %2093 = vmatpush1.bf16.msra.mxu0 %v1282
    %2094 = vmatprep.subr.bf16.mxu0 %v1289
    %2095 = vmatpush1.bf16.msra.mxu0 %v1288
    %2096 = vmatprep.subr.bf16.mxu0 %v1295
    %2097 = vmatpush1.bf16.msra.mxu0 %v1294
    %2098 = vmatprep.subr.bf16.mxu0 %v1301
    %2099 = vmatpush1.bf16.msra.mxu0 %v1300
    %2100 = vmatprep.subr.bf16.mxu0 %v1307
    %2101 = vmatpush1.bf16.msra.mxu0 %v1306
    %2102 = vmatprep.subr.bf16.mxu0 %v1313
    %2103 = vmatpush1.bf16.msra.mxu0 %v1312
    %2104 = vmatprep.subr.bf16.mxu0 %v1319
    %2105 = vmatpush1.bf16.msra.mxu0 %v1318
    %2106 = vmatprep.subr.bf16.mxu0 %v1325
    %2107 = vmatpush1.bf16.msra.mxu0 %v1324
    %2108 = vmatprep.subr.bf16.mxu0 %v1331
    %2109 = vmatpush1.bf16.msra.mxu0 %v1330
    %2110 = vmatprep.subr.bf16.mxu0 %v1337
    %2111 = vmatpush1.bf16.msra.mxu0 %v1336
    %2112 = vmatprep.subr.bf16.mxu0 %v1343
    %2113 = vmatpush1.bf16.msra.mxu0 %v1342
    %2114 = vmatprep.subr.bf16.mxu0 %v1349
    %2115 = vmatpush1.bf16.msra.mxu0 %v1348
    %2116 = vmatprep.subr.bf16.mxu0 %v1355
    %2117 = vmatpush1.bf16.msra.mxu0 %v1354
    %2118 = vmatprep.subr.bf16.mxu0 %v1361
    %2119 = vmatpush1.bf16.msra.mxu0 %v1360
    %2120 = vmatprep.mubr.bf16.mxu0 %v75
    %2121 = vmatmul.mubr.bf16.gmra.mrb[0].mxu0 %v74
    %v2122 = vpop.f32.mrb[0].mxu0
    %v2123 = vadd.f32 %v391, %v2122
    %v2124 = vpop.f32.mrb[0].mxu0
    %v2125 = vadd.f32 %v395, %v2124
    %v2126 = vpop.f32.mrb[0].mxu0
    %v2127 = vpop.f32.mrb[0].mxu0
    %2128 = vdwg.mxu0
    %2129 = vmatprep.subr.bf16.mxu0 %v1367
    %2130 = vmatpush1.bf16.msra.mxu0 %v1366
    %2131 = vmatprep.subr.bf16.mxu0 %v1373
    %2132 = vmatpush1.bf16.msra.mxu0 %v1372
    %2133 = vmatprep.subr.bf16.mxu0 %v1379
    %2134 = vmatpush1.bf16.msra.mxu0 %v1378
    %2135 = vmatprep.subr.bf16.mxu0 %v1385
    %2136 = vmatpush1.bf16.msra.mxu0 %v1384
    %2137 = vmatprep.subr.bf16.mxu0 %v1391
    %2138 = vmatpush1.bf16.msra.mxu0 %v1390
    %2139 = vmatprep.subr.bf16.mxu0 %v1397
    %2140 = vmatpush1.bf16.msra.mxu0 %v1396
    %2141 = vmatprep.subr.bf16.mxu0 %v1403
    %2142 = vmatpush1.bf16.msra.mxu0 %v1402
    %2143 = vmatprep.subr.bf16.mxu0 %v1409
    %2144 = vmatpush1.bf16.msra.mxu0 %v1408
    %2145 = vmatprep.subr.bf16.mxu0 %v1415
    %2146 = vmatpush1.bf16.msra.mxu0 %v1414
    %2147 = vmatprep.subr.bf16.mxu0 %v1421
    %2148 = vmatpush1.bf16.msra.mxu0 %v1420
    %2149 = vmatprep.subr.bf16.mxu0 %v1427
    %2150 = vmatpush1.bf16.msra.mxu0 %v1426
    %2151 = vmatprep.subr.bf16.mxu0 %v1433
    %2152 = vmatpush1.bf16.msra.mxu0 %v1432
    %2153 = vmatprep.subr.bf16.mxu0 %v1439
    %2154 = vmatpush1.bf16.msra.mxu0 %v1438
    %2155 = vmatprep.subr.bf16.mxu0 %v1445
    %2156 = vmatpush1.bf16.msra.mxu0 %v1444
    %2157 = vmatprep.subr.bf16.mxu0 %v1451
    %2158 = vmatpush1.bf16.msra.mxu0 %v1450
    %2159 = vmatprep.subr.bf16.mxu0 %v1457
    %2160 = vmatpush1.bf16.msra.mxu0 %v1456
    %2161 = vmatprep.mubr.bf16.mxu0 %v77
    %2162 = vmatmul.mubr.bf16.gmra.mrb[0].mxu0 %v76
    %v2163 = vpop.f32.mrb[0].mxu0
    %v2164 = vadd.f32 %v2123, %v2163
    %v2165 = vpop.f32.mrb[0].mxu0
    %v2166 = vadd.f32 %v2125, %v2165
    %v2167 = vpop.f32.mrb[0].mxu0
    %v2168 = vpop.f32.mrb[0].mxu0
    %2169 = vdwg.mxu0
    %2170 = vmatprep.subr.bf16.mxu0 %v1463
    %2171 = vmatpush1.bf16.msra.mxu0 %v1462
    %2172 = vmatprep.subr.bf16.mxu0 %v1469
    %2173 = vmatpush1.bf16.msra.mxu0 %v1468
    %2174 = vmatprep.subr.bf16.mxu0 %v1475
    %2175 = vmatpush1.bf16.msra.mxu0 %v1474
    %2176 = vmatprep.subr.bf16.mxu0 %v1481
    %2177 = vmatpush1.bf16.msra.mxu0 %v1480
    %2178 = vmatprep.subr.bf16.mxu0 %v1487
    %2179 = vmatpush1.bf16.msra.mxu0 %v1486
    %2180 = vmatprep.subr.bf16.mxu0 %v1493
    %2181 = vmatpush1.bf16.msra.mxu0 %v1492
    %2182 = vmatprep.subr.bf16.mxu0 %v1499
    %2183 = vmatpush1.bf16.msra.mxu0 %v1498
    %2184 = vmatprep.subr.bf16.mxu0 %v1505
    %2185 = vmatpush1.bf16.msra.mxu0 %v1504
    %2186 = vmatprep.subr.bf16.mxu0 %v1511
    %2187 = vmatpush1.bf16.msra.mxu0 %v1510
    %2188 = vmatprep.subr.bf16.mxu0 %v1517
    %2189 = vmatpush1.bf16.msra.mxu0 %v1516
    %2190 = vmatprep.subr.bf16.mxu0 %v1523
    %2191 = vmatpush1.bf16.msra.mxu0 %v1522
    %2192 = vmatprep.subr.bf16.mxu0 %v1529
    %2193 = vmatpush1.bf16.msra.mxu0 %v1528
    %2194 = vmatprep.subr.bf16.mxu0 %v1535
    %2195 = vmatpush1.bf16.msra.mxu0 %v1534
    %2196 = vmatprep.subr.bf16.mxu0 %v1541
    %2197 = vmatpush1.bf16.msra.mxu0 %v1540
    %2198 = vmatprep.subr.bf16.mxu0 %v1547
    %2199 = vmatpush1.bf16.msra.mxu0 %v1546
    %2200 = vmatprep.subr.bf16.mxu0 %v1553
    %2201 = vmatpush1.bf16.msra.mxu0 %v1552
    %2202 = vmatprep.mubr.bf16.mxu0 %v79
    %2203 = vmatmul.mubr.bf16.gmra.mrb[0].mxu0 %v78
    %v2204 = vpop.f32.mrb[0].mxu0
    %v2205 = vadd.f32 %v2164, %v2204
    %v2206 = vpop.f32.mrb[0].mxu0
    %v2207 = vadd.f32 %v2166, %v2206
    %v2208 = vpop.f32.mrb[0].mxu0
    %v2209 = vpop.f32.mrb[0].mxu0
    %2210 = vdwg.mxu0
    %v2211 = vstv %s72
    %v2212 = vmul.f32 %v2211, %v66
    %v2213 = vmul.f32 %v2211, %v67
    %v2214 = vmul.f32 %v2211, %v68
    %v2215 = vmul.f32 %v2211, %v69
    %v2216 = vmul.f32 %v2211, %v70
    %v2217 = vmul.f32 %v2211, %v71
    %v2218 = vadd.f32 %v1959, %v2212
    %v2219 = vadd.f32 %v1961, %v2213
    %v2220 = vadd.f32 %v2082, %v2214
    %v2221 = vadd.f32 %v2084, %v2215
    %v2222 = vadd.f32 %v2205, %v2216
    %v2223 = vadd.f32 %v2207, %v2217
    %v2224 = vstv %s73
    %v2225 = vmul.f32 %v2224, %v2218
    %v2226 = vmul.f32 %v2224, %v2219
    %v2227 = vmul.f32 %v2224, %v2220
    %v2228 = vmul.f32 %v2224, %v2221
    %v2229 = vmul.f32 %v2224, %v2222
    %v2230 = vmul.f32 %v2224, %v2223
    %v2231 = vmax.f32 %v2218, %v2225
    %v2232 = vmax.f32 %v2219, %v2226
    %v2233 = vmax.f32 %v2220, %v2227
    %v2234 = vmax.f32 %v2221, %v2228
    %v2235 = vmax.f32 %v2222, %v2229
    %v2236 = vmax.f32 %v2223, %v2230
    %s2237 = sld [smem:[#allocation2 + $0x2]]
    %s2238 = sld [smem:[#allocation2 + $0x3]]
    %v2239 = vpack.c.bf16 %v2231, %v2231
    %v2240 = vpack.c.bf16 %v2232, %v2232
    %v2241 = vpack.c.bf16 %v2233, %v2233
    %v2242 = vpack.c.bf16 %v2234, %v2234
    %v2243 = vpack.c.bf16 %v2235, %v2235
    %v2244 = vpack.c.bf16 %v2236, %v2236
    %s2245 = scalar_lea.vmem [#allocation7], 2304
    %v2246 = vld [vmem:[%s2245] sm:$0xff]
    %v2247 = vld [vmem:[%s2245 + $0x8] sm:$0xff]
    %v2248 = vld [vmem:[%s2245 + $0x10] sm:$0xff]
    %v2249 = vld [vmem:[%s2245 + $0x18] sm:$0xff]
    %v2250 = vld [vmem:[%s2245 + $0x20] sm:$0xff]
    %v2251 = vld [vmem:[%s2245 + $0x28] sm:$0xff]
    %v2252 = vld [vmem:[%s2245 + $0x30] sm:$0xff]
    %v2253 = vld [vmem:[%s2245 + $0x38] sm:$0xff]
    %v2254 = vld [vmem:[%s2245 + $0x40] sm:$0xff]
    %v2255 = vld [vmem:[%s2245 + $0x48] sm:$0xff]
    %v2256 = vld [vmem:[%s2245 + $0x50] sm:$0xff]
    %v2257 = vld [vmem:[%s2245 + $0x58] sm:$0xff]
    %v2258 = vld [vmem:[%s2245 + $0x60] sm:$0xff]
    %v2259 = vld [vmem:[%s2245 + $0x68] sm:$0xff]
    %v2260 = vld [vmem:[%s2245 + $0x70] sm:$0xff]
    %v2261 = vld [vmem:[%s2245 + $0x78] sm:$0xff]
    %v2262 = vld [vmem:[%s2245 + $0x80] sm:$0xff]
    %v2263 = vld [vmem:[%s2245 + $0x88] sm:$0xff]
    %v2264 = vld [vmem:[%s2245 + $0x90] sm:$0xff]
    %v2265 = vld [vmem:[%s2245 + $0x98] sm:$0xff]
    %v2266 = vld [vmem:[%s2245 + $0xa0] sm:$0xff]
    %v2267 = vld [vmem:[%s2245 + $0xa8] sm:$0xff]
    %v2268 = vld [vmem:[%s2245 + $0xb0] sm:$0xff]
    %v2269 = vld [vmem:[%s2245 + $0xb8] sm:$0xff]
    %v2270 = vld [vmem:[%s2245 + $0xc0] sm:$0xff]
    %v2271 = vld [vmem:[%s2245 + $0xc8] sm:$0xff]
    %v2272 = vld [vmem:[%s2245 + $0xd0] sm:$0xff]
    %v2273 = vld [vmem:[%s2245 + $0xd8] sm:$0xff]
    %v2274 = vld [vmem:[%s2245 + $0xe0] sm:$0xff]
    %v2275 = vld [vmem:[%s2245 + $0xe8] sm:$0xff]
    %v2276 = vld [vmem:[%s2245 + $0xf0] sm:$0xff]
    %v2277 = vld [vmem:[%s2245 + $0xf8] sm:$0xff]
    %v2278 = vld [vmem:[%s2245 + $0x100] sm:$0xff]
    %v2279 = vld [vmem:[%s2245 + $0x108] sm:$0xff]
    %v2280 = vld [vmem:[%s2245 + $0x110] sm:$0xff]
    %v2281 = vld [vmem:[%s2245 + $0x118] sm:$0xff]
    %v2282 = vld [vmem:[%s2245 + $0x120] sm:$0xff]
    %v2283 = vld [vmem:[%s2245 + $0x128] sm:$0xff]
    %v2284 = vld [vmem:[%s2245 + $0x130] sm:$0xff]
    %v2285 = vld [vmem:[%s2245 + $0x138] sm:$0xff]
    %v2286 = vld [vmem:[%s2245 + $0x140] sm:$0xff]
    %v2287 = vld [vmem:[%s2245 + $0x148] sm:$0xff]
    %v2288 = vld [vmem:[%s2245 + $0x150] sm:$0xff]
    %v2289 = vld [vmem:[%s2245 + $0x158] sm:$0xff]
    %v2290 = vld [vmem:[%s2245 + $0x160] sm:$0xff]
    %v2291 = vld [vmem:[%s2245 + $0x168] sm:$0xff]
    %v2292 = vld [vmem:[%s2245 + $0x170] sm:$0xff]
    %v2293 = vld [vmem:[%s2245 + $0x178] sm:$0xff]
    %v2294 = vld [vmem:[%s2245 + $0x180] sm:$0xff]
    %v2295 = vld [vmem:[%s2245 + $0x188] sm:$0xff]
    %v2296 = vld [vmem:[%s2245 + $0x190] sm:$0xff]
    %v2297 = vld [vmem:[%s2245 + $0x198] sm:$0xff]
    %v2298 = vld [vmem:[%s2245 + $0x1a0] sm:$0xff]
    %v2299 = vld [vmem:[%s2245 + $0x1a8] sm:$0xff]
    %v2300 = vld [vmem:[%s2245 + $0x1b0] sm:$0xff]
    %v2301 = vld [vmem:[%s2245 + $0x1b8] sm:$0xff]
    %v2302 = vld [vmem:[%s2245 + $0x1c0] sm:$0xff]
    %v2303 = vld [vmem:[%s2245 + $0x1c8] sm:$0xff]
    %v2304 = vld [vmem:[%s2245 + $0x1d0] sm:$0xff]
    %v2305 = vld [vmem:[%s2245 + $0x1d8] sm:$0xff]
    %v2306 = vld [vmem:[%s2245 + $0x1e0] sm:$0xff]
    %v2307 = vld [vmem:[%s2245 + $0x1e8] sm:$0xff]
    %v2308 = vld [vmem:[%s2245 + $0x1f0] sm:$0xff]
    %v2309 = vld [vmem:[%s2245 + $0x1f8] sm:$0xff]
    %v2310 = vld [vmem:[%s2245 + $0x200] sm:$0xff]
    %v2311 = vld [vmem:[%s2245 + $0x208] sm:$0xff]
    %v2312 = vld [vmem:[%s2245 + $0x210] sm:$0xff]
    %v2313 = vld [vmem:[%s2245 + $0x218] sm:$0xff]
    %v2314 = vld [vmem:[%s2245 + $0x220] sm:$0xff]
    %v2315 = vld [vmem:[%s2245 + $0x228] sm:$0xff]
    %v2316 = vld [vmem:[%s2245 + $0x230] sm:$0xff]
    %v2317 = vld [vmem:[%s2245 + $0x238] sm:$0xff]
    %v2318 = vld [vmem:[%s2245 + $0x240] sm:$0xff]
    %v2319 = vld [vmem:[%s2245 + $0x248] sm:$0xff]
    %v2320 = vld [vmem:[%s2245 + $0x250] sm:$0xff]
    %v2321 = vld [vmem:[%s2245 + $0x258] sm:$0xff]
    %v2322 = vld [vmem:[%s2245 + $0x260] sm:$0xff]
    %v2323 = vld [vmem:[%s2245 + $0x268] sm:$0xff]
    %v2324 = vld [vmem:[%s2245 + $0x270] sm:$0xff]
    %v2325 = vld [vmem:[%s2245 + $0x278] sm:$0xff]
    %v2326 = vld [vmem:[%s2245 + $0x280] sm:$0xff]
    %v2327 = vld [vmem:[%s2245 + $0x288] sm:$0xff]
    %v2328 = vld [vmem:[%s2245 + $0x290] sm:$0xff]
    %v2329 = vld [vmem:[%s2245 + $0x298] sm:$0xff]
    %v2330 = vld [vmem:[%s2245 + $0x2a0] sm:$0xff]
    %v2331 = vld [vmem:[%s2245 + $0x2a8] sm:$0xff]
    %v2332 = vld [vmem:[%s2245 + $0x2b0] sm:$0xff]
    %v2333 = vld [vmem:[%s2245 + $0x2b8] sm:$0xff]
    %v2334 = vld [vmem:[%s2245 + $0x2c0] sm:$0xff]
    %v2335 = vld [vmem:[%s2245 + $0x2c8] sm:$0xff]
    %v2336 = vld [vmem:[%s2245 + $0x2d0] sm:$0xff]
    %v2337 = vld [vmem:[%s2245 + $0x2d8] sm:$0xff]
    %v2338 = vld [vmem:[%s2245 + $0x2e0] sm:$0xff]
    %v2339 = vld [vmem:[%s2245 + $0x2e8] sm:$0xff]
    %v2340 = vld [vmem:[%s2245 + $0x2f0] sm:$0xff]
    %v2341 = vld [vmem:[%s2245 + $0x2f8] sm:$0xff]
    %v2342 = vld [vmem:[%s2245 + $0x300] sm:$0xff]
    %v2343 = vld [vmem:[%s2245 + $0x308] sm:$0xff]
    %v2344 = vld [vmem:[%s2245 + $0x310] sm:$0xff]
    %v2345 = vld [vmem:[%s2245 + $0x318] sm:$0xff]
    %v2346 = vld [vmem:[%s2245 + $0x320] sm:$0xff]
    %v2347 = vld [vmem:[%s2245 + $0x328] sm:$0xff]
    %v2348 = vld [vmem:[%s2245 + $0x330] sm:$0xff]
    %v2349 = vld [vmem:[%s2245 + $0x338] sm:$0xff]
    %v2350 = vld [vmem:[%s2245 + $0x340] sm:$0xff]
    %v2351 = vld [vmem:[%s2245 + $0x348] sm:$0xff]
    %v2352 = vld [vmem:[%s2245 + $0x350] sm:$0xff]
    %v2353 = vld [vmem:[%s2245 + $0x358] sm:$0xff]
    %v2354 = vld [vmem:[%s2245 + $0x360] sm:$0xff]
    %v2355 = vld [vmem:[%s2245 + $0x368] sm:$0xff]
    %v2356 = vld [vmem:[%s2245 + $0x370] sm:$0xff]
    %v2357 = vld [vmem:[%s2245 + $0x378] sm:$0xff]
    %v2358 = vld [vmem:[%s2245 + $0x380] sm:$0xff]
    %v2359 = vld [vmem:[%s2245 + $0x388] sm:$0xff]
    %v2360 = vld [vmem:[%s2245 + $0x390] sm:$0xff]
    %v2361 = vld [vmem:[%s2245 + $0x398] sm:$0xff]
    %v2362 = vld [vmem:[%s2245 + $0x3a0] sm:$0xff]
    %v2363 = vld [vmem:[%s2245 + $0x3a8] sm:$0xff]
    %v2364 = vld [vmem:[%s2245 + $0x3b0] sm:$0xff]
    %v2365 = vld [vmem:[%s2245 + $0x3b8] sm:$0xff]
    %v2366 = vld [vmem:[%s2245 + $0x3c0] sm:$0xff]
    %v2367 = vld [vmem:[%s2245 + $0x3c8] sm:$0xff]
    %v2368 = vld [vmem:[%s2245 + $0x3d0] sm:$0xff]
    %v2369 = vld [vmem:[%s2245 + $0x3d8] sm:$0xff]
    %v2370 = vld [vmem:[%s2245 + $0x3e0] sm:$0xff]
    %v2371 = vld [vmem:[%s2245 + $0x3e8] sm:$0xff]
    %v2372 = vld [vmem:[%s2245 + $0x3f0] sm:$0xff]
    %v2373 = vld [vmem:[%s2245 + $0x3f8] sm:$0xff]
    %v2374 = vld [vmem:[%s2245 + $0x400] sm:$0xff]
    %v2375 = vld [vmem:[%s2245 + $0x408] sm:$0xff]
    %v2376 = vld [vmem:[%s2245 + $0x410] sm:$0xff]
    %v2377 = vld [vmem:[%s2245 + $0x418] sm:$0xff]
    %v2378 = vld [vmem:[%s2245 + $0x420] sm:$0xff]
    %v2379 = vld [vmem:[%s2245 + $0x428] sm:$0xff]
    %v2380 = vld [vmem:[%s2245 + $0x430] sm:$0xff]
    %v2381 = vld [vmem:[%s2245 + $0x438] sm:$0xff]
    %v2382 = vld [vmem:[%s2245 + $0x440] sm:$0xff]
    %v2383 = vld [vmem:[%s2245 + $0x448] sm:$0xff]
    %v2384 = vld [vmem:[%s2245 + $0x450] sm:$0xff]
    %v2385 = vld [vmem:[%s2245 + $0x458] sm:$0xff]
    %v2386 = vld [vmem:[%s2245 + $0x460] sm:$0xff]
    %v2387 = vld [vmem:[%s2245 + $0x468] sm:$0xff]
    %v2388 = vld [vmem:[%s2245 + $0x470] sm:$0xff]
    %v2389 = vld [vmem:[%s2245 + $0x478] sm:$0xff]
    %v2390 = vld [vmem:[%s2245 + $0x480] sm:$0xff]
    %v2391 = vld [vmem:[%s2245 + $0x488] sm:$0xff]
    %v2392 = vld [vmem:[%s2245 + $0x490] sm:$0xff]
    %v2393 = vld [vmem:[%s2245 + $0x498] sm:$0xff]
    %v2394 = vld [vmem:[%s2245 + $0x4a0] sm:$0xff]
    %v2395 = vld [vmem:[%s2245 + $0x4a8] sm:$0xff]
    %v2396 = vld [vmem:[%s2245 + $0x4b0] sm:$0xff]
    %v2397 = vld [vmem:[%s2245 + $0x4b8] sm:$0xff]
    %v2398 = vld [vmem:[%s2245 + $0x4c0] sm:$0xff]
    %v2399 = vld [vmem:[%s2245 + $0x4c8] sm:$0xff]
    %v2400 = vld [vmem:[%s2245 + $0x4d0] sm:$0xff]
    %v2401 = vld [vmem:[%s2245 + $0x4d8] sm:$0xff]
    %v2402 = vld [vmem:[%s2245 + $0x4e0] sm:$0xff]
    %v2403 = vld [vmem:[%s2245 + $0x4e8] sm:$0xff]
    %v2404 = vld [vmem:[%s2245 + $0x4f0] sm:$0xff]
    %v2405 = vld [vmem:[%s2245 + $0x4f8] sm:$0xff]
    %v2406 = vld [vmem:[%s2245 + $0x500] sm:$0xff]
    %v2407 = vld [vmem:[%s2245 + $0x508] sm:$0xff]
    %v2408 = vld [vmem:[%s2245 + $0x510] sm:$0xff]
    %v2409 = vld [vmem:[%s2245 + $0x518] sm:$0xff]
    %v2410 = vld [vmem:[%s2245 + $0x520] sm:$0xff]
    %v2411 = vld [vmem:[%s2245 + $0x528] sm:$0xff]
    %v2412 = vld [vmem:[%s2245 + $0x530] sm:$0xff]
    %v2413 = vld [vmem:[%s2245 + $0x538] sm:$0xff]
    %v2414 = vld [vmem:[%s2245 + $0x540] sm:$0xff]
    %v2415 = vld [vmem:[%s2245 + $0x548] sm:$0xff]
    %v2416 = vld [vmem:[%s2245 + $0x550] sm:$0xff]
    %v2417 = vld [vmem:[%s2245 + $0x558] sm:$0xff]
    %v2418 = vld [vmem:[%s2245 + $0x560] sm:$0xff]
    %v2419 = vld [vmem:[%s2245 + $0x568] sm:$0xff]
    %v2420 = vld [vmem:[%s2245 + $0x570] sm:$0xff]
    %v2421 = vld [vmem:[%s2245 + $0x578] sm:$0xff]
    %v2422 = vld [vmem:[%s2245 + $0x580] sm:$0xff]
    %v2423 = vld [vmem:[%s2245 + $0x588] sm:$0xff]
    %v2424 = vld [vmem:[%s2245 + $0x590] sm:$0xff]
    %v2425 = vld [vmem:[%s2245 + $0x598] sm:$0xff]
    %v2426 = vld [vmem:[%s2245 + $0x5a0] sm:$0xff]
    %v2427 = vld [vmem:[%s2245 + $0x5a8] sm:$0xff]
    %v2428 = vld [vmem:[%s2245 + $0x5b0] sm:$0xff]
    %v2429 = vld [vmem:[%s2245 + $0x5b8] sm:$0xff]
    %v2430 = vld [vmem:[%s2245 + $0x5c0] sm:$0xff]
    %v2431 = vld [vmem:[%s2245 + $0x5c8] sm:$0xff]
    %v2432 = vld [vmem:[%s2245 + $0x5d0] sm:$0xff]
    %v2433 = vld [vmem:[%s2245 + $0x5d8] sm:$0xff]
    %v2434 = vld [vmem:[%s2245 + $0x5e0] sm:$0xff]
    %v2435 = vld [vmem:[%s2245 + $0x5e8] sm:$0xff]
    %v2436 = vld [vmem:[%s2245 + $0x5f0] sm:$0xff]
    %v2437 = vld [vmem:[%s2245 + $0x5f8] sm:$0xff]
    %v2438 = vld [vmem:[%s2245 + $0x600] sm:$0xff]
    %v2439 = vld [vmem:[%s2245 + $0x608] sm:$0xff]
    %v2440 = vld [vmem:[%s2245 + $0x610] sm:$0xff]
    %v2441 = vld [vmem:[%s2245 + $0x618] sm:$0xff]
    %v2442 = vld [vmem:[%s2245 + $0x620] sm:$0xff]
    %v2443 = vld [vmem:[%s2245 + $0x628] sm:$0xff]
    %v2444 = vld [vmem:[%s2245 + $0x630] sm:$0xff]
    %v2445 = vld [vmem:[%s2245 + $0x638] sm:$0xff]
    %v2446 = vld [vmem:[%s2245 + $0x640] sm:$0xff]
    %v2447 = vld [vmem:[%s2245 + $0x648] sm:$0xff]
    %v2448 = vld [vmem:[%s2245 + $0x650] sm:$0xff]
    %v2449 = vld [vmem:[%s2245 + $0x658] sm:$0xff]
    %v2450 = vld [vmem:[%s2245 + $0x660] sm:$0xff]
    %v2451 = vld [vmem:[%s2245 + $0x668] sm:$0xff]
    %v2452 = vld [vmem:[%s2245 + $0x670] sm:$0xff]
    %v2453 = vld [vmem:[%s2245 + $0x678] sm:$0xff]
    %v2454 = vld [vmem:[%s2245 + $0x680] sm:$0xff]
    %v2455 = vld [vmem:[%s2245 + $0x688] sm:$0xff]
    %v2456 = vld [vmem:[%s2245 + $0x690] sm:$0xff]
    %v2457 = vld [vmem:[%s2245 + $0x698] sm:$0xff]
    %v2458 = vld [vmem:[%s2245 + $0x6a0] sm:$0xff]
    %v2459 = vld [vmem:[%s2245 + $0x6a8] sm:$0xff]
    %v2460 = vld [vmem:[%s2245 + $0x6b0] sm:$0xff]
    %v2461 = vld [vmem:[%s2245 + $0x6b8] sm:$0xff]
    %v2462 = vld [vmem:[%s2245 + $0x6c0] sm:$0xff]
    %v2463 = vld [vmem:[%s2245 + $0x6c8] sm:$0xff]
    %v2464 = vld [vmem:[%s2245 + $0x6d0] sm:$0xff]
    %v2465 = vld [vmem:[%s2245 + $0x6d8] sm:$0xff]
    %v2466 = vld [vmem:[%s2245 + $0x6e0] sm:$0xff]
    %v2467 = vld [vmem:[%s2245 + $0x6e8] sm:$0xff]
    %v2468 = vld [vmem:[%s2245 + $0x6f0] sm:$0xff]
    %v2469 = vld [vmem:[%s2245 + $0x6f8] sm:$0xff]
    %v2470 = vld [vmem:[%s2245 + $0x700] sm:$0xff]
    %v2471 = vld [vmem:[%s2245 + $0x708] sm:$0xff]
    %v2472 = vld [vmem:[%s2245 + $0x710] sm:$0xff]
    %v2473 = vld [vmem:[%s2245 + $0x718] sm:$0xff]
    %v2474 = vld [vmem:[%s2245 + $0x720] sm:$0xff]
    %v2475 = vld [vmem:[%s2245 + $0x728] sm:$0xff]
    %v2476 = vld [vmem:[%s2245 + $0x730] sm:$0xff]
    %v2477 = vld [vmem:[%s2245 + $0x738] sm:$0xff]
    %v2478 = vld [vmem:[%s2245 + $0x740] sm:$0xff]
    %v2479 = vld [vmem:[%s2245 + $0x748] sm:$0xff]
    %v2480 = vld [vmem:[%s2245 + $0x750] sm:$0xff]
    %v2481 = vld [vmem:[%s2245 + $0x758] sm:$0xff]
    %v2482 = vld [vmem:[%s2245 + $0x760] sm:$0xff]
    %v2483 = vld [vmem:[%s2245 + $0x768] sm:$0xff]
    %v2484 = vld [vmem:[%s2245 + $0x770] sm:$0xff]
    %v2485 = vld [vmem:[%s2245 + $0x778] sm:$0xff]
    %v2486 = vld [vmem:[%s2245 + $0x780] sm:$0xff]
    %v2487 = vld [vmem:[%s2245 + $0x788] sm:$0xff]
    %v2488 = vld [vmem:[%s2245 + $0x790] sm:$0xff]
    %v2489 = vld [vmem:[%s2245 + $0x798] sm:$0xff]
    %v2490 = vld [vmem:[%s2245 + $0x7a0] sm:$0xff]
    %v2491 = vld [vmem:[%s2245 + $0x7a8] sm:$0xff]
    %v2492 = vld [vmem:[%s2245 + $0x7b0] sm:$0xff]
    %v2493 = vld [vmem:[%s2245 + $0x7b8] sm:$0xff]
    %v2494 = vld [vmem:[%s2245 + $0x7c0] sm:$0xff]
    %v2495 = vld [vmem:[%s2245 + $0x7c8] sm:$0xff]
    %v2496 = vld [vmem:[%s2245 + $0x7d0] sm:$0xff]
    %v2497 = vld [vmem:[%s2245 + $0x7d8] sm:$0xff]
    %v2498 = vld [vmem:[%s2245 + $0x7e0] sm:$0xff]
    %v2499 = vld [vmem:[%s2245 + $0x7e8] sm:$0xff]
    %v2500 = vld [vmem:[%s2245 + $0x7f0] sm:$0xff]
    %v2501 = vld [vmem:[%s2245 + $0x7f8] sm:$0xff]
    %v2502 = vld [vmem:[%s2245 + $0x800] sm:$0xff]
    %v2503 = vld [vmem:[%s2245 + $0x808] sm:$0xff]
    %v2504 = vld [vmem:[%s2245 + $0x810] sm:$0xff]
    %v2505 = vld [vmem:[%s2245 + $0x818] sm:$0xff]
    %v2506 = vld [vmem:[%s2245 + $0x820] sm:$0xff]
    %v2507 = vld [vmem:[%s2245 + $0x828] sm:$0xff]
    %v2508 = vld [vmem:[%s2245 + $0x830] sm:$0xff]
    %v2509 = vld [vmem:[%s2245 + $0x838] sm:$0xff]
    %v2510 = vld [vmem:[%s2245 + $0x840] sm:$0xff]
    %v2511 = vld [vmem:[%s2245 + $0x848] sm:$0xff]
    %v2512 = vld [vmem:[%s2245 + $0x850] sm:$0xff]
    %v2513 = vld [vmem:[%s2245 + $0x858] sm:$0xff]
    %v2514 = vld [vmem:[%s2245 + $0x860] sm:$0xff]
    %v2515 = vld [vmem:[%s2245 + $0x868] sm:$0xff]
    %v2516 = vld [vmem:[%s2245 + $0x870] sm:$0xff]
    %v2517 = vld [vmem:[%s2245 + $0x878] sm:$0xff]
    %v2518 = vld [vmem:[%s2245 + $0x880] sm:$0xff]
    %v2519 = vld [vmem:[%s2245 + $0x888] sm:$0xff]
    %v2520 = vld [vmem:[%s2245 + $0x890] sm:$0xff]
    %v2521 = vld [vmem:[%s2245 + $0x898] sm:$0xff]
    %v2522 = vld [vmem:[%s2245 + $0x8a0] sm:$0xff]
    %v2523 = vld [vmem:[%s2245 + $0x8a8] sm:$0xff]
    %v2524 = vld [vmem:[%s2245 + $0x8b0] sm:$0xff]
    %v2525 = vld [vmem:[%s2245 + $0x8b8] sm:$0xff]
    %v2526 = vld [vmem:[%s2245 + $0x8c0] sm:$0xff]
    %v2527 = vld [vmem:[%s2245 + $0x8c8] sm:$0xff]
    %v2528 = vld [vmem:[%s2245 + $0x8d0] sm:$0xff]
    %v2529 = vld [vmem:[%s2245 + $0x8d8] sm:$0xff]
    %v2530 = vld [vmem:[%s2245 + $0x8e0] sm:$0xff]
    %v2531 = vld [vmem:[%s2245 + $0x8e8] sm:$0xff]
    %v2532 = vld [vmem:[%s2245 + $0x8f0] sm:$0xff]
    %v2533 = vld [vmem:[%s2245 + $0x8f8] sm:$0xff]
    %s2534 = scalar_lea.vmem [#allocation9], 1
    %v2535 = vld [vmem:[%s2534] ss:$8 sm:$0xf]
    %v2536 = vld [vmem:[%s2534] ss:$8 sm:$0x30]
    %v2537 = vor.u32 %v2535, %v2536
    %v2539 = vlaneseq
    %v2540 = vshrl.u32 %v2539, 7
    %v2541 = vsub.s32 0, %v2540
    %v2542 = vrot.slane %v2537, %v2541
    %v2543 = vlaneseq
    %v2544 = vshrl.u32 %v2543, 7
    %v2545 = vsub.s32 1, %v2544
    %v2546 = vrot.slane %v2537, %v2545
    %v2547 = vlaneseq
    %v2548 = vshrl.u32 %v2547, 7
    %v2549 = vsub.s32 2, %v2548
    %v2550 = vrot.slane %v2537, %v2549
    %v2551 = vlaneseq
    %v2552 = vshrl.u32 %v2551, 7
    %v2553 = vsub.s32 3, %v2552
    %v2554 = vrot.slane %v2537, %v2553
    %v2555 = vlaneseq
    %v2556 = vshrl.u32 %v2555, 7
    %v2557 = vsub.s32 4, %v2556
    %v2558 = vrot.slane %v2537, %v2557
    %v2559 = vlaneseq
    %v2560 = vshrl.u32 %v2559, 7
    %v2561 = vsub.s32 5, %v2560
    %v2562 = vrot.slane %v2537, %v2561
    %v2857 = vunpack.c.l.b16 %v2246
    %v2858 = vunpack.c.h.b16 %v2246
    %v2859 = vunpack.c.l.b16 %v2247
    %v2860 = vunpack.c.h.b16 %v2247
    %v2861 = vunpack.c.l.b16 %v2248
    %v2862 = vunpack.c.h.b16 %v2248
    %v2863 = vunpack.c.l.b16 %v2249
    %v2864 = vunpack.c.h.b16 %v2249
    %v2865 = vunpack.c.l.b16 %v2250
    %v2866 = vunpack.c.h.b16 %v2250
    %v2867 = vunpack.c.l.b16 %v2251
    %v2868 = vunpack.c.h.b16 %v2251
    %v2869 = vunpack.c.l.b16 %v2252
    %v2870 = vunpack.c.h.b16 %v2252
    %v2871 = vunpack.c.l.b16 %v2253
    %v2872 = vunpack.c.h.b16 %v2253
    %v2873 = vunpack.c.l.b16 %v2254
    %v2874 = vunpack.c.h.b16 %v2254
    %v2875 = vunpack.c.l.b16 %v2255
    %v2876 = vunpack.c.h.b16 %v2255
    %v2877 = vunpack.c.l.b16 %v2256
    %v2878 = vunpack.c.h.b16 %v2256
    %v2879 = vunpack.c.l.b16 %v2257
    %v2880 = vunpack.c.h.b16 %v2257
    %v2881 = vunpack.c.l.b16 %v2258
    %v2882 = vunpack.c.h.b16 %v2258
    %v2883 = vunpack.c.l.b16 %v2259
    %v2884 = vunpack.c.h.b16 %v2259
    %v2885 = vunpack.c.l.b16 %v2260
    %v2886 = vunpack.c.h.b16 %v2260
    %v2887 = vunpack.c.l.b16 %v2261
    %v2888 = vunpack.c.h.b16 %v2261
    %v2889 = vunpack.c.l.b16 %v2262
    %v2890 = vunpack.c.h.b16 %v2262
    %v2891 = vunpack.c.l.b16 %v2263
    %v2892 = vunpack.c.h.b16 %v2263
    %v2893 = vunpack.c.l.b16 %v2264
    %v2894 = vunpack.c.h.b16 %v2264
    %v2895 = vunpack.c.l.b16 %v2265
    %v2896 = vunpack.c.h.b16 %v2265
    %v2897 = vunpack.c.l.b16 %v2266
    %v2898 = vunpack.c.h.b16 %v2266
    %v2899 = vunpack.c.l.b16 %v2267
    %v2900 = vunpack.c.h.b16 %v2267
    %v2901 = vunpack.c.l.b16 %v2268
    %v2902 = vunpack.c.h.b16 %v2268
    %v2903 = vunpack.c.l.b16 %v2269
    %v2904 = vunpack.c.h.b16 %v2269
    %v2905 = vunpack.c.l.b16 %v2270
    %v2906 = vunpack.c.h.b16 %v2270
    %v2907 = vunpack.c.l.b16 %v2271
    %v2908 = vunpack.c.h.b16 %v2271
    %v2909 = vunpack.c.l.b16 %v2272
    %v2910 = vunpack.c.h.b16 %v2272
    %v2911 = vunpack.c.l.b16 %v2273
    %v2912 = vunpack.c.h.b16 %v2273
    %v2913 = vunpack.c.l.b16 %v2274
    %v2914 = vunpack.c.h.b16 %v2274
    %v2915 = vunpack.c.l.b16 %v2275
    %v2916 = vunpack.c.h.b16 %v2275
    %v2917 = vunpack.c.l.b16 %v2276
    %v2918 = vunpack.c.h.b16 %v2276
    %v2919 = vunpack.c.l.b16 %v2277
    %v2920 = vunpack.c.h.b16 %v2277
    %v2921 = vunpack.c.l.b16 %v2278
    %v2922 = vunpack.c.h.b16 %v2278
    %v2923 = vunpack.c.l.b16 %v2279
    %v2924 = vunpack.c.h.b16 %v2279
    %v2925 = vunpack.c.l.b16 %v2280
    %v2926 = vunpack.c.h.b16 %v2280
    %v2927 = vunpack.c.l.b16 %v2281
    %v2928 = vunpack.c.h.b16 %v2281
    %v2929 = vunpack.c.l.b16 %v2282
    %v2930 = vunpack.c.h.b16 %v2282
    %v2931 = vunpack.c.l.b16 %v2283
    %v2932 = vunpack.c.h.b16 %v2283
    %v2933 = vunpack.c.l.b16 %v2284
    %v2934 = vunpack.c.h.b16 %v2284
    %v2935 = vunpack.c.l.b16 %v2285
    %v2936 = vunpack.c.h.b16 %v2285
    %v2937 = vunpack.c.l.b16 %v2286
    %v2938 = vunpack.c.h.b16 %v2286
    %v2939 = vunpack.c.l.b16 %v2287
    %v2940 = vunpack.c.h.b16 %v2287
    %v2941 = vunpack.c.l.b16 %v2288
    %v2942 = vunpack.c.h.b16 %v2288
    %v2943 = vunpack.c.l.b16 %v2289
    %v2944 = vunpack.c.h.b16 %v2289
    %v2945 = vunpack.c.l.b16 %v2290
    %v2946 = vunpack.c.h.b16 %v2290
    %v2947 = vunpack.c.l.b16 %v2291
    %v2948 = vunpack.c.h.b16 %v2291
    %v2949 = vunpack.c.l.b16 %v2292
    %v2950 = vunpack.c.h.b16 %v2292
    %v2951 = vunpack.c.l.b16 %v2293
    %v2952 = vunpack.c.h.b16 %v2293
    %v2953 = vunpack.c.l.b16 %v2294
    %v2954 = vunpack.c.h.b16 %v2294
    %v2955 = vunpack.c.l.b16 %v2295
    %v2956 = vunpack.c.h.b16 %v2295
    %v2957 = vunpack.c.l.b16 %v2296
    %v2958 = vunpack.c.h.b16 %v2296
    %v2959 = vunpack.c.l.b16 %v2297
    %v2960 = vunpack.c.h.b16 %v2297
    %v2961 = vunpack.c.l.b16 %v2298
    %v2962 = vunpack.c.h.b16 %v2298
    %v2963 = vunpack.c.l.b16 %v2299
    %v2964 = vunpack.c.h.b16 %v2299
    %v2965 = vunpack.c.l.b16 %v2300
    %v2966 = vunpack.c.h.b16 %v2300
    %v2967 = vunpack.c.l.b16 %v2301
    %v2968 = vunpack.c.h.b16 %v2301
    %v2969 = vunpack.c.l.b16 %v2302
    %v2970 = vunpack.c.h.b16 %v2302
    %v2971 = vunpack.c.l.b16 %v2303
    %v2972 = vunpack.c.h.b16 %v2303
    %v2973 = vunpack.c.l.b16 %v2304
    %v2974 = vunpack.c.h.b16 %v2304
    %v2975 = vunpack.c.l.b16 %v2305
    %v2976 = vunpack.c.h.b16 %v2305
    %v2977 = vunpack.c.l.b16 %v2306
    %v2978 = vunpack.c.h.b16 %v2306
    %v2979 = vunpack.c.l.b16 %v2307
    %v2980 = vunpack.c.h.b16 %v2307
    %v2981 = vunpack.c.l.b16 %v2308
    %v2982 = vunpack.c.h.b16 %v2308
    %v2983 = vunpack.c.l.b16 %v2309
    %v2984 = vunpack.c.h.b16 %v2309
    %v2985 = vunpack.c.l.b16 %v2310
    %v2986 = vunpack.c.h.b16 %v2310
    %v2987 = vunpack.c.l.b16 %v2311
    %v2988 = vunpack.c.h.b16 %v2311
    %v2989 = vunpack.c.l.b16 %v2312
    %v2990 = vunpack.c.h.b16 %v2312
    %v2991 = vunpack.c.l.b16 %v2313
    %v2992 = vunpack.c.h.b16 %v2313
    %v2993 = vunpack.c.l.b16 %v2314
    %v2994 = vunpack.c.h.b16 %v2314
    %v2995 = vunpack.c.l.b16 %v2315
    %v2996 = vunpack.c.h.b16 %v2315
    %v2997 = vunpack.c.l.b16 %v2316
    %v2998 = vunpack.c.h.b16 %v2316
    %v2999 = vunpack.c.l.b16 %v2317
    %v3000 = vunpack.c.h.b16 %v2317
    %v3001 = vunpack.c.l.b16 %v2318
    %v3002 = vunpack.c.h.b16 %v2318
    %v3003 = vunpack.c.l.b16 %v2319
    %v3004 = vunpack.c.h.b16 %v2319
    %v3005 = vunpack.c.l.b16 %v2320
    %v3006 = vunpack.c.h.b16 %v2320
    %v3007 = vunpack.c.l.b16 %v2321
    %v3008 = vunpack.c.h.b16 %v2321
    %v3009 = vunpack.c.l.b16 %v2322
    %v3010 = vunpack.c.h.b16 %v2322
    %v3011 = vunpack.c.l.b16 %v2323
    %v3012 = vunpack.c.h.b16 %v2323
    %v3013 = vunpack.c.l.b16 %v2324
    %v3014 = vunpack.c.h.b16 %v2324
    %v3015 = vunpack.c.l.b16 %v2325
    %v3016 = vunpack.c.h.b16 %v2325
    %v3017 = vunpack.c.l.b16 %v2326
    %v3018 = vunpack.c.h.b16 %v2326
    %v3019 = vunpack.c.l.b16 %v2327
    %v3020 = vunpack.c.h.b16 %v2327
    %v3021 = vunpack.c.l.b16 %v2328
    %v3022 = vunpack.c.h.b16 %v2328
    %v3023 = vunpack.c.l.b16 %v2329
    %v3024 = vunpack.c.h.b16 %v2329
    %v3025 = vunpack.c.l.b16 %v2330
    %v3026 = vunpack.c.h.b16 %v2330
    %v3027 = vunpack.c.l.b16 %v2331
    %v3028 = vunpack.c.h.b16 %v2331
    %v3029 = vunpack.c.l.b16 %v2332
    %v3030 = vunpack.c.h.b16 %v2332
    %v3031 = vunpack.c.l.b16 %v2333
    %v3032 = vunpack.c.h.b16 %v2333
    %v3033 = vunpack.c.l.b16 %v2334
    %v3034 = vunpack.c.h.b16 %v2334
    %v3035 = vunpack.c.l.b16 %v2335
    %v3036 = vunpack.c.h.b16 %v2335
    %v3037 = vunpack.c.l.b16 %v2336
    %v3038 = vunpack.c.h.b16 %v2336
    %v3039 = vunpack.c.l.b16 %v2337
    %v3040 = vunpack.c.h.b16 %v2337
    %v3041 = vunpack.c.l.b16 %v2338
    %v3042 = vunpack.c.h.b16 %v2338
    %v3043 = vunpack.c.l.b16 %v2339
    %v3044 = vunpack.c.h.b16 %v2339
    %v3045 = vunpack.c.l.b16 %v2340
    %v3046 = vunpack.c.h.b16 %v2340
    %v3047 = vunpack.c.l.b16 %v2341
    %v3048 = vunpack.c.h.b16 %v2341
    %v3049 = vunpack.c.l.b16 %v2342
    %v3050 = vunpack.c.h.b16 %v2342
    %v3051 = vunpack.c.l.b16 %v2343
    %v3052 = vunpack.c.h.b16 %v2343
    %v3053 = vunpack.c.l.b16 %v2344
    %v3054 = vunpack.c.h.b16 %v2344
    %v3055 = vunpack.c.l.b16 %v2345
    %v3056 = vunpack.c.h.b16 %v2345
    %v3057 = vunpack.c.l.b16 %v2346
    %v3058 = vunpack.c.h.b16 %v2346
    %v3059 = vunpack.c.l.b16 %v2347
    %v3060 = vunpack.c.h.b16 %v2347
    %v3061 = vunpack.c.l.b16 %v2348
    %v3062 = vunpack.c.h.b16 %v2348
    %v3063 = vunpack.c.l.b16 %v2349
    %v3064 = vunpack.c.h.b16 %v2349
    %v3065 = vunpack.c.l.b16 %v2350
    %v3066 = vunpack.c.h.b16 %v2350
    %v3067 = vunpack.c.l.b16 %v2351
    %v3068 = vunpack.c.h.b16 %v2351
    %v3069 = vunpack.c.l.b16 %v2352
    %v3070 = vunpack.c.h.b16 %v2352
    %v3071 = vunpack.c.l.b16 %v2353
    %v3072 = vunpack.c.h.b16 %v2353
    %v3073 = vunpack.c.l.b16 %v2354
    %v3074 = vunpack.c.h.b16 %v2354
    %v3075 = vunpack.c.l.b16 %v2355
    %v3076 = vunpack.c.h.b16 %v2355
    %v3077 = vunpack.c.l.b16 %v2356
    %v3078 = vunpack.c.h.b16 %v2356
    %v3079 = vunpack.c.l.b16 %v2357
    %v3080 = vunpack.c.h.b16 %v2357
    %v3081 = vunpack.c.l.b16 %v2358
    %v3082 = vunpack.c.h.b16 %v2358
    %v3083 = vunpack.c.l.b16 %v2359
    %v3084 = vunpack.c.h.b16 %v2359
    %v3085 = vunpack.c.l.b16 %v2360
    %v3086 = vunpack.c.h.b16 %v2360
    %v3087 = vunpack.c.l.b16 %v2361
    %v3088 = vunpack.c.h.b16 %v2361
    %v3089 = vunpack.c.l.b16 %v2362
    %v3090 = vunpack.c.h.b16 %v2362
    %v3091 = vunpack.c.l.b16 %v2363
    %v3092 = vunpack.c.h.b16 %v2363
    %v3093 = vunpack.c.l.b16 %v2364
    %v3094 = vunpack.c.h.b16 %v2364
    %v3095 = vunpack.c.l.b16 %v2365
    %v3096 = vunpack.c.h.b16 %v2365
    %v3097 = vunpack.c.l.b16 %v2366
    %v3098 = vunpack.c.h.b16 %v2366
    %v3099 = vunpack.c.l.b16 %v2367
    %v3100 = vunpack.c.h.b16 %v2367
    %v3101 = vunpack.c.l.b16 %v2368
    %v3102 = vunpack.c.h.b16 %v2368
    %v3103 = vunpack.c.l.b16 %v2369
    %v3104 = vunpack.c.h.b16 %v2369
    %v3105 = vunpack.c.l.b16 %v2370
    %v3106 = vunpack.c.h.b16 %v2370
    %v3107 = vunpack.c.l.b16 %v2371
    %v3108 = vunpack.c.h.b16 %v2371
    %v3109 = vunpack.c.l.b16 %v2372
    %v3110 = vunpack.c.h.b16 %v2372
    %v3111 = vunpack.c.l.b16 %v2373
    %v3112 = vunpack.c.h.b16 %v2373
    %v3113 = vunpack.c.l.b16 %v2374
    %v3114 = vunpack.c.h.b16 %v2374
    %v3115 = vunpack.c.l.b16 %v2375
    %v3116 = vunpack.c.h.b16 %v2375
    %v3117 = vunpack.c.l.b16 %v2376
    %v3118 = vunpack.c.h.b16 %v2376
    %v3119 = vunpack.c.l.b16 %v2377
    %v3120 = vunpack.c.h.b16 %v2377
    %v3121 = vunpack.c.l.b16 %v2378
    %v3122 = vunpack.c.h.b16 %v2378
    %v3123 = vunpack.c.l.b16 %v2379
    %v3124 = vunpack.c.h.b16 %v2379
    %v3125 = vunpack.c.l.b16 %v2380
    %v3126 = vunpack.c.h.b16 %v2380
    %v3127 = vunpack.c.l.b16 %v2381
    %v3128 = vunpack.c.h.b16 %v2381
    %v3129 = vunpack.c.l.b16 %v2382
    %v3130 = vunpack.c.h.b16 %v2382
    %v3131 = vunpack.c.l.b16 %v2383
    %v3132 = vunpack.c.h.b16 %v2383
    %v3133 = vunpack.c.l.b16 %v2384
    %v3134 = vunpack.c.h.b16 %v2384
    %v3135 = vunpack.c.l.b16 %v2385
    %v3136 = vunpack.c.h.b16 %v2385
    %v3137 = vunpack.c.l.b16 %v2386
    %v3138 = vunpack.c.h.b16 %v2386
    %v3139 = vunpack.c.l.b16 %v2387
    %v3140 = vunpack.c.h.b16 %v2387
    %v3141 = vunpack.c.l.b16 %v2388
    %v3142 = vunpack.c.h.b16 %v2388
    %v3143 = vunpack.c.l.b16 %v2389
    %v3144 = vunpack.c.h.b16 %v2389
    %v3145 = vunpack.c.l.b16 %v2390
    %v3146 = vunpack.c.h.b16 %v2390
    %v3147 = vunpack.c.l.b16 %v2391
    %v3148 = vunpack.c.h.b16 %v2391
    %v3149 = vunpack.c.l.b16 %v2392
    %v3150 = vunpack.c.h.b16 %v2392
    %v3151 = vunpack.c.l.b16 %v2393
    %v3152 = vunpack.c.h.b16 %v2393
    %v3153 = vunpack.c.l.b16 %v2394
    %v3154 = vunpack.c.h.b16 %v2394
    %v3155 = vunpack.c.l.b16 %v2395
    %v3156 = vunpack.c.h.b16 %v2395
    %v3157 = vunpack.c.l.b16 %v2396
    %v3158 = vunpack.c.h.b16 %v2396
    %v3159 = vunpack.c.l.b16 %v2397
    %v3160 = vunpack.c.h.b16 %v2397
    %v3161 = vunpack.c.l.b16 %v2398
    %v3162 = vunpack.c.h.b16 %v2398
    %v3163 = vunpack.c.l.b16 %v2399
    %v3164 = vunpack.c.h.b16 %v2399
    %v3165 = vunpack.c.l.b16 %v2400
    %v3166 = vunpack.c.h.b16 %v2400
    %v3167 = vunpack.c.l.b16 %v2401
    %v3168 = vunpack.c.h.b16 %v2401
    %v3169 = vunpack.c.l.b16 %v2402
    %v3170 = vunpack.c.h.b16 %v2402
    %v3171 = vunpack.c.l.b16 %v2403
    %v3172 = vunpack.c.h.b16 %v2403
    %v3173 = vunpack.c.l.b16 %v2404
    %v3174 = vunpack.c.h.b16 %v2404
    %v3175 = vunpack.c.l.b16 %v2405
    %v3176 = vunpack.c.h.b16 %v2405
    %v3177 = vunpack.c.l.b16 %v2406
    %v3178 = vunpack.c.h.b16 %v2406
    %v3179 = vunpack.c.l.b16 %v2407
    %v3180 = vunpack.c.h.b16 %v2407
    %v3181 = vunpack.c.l.b16 %v2408
    %v3182 = vunpack.c.h.b16 %v2408
    %v3183 = vunpack.c.l.b16 %v2409
    %v3184 = vunpack.c.h.b16 %v2409
    %v3185 = vunpack.c.l.b16 %v2410
    %v3186 = vunpack.c.h.b16 %v2410
    %v3187 = vunpack.c.l.b16 %v2411
    %v3188 = vunpack.c.h.b16 %v2411
    %v3189 = vunpack.c.l.b16 %v2412
    %v3190 = vunpack.c.h.b16 %v2412
    %v3191 = vunpack.c.l.b16 %v2413
    %v3192 = vunpack.c.h.b16 %v2413
    %v3193 = vunpack.c.l.b16 %v2414
    %v3194 = vunpack.c.h.b16 %v2414
    %v3195 = vunpack.c.l.b16 %v2415
    %v3196 = vunpack.c.h.b16 %v2415
    %v3197 = vunpack.c.l.b16 %v2416
    %v3198 = vunpack.c.h.b16 %v2416
    %v3199 = vunpack.c.l.b16 %v2417
    %v3200 = vunpack.c.h.b16 %v2417
    %v3201 = vunpack.c.l.b16 %v2418
    %v3202 = vunpack.c.h.b16 %v2418
    %v3203 = vunpack.c.l.b16 %v2419
    %v3204 = vunpack.c.h.b16 %v2419
    %v3205 = vunpack.c.l.b16 %v2420
    %v3206 = vunpack.c.h.b16 %v2420
    %v3207 = vunpack.c.l.b16 %v2421
    %v3208 = vunpack.c.h.b16 %v2421
    %v3209 = vunpack.c.l.b16 %v2422
    %v3210 = vunpack.c.h.b16 %v2422
    %v3211 = vunpack.c.l.b16 %v2423
    %v3212 = vunpack.c.h.b16 %v2423
    %v3213 = vunpack.c.l.b16 %v2424
    %v3214 = vunpack.c.h.b16 %v2424
    %v3215 = vunpack.c.l.b16 %v2425
    %v3216 = vunpack.c.h.b16 %v2425
    %v3217 = vunpack.c.l.b16 %v2426
    %v3218 = vunpack.c.h.b16 %v2426
    %v3219 = vunpack.c.l.b16 %v2427
    %v3220 = vunpack.c.h.b16 %v2427
    %v3221 = vunpack.c.l.b16 %v2428
    %v3222 = vunpack.c.h.b16 %v2428
    %v3223 = vunpack.c.l.b16 %v2429
    %v3224 = vunpack.c.h.b16 %v2429
    %v3225 = vunpack.c.l.b16 %v2430
    %v3226 = vunpack.c.h.b16 %v2430
    %v3227 = vunpack.c.l.b16 %v2431
    %v3228 = vunpack.c.h.b16 %v2431
    %v3229 = vunpack.c.l.b16 %v2432
    %v3230 = vunpack.c.h.b16 %v2432
    %v3231 = vunpack.c.l.b16 %v2433
    %v3232 = vunpack.c.h.b16 %v2433
    %v3233 = vunpack.c.l.b16 %v2434
    %v3234 = vunpack.c.h.b16 %v2434
    %v3235 = vunpack.c.l.b16 %v2435
    %v3236 = vunpack.c.h.b16 %v2435
    %v3237 = vunpack.c.l.b16 %v2436
    %v3238 = vunpack.c.h.b16 %v2436
    %v3239 = vunpack.c.l.b16 %v2437
    %v3240 = vunpack.c.h.b16 %v2437
    %v3241 = vunpack.c.l.b16 %v2438
    %v3242 = vunpack.c.h.b16 %v2438
    %v3243 = vunpack.c.l.b16 %v2439
    %v3244 = vunpack.c.h.b16 %v2439
    %v3245 = vunpack.c.l.b16 %v2440
    %v3246 = vunpack.c.h.b16 %v2440
    %v3247 = vunpack.c.l.b16 %v2441
    %v3248 = vunpack.c.h.b16 %v2441
    %v3249 = vunpack.c.l.b16 %v2442
    %v3250 = vunpack.c.h.b16 %v2442
    %v3251 = vunpack.c.l.b16 %v2443
    %v3252 = vunpack.c.h.b16 %v2443
    %v3253 = vunpack.c.l.b16 %v2444
    %v3254 = vunpack.c.h.b16 %v2444
    %v3255 = vunpack.c.l.b16 %v2445
    %v3256 = vunpack.c.h.b16 %v2445
    %v3257 = vunpack.c.l.b16 %v2446
    %v3258 = vunpack.c.h.b16 %v2446
    %v3259 = vunpack.c.l.b16 %v2447
    %v3260 = vunpack.c.h.b16 %v2447
    %v3261 = vunpack.c.l.b16 %v2448
    %v3262 = vunpack.c.h.b16 %v2448
    %v3263 = vunpack.c.l.b16 %v2449
    %v3264 = vunpack.c.h.b16 %v2449
    %v3265 = vunpack.c.l.b16 %v2450
    %v3266 = vunpack.c.h.b16 %v2450
    %v3267 = vunpack.c.l.b16 %v2451
    %v3268 = vunpack.c.h.b16 %v2451
    %v3269 = vunpack.c.l.b16 %v2452
    %v3270 = vunpack.c.h.b16 %v2452
    %v3271 = vunpack.c.l.b16 %v2453
    %v3272 = vunpack.c.h.b16 %v2453
    %v3273 = vunpack.c.l.b16 %v2454
    %v3274 = vunpack.c.h.b16 %v2454
    %v3275 = vunpack.c.l.b16 %v2455
    %v3276 = vunpack.c.h.b16 %v2455
    %v3277 = vunpack.c.l.b16 %v2456
    %v3278 = vunpack.c.h.b16 %v2456
    %v3279 = vunpack.c.l.b16 %v2457
    %v3280 = vunpack.c.h.b16 %v2457
    %v3281 = vunpack.c.l.b16 %v2458
    %v3282 = vunpack.c.h.b16 %v2458
    %v3283 = vunpack.c.l.b16 %v2459
    %v3284 = vunpack.c.h.b16 %v2459
    %v3285 = vunpack.c.l.b16 %v2460
    %v3286 = vunpack.c.h.b16 %v2460
    %v3287 = vunpack.c.l.b16 %v2461
    %v3288 = vunpack.c.h.b16 %v2461
    %v3289 = vunpack.c.l.b16 %v2462
    %v3290 = vunpack.c.h.b16 %v2462
    %v3291 = vunpack.c.l.b16 %v2463
    %v3292 = vunpack.c.h.b16 %v2463
    %v3293 = vunpack.c.l.b16 %v2464
    %v3294 = vunpack.c.h.b16 %v2464
    %v3295 = vunpack.c.l.b16 %v2465
    %v3296 = vunpack.c.h.b16 %v2465
    %v3297 = vunpack.c.l.b16 %v2466
    %v3298 = vunpack.c.h.b16 %v2466
    %v3299 = vunpack.c.l.b16 %v2467
    %v3300 = vunpack.c.h.b16 %v2467
    %v3301 = vunpack.c.l.b16 %v2468
    %v3302 = vunpack.c.h.b16 %v2468
    %v3303 = vunpack.c.l.b16 %v2469
    %v3304 = vunpack.c.h.b16 %v2469
    %v3305 = vunpack.c.l.b16 %v2470
    %v3306 = vunpack.c.h.b16 %v2470
    %v3307 = vunpack.c.l.b16 %v2471
    %v3308 = vunpack.c.h.b16 %v2471
    %v3309 = vunpack.c.l.b16 %v2472
    %v3310 = vunpack.c.h.b16 %v2472
    %v3311 = vunpack.c.l.b16 %v2473
    %v3312 = vunpack.c.h.b16 %v2473
    %v3313 = vunpack.c.l.b16 %v2474
    %v3314 = vunpack.c.h.b16 %v2474
    %v3315 = vunpack.c.l.b16 %v2475
    %v3316 = vunpack.c.h.b16 %v2475
    %v3317 = vunpack.c.l.b16 %v2476
    %v3318 = vunpack.c.h.b16 %v2476
    %v3319 = vunpack.c.l.b16 %v2477
    %v3320 = vunpack.c.h.b16 %v2477
    %v3321 = vunpack.c.l.b16 %v2478
    %v3322 = vunpack.c.h.b16 %v2478
    %v3323 = vunpack.c.l.b16 %v2479
    %v3324 = vunpack.c.h.b16 %v2479
    %v3325 = vunpack.c.l.b16 %v2480
    %v3326 = vunpack.c.h.b16 %v2480
    %v3327 = vunpack.c.l.b16 %v2481
    %v3328 = vunpack.c.h.b16 %v2481
    %v3329 = vunpack.c.l.b16 %v2482
    %v3330 = vunpack.c.h.b16 %v2482
    %v3331 = vunpack.c.l.b16 %v2483
    %v3332 = vunpack.c.h.b16 %v2483
    %v3333 = vunpack.c.l.b16 %v2484
    %v3334 = vunpack.c.h.b16 %v2484
    %v3335 = vunpack.c.l.b16 %v2485
    %v3336 = vunpack.c.h.b16 %v2485
    %v3337 = vunpack.c.l.b16 %v2486
    %v3338 = vunpack.c.h.b16 %v2486
    %v3339 = vunpack.c.l.b16 %v2487
    %v3340 = vunpack.c.h.b16 %v2487
    %v3341 = vunpack.c.l.b16 %v2488
    %v3342 = vunpack.c.h.b16 %v2488
    %v3343 = vunpack.c.l.b16 %v2489
    %v3344 = vunpack.c.h.b16 %v2489
    %v3345 = vunpack.c.l.b16 %v2490
    %v3346 = vunpack.c.h.b16 %v2490
    %v3347 = vunpack.c.l.b16 %v2491
    %v3348 = vunpack.c.h.b16 %v2491
    %v3349 = vunpack.c.l.b16 %v2492
    %v3350 = vunpack.c.h.b16 %v2492
    %v3351 = vunpack.c.l.b16 %v2493
    %v3352 = vunpack.c.h.b16 %v2493
    %v3353 = vunpack.c.l.b16 %v2494
    %v3354 = vunpack.c.h.b16 %v2494
    %v3355 = vunpack.c.l.b16 %v2495
    %v3356 = vunpack.c.h.b16 %v2495
    %v3357 = vunpack.c.l.b16 %v2496
    %v3358 = vunpack.c.h.b16 %v2496
    %v3359 = vunpack.c.l.b16 %v2497
    %v3360 = vunpack.c.h.b16 %v2497
    %v3361 = vunpack.c.l.b16 %v2498
    %v3362 = vunpack.c.h.b16 %v2498
    %v3363 = vunpack.c.l.b16 %v2499
    %v3364 = vunpack.c.h.b16 %v2499
    %v3365 = vunpack.c.l.b16 %v2500
    %v3366 = vunpack.c.h.b16 %v2500
    %v3367 = vunpack.c.l.b16 %v2501
    %v3368 = vunpack.c.h.b16 %v2501
    %v3369 = vunpack.c.l.b16 %v2502
    %v3370 = vunpack.c.h.b16 %v2502
    %v3371 = vunpack.c.l.b16 %v2503
    %v3372 = vunpack.c.h.b16 %v2503
    %v3373 = vunpack.c.l.b16 %v2504
    %v3374 = vunpack.c.h.b16 %v2504
    %v3375 = vunpack.c.l.b16 %v2505
    %v3376 = vunpack.c.h.b16 %v2505
    %v3377 = vunpack.c.l.b16 %v2506
    %v3378 = vunpack.c.h.b16 %v2506
    %v3379 = vunpack.c.l.b16 %v2507
    %v3380 = vunpack.c.h.b16 %v2507
    %v3381 = vunpack.c.l.b16 %v2508
    %v3382 = vunpack.c.h.b16 %v2508
    %v3383 = vunpack.c.l.b16 %v2509
    %v3384 = vunpack.c.h.b16 %v2509
    %v3385 = vunpack.c.l.b16 %v2510
    %v3386 = vunpack.c.h.b16 %v2510
    %v3387 = vunpack.c.l.b16 %v2511
    %v3388 = vunpack.c.h.b16 %v2511
    %v3389 = vunpack.c.l.b16 %v2512
    %v3390 = vunpack.c.h.b16 %v2512
    %v3391 = vunpack.c.l.b16 %v2513
    %v3392 = vunpack.c.h.b16 %v2513
    %v3393 = vunpack.c.l.b16 %v2514
    %v3394 = vunpack.c.h.b16 %v2514
    %v3395 = vunpack.c.l.b16 %v2515
    %v3396 = vunpack.c.h.b16 %v2515
    %v3397 = vunpack.c.l.b16 %v2516
    %v3398 = vunpack.c.h.b16 %v2516
    %v3399 = vunpack.c.l.b16 %v2517
    %v3400 = vunpack.c.h.b16 %v2517
    %v3401 = vunpack.c.l.b16 %v2518
    %v3402 = vunpack.c.h.b16 %v2518
    %v3403 = vunpack.c.l.b16 %v2519
    %v3404 = vunpack.c.h.b16 %v2519
    %v3405 = vunpack.c.l.b16 %v2520
    %v3406 = vunpack.c.h.b16 %v2520
    %v3407 = vunpack.c.l.b16 %v2521
    %v3408 = vunpack.c.h.b16 %v2521
    %v3409 = vunpack.c.l.b16 %v2522
    %v3410 = vunpack.c.h.b16 %v2522
    %v3411 = vunpack.c.l.b16 %v2523
    %v3412 = vunpack.c.h.b16 %v2523
    %v3413 = vunpack.c.l.b16 %v2524
    %v3414 = vunpack.c.h.b16 %v2524
    %v3415 = vunpack.c.l.b16 %v2525
    %v3416 = vunpack.c.h.b16 %v2525
    %v3417 = vunpack.c.l.b16 %v2526
    %v3418 = vunpack.c.h.b16 %v2526
    %v3419 = vunpack.c.l.b16 %v2527
    %v3420 = vunpack.c.h.b16 %v2527
    %v3421 = vunpack.c.l.b16 %v2528
    %v3422 = vunpack.c.h.b16 %v2528
    %v3423 = vunpack.c.l.b16 %v2529
    %v3424 = vunpack.c.h.b16 %v2529
    %v3425 = vunpack.c.l.b16 %v2530
    %v3426 = vunpack.c.h.b16 %v2530
    %v3427 = vunpack.c.l.b16 %v2531
    %v3428 = vunpack.c.h.b16 %v2531
    %v3429 = vunpack.c.l.b16 %v2532
    %v3430 = vunpack.c.h.b16 %v2532
    %v3431 = vunpack.c.l.b16 %v2533
    %v3432 = vunpack.c.h.b16 %v2533
    %v3433 = vpack.c.b16 %v2863, %v2857
    %v3434 = vpack.c.b16 %v2864, %v2858
    %v3435 = vpack.c.b16 %v2865, %v2859
    %v3436 = vpack.c.b16 %v2866, %v2860
    %v3437 = vpack.c.b16 %v2867, %v2861
    %v3438 = vpack.c.b16 %v2868, %v2862
    %v3439 = vpack.c.b16 %v2875, %v2869
    %v3440 = vpack.c.b16 %v2876, %v2870
    %v3441 = vpack.c.b16 %v2877, %v2871
    %v3442 = vpack.c.b16 %v2878, %v2872
    %v3443 = vpack.c.b16 %v2879, %v2873
    %v3444 = vpack.c.b16 %v2880, %v2874
    %v3445 = vpack.c.b16 %v2887, %v2881
    %v3446 = vpack.c.b16 %v2888, %v2882
    %v3447 = vpack.c.b16 %v2889, %v2883
    %v3448 = vpack.c.b16 %v2890, %v2884
    %v3449 = vpack.c.b16 %v2891, %v2885
    %v3450 = vpack.c.b16 %v2892, %v2886
    %v3451 = vpack.c.b16 %v2899, %v2893
    %v3452 = vpack.c.b16 %v2900, %v2894
    %v3453 = vpack.c.b16 %v2901, %v2895
    %v3454 = vpack.c.b16 %v2902, %v2896
    %v3455 = vpack.c.b16 %v2903, %v2897
    %v3456 = vpack.c.b16 %v2904, %v2898
    %v3457 = vpack.c.b16 %v2911, %v2905
    %v3458 = vpack.c.b16 %v2912, %v2906
    %v3459 = vpack.c.b16 %v2913, %v2907
    %v3460 = vpack.c.b16 %v2914, %v2908
    %v3461 = vpack.c.b16 %v2915, %v2909
    %v3462 = vpack.c.b16 %v2916, %v2910
    %v3463 = vpack.c.b16 %v2923, %v2917
    %v3464 = vpack.c.b16 %v2924, %v2918
    %v3465 = vpack.c.b16 %v2925, %v2919
    %v3466 = vpack.c.b16 %v2926, %v2920
    %v3467 = vpack.c.b16 %v2927, %v2921
    %v3468 = vpack.c.b16 %v2928, %v2922
    %v3469 = vpack.c.b16 %v2935, %v2929
    %v3470 = vpack.c.b16 %v2936, %v2930
    %v3471 = vpack.c.b16 %v2937, %v2931
    %v3472 = vpack.c.b16 %v2938, %v2932
    %v3473 = vpack.c.b16 %v2939, %v2933
    %v3474 = vpack.c.b16 %v2940, %v2934
    %v3475 = vpack.c.b16 %v2947, %v2941
    %v3476 = vpack.c.b16 %v2948, %v2942
    %v3477 = vpack.c.b16 %v2949, %v2943
    %v3478 = vpack.c.b16 %v2950, %v2944
    %v3479 = vpack.c.b16 %v2951, %v2945
    %v3480 = vpack.c.b16 %v2952, %v2946
    %v3481 = vpack.c.b16 %v2959, %v2953
    %v3482 = vpack.c.b16 %v2960, %v2954
    %v3483 = vpack.c.b16 %v2961, %v2955
    %v3484 = vpack.c.b16 %v2962, %v2956
    %v3485 = vpack.c.b16 %v2963, %v2957
    %v3486 = vpack.c.b16 %v2964, %v2958
    %v3487 = vpack.c.b16 %v2971, %v2965
    %v3488 = vpack.c.b16 %v2972, %v2966
    %v3489 = vpack.c.b16 %v2973, %v2967
    %v3490 = vpack.c.b16 %v2974, %v2968
    %v3491 = vpack.c.b16 %v2975, %v2969
    %v3492 = vpack.c.b16 %v2976, %v2970
    %v3493 = vpack.c.b16 %v2983, %v2977
    %v3494 = vpack.c.b16 %v2984, %v2978
    %v3495 = vpack.c.b16 %v2985, %v2979
    %v3496 = vpack.c.b16 %v2986, %v2980
    %v3497 = vpack.c.b16 %v2987, %v2981
    %v3498 = vpack.c.b16 %v2988, %v2982
    %v3499 = vpack.c.b16 %v2995, %v2989
    %v3500 = vpack.c.b16 %v2996, %v2990
    %v3501 = vpack.c.b16 %v2997, %v2991
    %v3502 = vpack.c.b16 %v2998, %v2992
    %v3503 = vpack.c.b16 %v2999, %v2993
    %v3504 = vpack.c.b16 %v3000, %v2994
    %v3505 = vpack.c.b16 %v3007, %v3001
    %v3506 = vpack.c.b16 %v3008, %v3002
    %v3507 = vpack.c.b16 %v3009, %v3003
    %v3508 = vpack.c.b16 %v3010, %v3004
    %v3509 = vpack.c.b16 %v3011, %v3005
    %v3510 = vpack.c.b16 %v3012, %v3006
    %v3511 = vpack.c.b16 %v3019, %v3013
    %v3512 = vpack.c.b16 %v3020, %v3014
    %v3513 = vpack.c.b16 %v3021, %v3015
    %v3514 = vpack.c.b16 %v3022, %v3016
    %v3515 = vpack.c.b16 %v3023, %v3017
    %v3516 = vpack.c.b16 %v3024, %v3018
    %v3517 = vpack.c.b16 %v3031, %v3025
    %v3518 = vpack.c.b16 %v3032, %v3026
    %v3519 = vpack.c.b16 %v3033, %v3027
    %v3520 = vpack.c.b16 %v3034, %v3028
    %v3521 = vpack.c.b16 %v3035, %v3029
    %v3522 = vpack.c.b16 %v3036, %v3030
    %v3523 = vpack.c.b16 %v3043, %v3037
    %v3524 = vpack.c.b16 %v3044, %v3038
    %v3525 = vpack.c.b16 %v3045, %v3039
    %v3526 = vpack.c.b16 %v3046, %v3040
    %v3527 = vpack.c.b16 %v3047, %v3041
    %v3528 = vpack.c.b16 %v3048, %v3042
    %v3529 = vpack.c.b16 %v3055, %v3049
    %v3530 = vpack.c.b16 %v3056, %v3050
    %v3531 = vpack.c.b16 %v3057, %v3051
    %v3532 = vpack.c.b16 %v3058, %v3052
    %v3533 = vpack.c.b16 %v3059, %v3053
    %v3534 = vpack.c.b16 %v3060, %v3054
    %v3535 = vpack.c.b16 %v3067, %v3061
    %v3536 = vpack.c.b16 %v3068, %v3062
    %v3537 = vpack.c.b16 %v3069, %v3063
    %v3538 = vpack.c.b16 %v3070, %v3064
    %v3539 = vpack.c.b16 %v3071, %v3065
    %v3540 = vpack.c.b16 %v3072, %v3066
    %v3541 = vpack.c.b16 %v3079, %v3073
    %v3542 = vpack.c.b16 %v3080, %v3074
    %v3543 = vpack.c.b16 %v3081, %v3075
    %v3544 = vpack.c.b16 %v3082, %v3076
    %v3545 = vpack.c.b16 %v3083, %v3077
    %v3546 = vpack.c.b16 %v3084, %v3078
    %v3547 = vpack.c.b16 %v3091, %v3085
    %v3548 = vpack.c.b16 %v3092, %v3086
    %v3549 = vpack.c.b16 %v3093, %v3087
    %v3550 = vpack.c.b16 %v3094, %v3088
    %v3551 = vpack.c.b16 %v3095, %v3089
    %v3552 = vpack.c.b16 %v3096, %v3090
    %v3553 = vpack.c.b16 %v3103, %v3097
    %v3554 = vpack.c.b16 %v3104, %v3098
    %v3555 = vpack.c.b16 %v3105, %v3099
    %v3556 = vpack.c.b16 %v3106, %v3100
    %v3557 = vpack.c.b16 %v3107, %v3101
    %v3558 = vpack.c.b16 %v3108, %v3102
    %v3559 = vpack.c.b16 %v3115, %v3109
    %v3560 = vpack.c.b16 %v3116, %v3110
    %v3561 = vpack.c.b16 %v3117, %v3111
    %v3562 = vpack.c.b16 %v3118, %v3112
    %v3563 = vpack.c.b16 %v3119, %v3113
    %v3564 = vpack.c.b16 %v3120, %v3114
    %v3565 = vpack.c.b16 %v3127, %v3121
    %v3566 = vpack.c.b16 %v3128, %v3122
    %v3567 = vpack.c.b16 %v3129, %v3123
    %v3568 = vpack.c.b16 %v3130, %v3124
    %v3569 = vpack.c.b16 %v3131, %v3125
    %v3570 = vpack.c.b16 %v3132, %v3126
    %v3571 = vpack.c.b16 %v3139, %v3133
    %v3572 = vpack.c.b16 %v3140, %v3134
    %v3573 = vpack.c.b16 %v3141, %v3135
    %v3574 = vpack.c.b16 %v3142, %v3136
    %v3575 = vpack.c.b16 %v3143, %v3137
    %v3576 = vpack.c.b16 %v3144, %v3138
    %v3577 = vpack.c.b16 %v3151, %v3145
    %v3578 = vpack.c.b16 %v3152, %v3146
    %v3579 = vpack.c.b16 %v3153, %v3147
    %v3580 = vpack.c.b16 %v3154, %v3148
    %v3581 = vpack.c.b16 %v3155, %v3149
    %v3582 = vpack.c.b16 %v3156, %v3150
    %v3583 = vpack.c.b16 %v3163, %v3157
    %v3584 = vpack.c.b16 %v3164, %v3158
    %v3585 = vpack.c.b16 %v3165, %v3159
    %v3586 = vpack.c.b16 %v3166, %v3160
    %v3587 = vpack.c.b16 %v3167, %v3161
    %v3588 = vpack.c.b16 %v3168, %v3162
    %v3589 = vpack.c.b16 %v3175, %v3169
    %v3590 = vpack.c.b16 %v3176, %v3170
    %v3591 = vpack.c.b16 %v3177, %v3171
    %v3592 = vpack.c.b16 %v3178, %v3172
    %v3593 = vpack.c.b16 %v3179, %v3173
    %v3594 = vpack.c.b16 %v3180, %v3174
    %v3595 = vpack.c.b16 %v3187, %v3181
    %v3596 = vpack.c.b16 %v3188, %v3182
    %v3597 = vpack.c.b16 %v3189, %v3183
    %v3598 = vpack.c.b16 %v3190, %v3184
    %v3599 = vpack.c.b16 %v3191, %v3185
    %v3600 = vpack.c.b16 %v3192, %v3186
    %v3601 = vpack.c.b16 %v3199, %v3193
    %v3602 = vpack.c.b16 %v3200, %v3194
    %v3603 = vpack.c.b16 %v3201, %v3195
    %v3604 = vpack.c.b16 %v3202, %v3196
    %v3605 = vpack.c.b16 %v3203, %v3197
    %v3606 = vpack.c.b16 %v3204, %v3198
    %v3607 = vpack.c.b16 %v3211, %v3205
    %v3608 = vpack.c.b16 %v3212, %v3206
    %v3609 = vpack.c.b16 %v3213, %v3207
    %v3610 = vpack.c.b16 %v3214, %v3208
    %v3611 = vpack.c.b16 %v3215, %v3209
    %v3612 = vpack.c.b16 %v3216, %v3210
    %v3613 = vpack.c.b16 %v3223, %v3217
    %v3614 = vpack.c.b16 %v3224, %v3218
    %v3615 = vpack.c.b16 %v3225, %v3219
    %v3616 = vpack.c.b16 %v3226, %v3220
    %v3617 = vpack.c.b16 %v3227, %v3221
    %v3618 = vpack.c.b16 %v3228, %v3222
    %v3619 = vpack.c.b16 %v3235, %v3229
    %v3620 = vpack.c.b16 %v3236, %v3230
    %v3621 = vpack.c.b16 %v3237, %v3231
    %v3622 = vpack.c.b16 %v3238, %v3232
    %v3623 = vpack.c.b16 %v3239, %v3233
    %v3624 = vpack.c.b16 %v3240, %v3234
    %v3625 = vpack.c.b16 %v3247, %v3241
    %v3626 = vpack.c.b16 %v3248, %v3242
    %v3627 = vpack.c.b16 %v3249, %v3243
    %v3628 = vpack.c.b16 %v3250, %v3244
    %v3629 = vpack.c.b16 %v3251, %v3245
    %v3630 = vpack.c.b16 %v3252, %v3246
    %v3631 = vpack.c.b16 %v3259, %v3253
    %v3632 = vpack.c.b16 %v3260, %v3254
    %v3633 = vpack.c.b16 %v3261, %v3255
    %v3634 = vpack.c.b16 %v3262, %v3256
    %v3635 = vpack.c.b16 %v3263, %v3257
    %v3636 = vpack.c.b16 %v3264, %v3258
    %v3637 = vpack.c.b16 %v3271, %v3265
    %v3638 = vpack.c.b16 %v3272, %v3266
    %v3639 = vpack.c.b16 %v3273, %v3267
    %v3640 = vpack.c.b16 %v3274, %v3268
    %v3641 = vpack.c.b16 %v3275, %v3269
    %v3642 = vpack.c.b16 %v3276, %v3270
    %v3643 = vpack.c.b16 %v3283, %v3277
    %v3644 = vpack.c.b16 %v3284, %v3278
    %v3645 = vpack.c.b16 %v3285, %v3279
    %v3646 = vpack.c.b16 %v3286, %v3280
    %v3647 = vpack.c.b16 %v3287, %v3281
    %v3648 = vpack.c.b16 %v3288, %v3282
    %v3649 = vpack.c.b16 %v3295, %v3289
    %v3650 = vpack.c.b16 %v3296, %v3290
    %v3651 = vpack.c.b16 %v3297, %v3291
    %v3652 = vpack.c.b16 %v3298, %v3292
    %v3653 = vpack.c.b16 %v3299, %v3293
    %v3654 = vpack.c.b16 %v3300, %v3294
    %v3655 = vpack.c.b16 %v3307, %v3301
    %v3656 = vpack.c.b16 %v3308, %v3302
    %v3657 = vpack.c.b16 %v3309, %v3303
    %v3658 = vpack.c.b16 %v3310, %v3304
    %v3659 = vpack.c.b16 %v3311, %v3305
    %v3660 = vpack.c.b16 %v3312, %v3306
    %v3661 = vpack.c.b16 %v3319, %v3313
    %v3662 = vpack.c.b16 %v3320, %v3314
    %v3663 = vpack.c.b16 %v3321, %v3315
    %v3664 = vpack.c.b16 %v3322, %v3316
    %v3665 = vpack.c.b16 %v3323, %v3317
    %v3666 = vpack.c.b16 %v3324, %v3318
    %v3667 = vpack.c.b16 %v3331, %v3325
    %v3668 = vpack.c.b16 %v3332, %v3326
    %v3669 = vpack.c.b16 %v3333, %v3327
    %v3670 = vpack.c.b16 %v3334, %v3328
    %v3671 = vpack.c.b16 %v3335, %v3329
    %v3672 = vpack.c.b16 %v3336, %v3330
    %v3673 = vpack.c.b16 %v3343, %v3337
    %v3674 = vpack.c.b16 %v3344, %v3338
    %v3675 = vpack.c.b16 %v3345, %v3339
    %v3676 = vpack.c.b16 %v3346, %v3340
    %v3677 = vpack.c.b16 %v3347, %v3341
    %v3678 = vpack.c.b16 %v3348, %v3342
    %v3679 = vpack.c.b16 %v3355, %v3349
    %v3680 = vpack.c.b16 %v3356, %v3350
    %v3681 = vpack.c.b16 %v3357, %v3351
    %v3682 = vpack.c.b16 %v3358, %v3352
    %v3683 = vpack.c.b16 %v3359, %v3353
    %v3684 = vpack.c.b16 %v3360, %v3354
    %v3685 = vpack.c.b16 %v3367, %v3361
    %v3686 = vpack.c.b16 %v3368, %v3362
    %v3687 = vpack.c.b16 %v3369, %v3363
    %v3688 = vpack.c.b16 %v3370, %v3364
    %v3689 = vpack.c.b16 %v3371, %v3365
    %v3690 = vpack.c.b16 %v3372, %v3366
    %v3691 = vpack.c.b16 %v3379, %v3373
    %v3692 = vpack.c.b16 %v3380, %v3374
    %v3693 = vpack.c.b16 %v3381, %v3375
    %v3694 = vpack.c.b16 %v3382, %v3376
    %v3695 = vpack.c.b16 %v3383, %v3377
    %v3696 = vpack.c.b16 %v3384, %v3378
    %v3697 = vpack.c.b16 %v3391, %v3385
    %v3698 = vpack.c.b16 %v3392, %v3386
    %v3699 = vpack.c.b16 %v3393, %v3387
    %v3700 = vpack.c.b16 %v3394, %v3388
    %v3701 = vpack.c.b16 %v3395, %v3389
    %v3702 = vpack.c.b16 %v3396, %v3390
    %v3703 = vpack.c.b16 %v3403, %v3397
    %v3704 = vpack.c.b16 %v3404, %v3398
    %v3705 = vpack.c.b16 %v3405, %v3399
    %v3706 = vpack.c.b16 %v3406, %v3400
    %v3707 = vpack.c.b16 %v3407, %v3401
    %v3708 = vpack.c.b16 %v3408, %v3402
    %v3709 = vpack.c.b16 %v3415, %v3409
    %v3710 = vpack.c.b16 %v3416, %v3410
    %v3711 = vpack.c.b16 %v3417, %v3411
    %v3712 = vpack.c.b16 %v3418, %v3412
    %v3713 = vpack.c.b16 %v3419, %v3413
    %v3714 = vpack.c.b16 %v3420, %v3414
    %v3715 = vpack.c.b16 %v3427, %v3421
    %v3716 = vpack.c.b16 %v3428, %v3422
    %v3717 = vpack.c.b16 %v3429, %v3423
    %v3718 = vpack.c.b16 %v3430, %v3424
    %v3719 = vpack.c.b16 %v3431, %v3425
    %v3720 = vpack.c.b16 %v3432, %v3426
    %4009 = vmatprep.subr.bf16.mxu0 %v3434
    %4010 = vmatpush1.bf16.msra.mxu0 %v3433
    %4011 = vmatprep.subr.bf16.mxu0 %v3440
    %4012 = vmatpush1.bf16.msra.mxu0 %v3439
    %4013 = vmatprep.subr.bf16.mxu0 %v3446
    %4014 = vmatpush1.bf16.msra.mxu0 %v3445
    %4015 = vmatprep.subr.bf16.mxu0 %v3452
    %4016 = vmatpush1.bf16.msra.mxu0 %v3451
    %4017 = vmatprep.subr.bf16.mxu0 %v3458
    %4018 = vmatpush1.bf16.msra.mxu0 %v3457
    %4019 = vmatprep.subr.bf16.mxu0 %v3464
    %4020 = vmatpush1.bf16.msra.mxu0 %v3463
    %4021 = vmatprep.subr.bf16.mxu0 %v3470
    %4022 = vmatpush1.bf16.msra.mxu0 %v3469
    %4023 = vmatprep.subr.bf16.mxu0 %v3476
    %4024 = vmatpush1.bf16.msra.mxu0 %v3475
    %4025 = vmatprep.subr.bf16.mxu0 %v3482
    %4026 = vmatpush1.bf16.msra.mxu0 %v3481
    %4027 = vmatprep.subr.bf16.mxu0 %v3488
    %4028 = vmatpush1.bf16.msra.mxu0 %v3487
    %4029 = vmatprep.subr.bf16.mxu0 %v3494
    %4030 = vmatpush1.bf16.msra.mxu0 %v3493
    %4031 = vmatprep.subr.bf16.mxu0 %v3500
    %4032 = vmatpush1.bf16.msra.mxu0 %v3499
    %4033 = vmatprep.subr.bf16.mxu0 %v3506
    %4034 = vmatpush1.bf16.msra.mxu0 %v3505
    %4035 = vmatprep.subr.bf16.mxu0 %v3512
    %4036 = vmatpush1.bf16.msra.mxu0 %v3511
    %4037 = vmatprep.subr.bf16.mxu0 %v3518
    %4038 = vmatpush1.bf16.msra.mxu0 %v3517
    %4039 = vmatprep.subr.bf16.mxu0 %v3524
    %4040 = vmatpush1.bf16.msra.mxu0 %v3523
    %4041 = vmatprep.mubr.bf16.mxu0 %v2240
    %4042 = vmatmul.mubr.bf16.gmra.mrb[0].mxu0 %v2239
    %v4043 = vpop.f32.mrb[0].mxu0
    %v4044 = vadd.f32 %v2542, %v4043
    %v4045 = vpop.f32.mrb[0].mxu0
    %v4046 = vadd.f32 %v2546, %v4045
    %v4047 = vpop.f32.mrb[0].mxu0
    %v4048 = vpop.f32.mrb[0].mxu0
    %4049 = vdwg.mxu0
    %4050 = vmatprep.subr.bf16.mxu0 %v3530
    %4051 = vmatpush1.bf16.msra.mxu0 %v3529
    %4052 = vmatprep.subr.bf16.mxu0 %v3536
    %4053 = vmatpush1.bf16.msra.mxu0 %v3535
    %4054 = vmatprep.subr.bf16.mxu0 %v3542
    %4055 = vmatpush1.bf16.msra.mxu0 %v3541
    %4056 = vmatprep.subr.bf16.mxu0 %v3548
    %4057 = vmatpush1.bf16.msra.mxu0 %v3547
    %4058 = vmatprep.subr.bf16.mxu0 %v3554
    %4059 = vmatpush1.bf16.msra.mxu0 %v3553
    %4060 = vmatprep.subr.bf16.mxu0 %v3560
    %4061 = vmatpush1.bf16.msra.mxu0 %v3559
    %4062 = vmatprep.subr.bf16.mxu0 %v3566
    %4063 = vmatpush1.bf16.msra.mxu0 %v3565
    %4064 = vmatprep.subr.bf16.mxu0 %v3572
    %4065 = vmatpush1.bf16.msra.mxu0 %v3571
    %4066 = vmatprep.subr.bf16.mxu0 %v3578
    %4067 = vmatpush1.bf16.msra.mxu0 %v3577
    %4068 = vmatprep.subr.bf16.mxu0 %v3584
    %4069 = vmatpush1.bf16.msra.mxu0 %v3583
    %4070 = vmatprep.subr.bf16.mxu0 %v3590
    %4071 = vmatpush1.bf16.msra.mxu0 %v3589
    %4072 = vmatprep.subr.bf16.mxu0 %v3596
    %4073 = vmatpush1.bf16.msra.mxu0 %v3595
    %4074 = vmatprep.subr.bf16.mxu0 %v3602
    %4075 = vmatpush1.bf16.msra.mxu0 %v3601
    %4076 = vmatprep.subr.bf16.mxu0 %v3608
    %4077 = vmatpush1.bf16.msra.mxu0 %v3607
    %4078 = vmatprep.subr.bf16.mxu0 %v3614
    %4079 = vmatpush1.bf16.msra.mxu0 %v3613
    %4080 = vmatprep.subr.bf16.mxu0 %v3620
    %4081 = vmatpush1.bf16.msra.mxu0 %v3619
    %4082 = vmatprep.mubr.bf16.mxu0 %v2242
    %4083 = vmatmul.mubr.bf16.gmra.mrb[0].mxu0 %v2241
    %v4084 = vpop.f32.mrb[0].mxu0
    %v4085 = vadd.f32 %v4044, %v4084
    %v4086 = vpop.f32.mrb[0].mxu0
    %v4087 = vadd.f32 %v4046, %v4086
    %v4088 = vpop.f32.mrb[0].mxu0
    %v4089 = vpop.f32.mrb[0].mxu0
    %4090 = vdwg.mxu0
    %4091 = vmatprep.subr.bf16.mxu0 %v3626
    %4092 = vmatpush1.bf16.msra.mxu0 %v3625
    %4093 = vmatprep.subr.bf16.mxu0 %v3632
    %4094 = vmatpush1.bf16.msra.mxu0 %v3631
    %4095 = vmatprep.subr.bf16.mxu0 %v3638
    %4096 = vmatpush1.bf16.msra.mxu0 %v3637
    %4097 = vmatprep.subr.bf16.mxu0 %v3644
    %4098 = vmatpush1.bf16.msra.mxu0 %v3643
    %4099 = vmatprep.subr.bf16.mxu0 %v3650
    %4100 = vmatpush1.bf16.msra.mxu0 %v3649
    %4101 = vmatprep.subr.bf16.mxu0 %v3656
    %4102 = vmatpush1.bf16.msra.mxu0 %v3655
    %4103 = vmatprep.subr.bf16.mxu0 %v3662
    %4104 = vmatpush1.bf16.msra.mxu0 %v3661
    %4105 = vmatprep.subr.bf16.mxu0 %v3668
    %4106 = vmatpush1.bf16.msra.mxu0 %v3667
    %4107 = vmatprep.subr.bf16.mxu0 %v3674
    %4108 = vmatpush1.bf16.msra.mxu0 %v3673
    %4109 = vmatprep.subr.bf16.mxu0 %v3680
    %4110 = vmatpush1.bf16.msra.mxu0 %v3679
    %4111 = vmatprep.subr.bf16.mxu0 %v3686
    %4112 = vmatpush1.bf16.msra.mxu0 %v3685
    %4113 = vmatprep.subr.bf16.mxu0 %v3692
    %4114 = vmatpush1.bf16.msra.mxu0 %v3691
    %4115 = vmatprep.subr.bf16.mxu0 %v3698
    %4116 = vmatpush1.bf16.msra.mxu0 %v3697
    %4117 = vmatprep.subr.bf16.mxu0 %v3704
    %4118 = vmatpush1.bf16.msra.mxu0 %v3703
    %4119 = vmatprep.subr.bf16.mxu0 %v3710
    %4120 = vmatpush1.bf16.msra.mxu0 %v3709
    %4121 = vmatprep.subr.bf16.mxu0 %v3716
    %4122 = vmatpush1.bf16.msra.mxu0 %v3715
    %4123 = vmatprep.mubr.bf16.mxu0 %v2244
    %4124 = vmatmul.mubr.bf16.gmra.mrb[0].mxu0 %v2243
    %v4125 = vpop.f32.mrb[0].mxu0
    %v4126 = vadd.f32 %v4085, %v4125
    %v4127 = vpop.f32.mrb[0].mxu0
    %v4128 = vadd.f32 %v4087, %v4127
    %v4129 = vpop.f32.mrb[0].mxu0
    %v4130 = vpop.f32.mrb[0].mxu0
    %4131 = vdwg.mxu0
    %4132 = vmatprep.subr.bf16.mxu0 %v3436
    %4133 = vmatpush1.bf16.msra.mxu0 %v3435
    %4134 = vmatprep.subr.bf16.mxu0 %v3442
    %4135 = vmatpush1.bf16.msra.mxu0 %v3441
    %4136 = vmatprep.subr.bf16.mxu0 %v3448
    %4137 = vmatpush1.bf16.msra.mxu0 %v3447
    %4138 = vmatprep.subr.bf16.mxu0 %v3454
    %4139 = vmatpush1.bf16.msra.mxu0 %v3453
    %4140 = vmatprep.subr.bf16.mxu0 %v3460
    %4141 = vmatpush1.bf16.msra.mxu0 %v3459
    %4142 = vmatprep.subr.bf16.mxu0 %v3466
    %4143 = vmatpush1.bf16.msra.mxu0 %v3465
    %4144 = vmatprep.subr.bf16.mxu0 %v3472
    %4145 = vmatpush1.bf16.msra.mxu0 %v3471
    %4146 = vmatprep.subr.bf16.mxu0 %v3478
    %4147 = vmatpush1.bf16.msra.mxu0 %v3477
    %4148 = vmatprep.subr.bf16.mxu0 %v3484
    %4149 = vmatpush1.bf16.msra.mxu0 %v3483
    %4150 = vmatprep.subr.bf16.mxu0 %v3490
    %4151 = vmatpush1.bf16.msra.mxu0 %v3489
    %4152 = vmatprep.subr.bf16.mxu0 %v3496
    %4153 = vmatpush1.bf16.msra.mxu0 %v3495
    %4154 = vmatprep.subr.bf16.mxu0 %v3502
    %4155 = vmatpush1.bf16.msra.mxu0 %v3501
    %4156 = vmatprep.subr.bf16.mxu0 %v3508
    %4157 = vmatpush1.bf16.msra.mxu0 %v3507
    %4158 = vmatprep.subr.bf16.mxu0 %v3514
    %4159 = vmatpush1.bf16.msra.mxu0 %v3513
    %4160 = vmatprep.subr.bf16.mxu0 %v3520
    %4161 = vmatpush1.bf16.msra.mxu0 %v3519
    %4162 = vmatprep.subr.bf16.mxu0 %v3526
    %4163 = vmatpush1.bf16.msra.mxu0 %v3525
    %4164 = vmatprep.mubr.bf16.mxu0 %v2240
    %4165 = vmatmul.mubr.bf16.gmra.mrb[0].mxu0 %v2239
    %v4166 = vpop.f32.mrb[0].mxu0
    %v4167 = vadd.f32 %v2550, %v4166
    %v4168 = vpop.f32.mrb[0].mxu0
    %v4169 = vadd.f32 %v2554, %v4168
    %v4170 = vpop.f32.mrb[0].mxu0
    %v4171 = vpop.f32.mrb[0].mxu0
    %4172 = vdwg.mxu0
    %4173 = vmatprep.subr.bf16.mxu0 %v3532
    %4174 = vmatpush1.bf16.msra.mxu0 %v3531
    %4175 = vmatprep.subr.bf16.mxu0 %v3538
    %4176 = vmatpush1.bf16.msra.mxu0 %v3537
    %4177 = vmatprep.subr.bf16.mxu0 %v3544
    %4178 = vmatpush1.bf16.msra.mxu0 %v3543
    %4179 = vmatprep.subr.bf16.mxu0 %v3550
    %4180 = vmatpush1.bf16.msra.mxu0 %v3549
    %4181 = vmatprep.subr.bf16.mxu0 %v3556
    %4182 = vmatpush1.bf16.msra.mxu0 %v3555
    %4183 = vmatprep.subr.bf16.mxu0 %v3562
    %4184 = vmatpush1.bf16.msra.mxu0 %v3561
    %4185 = vmatprep.subr.bf16.mxu0 %v3568
    %4186 = vmatpush1.bf16.msra.mxu0 %v3567
    %4187 = vmatprep.subr.bf16.mxu0 %v3574
    %4188 = vmatpush1.bf16.msra.mxu0 %v3573
    %4189 = vmatprep.subr.bf16.mxu0 %v3580
    %4190 = vmatpush1.bf16.msra.mxu0 %v3579
    %4191 = vmatprep.subr.bf16.mxu0 %v3586
    %4192 = vmatpush1.bf16.msra.mxu0 %v3585
    %4193 = vmatprep.subr.bf16.mxu0 %v3592
    %4194 = vmatpush1.bf16.msra.mxu0 %v3591
    %4195 = vmatprep.subr.bf16.mxu0 %v3598
    %4196 = vmatpush1.bf16.msra.mxu0 %v3597
    %4197 = vmatprep.subr.bf16.mxu0 %v3604
    %4198 = vmatpush1.bf16.msra.mxu0 %v3603
    %4199 = vmatprep.subr.bf16.mxu0 %v3610
    %4200 = vmatpush1.bf16.msra.mxu0 %v3609
    %4201 = vmatprep.subr.bf16.mxu0 %v3616
    %4202 = vmatpush1.bf16.msra.mxu0 %v3615
    %4203 = vmatprep.subr.bf16.mxu0 %v3622
    %4204 = vmatpush1.bf16.msra.mxu0 %v3621
    %4205 = vmatprep.mubr.bf16.mxu0 %v2242
    %4206 = vmatmul.mubr.bf16.gmra.mrb[0].mxu0 %v2241
    %v4207 = vpop.f32.mrb[0].mxu0
    %v4208 = vadd.f32 %v4167, %v4207
    %v4209 = vpop.f32.mrb[0].mxu0
    %v4210 = vadd.f32 %v4169, %v4209
    %v4211 = vpop.f32.mrb[0].mxu0
    %v4212 = vpop.f32.mrb[0].mxu0
    %4213 = vdwg.mxu0
    %4214 = vmatprep.subr.bf16.mxu0 %v3628
    %4215 = vmatpush1.bf16.msra.mxu0 %v3627
    %4216 = vmatprep.subr.bf16.mxu0 %v3634
    %4217 = vmatpush1.bf16.msra.mxu0 %v3633
    %4218 = vmatprep.subr.bf16.mxu0 %v3640
    %4219 = vmatpush1.bf16.msra.mxu0 %v3639
    %4220 = vmatprep.subr.bf16.mxu0 %v3646
    %4221 = vmatpush1.bf16.msra.mxu0 %v3645
    %4222 = vmatprep.subr.bf16.mxu0 %v3652
    %4223 = vmatpush1.bf16.msra.mxu0 %v3651
    %4224 = vmatprep.subr.bf16.mxu0 %v3658
    %4225 = vmatpush1.bf16.msra.mxu0 %v3657
    %4226 = vmatprep.subr.bf16.mxu0 %v3664
    %4227 = vmatpush1.bf16.msra.mxu0 %v3663
    %4228 = vmatprep.subr.bf16.mxu0 %v3670
    %4229 = vmatpush1.bf16.msra.mxu0 %v3669
    %4230 = vmatprep.subr.bf16.mxu0 %v3676
    %4231 = vmatpush1.bf16.msra.mxu0 %v3675
    %4232 = vmatprep.subr.bf16.mxu0 %v3682
    %4233 = vmatpush1.bf16.msra.mxu0 %v3681
    %4234 = vmatprep.subr.bf16.mxu0 %v3688
    %4235 = vmatpush1.bf16.msra.mxu0 %v3687
    %4236 = vmatprep.subr.bf16.mxu0 %v3694
    %4237 = vmatpush1.bf16.msra.mxu0 %v3693
    %4238 = vmatprep.subr.bf16.mxu0 %v3700
    %4239 = vmatpush1.bf16.msra.mxu0 %v3699
    %4240 = vmatprep.subr.bf16.mxu0 %v3706
    %4241 = vmatpush1.bf16.msra.mxu0 %v3705
    %4242 = vmatprep.subr.bf16.mxu0 %v3712
    %4243 = vmatpush1.bf16.msra.mxu0 %v3711
    %4244 = vmatprep.subr.bf16.mxu0 %v3718
    %4245 = vmatpush1.bf16.msra.mxu0 %v3717
    %4246 = vmatprep.mubr.bf16.mxu0 %v2244
    %4247 = vmatmul.mubr.bf16.gmra.mrb[0].mxu0 %v2243
    %v4248 = vpop.f32.mrb[0].mxu0
    %v4249 = vadd.f32 %v4208, %v4248
    %v4250 = vpop.f32.mrb[0].mxu0
    %v4251 = vadd.f32 %v4210, %v4250
    %v4252 = vpop.f32.mrb[0].mxu0
    %v4253 = vpop.f32.mrb[0].mxu0
    %4254 = vdwg.mxu0
    %4255 = vmatprep.subr.bf16.mxu0 %v3438
    %4256 = vmatpush1.bf16.msra.mxu0 %v3437
    %4257 = vmatprep.subr.bf16.mxu0 %v3444
    %4258 = vmatpush1.bf16.msra.mxu0 %v3443
    %4259 = vmatprep.subr.bf16.mxu0 %v3450
    %4260 = vmatpush1.bf16.msra.mxu0 %v3449
    %4261 = vmatprep.subr.bf16.mxu0 %v3456
    %4262 = vmatpush1.bf16.msra.mxu0 %v3455
    %4263 = vmatprep.subr.bf16.mxu0 %v3462
    %4264 = vmatpush1.bf16.msra.mxu0 %v3461
    %4265 = vmatprep.subr.bf16.mxu0 %v3468
    %4266 = vmatpush1.bf16.msra.mxu0 %v3467
    %4267 = vmatprep.subr.bf16.mxu0 %v3474
    %4268 = vmatpush1.bf16.msra.mxu0 %v3473
    %4269 = vmatprep.subr.bf16.mxu0 %v3480
    %4270 = vmatpush1.bf16.msra.mxu0 %v3479
    %4271 = vmatprep.subr.bf16.mxu0 %v3486
    %4272 = vmatpush1.bf16.msra.mxu0 %v3485
    %4273 = vmatprep.subr.bf16.mxu0 %v3492
    %4274 = vmatpush1.bf16.msra.mxu0 %v3491
    %4275 = vmatprep.subr.bf16.mxu0 %v3498
    %4276 = vmatpush1.bf16.msra.mxu0 %v3497
    %4277 = vmatprep.subr.bf16.mxu0 %v3504
    %4278 = vmatpush1.bf16.msra.mxu0 %v3503
    %4279 = vmatprep.subr.bf16.mxu0 %v3510
    %4280 = vmatpush1.bf16.msra.mxu0 %v3509
    %4281 = vmatprep.subr.bf16.mxu0 %v3516
    %4282 = vmatpush1.bf16.msra.mxu0 %v3515
    %4283 = vmatprep.subr.bf16.mxu0 %v3522
    %4284 = vmatpush1.bf16.msra.mxu0 %v3521
    %4285 = vmatprep.subr.bf16.mxu0 %v3528
    %4286 = vmatpush1.bf16.msra.mxu0 %v3527
    %4287 = vmatprep.mubr.bf16.mxu0 %v2240
    %4288 = vmatmul.mubr.bf16.gmra.mrb[0].mxu0 %v2239
    %v4289 = vpop.f32.mrb[0].mxu0
    %v4290 = vadd.f32 %v2558, %v4289
    %v4291 = vpop.f32.mrb[0].mxu0
    %v4292 = vadd.f32 %v2562, %v4291
    %v4293 = vpop.f32.mrb[0].mxu0
    %v4294 = vpop.f32.mrb[0].mxu0
    %4295 = vdwg.mxu0
    %4296 = vmatprep.subr.bf16.mxu0 %v3534
    %4297 = vmatpush1.bf16.msra.mxu0 %v3533
    %4298 = vmatprep.subr.bf16.mxu0 %v3540
    %4299 = vmatpush1.bf16.msra.mxu0 %v3539
    %4300 = vmatprep.subr.bf16.mxu0 %v3546
    %4301 = vmatpush1.bf16.msra.mxu0 %v3545
    %4302 = vmatprep.subr.bf16.mxu0 %v3552
    %4303 = vmatpush1.bf16.msra.mxu0 %v3551
    %4304 = vmatprep.subr.bf16.mxu0 %v3558
    %4305 = vmatpush1.bf16.msra.mxu0 %v3557
    %4306 = vmatprep.subr.bf16.mxu0 %v3564
    %4307 = vmatpush1.bf16.msra.mxu0 %v3563
    %4308 = vmatprep.subr.bf16.mxu0 %v3570
    %4309 = vmatpush1.bf16.msra.mxu0 %v3569
    %4310 = vmatprep.subr.bf16.mxu0 %v3576
    %4311 = vmatpush1.bf16.msra.mxu0 %v3575
    %4312 = vmatprep.subr.bf16.mxu0 %v3582
    %4313 = vmatpush1.bf16.msra.mxu0 %v3581
    %4314 = vmatprep.subr.bf16.mxu0 %v3588
    %4315 = vmatpush1.bf16.msra.mxu0 %v3587
    %4316 = vmatprep.subr.bf16.mxu0 %v3594
    %4317 = vmatpush1.bf16.msra.mxu0 %v3593
    %4318 = vmatprep.subr.bf16.mxu0 %v3600
    %4319 = vmatpush1.bf16.msra.mxu0 %v3599
    %4320 = vmatprep.subr.bf16.mxu0 %v3606
    %4321 = vmatpush1.bf16.msra.mxu0 %v3605
    %4322 = vmatprep.subr.bf16.mxu0 %v3612
    %4323 = vmatpush1.bf16.msra.mxu0 %v3611
    %4324 = vmatprep.subr.bf16.mxu0 %v3618
    %4325 = vmatpush1.bf16.msra.mxu0 %v3617
    %4326 = vmatprep.subr.bf16.mxu0 %v3624
    %4327 = vmatpush1.bf16.msra.mxu0 %v3623
    %4328 = vmatprep.mubr.bf16.mxu0 %v2242
    %4329 = vmatmul.mubr.bf16.gmra.mrb[0].mxu0 %v2241
    %v4330 = vpop.f32.mrb[0].mxu0
    %v4331 = vadd.f32 %v4290, %v4330
    %v4332 = vpop.f32.mrb[0].mxu0
    %v4333 = vadd.f32 %v4292, %v4332
    %v4334 = vpop.f32.mrb[0].mxu0
    %v4335 = vpop.f32.mrb[0].mxu0
    %4336 = vdwg.mxu0
    %4337 = vmatprep.subr.bf16.mxu0 %v3630
    %4338 = vmatpush1.bf16.msra.mxu0 %v3629
    %4339 = vmatprep.subr.bf16.mxu0 %v3636
    %4340 = vmatpush1.bf16.msra.mxu0 %v3635
    %4341 = vmatprep.subr.bf16.mxu0 %v3642
    %4342 = vmatpush1.bf16.msra.mxu0 %v3641
    %4343 = vmatprep.subr.bf16.mxu0 %v3648
    %4344 = vmatpush1.bf16.msra.mxu0 %v3647
    %4345 = vmatprep.subr.bf16.mxu0 %v3654
    %4346 = vmatpush1.bf16.msra.mxu0 %v3653
    %4347 = vmatprep.subr.bf16.mxu0 %v3660
    %4348 = vmatpush1.bf16.msra.mxu0 %v3659
    %4349 = vmatprep.subr.bf16.mxu0 %v3666
    %4350 = vmatpush1.bf16.msra.mxu0 %v3665
    %4351 = vmatprep.subr.bf16.mxu0 %v3672
    %4352 = vmatpush1.bf16.msra.mxu0 %v3671
    %4353 = vmatprep.subr.bf16.mxu0 %v3678
    %4354 = vmatpush1.bf16.msra.mxu0 %v3677
    %4355 = vmatprep.subr.bf16.mxu0 %v3684
    %4356 = vmatpush1.bf16.msra.mxu0 %v3683
    %4357 = vmatprep.subr.bf16.mxu0 %v3690
    %4358 = vmatpush1.bf16.msra.mxu0 %v3689
    %4359 = vmatprep.subr.bf16.mxu0 %v3696
    %4360 = vmatpush1.bf16.msra.mxu0 %v3695
    %4361 = vmatprep.subr.bf16.mxu0 %v3702
    %4362 = vmatpush1.bf16.msra.mxu0 %v3701
    %4363 = vmatprep.subr.bf16.mxu0 %v3708
    %4364 = vmatpush1.bf16.msra.mxu0 %v3707
    %4365 = vmatprep.subr.bf16.mxu0 %v3714
    %4366 = vmatpush1.bf16.msra.mxu0 %v3713
    %4367 = vmatprep.subr.bf16.mxu0 %v3720
    %4368 = vmatpush1.bf16.msra.mxu0 %v3719
    %4369 = vmatprep.mubr.bf16.mxu0 %v2244
    %4370 = vmatmul.mubr.bf16.gmra.mrb[0].mxu0 %v2243
    %v4371 = vpop.f32.mrb[0].mxu0
    %v4372 = vadd.f32 %v4331, %v4371
    %v4373 = vpop.f32.mrb[0].mxu0
    %v4374 = vadd.f32 %v4333, %v4373
    %v4375 = vpop.f32.mrb[0].mxu0
    %v4376 = vpop.f32.mrb[0].mxu0
    %4377 = vdwg.mxu0
    %v4378 = vstv %s2237
    %v4379 = vmul.f32 %v4378, %v2231
    %v4380 = vmul.f32 %v4378, %v2232
    %v4381 = vmul.f32 %v4378, %v2233
    %v4382 = vmul.f32 %v4378, %v2234
    %v4383 = vmul.f32 %v4378, %v2235
    %v4384 = vmul.f32 %v4378, %v2236
    %v4385 = vadd.f32 %v4126, %v4379
    %v4386 = vadd.f32 %v4128, %v4380
    %v4387 = vadd.f32 %v4249, %v4381
    %v4388 = vadd.f32 %v4251, %v4382
    %v4389 = vadd.f32 %v4372, %v4383
    %v4390 = vadd.f32 %v4374, %v4384
    %v4391 = vstv %s2238
    %v4392 = vmul.f32 %v4391, %v4385
    %v4393 = vmul.f32 %v4391, %v4386
    %v4394 = vmul.f32 %v4391, %v4387
    %v4395 = vmul.f32 %v4391, %v4388
    %v4396 = vmul.f32 %v4391, %v4389
    %v4397 = vmul.f32 %v4391, %v4390
    %v4398 = vmax.f32 %v4385, %v4392
    %v4399 = vmax.f32 %v4386, %v4393
    %v4400 = vmax.f32 %v4387, %v4394
    %v4401 = vmax.f32 %v4388, %v4395
    %v4402 = vmax.f32 %v4389, %v4396
    %v4403 = vmax.f32 %v4390, %v4397
    %s4404 = sld [smem:[#allocation2 + $0x4]]
    %s4405 = sld [smem:[#allocation2 + $0x5]]
    %v4406 = vpack.c.bf16 %v4398, %v4398
    %v4407 = vpack.c.bf16 %v4399, %v4399
    %v4408 = vpack.c.bf16 %v4400, %v4400
    %v4409 = vpack.c.bf16 %v4401, %v4401
    %v4410 = vpack.c.bf16 %v4402, %v4402
    %v4411 = vpack.c.bf16 %v4403, %v4403
    %s4412 = scalar_lea.vmem [#allocation7], 4608
    %v4413 = vld [vmem:[%s4412] sm:$0xff]
    %v4414 = vld [vmem:[%s4412 + $0x8] sm:$0xff]
    %v4415 = vld [vmem:[%s4412 + $0x10] sm:$0xff]
    %v4416 = vld [vmem:[%s4412 + $0x18] sm:$0xff]
    %v4417 = vld [vmem:[%s4412 + $0x20] sm:$0xff]
    %v4418 = vld [vmem:[%s4412 + $0x28] sm:$0xff]
    %v4419 = vld [vmem:[%s4412 + $0x30] sm:$0xff]
    %v4420 = vld [vmem:[%s4412 + $0x38] sm:$0xff]
    %v4421 = vld [vmem:[%s4412 + $0x40] sm:$0xff]
    %v4422 = vld [vmem:[%s4412 + $0x48] sm:$0xff]
    %v4423 = vld [vmem:[%s4412 + $0x50] sm:$0xff]
    %v4424 = vld [vmem:[%s4412 + $0x58] sm:$0xff]
    %v4425 = vld [vmem:[%s4412 + $0x60] sm:$0xff]
    %v4426 = vld [vmem:[%s4412 + $0x68] sm:$0xff]
    %v4427 = vld [vmem:[%s4412 + $0x70] sm:$0xff]
    %v4428 = vld [vmem:[%s4412 + $0x78] sm:$0xff]
    %v4429 = vld [vmem:[%s4412 + $0x80] sm:$0xff]
    %v4430 = vld [vmem:[%s4412 + $0x88] sm:$0xff]
    %v4431 = vld [vmem:[%s4412 + $0x90] sm:$0xff]
    %v4432 = vld [vmem:[%s4412 + $0x98] sm:$0xff]
    %v4433 = vld [vmem:[%s4412 + $0xa0] sm:$0xff]
    %v4434 = vld [vmem:[%s4412 + $0xa8] sm:$0xff]
    %v4435 = vld [vmem:[%s4412 + $0xb0] sm:$0xff]
    %v4436 = vld [vmem:[%s4412 + $0xb8] sm:$0xff]
    %v4437 = vld [vmem:[%s4412 + $0xc0] sm:$0xff]
    %v4438 = vld [vmem:[%s4412 + $0xc8] sm:$0xff]
    %v4439 = vld [vmem:[%s4412 + $0xd0] sm:$0xff]
    %v4440 = vld [vmem:[%s4412 + $0xd8] sm:$0xff]
    %v4441 = vld [vmem:[%s4412 + $0xe0] sm:$0xff]
    %v4442 = vld [vmem:[%s4412 + $0xe8] sm:$0xff]
    %v4443 = vld [vmem:[%s4412 + $0xf0] sm:$0xff]
    %v4444 = vld [vmem:[%s4412 + $0xf8] sm:$0xff]
    %v4445 = vld [vmem:[%s4412 + $0x100] sm:$0xff]
    %v4446 = vld [vmem:[%s4412 + $0x108] sm:$0xff]
    %v4447 = vld [vmem:[%s4412 + $0x110] sm:$0xff]
    %v4448 = vld [vmem:[%s4412 + $0x118] sm:$0xff]
    %v4449 = vld [vmem:[%s4412 + $0x120] sm:$0xff]
    %v4450 = vld [vmem:[%s4412 + $0x128] sm:$0xff]
    %v4451 = vld [vmem:[%s4412 + $0x130] sm:$0xff]
    %v4452 = vld [vmem:[%s4412 + $0x138] sm:$0xff]
    %v4453 = vld [vmem:[%s4412 + $0x140] sm:$0xff]
    %v4454 = vld [vmem:[%s4412 + $0x148] sm:$0xff]
    %v4455 = vld [vmem:[%s4412 + $0x150] sm:$0xff]
    %v4456 = vld [vmem:[%s4412 + $0x158] sm:$0xff]
    %v4457 = vld [vmem:[%s4412 + $0x160] sm:$0xff]
    %v4458 = vld [vmem:[%s4412 + $0x168] sm:$0xff]
    %v4459 = vld [vmem:[%s4412 + $0x170] sm:$0xff]
    %v4460 = vld [vmem:[%s4412 + $0x178] sm:$0xff]
    %v4461 = vld [vmem:[%s4412 + $0x180] sm:$0xff]
    %v4462 = vld [vmem:[%s4412 + $0x188] sm:$0xff]
    %v4463 = vld [vmem:[%s4412 + $0x190] sm:$0xff]
    %v4464 = vld [vmem:[%s4412 + $0x198] sm:$0xff]
    %v4465 = vld [vmem:[%s4412 + $0x1a0] sm:$0xff]
    %v4466 = vld [vmem:[%s4412 + $0x1a8] sm:$0xff]
    %v4467 = vld [vmem:[%s4412 + $0x1b0] sm:$0xff]
    %v4468 = vld [vmem:[%s4412 + $0x1b8] sm:$0xff]
    %v4469 = vld [vmem:[%s4412 + $0x1c0] sm:$0xff]
    %v4470 = vld [vmem:[%s4412 + $0x1c8] sm:$0xff]
    %v4471 = vld [vmem:[%s4412 + $0x1d0] sm:$0xff]
    %v4472 = vld [vmem:[%s4412 + $0x1d8] sm:$0xff]
    %v4473 = vld [vmem:[%s4412 + $0x1e0] sm:$0xff]
    %v4474 = vld [vmem:[%s4412 + $0x1e8] sm:$0xff]
    %v4475 = vld [vmem:[%s4412 + $0x1f0] sm:$0xff]
    %v4476 = vld [vmem:[%s4412 + $0x1f8] sm:$0xff]
    %v4477 = vld [vmem:[%s4412 + $0x200] sm:$0xff]
    %v4478 = vld [vmem:[%s4412 + $0x208] sm:$0xff]
    %v4479 = vld [vmem:[%s4412 + $0x210] sm:$0xff]
    %v4480 = vld [vmem:[%s4412 + $0x218] sm:$0xff]
    %v4481 = vld [vmem:[%s4412 + $0x220] sm:$0xff]
    %v4482 = vld [vmem:[%s4412 + $0x228] sm:$0xff]
    %v4483 = vld [vmem:[%s4412 + $0x230] sm:$0xff]
    %v4484 = vld [vmem:[%s4412 + $0x238] sm:$0xff]
    %v4485 = vld [vmem:[%s4412 + $0x240] sm:$0xff]
    %v4486 = vld [vmem:[%s4412 + $0x248] sm:$0xff]
    %v4487 = vld [vmem:[%s4412 + $0x250] sm:$0xff]
    %v4488 = vld [vmem:[%s4412 + $0x258] sm:$0xff]
    %v4489 = vld [vmem:[%s4412 + $0x260] sm:$0xff]
    %v4490 = vld [vmem:[%s4412 + $0x268] sm:$0xff]
    %v4491 = vld [vmem:[%s4412 + $0x270] sm:$0xff]
    %v4492 = vld [vmem:[%s4412 + $0x278] sm:$0xff]
    %v4493 = vld [vmem:[%s4412 + $0x280] sm:$0xff]
    %v4494 = vld [vmem:[%s4412 + $0x288] sm:$0xff]
    %v4495 = vld [vmem:[%s4412 + $0x290] sm:$0xff]
    %v4496 = vld [vmem:[%s4412 + $0x298] sm:$0xff]
    %v4497 = vld [vmem:[%s4412 + $0x2a0] sm:$0xff]
    %v4498 = vld [vmem:[%s4412 + $0x2a8] sm:$0xff]
    %v4499 = vld [vmem:[%s4412 + $0x2b0] sm:$0xff]
    %v4500 = vld [vmem:[%s4412 + $0x2b8] sm:$0xff]
    %v4501 = vld [vmem:[%s4412 + $0x2c0] sm:$0xff]
    %v4502 = vld [vmem:[%s4412 + $0x2c8] sm:$0xff]
    %v4503 = vld [vmem:[%s4412 + $0x2d0] sm:$0xff]
    %v4504 = vld [vmem:[%s4412 + $0x2d8] sm:$0xff]
    %v4505 = vld [vmem:[%s4412 + $0x2e0] sm:$0xff]
    %v4506 = vld [vmem:[%s4412 + $0x2e8] sm:$0xff]
    %v4507 = vld [vmem:[%s4412 + $0x2f0] sm:$0xff]
    %v4508 = vld [vmem:[%s4412 + $0x2f8] sm:$0xff]
    %v4509 = vld [vmem:[%s4412 + $0x300] sm:$0xff]
    %v4510 = vld [vmem:[%s4412 + $0x308] sm:$0xff]
    %v4511 = vld [vmem:[%s4412 + $0x310] sm:$0xff]
    %v4512 = vld [vmem:[%s4412 + $0x318] sm:$0xff]
    %v4513 = vld [vmem:[%s4412 + $0x320] sm:$0xff]
    %v4514 = vld [vmem:[%s4412 + $0x328] sm:$0xff]
    %v4515 = vld [vmem:[%s4412 + $0x330] sm:$0xff]
    %v4516 = vld [vmem:[%s4412 + $0x338] sm:$0xff]
    %v4517 = vld [vmem:[%s4412 + $0x340] sm:$0xff]
    %v4518 = vld [vmem:[%s4412 + $0x348] sm:$0xff]
    %v4519 = vld [vmem:[%s4412 + $0x350] sm:$0xff]
    %v4520 = vld [vmem:[%s4412 + $0x358] sm:$0xff]
    %v4521 = vld [vmem:[%s4412 + $0x360] sm:$0xff]
    %v4522 = vld [vmem:[%s4412 + $0x368] sm:$0xff]
    %v4523 = vld [vmem:[%s4412 + $0x370] sm:$0xff]
    %v4524 = vld [vmem:[%s4412 + $0x378] sm:$0xff]
    %v4525 = vld [vmem:[%s4412 + $0x380] sm:$0xff]
    %v4526 = vld [vmem:[%s4412 + $0x388] sm:$0xff]
    %v4527 = vld [vmem:[%s4412 + $0x390] sm:$0xff]
    %v4528 = vld [vmem:[%s4412 + $0x398] sm:$0xff]
    %v4529 = vld [vmem:[%s4412 + $0x3a0] sm:$0xff]
    %v4530 = vld [vmem:[%s4412 + $0x3a8] sm:$0xff]
    %v4531 = vld [vmem:[%s4412 + $0x3b0] sm:$0xff]
    %v4532 = vld [vmem:[%s4412 + $0x3b8] sm:$0xff]
    %v4533 = vld [vmem:[%s4412 + $0x3c0] sm:$0xff]
    %v4534 = vld [vmem:[%s4412 + $0x3c8] sm:$0xff]
    %v4535 = vld [vmem:[%s4412 + $0x3d0] sm:$0xff]
    %v4536 = vld [vmem:[%s4412 + $0x3d8] sm:$0xff]
    %v4537 = vld [vmem:[%s4412 + $0x3e0] sm:$0xff]
    %v4538 = vld [vmem:[%s4412 + $0x3e8] sm:$0xff]
    %v4539 = vld [vmem:[%s4412 + $0x3f0] sm:$0xff]
    %v4540 = vld [vmem:[%s4412 + $0x3f8] sm:$0xff]
    %v4541 = vld [vmem:[%s4412 + $0x400] sm:$0xff]
    %v4542 = vld [vmem:[%s4412 + $0x408] sm:$0xff]
    %v4543 = vld [vmem:[%s4412 + $0x410] sm:$0xff]
    %v4544 = vld [vmem:[%s4412 + $0x418] sm:$0xff]
    %v4545 = vld [vmem:[%s4412 + $0x420] sm:$0xff]
    %v4546 = vld [vmem:[%s4412 + $0x428] sm:$0xff]
    %v4547 = vld [vmem:[%s4412 + $0x430] sm:$0xff]
    %v4548 = vld [vmem:[%s4412 + $0x438] sm:$0xff]
    %v4549 = vld [vmem:[%s4412 + $0x440] sm:$0xff]
    %v4550 = vld [vmem:[%s4412 + $0x448] sm:$0xff]
    %v4551 = vld [vmem:[%s4412 + $0x450] sm:$0xff]
    %v4552 = vld [vmem:[%s4412 + $0x458] sm:$0xff]
    %v4553 = vld [vmem:[%s4412 + $0x460] sm:$0xff]
    %v4554 = vld [vmem:[%s4412 + $0x468] sm:$0xff]
    %v4555 = vld [vmem:[%s4412 + $0x470] sm:$0xff]
    %v4556 = vld [vmem:[%s4412 + $0x478] sm:$0xff]
    %v4557 = vld [vmem:[%s4412 + $0x480] sm:$0xff]
    %v4558 = vld [vmem:[%s4412 + $0x488] sm:$0xff]
    %v4559 = vld [vmem:[%s4412 + $0x490] sm:$0xff]
    %v4560 = vld [vmem:[%s4412 + $0x498] sm:$0xff]
    %v4561 = vld [vmem:[%s4412 + $0x4a0] sm:$0xff]
    %v4562 = vld [vmem:[%s4412 + $0x4a8] sm:$0xff]
    %v4563 = vld [vmem:[%s4412 + $0x4b0] sm:$0xff]
    %v4564 = vld [vmem:[%s4412 + $0x4b8] sm:$0xff]
    %v4565 = vld [vmem:[%s4412 + $0x4c0] sm:$0xff]
    %v4566 = vld [vmem:[%s4412 + $0x4c8] sm:$0xff]
    %v4567 = vld [vmem:[%s4412 + $0x4d0] sm:$0xff]
    %v4568 = vld [vmem:[%s4412 + $0x4d8] sm:$0xff]
    %v4569 = vld [vmem:[%s4412 + $0x4e0] sm:$0xff]
    %v4570 = vld [vmem:[%s4412 + $0x4e8] sm:$0xff]
    %v4571 = vld [vmem:[%s4412 + $0x4f0] sm:$0xff]
    %v4572 = vld [vmem:[%s4412 + $0x4f8] sm:$0xff]
    %v4573 = vld [vmem:[%s4412 + $0x500] sm:$0xff]
    %v4574 = vld [vmem:[%s4412 + $0x508] sm:$0xff]
    %v4575 = vld [vmem:[%s4412 + $0x510] sm:$0xff]
    %v4576 = vld [vmem:[%s4412 + $0x518] sm:$0xff]
    %v4577 = vld [vmem:[%s4412 + $0x520] sm:$0xff]
    %v4578 = vld [vmem:[%s4412 + $0x528] sm:$0xff]
    %v4579 = vld [vmem:[%s4412 + $0x530] sm:$0xff]
    %v4580 = vld [vmem:[%s4412 + $0x538] sm:$0xff]
    %v4581 = vld [vmem:[%s4412 + $0x540] sm:$0xff]
    %v4582 = vld [vmem:[%s4412 + $0x548] sm:$0xff]
    %v4583 = vld [vmem:[%s4412 + $0x550] sm:$0xff]
    %v4584 = vld [vmem:[%s4412 + $0x558] sm:$0xff]
    %v4585 = vld [vmem:[%s4412 + $0x560] sm:$0xff]
    %v4586 = vld [vmem:[%s4412 + $0x568] sm:$0xff]
    %v4587 = vld [vmem:[%s4412 + $0x570] sm:$0xff]
    %v4588 = vld [vmem:[%s4412 + $0x578] sm:$0xff]
    %v4589 = vld [vmem:[%s4412 + $0x580] sm:$0xff]
    %v4590 = vld [vmem:[%s4412 + $0x588] sm:$0xff]
    %v4591 = vld [vmem:[%s4412 + $0x590] sm:$0xff]
    %v4592 = vld [vmem:[%s4412 + $0x598] sm:$0xff]
    %v4593 = vld [vmem:[%s4412 + $0x5a0] sm:$0xff]
    %v4594 = vld [vmem:[%s4412 + $0x5a8] sm:$0xff]
    %v4595 = vld [vmem:[%s4412 + $0x5b0] sm:$0xff]
    %v4596 = vld [vmem:[%s4412 + $0x5b8] sm:$0xff]
    %v4597 = vld [vmem:[%s4412 + $0x5c0] sm:$0xff]
    %v4598 = vld [vmem:[%s4412 + $0x5c8] sm:$0xff]
    %v4599 = vld [vmem:[%s4412 + $0x5d0] sm:$0xff]
    %v4600 = vld [vmem:[%s4412 + $0x5d8] sm:$0xff]
    %v4601 = vld [vmem:[%s4412 + $0x5e0] sm:$0xff]
    %v4602 = vld [vmem:[%s4412 + $0x5e8] sm:$0xff]
    %v4603 = vld [vmem:[%s4412 + $0x5f0] sm:$0xff]
    %v4604 = vld [vmem:[%s4412 + $0x5f8] sm:$0xff]
    %v4605 = vld [vmem:[%s4412 + $0x600] sm:$0xff]
    %v4606 = vld [vmem:[%s4412 + $0x608] sm:$0xff]
    %v4607 = vld [vmem:[%s4412 + $0x610] sm:$0xff]
    %v4608 = vld [vmem:[%s4412 + $0x618] sm:$0xff]
    %v4609 = vld [vmem:[%s4412 + $0x620] sm:$0xff]
    %v4610 = vld [vmem:[%s4412 + $0x628] sm:$0xff]
    %v4611 = vld [vmem:[%s4412 + $0x630] sm:$0xff]
    %v4612 = vld [vmem:[%s4412 + $0x638] sm:$0xff]
    %v4613 = vld [vmem:[%s4412 + $0x640] sm:$0xff]
    %v4614 = vld [vmem:[%s4412 + $0x648] sm:$0xff]
    %v4615 = vld [vmem:[%s4412 + $0x650] sm:$0xff]
    %v4616 = vld [vmem:[%s4412 + $0x658] sm:$0xff]
    %v4617 = vld [vmem:[%s4412 + $0x660] sm:$0xff]
    %v4618 = vld [vmem:[%s4412 + $0x668] sm:$0xff]
    %v4619 = vld [vmem:[%s4412 + $0x670] sm:$0xff]
    %v4620 = vld [vmem:[%s4412 + $0x678] sm:$0xff]
    %v4621 = vld [vmem:[%s4412 + $0x680] sm:$0xff]
    %v4622 = vld [vmem:[%s4412 + $0x688] sm:$0xff]
    %v4623 = vld [vmem:[%s4412 + $0x690] sm:$0xff]
    %v4624 = vld [vmem:[%s4412 + $0x698] sm:$0xff]
    %v4625 = vld [vmem:[%s4412 + $0x6a0] sm:$0xff]
    %v4626 = vld [vmem:[%s4412 + $0x6a8] sm:$0xff]
    %v4627 = vld [vmem:[%s4412 + $0x6b0] sm:$0xff]
    %v4628 = vld [vmem:[%s4412 + $0x6b8] sm:$0xff]
    %v4629 = vld [vmem:[%s4412 + $0x6c0] sm:$0xff]
    %v4630 = vld [vmem:[%s4412 + $0x6c8] sm:$0xff]
    %v4631 = vld [vmem:[%s4412 + $0x6d0] sm:$0xff]
    %v4632 = vld [vmem:[%s4412 + $0x6d8] sm:$0xff]
    %v4633 = vld [vmem:[%s4412 + $0x6e0] sm:$0xff]
    %v4634 = vld [vmem:[%s4412 + $0x6e8] sm:$0xff]
    %v4635 = vld [vmem:[%s4412 + $0x6f0] sm:$0xff]
    %v4636 = vld [vmem:[%s4412 + $0x6f8] sm:$0xff]
    %v4637 = vld [vmem:[%s4412 + $0x700] sm:$0xff]
    %v4638 = vld [vmem:[%s4412 + $0x708] sm:$0xff]
    %v4639 = vld [vmem:[%s4412 + $0x710] sm:$0xff]
    %v4640 = vld [vmem:[%s4412 + $0x718] sm:$0xff]
    %v4641 = vld [vmem:[%s4412 + $0x720] sm:$0xff]
    %v4642 = vld [vmem:[%s4412 + $0x728] sm:$0xff]
    %v4643 = vld [vmem:[%s4412 + $0x730] sm:$0xff]
    %v4644 = vld [vmem:[%s4412 + $0x738] sm:$0xff]
    %v4645 = vld [vmem:[%s4412 + $0x740] sm:$0xff]
    %v4646 = vld [vmem:[%s4412 + $0x748] sm:$0xff]
    %v4647 = vld [vmem:[%s4412 + $0x750] sm:$0xff]
    %v4648 = vld [vmem:[%s4412 + $0x758] sm:$0xff]
    %v4649 = vld [vmem:[%s4412 + $0x760] sm:$0xff]
    %v4650 = vld [vmem:[%s4412 + $0x768] sm:$0xff]
    %v4651 = vld [vmem:[%s4412 + $0x770] sm:$0xff]
    %v4652 = vld [vmem:[%s4412 + $0x778] sm:$0xff]
    %v4653 = vld [vmem:[%s4412 + $0x780] sm:$0xff]
    %v4654 = vld [vmem:[%s4412 + $0x788] sm:$0xff]
    %v4655 = vld [vmem:[%s4412 + $0x790] sm:$0xff]
    %v4656 = vld [vmem:[%s4412 + $0x798] sm:$0xff]
    %v4657 = vld [vmem:[%s4412 + $0x7a0] sm:$0xff]
    %v4658 = vld [vmem:[%s4412 + $0x7a8] sm:$0xff]
    %v4659 = vld [vmem:[%s4412 + $0x7b0] sm:$0xff]
    %v4660 = vld [vmem:[%s4412 + $0x7b8] sm:$0xff]
    %v4661 = vld [vmem:[%s4412 + $0x7c0] sm:$0xff]
    %v4662 = vld [vmem:[%s4412 + $0x7c8] sm:$0xff]
    %v4663 = vld [vmem:[%s4412 + $0x7d0] sm:$0xff]
    %v4664 = vld [vmem:[%s4412 + $0x7d8] sm:$0xff]
    %v4665 = vld [vmem:[%s4412 + $0x7e0] sm:$0xff]
    %v4666 = vld [vmem:[%s4412 + $0x7e8] sm:$0xff]
    %v4667 = vld [vmem:[%s4412 + $0x7f0] sm:$0xff]
    %v4668 = vld [vmem:[%s4412 + $0x7f8] sm:$0xff]
    %v4669 = vld [vmem:[%s4412 + $0x800] sm:$0xff]
    %v4670 = vld [vmem:[%s4412 + $0x808] sm:$0xff]
    %v4671 = vld [vmem:[%s4412 + $0x810] sm:$0xff]
    %v4672 = vld [vmem:[%s4412 + $0x818] sm:$0xff]
    %v4673 = vld [vmem:[%s4412 + $0x820] sm:$0xff]
    %v4674 = vld [vmem:[%s4412 + $0x828] sm:$0xff]
    %v4675 = vld [vmem:[%s4412 + $0x830] sm:$0xff]
    %v4676 = vld [vmem:[%s4412 + $0x838] sm:$0xff]
    %v4677 = vld [vmem:[%s4412 + $0x840] sm:$0xff]
    %v4678 = vld [vmem:[%s4412 + $0x848] sm:$0xff]
    %v4679 = vld [vmem:[%s4412 + $0x850] sm:$0xff]
    %v4680 = vld [vmem:[%s4412 + $0x858] sm:$0xff]
    %v4681 = vld [vmem:[%s4412 + $0x860] sm:$0xff]
    %v4682 = vld [vmem:[%s4412 + $0x868] sm:$0xff]
    %v4683 = vld [vmem:[%s4412 + $0x870] sm:$0xff]
    %v4684 = vld [vmem:[%s4412 + $0x878] sm:$0xff]
    %v4685 = vld [vmem:[%s4412 + $0x880] sm:$0xff]
    %v4686 = vld [vmem:[%s4412 + $0x888] sm:$0xff]
    %v4687 = vld [vmem:[%s4412 + $0x890] sm:$0xff]
    %v4688 = vld [vmem:[%s4412 + $0x898] sm:$0xff]
    %v4689 = vld [vmem:[%s4412 + $0x8a0] sm:$0xff]
    %v4690 = vld [vmem:[%s4412 + $0x8a8] sm:$0xff]
    %v4691 = vld [vmem:[%s4412 + $0x8b0] sm:$0xff]
    %v4692 = vld [vmem:[%s4412 + $0x8b8] sm:$0xff]
    %v4693 = vld [vmem:[%s4412 + $0x8c0] sm:$0xff]
    %v4694 = vld [vmem:[%s4412 + $0x8c8] sm:$0xff]
    %v4695 = vld [vmem:[%s4412 + $0x8d0] sm:$0xff]
    %v4696 = vld [vmem:[%s4412 + $0x8d8] sm:$0xff]
    %v4697 = vld [vmem:[%s4412 + $0x8e0] sm:$0xff]
    %v4698 = vld [vmem:[%s4412 + $0x8e8] sm:$0xff]
    %v4699 = vld [vmem:[%s4412 + $0x8f0] sm:$0xff]
    %v4700 = vld [vmem:[%s4412 + $0x8f8] sm:$0xff]
    %s4701 = scalar_lea.vmem [#allocation9], 2
    %v4702 = vld [vmem:[%s4701] ss:$8 sm:$0xf]
    %v4703 = vld [vmem:[%s4701] ss:$8 sm:$0x30]
    %v4704 = vor.u32 %v4702, %v4703
    %v4706 = vlaneseq
    %v4707 = vshrl.u32 %v4706, 7
    %v4708 = vsub.s32 0, %v4707
    %v4709 = vrot.slane %v4704, %v4708
    %v4710 = vlaneseq
    %v4711 = vshrl.u32 %v4710, 7
    %v4712 = vsub.s32 1, %v4711
    %v4713 = vrot.slane %v4704, %v4712
    %v4714 = vlaneseq
    %v4715 = vshrl.u32 %v4714, 7
    %v4716 = vsub.s32 2, %v4715
    %v4717 = vrot.slane %v4704, %v4716
    %v4718 = vlaneseq
    %v4719 = vshrl.u32 %v4718, 7
    %v4720 = vsub.s32 3, %v4719
    %v4721 = vrot.slane %v4704, %v4720
    %v4722 = vlaneseq
    %v4723 = vshrl.u32 %v4722, 7
    %v4724 = vsub.s32 4, %v4723
    %v4725 = vrot.slane %v4704, %v4724
    %v4726 = vlaneseq
    %v4727 = vshrl.u32 %v4726, 7
    %v4728 = vsub.s32 5, %v4727
    %v4729 = vrot.slane %v4704, %v4728
    %v5024 = vunpack.c.l.b16 %v4413
    %v5025 = vunpack.c.h.b16 %v4413
    %v5026 = vunpack.c.l.b16 %v4414
    %v5027 = vunpack.c.h.b16 %v4414
    %v5028 = vunpack.c.l.b16 %v4415
    %v5029 = vunpack.c.h.b16 %v4415
    %v5030 = vunpack.c.l.b16 %v4416
    %v5031 = vunpack.c.h.b16 %v4416
    %v5032 = vunpack.c.l.b16 %v4417
    %v5033 = vunpack.c.h.b16 %v4417
    %v5034 = vunpack.c.l.b16 %v4418
    %v5035 = vunpack.c.h.b16 %v4418
    %v5036 = vunpack.c.l.b16 %v4419
    %v5037 = vunpack.c.h.b16 %v4419
    %v5038 = vunpack.c.l.b16 %v4420
    %v5039 = vunpack.c.h.b16 %v4420
    %v5040 = vunpack.c.l.b16 %v4421
    %v5041 = vunpack.c.h.b16 %v4421
    %v5042 = vunpack.c.l.b16 %v4422
    %v5043 = vunpack.c.h.b16 %v4422
    %v5044 = vunpack.c.l.b16 %v4423
    %v5045 = vunpack.c.h.b16 %v4423
    %v5046 = vunpack.c.l.b16 %v4424
    %v5047 = vunpack.c.h.b16 %v4424
    %v5048 = vunpack.c.l.b16 %v4425
    %v5049 = vunpack.c.h.b16 %v4425
    %v5050 = vunpack.c.l.b16 %v4426
    %v5051 = vunpack.c.h.b16 %v4426
    %v5052 = vunpack.c.l.b16 %v4427
    %v5053 = vunpack.c.h.b16 %v4427
    %v5054 = vunpack.c.l.b16 %v4428
    %v5055 = vunpack.c.h.b16 %v4428
    %v5056 = vunpack.c.l.b16 %v4429
    %v5057 = vunpack.c.h.b16 %v4429
    %v5058 = vunpack.c.l.b16 %v4430
    %v5059 = vunpack.c.h.b16 %v4430
    %v5060 = vunpack.c.l.b16 %v4431
    %v5061 = vunpack.c.h.b16 %v4431
    %v5062 = vunpack.c.l.b16 %v4432
    %v5063 = vunpack.c.h.b16 %v4432
    %v5064 = vunpack.c.l.b16 %v4433
    %v5065 = vunpack.c.h.b16 %v4433
    %v5066 = vunpack.c.l.b16 %v4434
    %v5067 = vunpack.c.h.b16 %v4434
    %v5068 = vunpack.c.l.b16 %v4435
    %v5069 = vunpack.c.h.b16 %v4435
    %v5070 = vunpack.c.l.b16 %v4436
    %v5071 = vunpack.c.h.b16 %v4436
    %v5072 = vunpack.c.l.b16 %v4437
    %v5073 = vunpack.c.h.b16 %v4437
    %v5074 = vunpack.c.l.b16 %v4438
    %v5075 = vunpack.c.h.b16 %v4438
    %v5076 = vunpack.c.l.b16 %v4439
    %v5077 = vunpack.c.h.b16 %v4439
    %v5078 = vunpack.c.l.b16 %v4440
    %v5079 = vunpack.c.h.b16 %v4440
    %v5080 = vunpack.c.l.b16 %v4441
    %v5081 = vunpack.c.h.b16 %v4441
    %v5082 = vunpack.c.l.b16 %v4442
    %v5083 = vunpack.c.h.b16 %v4442
    %v5084 = vunpack.c.l.b16 %v4443
    %v5085 = vunpack.c.h.b16 %v4443
    %v5086 = vunpack.c.l.b16 %v4444
    %v5087 = vunpack.c.h.b16 %v4444
    %v5088 = vunpack.c.l.b16 %v4445
    %v5089 = vunpack.c.h.b16 %v4445
    %v5090 = vunpack.c.l.b16 %v4446
    %v5091 = vunpack.c.h.b16 %v4446
    %v5092 = vunpack.c.l.b16 %v4447
    %v5093 = vunpack.c.h.b16 %v4447
    %v5094 = vunpack.c.l.b16 %v4448
    %v5095 = vunpack.c.h.b16 %v4448
    %v5096 = vunpack.c.l.b16 %v4449
    %v5097 = vunpack.c.h.b16 %v4449
    %v5098 = vunpack.c.l.b16 %v4450
    %v5099 = vunpack.c.h.b16 %v4450
    %v5100 = vunpack.c.l.b16 %v4451
    %v5101 = vunpack.c.h.b16 %v4451
    %v5102 = vunpack.c.l.b16 %v4452
    %v5103 = vunpack.c.h.b16 %v4452
    %v5104 = vunpack.c.l.b16 %v4453
    %v5105 = vunpack.c.h.b16 %v4453
    %v5106 = vunpack.c.l.b16 %v4454
    %v5107 = vunpack.c.h.b16 %v4454
    %v5108 = vunpack.c.l.b16 %v4455
    %v5109 = vunpack.c.h.b16 %v4455
    %v5110 = vunpack.c.l.b16 %v4456
    %v5111 = vunpack.c.h.b16 %v4456
    %v5112 = vunpack.c.l.b16 %v4457
    %v5113 = vunpack.c.h.b16 %v4457
    %v5114 = vunpack.c.l.b16 %v4458
    %v5115 = vunpack.c.h.b16 %v4458
    %v5116 = vunpack.c.l.b16 %v4459
    %v5117 = vunpack.c.h.b16 %v4459
    %v5118 = vunpack.c.l.b16 %v4460
    %v5119 = vunpack.c.h.b16 %v4460
    %v5120 = vunpack.c.l.b16 %v4461
    %v5121 = vunpack.c.h.b16 %v4461
    %v5122 = vunpack.c.l.b16 %v4462
    %v5123 = vunpack.c.h.b16 %v4462
    %v5124 = vunpack.c.l.b16 %v4463
    %v5125 = vunpack.c.h.b16 %v4463
    %v5126 = vunpack.c.l.b16 %v4464
    %v5127 = vunpack.c.h.b16 %v4464
    %v5128 = vunpack.c.l.b16 %v4465
    %v5129 = vunpack.c.h.b16 %v4465
    %v5130 = vunpack.c.l.b16 %v4466
    %v5131 = vunpack.c.h.b16 %v4466
    %v5132 = vunpack.c.l.b16 %v4467
    %v5133 = vunpack.c.h.b16 %v4467
    %v5134 = vunpack.c.l.b16 %v4468
    %v5135 = vunpack.c.h.b16 %v4468
    %v5136 = vunpack.c.l.b16 %v4469
    %v5137 = vunpack.c.h.b16 %v4469
    %v5138 = vunpack.c.l.b16 %v4470
    %v5139 = vunpack.c.h.b16 %v4470
    %v5140 = vunpack.c.l.b16 %v4471
    %v5141 = vunpack.c.h.b16 %v4471
    %v5142 = vunpack.c.l.b16 %v4472
    %v5143 = vunpack.c.h.b16 %v4472
    %v5144 = vunpack.c.l.b16 %v4473
    %v5145 = vunpack.c.h.b16 %v4473
    %v5146 = vunpack.c.l.b16 %v4474
    %v5147 = vunpack.c.h.b16 %v4474
    %v5148 = vunpack.c.l.b16 %v4475
    %v5149 = vunpack.c.h.b16 %v4475
    %v5150 = vunpack.c.l.b16 %v4476
    %v5151 = vunpack.c.h.b16 %v4476
    %v5152 = vunpack.c.l.b16 %v4477
    %v5153 = vunpack.c.h.b16 %v4477
    %v5154 = vunpack.c.l.b16 %v4478
    %v5155 = vunpack.c.h.b16 %v4478
    %v5156 = vunpack.c.l.b16 %v4479
    %v5157 = vunpack.c.h.b16 %v4479
    %v5158 = vunpack.c.l.b16 %v4480
    %v5159 = vunpack.c.h.b16 %v4480
    %v5160 = vunpack.c.l.b16 %v4481
    %v5161 = vunpack.c.h.b16 %v4481
    %v5162 = vunpack.c.l.b16 %v4482
    %v5163 = vunpack.c.h.b16 %v4482
    %v5164 = vunpack.c.l.b16 %v4483
    %v5165 = vunpack.c.h.b16 %v4483
    %v5166 = vunpack.c.l.b16 %v4484
    %v5167 = vunpack.c.h.b16 %v4484
    %v5168 = vunpack.c.l.b16 %v4485
    %v5169 = vunpack.c.h.b16 %v4485
    %v5170 = vunpack.c.l.b16 %v4486
    %v5171 = vunpack.c.h.b16 %v4486
    %v5172 = vunpack.c.l.b16 %v4487
    %v5173 = vunpack.c.h.b16 %v4487
    %v5174 = vunpack.c.l.b16 %v4488
    %v5175 = vunpack.c.h.b16 %v4488
    %v5176 = vunpack.c.l.b16 %v4489
    %v5177 = vunpack.c.h.b16 %v4489
    %v5178 = vunpack.c.l.b16 %v4490
    %v5179 = vunpack.c.h.b16 %v4490
    %v5180 = vunpack.c.l.b16 %v4491
    %v5181 = vunpack.c.h.b16 %v4491
    %v5182 = vunpack.c.l.b16 %v4492
    %v5183 = vunpack.c.h.b16 %v4492
    %v5184 = vunpack.c.l.b16 %v4493
    %v5185 = vunpack.c.h.b16 %v4493
    %v5186 = vunpack.c.l.b16 %v4494
    %v5187 = vunpack.c.h.b16 %v4494
    %v5188 = vunpack.c.l.b16 %v4495
    %v5189 = vunpack.c.h.b16 %v4495
    %v5190 = vunpack.c.l.b16 %v4496
    %v5191 = vunpack.c.h.b16 %v4496
    %v5192 = vunpack.c.l.b16 %v4497
    %v5193 = vunpack.c.h.b16 %v4497
    %v5194 = vunpack.c.l.b16 %v4498
    %v5195 = vunpack.c.h.b16 %v4498
    %v5196 = vunpack.c.l.b16 %v4499
    %v5197 = vunpack.c.h.b16 %v4499
    %v5198 = vunpack.c.l.b16 %v4500
    %v5199 = vunpack.c.h.b16 %v4500
    %v5200 = vunpack.c.l.b16 %v4501
    %v5201 = vunpack.c.h.b16 %v4501
    %v5202 = vunpack.c.l.b16 %v4502
    %v5203 = vunpack.c.h.b16 %v4502
    %v5204 = vunpack.c.l.b16 %v4503
    %v5205 = vunpack.c.h.b16 %v4503
    %v5206 = vunpack.c.l.b16 %v4504
    %v5207 = vunpack.c.h.b16 %v4504
    %v5208 = vunpack.c.l.b16 %v4505
    %v5209 = vunpack.c.h.b16 %v4505
    %v5210 = vunpack.c.l.b16 %v4506
    %v5211 = vunpack.c.h.b16 %v4506
    %v5212 = vunpack.c.l.b16 %v4507
    %v5213 = vunpack.c.h.b16 %v4507
    %v5214 = vunpack.c.l.b16 %v4508
    %v5215 = vunpack.c.h.b16 %v4508
    %v5216 = vunpack.c.l.b16 %v4509
    %v5217 = vunpack.c.h.b16 %v4509
    %v5218 = vunpack.c.l.b16 %v4510
    %v5219 = vunpack.c.h.b16 %v4510
    %v5220 = vunpack.c.l.b16 %v4511
    %v5221 = vunpack.c.h.b16 %v4511
    %v5222 = vunpack.c.l.b16 %v4512
    %v5223 = vunpack.c.h.b16 %v4512
    %v5224 = vunpack.c.l.b16 %v4513
    %v5225 = vunpack.c.h.b16 %v4513
    %v5226 = vunpack.c.l.b16 %v4514
    %v5227 = vunpack.c.h.b16 %v4514
    %v5228 = vunpack.c.l.b16 %v4515
    %v5229 = vunpack.c.h.b16 %v4515
    %v5230 = vunpack.c.l.b16 %v4516
    %v5231 = vunpack.c.h.b16 %v4516
    %v5232 = vunpack.c.l.b16 %v4517
    %v5233 = vunpack.c.h.b16 %v4517
    %v5234 = vunpack.c.l.b16 %v4518
    %v5235 = vunpack.c.h.b16 %v4518
    %v5236 = vunpack.c.l.b16 %v4519
    %v5237 = vunpack.c.h.b16 %v4519
    %v5238 = vunpack.c.l.b16 %v4520
    %v5239 = vunpack.c.h.b16 %v4520
    %v5240 = vunpack.c.l.b16 %v4521
    %v5241 = vunpack.c.h.b16 %v4521
    %v5242 = vunpack.c.l.b16 %v4522
    %v5243 = vunpack.c.h.b16 %v4522
    %v5244 = vunpack.c.l.b16 %v4523
    %v5245 = vunpack.c.h.b16 %v4523
    %v5246 = vunpack.c.l.b16 %v4524
    %v5247 = vunpack.c.h.b16 %v4524
    %v5248 = vunpack.c.l.b16 %v4525
    %v5249 = vunpack.c.h.b16 %v4525
    %v5250 = vunpack.c.l.b16 %v4526
    %v5251 = vunpack.c.h.b16 %v4526
    %v5252 = vunpack.c.l.b16 %v4527
    %v5253 = vunpack.c.h.b16 %v4527
    %v5254 = vunpack.c.l.b16 %v4528
    %v5255 = vunpack.c.h.b16 %v4528
    %v5256 = vunpack.c.l.b16 %v4529
    %v5257 = vunpack.c.h.b16 %v4529
    %v5258 = vunpack.c.l.b16 %v4530
    %v5259 = vunpack.c.h.b16 %v4530
    %v5260 = vunpack.c.l.b16 %v4531
    %v5261 = vunpack.c.h.b16 %v4531
    %v5262 = vunpack.c.l.b16 %v4532
    %v5263 = vunpack.c.h.b16 %v4532
    %v5264 = vunpack.c.l.b16 %v4533
    %v5265 = vunpack.c.h.b16 %v4533
    %v5266 = vunpack.c.l.b16 %v4534
    %v5267 = vunpack.c.h.b16 %v4534
    %v5268 = vunpack.c.l.b16 %v4535
    %v5269 = vunpack.c.h.b16 %v4535
    %v5270 = vunpack.c.l.b16 %v4536
    %v5271 = vunpack.c.h.b16 %v4536
    %v5272 = vunpack.c.l.b16 %v4537
    %v5273 = vunpack.c.h.b16 %v4537
    %v5274 = vunpack.c.l.b16 %v4538
    %v5275 = vunpack.c.h.b16 %v4538
    %v5276 = vunpack.c.l.b16 %v4539
    %v5277 = vunpack.c.h.b16 %v4539
    %v5278 = vunpack.c.l.b16 %v4540
    %v5279 = vunpack.c.h.b16 %v4540
    %v5280 = vunpack.c.l.b16 %v4541
    %v5281 = vunpack.c.h.b16 %v4541
    %v5282 = vunpack.c.l.b16 %v4542
    %v5283 = vunpack.c.h.b16 %v4542
    %v5284 = vunpack.c.l.b16 %v4543
    %v5285 = vunpack.c.h.b16 %v4543
    %v5286 = vunpack.c.l.b16 %v4544
    %v5287 = vunpack.c.h.b16 %v4544
    %v5288 = vunpack.c.l.b16 %v4545
    %v5289 = vunpack.c.h.b16 %v4545
    %v5290 = vunpack.c.l.b16 %v4546
    %v5291 = vunpack.c.h.b16 %v4546
    %v5292 = vunpack.c.l.b16 %v4547
    %v5293 = vunpack.c.h.b16 %v4547
    %v5294 = vunpack.c.l.b16 %v4548
    %v5295 = vunpack.c.h.b16 %v4548
    %v5296 = vunpack.c.l.b16 %v4549
    %v5297 = vunpack.c.h.b16 %v4549
    %v5298 = vunpack.c.l.b16 %v4550
    %v5299 = vunpack.c.h.b16 %v4550
    %v5300 = vunpack.c.l.b16 %v4551
    %v5301 = vunpack.c.h.b16 %v4551
    %v5302 = vunpack.c.l.b16 %v4552
    %v5303 = vunpack.c.h.b16 %v4552
    %v5304 = vunpack.c.l.b16 %v4553
    %v5305 = vunpack.c.h.b16 %v4553
    %v5306 = vunpack.c.l.b16 %v4554
    %v5307 = vunpack.c.h.b16 %v4554
    %v5308 = vunpack.c.l.b16 %v4555
    %v5309 = vunpack.c.h.b16 %v4555
    %v5310 = vunpack.c.l.b16 %v4556
    %v5311 = vunpack.c.h.b16 %v4556
    %v5312 = vunpack.c.l.b16 %v4557
    %v5313 = vunpack.c.h.b16 %v4557
    %v5314 = vunpack.c.l.b16 %v4558
    %v5315 = vunpack.c.h.b16 %v4558
    %v5316 = vunpack.c.l.b16 %v4559
    %v5317 = vunpack.c.h.b16 %v4559
    %v5318 = vunpack.c.l.b16 %v4560
    %v5319 = vunpack.c.h.b16 %v4560
    %v5320 = vunpack.c.l.b16 %v4561
    %v5321 = vunpack.c.h.b16 %v4561
    %v5322 = vunpack.c.l.b16 %v4562
    %v5323 = vunpack.c.h.b16 %v4562
    %v5324 = vunpack.c.l.b16 %v4563
    %v5325 = vunpack.c.h.b16 %v4563
    %v5326 = vunpack.c.l.b16 %v4564
    %v5327 = vunpack.c.h.b16 %v4564
    %v5328 = vunpack.c.l.b16 %v4565
    %v5329 = vunpack.c.h.b16 %v4565
    %v5330 = vunpack.c.l.b16 %v4566
    %v5331 = vunpack.c.h.b16 %v4566
    %v5332 = vunpack.c.l.b16 %v4567
    %v5333 = vunpack.c.h.b16 %v4567
    %v5334 = vunpack.c.l.b16 %v4568
    %v5335 = vunpack.c.h.b16 %v4568
    %v5336 = vunpack.c.l.b16 %v4569
    %v5337 = vunpack.c.h.b16 %v4569
    %v5338 = vunpack.c.l.b16 %v4570
    %v5339 = vunpack.c.h.b16 %v4570
    %v5340 = vunpack.c.l.b16 %v4571
    %v5341 = vunpack.c.h.b16 %v4571
    %v5342 = vunpack.c.l.b16 %v4572
    %v5343 = vunpack.c.h.b16 %v4572
    %v5344 = vunpack.c.l.b16 %v4573
    %v5345 = vunpack.c.h.b16 %v4573
    %v5346 = vunpack.c.l.b16 %v4574
    %v5347 = vunpack.c.h.b16 %v4574
    %v5348 = vunpack.c.l.b16 %v4575
    %v5349 = vunpack.c.h.b16 %v4575
    %v5350 = vunpack.c.l.b16 %v4576
    %v5351 = vunpack.c.h.b16 %v4576
    %v5352 = vunpack.c.l.b16 %v4577
    %v5353 = vunpack.c.h.b16 %v4577
    %v5354 = vunpack.c.l.b16 %v4578
    %v5355 = vunpack.c.h.b16 %v4578
    %v5356 = vunpack.c.l.b16 %v4579
    %v5357 = vunpack.c.h.b16 %v4579
    %v5358 = vunpack.c.l.b16 %v4580
    %v5359 = vunpack.c.h.b16 %v4580
    %v5360 = vunpack.c.l.b16 %v4581
    %v5361 = vunpack.c.h.b16 %v4581
    %v5362 = vunpack.c.l.b16 %v4582
    %v5363 = vunpack.c.h.b16 %v4582
    %v5364 = vunpack.c.l.b16 %v4583
    %v5365 = vunpack.c.h.b16 %v4583
    %v5366 = vunpack.c.l.b16 %v4584
    %v5367 = vunpack.c.h.b16 %v4584
    %v5368 = vunpack.c.l.b16 %v4585
    %v5369 = vunpack.c.h.b16 %v4585
    %v5370 = vunpack.c.l.b16 %v4586
    %v5371 = vunpack.c.h.b16 %v4586
    %v5372 = vunpack.c.l.b16 %v4587
    %v5373 = vunpack.c.h.b16 %v4587
    %v5374 = vunpack.c.l.b16 %v4588
    %v5375 = vunpack.c.h.b16 %v4588
    %v5376 = vunpack.c.l.b16 %v4589
    %v5377 = vunpack.c.h.b16 %v4589
    %v5378 = vunpack.c.l.b16 %v4590
    %v5379 = vunpack.c.h.b16 %v4590
    %v5380 = vunpack.c.l.b16 %v4591
    %v5381 = vunpack.c.h.b16 %v4591
    %v5382 = vunpack.c.l.b16 %v4592
    %v5383 = vunpack.c.h.b16 %v4592
    %v5384 = vunpack.c.l.b16 %v4593
    %v5385 = vunpack.c.h.b16 %v4593
    %v5386 = vunpack.c.l.b16 %v4594
    %v5387 = vunpack.c.h.b16 %v4594
    %v5388 = vunpack.c.l.b16 %v4595
    %v5389 = vunpack.c.h.b16 %v4595
    %v5390 = vunpack.c.l.b16 %v4596
    %v5391 = vunpack.c.h.b16 %v4596
    %v5392 = vunpack.c.l.b16 %v4597
    %v5393 = vunpack.c.h.b16 %v4597
    %v5394 = vunpack.c.l.b16 %v4598
    %v5395 = vunpack.c.h.b16 %v4598
    %v5396 = vunpack.c.l.b16 %v4599
    %v5397 = vunpack.c.h.b16 %v4599
    %v5398 = vunpack.c.l.b16 %v4600
    %v5399 = vunpack.c.h.b16 %v4600
    %v5400 = vunpack.c.l.b16 %v4601
    %v5401 = vunpack.c.h.b16 %v4601
    %v5402 = vunpack.c.l.b16 %v4602
    %v5403 = vunpack.c.h.b16 %v4602
    %v5404 = vunpack.c.l.b16 %v4603
    %v5405 = vunpack.c.h.b16 %v4603
    %v5406 = vunpack.c.l.b16 %v4604
    %v5407 = vunpack.c.h.b16 %v4604
    %v5408 = vunpack.c.l.b16 %v4605
    %v5409 = vunpack.c.h.b16 %v4605
    %v5410 = vunpack.c.l.b16 %v4606
    %v5411 = vunpack.c.h.b16 %v4606
    %v5412 = vunpack.c.l.b16 %v4607
    %v5413 = vunpack.c.h.b16 %v4607
    %v5414 = vunpack.c.l.b16 %v4608
    %v5415 = vunpack.c.h.b16 %v4608
    %v5416 = vunpack.c.l.b16 %v4609
    %v5417 = vunpack.c.h.b16 %v4609
    %v5418 = vunpack.c.l.b16 %v4610
    %v5419 = vunpack.c.h.b16 %v4610
    %v5420 = vunpack.c.l.b16 %v4611
    %v5421 = vunpack.c.h.b16 %v4611
    %v5422 = vunpack.c.l.b16 %v4612
    %v5423 = vunpack.c.h.b16 %v4612
    %v5424 = vunpack.c.l.b16 %v4613
    %v5425 = vunpack.c.h.b16 %v4613
    %v5426 = vunpack.c.l.b16 %v4614
    %v5427 = vunpack.c.h.b16 %v4614
    %v5428 = vunpack.c.l.b16 %v4615
    %v5429 = vunpack.c.h.b16 %v4615
    %v5430 = vunpack.c.l.b16 %v4616
    %v5431 = vunpack.c.h.b16 %v4616
    %v5432 = vunpack.c.l.b16 %v4617
    %v5433 = vunpack.c.h.b16 %v4617
    %v5434 = vunpack.c.l.b16 %v4618
    %v5435 = vunpack.c.h.b16 %v4618
    %v5436 = vunpack.c.l.b16 %v4619
    %v5437 = vunpack.c.h.b16 %v4619
    %v5438 = vunpack.c.l.b16 %v4620
    %v5439 = vunpack.c.h.b16 %v4620
    %v5440 = vunpack.c.l.b16 %v4621
    %v5441 = vunpack.c.h.b16 %v4621
    %v5442 = vunpack.c.l.b16 %v4622
    %v5443 = vunpack.c.h.b16 %v4622
    %v5444 = vunpack.c.l.b16 %v4623
    %v5445 = vunpack.c.h.b16 %v4623
    %v5446 = vunpack.c.l.b16 %v4624
    %v5447 = vunpack.c.h.b16 %v4624
    %v5448 = vunpack.c.l.b16 %v4625
    %v5449 = vunpack.c.h.b16 %v4625
    %v5450 = vunpack.c.l.b16 %v4626
    %v5451 = vunpack.c.h.b16 %v4626
    %v5452 = vunpack.c.l.b16 %v4627
    %v5453 = vunpack.c.h.b16 %v4627
    %v5454 = vunpack.c.l.b16 %v4628
    %v5455 = vunpack.c.h.b16 %v4628
    %v5456 = vunpack.c.l.b16 %v4629
    %v5457 = vunpack.c.h.b16 %v4629
    %v5458 = vunpack.c.l.b16 %v4630
    %v5459 = vunpack.c.h.b16 %v4630
    %v5460 = vunpack.c.l.b16 %v4631
    %v5461 = vunpack.c.h.b16 %v4631
    %v5462 = vunpack.c.l.b16 %v4632
    %v5463 = vunpack.c.h.b16 %v4632
    %v5464 = vunpack.c.l.b16 %v4633
    %v5465 = vunpack.c.h.b16 %v4633
    %v5466 = vunpack.c.l.b16 %v4634
    %v5467 = vunpack.c.h.b16 %v4634
    %v5468 = vunpack.c.l.b16 %v4635
    %v5469 = vunpack.c.h.b16 %v4635
    %v5470 = vunpack.c.l.b16 %v4636
    %v5471 = vunpack.c.h.b16 %v4636
    %v5472 = vunpack.c.l.b16 %v4637
    %v5473 = vunpack.c.h.b16 %v4637
    %v5474 = vunpack.c.l.b16 %v4638
    %v5475 = vunpack.c.h.b16 %v4638
    %v5476 = vunpack.c.l.b16 %v4639
    %v5477 = vunpack.c.h.b16 %v4639
    %v5478 = vunpack.c.l.b16 %v4640
    %v5479 = vunpack.c.h.b16 %v4640
    %v5480 = vunpack.c.l.b16 %v4641
    %v5481 = vunpack.c.h.b16 %v4641
    %v5482 = vunpack.c.l.b16 %v4642
    %v5483 = vunpack.c.h.b16 %v4642
    %v5484 = vunpack.c.l.b16 %v4643
    %v5485 = vunpack.c.h.b16 %v4643
    %v5486 = vunpack.c.l.b16 %v4644
    %v5487 = vunpack.c.h.b16 %v4644
    %v5488 = vunpack.c.l.b16 %v4645
    %v5489 = vunpack.c.h.b16 %v4645
    %v5490 = vunpack.c.l.b16 %v4646
    %v5491 = vunpack.c.h.b16 %v4646
    %v5492 = vunpack.c.l.b16 %v4647
    %v5493 = vunpack.c.h.b16 %v4647
    %v5494 = vunpack.c.l.b16 %v4648
    %v5495 = vunpack.c.h.b16 %v4648
    %v5496 = vunpack.c.l.b16 %v4649
    %v5497 = vunpack.c.h.b16 %v4649
    %v5498 = vunpack.c.l.b16 %v4650
    %v5499 = vunpack.c.h.b16 %v4650
    %v5500 = vunpack.c.l.b16 %v4651
    %v5501 = vunpack.c.h.b16 %v4651
    %v5502 = vunpack.c.l.b16 %v4652
    %v5503 = vunpack.c.h.b16 %v4652
    %v5504 = vunpack.c.l.b16 %v4653
    %v5505 = vunpack.c.h.b16 %v4653
    %v5506 = vunpack.c.l.b16 %v4654
    %v5507 = vunpack.c.h.b16 %v4654
    %v5508 = vunpack.c.l.b16 %v4655
    %v5509 = vunpack.c.h.b16 %v4655
    %v5510 = vunpack.c.l.b16 %v4656
    %v5511 = vunpack.c.h.b16 %v4656
    %v5512 = vunpack.c.l.b16 %v4657
    %v5513 = vunpack.c.h.b16 %v4657
    %v5514 = vunpack.c.l.b16 %v4658
    %v5515 = vunpack.c.h.b16 %v4658
    %v5516 = vunpack.c.l.b16 %v4659
    %v5517 = vunpack.c.h.b16 %v4659
    %v5518 = vunpack.c.l.b16 %v4660
    %v5519 = vunpack.c.h.b16 %v4660
    %v5520 = vunpack.c.l.b16 %v4661
    %v5521 = vunpack.c.h.b16 %v4661
    %v5522 = vunpack.c.l.b16 %v4662
    %v5523 = vunpack.c.h.b16 %v4662
    %v5524 = vunpack.c.l.b16 %v4663
    %v5525 = vunpack.c.h.b16 %v4663
    %v5526 = vunpack.c.l.b16 %v4664
    %v5527 = vunpack.c.h.b16 %v4664
    %v5528 = vunpack.c.l.b16 %v4665
    %v5529 = vunpack.c.h.b16 %v4665
    %v5530 = vunpack.c.l.b16 %v4666
    %v5531 = vunpack.c.h.b16 %v4666
    %v5532 = vunpack.c.l.b16 %v4667
    %v5533 = vunpack.c.h.b16 %v4667
    %v5534 = vunpack.c.l.b16 %v4668
    %v5535 = vunpack.c.h.b16 %v4668
    %v5536 = vunpack.c.l.b16 %v4669
    %v5537 = vunpack.c.h.b16 %v4669
    %v5538 = vunpack.c.l.b16 %v4670
    %v5539 = vunpack.c.h.b16 %v4670
    %v5540 = vunpack.c.l.b16 %v4671
    %v5541 = vunpack.c.h.b16 %v4671
    %v5542 = vunpack.c.l.b16 %v4672
    %v5543 = vunpack.c.h.b16 %v4672
    %v5544 = vunpack.c.l.b16 %v4673
    %v5545 = vunpack.c.h.b16 %v4673
    %v5546 = vunpack.c.l.b16 %v4674
    %v5547 = vunpack.c.h.b16 %v4674
    %v5548 = vunpack.c.l.b16 %v4675
    %v5549 = vunpack.c.h.b16 %v4675
    %v5550 = vunpack.c.l.b16 %v4676
    %v5551 = vunpack.c.h.b16 %v4676
    %v5552 = vunpack.c.l.b16 %v4677
    %v5553 = vunpack.c.h.b16 %v4677
    %v5554 = vunpack.c.l.b16 %v4678
    %v5555 = vunpack.c.h.b16 %v4678
    %v5556 = vunpack.c.l.b16 %v4679
    %v5557 = vunpack.c.h.b16 %v4679
    %v5558 = vunpack.c.l.b16 %v4680
    %v5559 = vunpack.c.h.b16 %v4680
    %v5560 = vunpack.c.l.b16 %v4681
    %v5561 = vunpack.c.h.b16 %v4681
    %v5562 = vunpack.c.l.b16 %v4682
    %v5563 = vunpack.c.h.b16 %v4682
    %v5564 = vunpack.c.l.b16 %v4683
    %v5565 = vunpack.c.h.b16 %v4683
    %v5566 = vunpack.c.l.b16 %v4684
    %v5567 = vunpack.c.h.b16 %v4684
    %v5568 = vunpack.c.l.b16 %v4685
    %v5569 = vunpack.c.h.b16 %v4685
    %v5570 = vunpack.c.l.b16 %v4686
    %v5571 = vunpack.c.h.b16 %v4686
    %v5572 = vunpack.c.l.b16 %v4687
    %v5573 = vunpack.c.h.b16 %v4687
    %v5574 = vunpack.c.l.b16 %v4688
    %v5575 = vunpack.c.h.b16 %v4688
    %v5576 = vunpack.c.l.b16 %v4689
    %v5577 = vunpack.c.h.b16 %v4689
    %v5578 = vunpack.c.l.b16 %v4690
    %v5579 = vunpack.c.h.b16 %v4690
    %v5580 = vunpack.c.l.b16 %v4691
    %v5581 = vunpack.c.h.b16 %v4691
    %v5582 = vunpack.c.l.b16 %v4692
    %v5583 = vunpack.c.h.b16 %v4692
    %v5584 = vunpack.c.l.b16 %v4693
    %v5585 = vunpack.c.h.b16 %v4693
    %v5586 = vunpack.c.l.b16 %v4694
    %v5587 = vunpack.c.h.b16 %v4694
    %v5588 = vunpack.c.l.b16 %v4695
    %v5589 = vunpack.c.h.b16 %v4695
    %v5590 = vunpack.c.l.b16 %v4696
    %v5591 = vunpack.c.h.b16 %v4696
    %v5592 = vunpack.c.l.b16 %v4697
    %v5593 = vunpack.c.h.b16 %v4697
    %v5594 = vunpack.c.l.b16 %v4698
    %v5595 = vunpack.c.h.b16 %v4698
    %v5596 = vunpack.c.l.b16 %v4699
    %v5597 = vunpack.c.h.b16 %v4699
    %v5598 = vunpack.c.l.b16 %v4700
    %v5599 = vunpack.c.h.b16 %v4700
    %v5600 = vpack.c.b16 %v5030, %v5024
    %v5601 = vpack.c.b16 %v5031, %v5025
    %v5602 = vpack.c.b16 %v5032, %v5026
    %v5603 = vpack.c.b16 %v5033, %v5027
    %v5604 = vpack.c.b16 %v5034, %v5028
    %v5605 = vpack.c.b16 %v5035, %v5029
    %v5606 = vpack.c.b16 %v5042, %v5036
    %v5607 = vpack.c.b16 %v5043, %v5037
    %v5608 = vpack.c.b16 %v5044, %v5038
    %v5609 = vpack.c.b16 %v5045, %v5039
    %v5610 = vpack.c.b16 %v5046, %v5040
    %v5611 = vpack.c.b16 %v5047, %v5041
    %v5612 = vpack.c.b16 %v5054, %v5048
    %v5613 = vpack.c.b16 %v5055, %v5049
    %v5614 = vpack.c.b16 %v5056, %v5050
    %v5615 = vpack.c.b16 %v5057, %v5051
    %v5616 = vpack.c.b16 %v5058, %v5052
    %v5617 = vpack.c.b16 %v5059, %v5053
    %v5618 = vpack.c.b16 %v5066, %v5060
    %v5619 = vpack.c.b16 %v5067, %v5061
    %v5620 = vpack.c.b16 %v5068, %v5062
    %v5621 = vpack.c.b16 %v5069, %v5063
    %v5622 = vpack.c.b16 %v5070, %v5064
    %v5623 = vpack.c.b16 %v5071, %v5065
    %v5624 = vpack.c.b16 %v5078, %v5072
    %v5625 = vpack.c.b16 %v5079, %v5073
    %v5626 = vpack.c.b16 %v5080, %v5074
    %v5627 = vpack.c.b16 %v5081, %v5075
    %v5628 = vpack.c.b16 %v5082, %v5076
    %v5629 = vpack.c.b16 %v5083, %v5077
    %v5630 = vpack.c.b16 %v5090, %v5084
    %v5631 = vpack.c.b16 %v5091, %v5085
    %v5632 = vpack.c.b16 %v5092, %v5086
    %v5633 = vpack.c.b16 %v5093, %v5087
    %v5634 = vpack.c.b16 %v5094, %v5088
    %v5635 = vpack.c.b16 %v5095, %v5089
    %v5636 = vpack.c.b16 %v5102, %v5096
    %v5637 = vpack.c.b16 %v5103, %v5097
    %v5638 = vpack.c.b16 %v5104, %v5098
    %v5639 = vpack.c.b16 %v5105, %v5099
    %v5640 = vpack.c.b16 %v5106, %v5100
    %v5641 = vpack.c.b16 %v5107, %v5101
    %v5642 = vpack.c.b16 %v5114, %v5108
    %v5643 = vpack.c.b16 %v5115, %v5109
    %v5644 = vpack.c.b16 %v5116, %v5110
    %v5645 = vpack.c.b16 %v5117, %v5111
    %v5646 = vpack.c.b16 %v5118, %v5112
    %v5647 = vpack.c.b16 %v5119, %v5113
    %v5648 = vpack.c.b16 %v5126, %v5120
    %v5649 = vpack.c.b16 %v5127, %v5121
    %v5650 = vpack.c.b16 %v5128, %v5122
    %v5651 = vpack.c.b16 %v5129, %v5123
    %v5652 = vpack.c.b16 %v5130, %v5124
    %v5653 = vpack.c.b16 %v5131, %v5125
    %v5654 = vpack.c.b16 %v5138, %v5132
    %v5655 = vpack.c.b16 %v5139, %v5133
    %v5656 = vpack.c.b16 %v5140, %v5134
    %v5657 = vpack.c.b16 %v5141, %v5135
    %v5658 = vpack.c.b16 %v5142, %v5136
    %v5659 = vpack.c.b16 %v5143, %v5137
    %v5660 = vpack.c.b16 %v5150, %v5144
    %v5661 = vpack.c.b16 %v5151, %v5145
    %v5662 = vpack.c.b16 %v5152, %v5146
    %v5663 = vpack.c.b16 %v5153, %v5147
    %v5664 = vpack.c.b16 %v5154, %v5148
    %v5665 = vpack.c.b16 %v5155, %v5149
    %v5666 = vpack.c.b16 %v5162, %v5156
    %v5667 = vpack.c.b16 %v5163, %v5157
    %v5668 = vpack.c.b16 %v5164, %v5158
    %v5669 = vpack.c.b16 %v5165, %v5159
    %v5670 = vpack.c.b16 %v5166, %v5160
    %v5671 = vpack.c.b16 %v5167, %v5161
    %v5672 = vpack.c.b16 %v5174, %v5168
    %v5673 = vpack.c.b16 %v5175, %v5169
    %v5674 = vpack.c.b16 %v5176, %v5170
    %v5675 = vpack.c.b16 %v5177, %v5171
    %v5676 = vpack.c.b16 %v5178, %v5172
    %v5677 = vpack.c.b16 %v5179, %v5173
    %v5678 = vpack.c.b16 %v5186, %v5180
    %v5679 = vpack.c.b16 %v5187, %v5181
    %v5680 = vpack.c.b16 %v5188, %v5182
    %v5681 = vpack.c.b16 %v5189, %v5183
    %v5682 = vpack.c.b16 %v5190, %v5184
    %v5683 = vpack.c.b16 %v5191, %v5185
    %v5684 = vpack.c.b16 %v5198, %v5192
    %v5685 = vpack.c.b16 %v5199, %v5193
    %v5686 = vpack.c.b16 %v5200, %v5194
    %v5687 = vpack.c.b16 %v5201, %v5195
    %v5688 = vpack.c.b16 %v5202, %v5196
    %v5689 = vpack.c.b16 %v5203, %v5197
    %v5690 = vpack.c.b16 %v5210, %v5204
    %v5691 = vpack.c.b16 %v5211, %v5205
    %v5692 = vpack.c.b16 %v5212, %v5206
    %v5693 = vpack.c.b16 %v5213, %v5207
    %v5694 = vpack.c.b16 %v5214, %v5208
    %v5695 = vpack.c.b16 %v5215, %v5209
    %v5696 = vpack.c.b16 %v5222, %v5216
    %v5697 = vpack.c.b16 %v5223, %v5217
    %v5698 = vpack.c.b16 %v5224, %v5218
    %v5699 = vpack.c.b16 %v5225, %v5219
    %v5700 = vpack.c.b16 %v5226, %v5220
    %v5701 = vpack.c.b16 %v5227, %v5221
    %v5702 = vpack.c.b16 %v5234, %v5228
    %v5703 = vpack.c.b16 %v5235, %v5229
    %v5704 = vpack.c.b16 %v5236, %v5230
    %v5705 = vpack.c.b16 %v5237, %v5231
    %v5706 = vpack.c.b16 %v5238, %v5232
    %v5707 = vpack.c.b16 %v5239, %v5233
    %v5708 = vpack.c.b16 %v5246, %v5240
    %v5709 = vpack.c.b16 %v5247, %v5241
    %v5710 = vpack.c.b16 %v5248, %v5242
    %v5711 = vpack.c.b16 %v5249, %v5243
    %v5712 = vpack.c.b16 %v5250, %v5244
    %v5713 = vpack.c.b16 %v5251, %v5245
    %v5714 = vpack.c.b16 %v5258, %v5252
    %v5715 = vpack.c.b16 %v5259, %v5253
    %v5716 = vpack.c.b16 %v5260, %v5254
    %v5717 = vpack.c.b16 %v5261, %v5255
    %v5718 = vpack.c.b16 %v5262, %v5256
    %v5719 = vpack.c.b16 %v5263, %v5257
    %v5720 = vpack.c.b16 %v5270, %v5264
    %v5721 = vpack.c.b16 %v5271, %v5265
    %v5722 = vpack.c.b16 %v5272, %v5266
    %v5723 = vpack.c.b16 %v5273, %v5267
    %v5724 = vpack.c.b16 %v5274, %v5268
    %v5725 = vpack.c.b16 %v5275, %v5269
    %v5726 = vpack.c.b16 %v5282, %v5276
    %v5727 = vpack.c.b16 %v5283, %v5277
    %v5728 = vpack.c.b16 %v5284, %v5278
    %v5729 = vpack.c.b16 %v5285, %v5279
    %v5730 = vpack.c.b16 %v5286, %v5280
    %v5731 = vpack.c.b16 %v5287, %v5281
    %v5732 = vpack.c.b16 %v5294, %v5288
    %v5733 = vpack.c.b16 %v5295, %v5289
    %v5734 = vpack.c.b16 %v5296, %v5290
    %v5735 = vpack.c.b16 %v5297, %v5291
    %v5736 = vpack.c.b16 %v5298, %v5292
    %v5737 = vpack.c.b16 %v5299, %v5293
    %v5738 = vpack.c.b16 %v5306, %v5300
    %v5739 = vpack.c.b16 %v5307, %v5301
    %v5740 = vpack.c.b16 %v5308, %v5302
    %v5741 = vpack.c.b16 %v5309, %v5303
    %v5742 = vpack.c.b16 %v5310, %v5304
    %v5743 = vpack.c.b16 %v5311, %v5305
    %v5744 = vpack.c.b16 %v5318, %v5312
    %v5745 = vpack.c.b16 %v5319, %v5313
    %v5746 = vpack.c.b16 %v5320, %v5314
    %v5747 = vpack.c.b16 %v5321, %v5315
    %v5748 = vpack.c.b16 %v5322, %v5316
    %v5749 = vpack.c.b16 %v5323, %v5317
    %v5750 = vpack.c.b16 %v5330, %v5324
    %v5751 = vpack.c.b16 %v5331, %v5325
    %v5752 = vpack.c.b16 %v5332, %v5326
    %v5753 = vpack.c.b16 %v5333, %v5327
    %v5754 = vpack.c.b16 %v5334, %v5328
    %v5755 = vpack.c.b16 %v5335, %v5329
    %v5756 = vpack.c.b16 %v5342, %v5336
    %v5757 = vpack.c.b16 %v5343, %v5337
    %v5758 = vpack.c.b16 %v5344, %v5338
    %v5759 = vpack.c.b16 %v5345, %v5339
    %v5760 = vpack.c.b16 %v5346, %v5340
    %v5761 = vpack.c.b16 %v5347, %v5341
    %v5762 = vpack.c.b16 %v5354, %v5348
    %v5763 = vpack.c.b16 %v5355, %v5349
    %v5764 = vpack.c.b16 %v5356, %v5350
    %v5765 = vpack.c.b16 %v5357, %v5351
    %v5766 = vpack.c.b16 %v5358, %v5352
    %v5767 = vpack.c.b16 %v5359, %v5353
    %v5768 = vpack.c.b16 %v5366, %v5360
    %v5769 = vpack.c.b16 %v5367, %v5361
    %v5770 = vpack.c.b16 %v5368, %v5362
    %v5771 = vpack.c.b16 %v5369, %v5363
    %v5772 = vpack.c.b16 %v5370, %v5364
    %v5773 = vpack.c.b16 %v5371, %v5365
    %v5774 = vpack.c.b16 %v5378, %v5372
    %v5775 = vpack.c.b16 %v5379, %v5373
    %v5776 = vpack.c.b16 %v5380, %v5374
    %v5777 = vpack.c.b16 %v5381, %v5375
    %v5778 = vpack.c.b16 %v5382, %v5376
    %v5779 = vpack.c.b16 %v5383, %v5377
    %v5780 = vpack.c.b16 %v5390, %v5384
    %v5781 = vpack.c.b16 %v5391, %v5385
    %v5782 = vpack.c.b16 %v5392, %v5386
    %v5783 = vpack.c.b16 %v5393, %v5387
    %v5784 = vpack.c.b16 %v5394, %v5388
    %v5785 = vpack.c.b16 %v5395, %v5389
    %v5786 = vpack.c.b16 %v5402, %v5396
    %v5787 = vpack.c.b16 %v5403, %v5397
    %v5788 = vpack.c.b16 %v5404, %v5398
    %v5789 = vpack.c.b16 %v5405, %v5399
    %v5790 = vpack.c.b16 %v5406, %v5400
    %v5791 = vpack.c.b16 %v5407, %v5401
    %v5792 = vpack.c.b16 %v5414, %v5408
    %v5793 = vpack.c.b16 %v5415, %v5409
    %v5794 = vpack.c.b16 %v5416, %v5410
    %v5795 = vpack.c.b16 %v5417, %v5411
    %v5796 = vpack.c.b16 %v5418, %v5412
    %v5797 = vpack.c.b16 %v5419, %v5413
    %v5798 = vpack.c.b16 %v5426, %v5420
    %v5799 = vpack.c.b16 %v5427, %v5421
    %v5800 = vpack.c.b16 %v5428, %v5422
    %v5801 = vpack.c.b16 %v5429, %v5423
    %v5802 = vpack.c.b16 %v5430, %v5424
    %v5803 = vpack.c.b16 %v5431, %v5425
    %v5804 = vpack.c.b16 %v5438, %v5432
    %v5805 = vpack.c.b16 %v5439, %v5433
    %v5806 = vpack.c.b16 %v5440, %v5434
    %v5807 = vpack.c.b16 %v5441, %v5435
    %v5808 = vpack.c.b16 %v5442, %v5436
    %v5809 = vpack.c.b16 %v5443, %v5437
    %v5810 = vpack.c.b16 %v5450, %v5444
    %v5811 = vpack.c.b16 %v5451, %v5445
    %v5812 = vpack.c.b16 %v5452, %v5446
    %v5813 = vpack.c.b16 %v5453, %v5447
    %v5814 = vpack.c.b16 %v5454, %v5448
    %v5815 = vpack.c.b16 %v5455, %v5449
    %v5816 = vpack.c.b16 %v5462, %v5456
    %v5817 = vpack.c.b16 %v5463, %v5457
    %v5818 = vpack.c.b16 %v5464, %v5458
    %v5819 = vpack.c.b16 %v5465, %v5459
    %v5820 = vpack.c.b16 %v5466, %v5460
    %v5821 = vpack.c.b16 %v5467, %v5461
    %v5822 = vpack.c.b16 %v5474, %v5468
    %v5823 = vpack.c.b16 %v5475, %v5469
    %v5824 = vpack.c.b16 %v5476, %v5470
    %v5825 = vpack.c.b16 %v5477, %v5471
    %v5826 = vpack.c.b16 %v5478, %v5472
    %v5827 = vpack.c.b16 %v5479, %v5473
    %v5828 = vpack.c.b16 %v5486, %v5480
    %v5829 = vpack.c.b16 %v5487, %v5481
    %v5830 = vpack.c.b16 %v5488, %v5482
    %v5831 = vpack.c.b16 %v5489, %v5483
    %v5832 = vpack.c.b16 %v5490, %v5484
    %v5833 = vpack.c.b16 %v5491, %v5485
    %v5834 = vpack.c.b16 %v5498, %v5492
    %v5835 = vpack.c.b16 %v5499, %v5493
    %v5836 = vpack.c.b16 %v5500, %v5494
    %v5837 = vpack.c.b16 %v5501, %v5495
    %v5838 = vpack.c.b16 %v5502, %v5496
    %v5839 = vpack.c.b16 %v5503, %v5497
    %v5840 = vpack.c.b16 %v5510, %v5504
    %v5841 = vpack.c.b16 %v5511, %v5505
    %v5842 = vpack.c.b16 %v5512, %v5506
    %v5843 = vpack.c.b16 %v5513, %v5507
    %v5844 = vpack.c.b16 %v5514, %v5508
    %v5845 = vpack.c.b16 %v5515, %v5509
    %v5846 = vpack.c.b16 %v5522, %v5516
    %v5847 = vpack.c.b16 %v5523, %v5517
    %v5848 = vpack.c.b16 %v5524, %v5518
    %v5849 = vpack.c.b16 %v5525, %v5519
    %v5850 = vpack.c.b16 %v5526, %v5520
    %v5851 = vpack.c.b16 %v5527, %v5521
    %v5852 = vpack.c.b16 %v5534, %v5528
    %v5853 = vpack.c.b16 %v5535, %v5529
    %v5854 = vpack.c.b16 %v5536, %v5530
    %v5855 = vpack.c.b16 %v5537, %v5531
    %v5856 = vpack.c.b16 %v5538, %v5532
    %v5857 = vpack.c.b16 %v5539, %v5533
    %v5858 = vpack.c.b16 %v5546, %v5540
    %v5859 = vpack.c.b16 %v5547, %v5541
    %v5860 = vpack.c.b16 %v5548, %v5542
    %v5861 = vpack.c.b16 %v5549, %v5543
    %v5862 = vpack.c.b16 %v5550, %v5544
    %v5863 = vpack.c.b16 %v5551, %v5545
    %v5864 = vpack.c.b16 %v5558, %v5552
    %v5865 = vpack.c.b16 %v5559, %v5553
    %v5866 = vpack.c.b16 %v5560, %v5554
    %v5867 = vpack.c.b16 %v5561, %v5555
    %v5868 = vpack.c.b16 %v5562, %v5556
    %v5869 = vpack.c.b16 %v5563, %v5557
    %v5870 = vpack.c.b16 %v5570, %v5564
    %v5871 = vpack.c.b16 %v5571, %v5565
    %v5872 = vpack.c.b16 %v5572, %v5566
    %v5873 = vpack.c.b16 %v5573, %v5567
    %v5874 = vpack.c.b16 %v5574, %v5568
    %v5875 = vpack.c.b16 %v5575, %v5569
    %v5876 = vpack.c.b16 %v5582, %v5576
    %v5877 = vpack.c.b16 %v5583, %v5577
    %v5878 = vpack.c.b16 %v5584, %v5578
    %v5879 = vpack.c.b16 %v5585, %v5579
    %v5880 = vpack.c.b16 %v5586, %v5580
    %v5881 = vpack.c.b16 %v5587, %v5581
    %v5882 = vpack.c.b16 %v5594, %v5588
    %v5883 = vpack.c.b16 %v5595, %v5589
    %v5884 = vpack.c.b16 %v5596, %v5590
    %v5885 = vpack.c.b16 %v5597, %v5591
    %v5886 = vpack.c.b16 %v5598, %v5592
    %v5887 = vpack.c.b16 %v5599, %v5593
    %6176 = vmatprep.subr.bf16.mxu0 %v5601
    %6177 = vmatpush1.bf16.msra.mxu0 %v5600
    %6178 = vmatprep.subr.bf16.mxu0 %v5607
    %6179 = vmatpush1.bf16.msra.mxu0 %v5606
    %6180 = vmatprep.subr.bf16.mxu0 %v5613
    %6181 = vmatpush1.bf16.msra.mxu0 %v5612
    %6182 = vmatprep.subr.bf16.mxu0 %v5619
    %6183 = vmatpush1.bf16.msra.mxu0 %v5618
    %6184 = vmatprep.subr.bf16.mxu0 %v5625
    %6185 = vmatpush1.bf16.msra.mxu0 %v5624
    %6186 = vmatprep.subr.bf16.mxu0 %v5631
    %6187 = vmatpush1.bf16.msra.mxu0 %v5630
    %6188 = vmatprep.subr.bf16.mxu0 %v5637
    %6189 = vmatpush1.bf16.msra.mxu0 %v5636
    %6190 = vmatprep.subr.bf16.mxu0 %v5643
    %6191 = vmatpush1.bf16.msra.mxu0 %v5642
    %6192 = vmatprep.subr.bf16.mxu0 %v5649
    %6193 = vmatpush1.bf16.msra.mxu0 %v5648
    %6194 = vmatprep.subr.bf16.mxu0 %v5655
    %6195 = vmatpush1.bf16.msra.mxu0 %v5654
    %6196 = vmatprep.subr.bf16.mxu0 %v5661
    %6197 = vmatpush1.bf16.msra.mxu0 %v5660
    %6198 = vmatprep.subr.bf16.mxu0 %v5667
    %6199 = vmatpush1.bf16.msra.mxu0 %v5666
    %6200 = vmatprep.subr.bf16.mxu0 %v5673
    %6201 = vmatpush1.bf16.msra.mxu0 %v5672
    %6202 = vmatprep.subr.bf16.mxu0 %v5679
    %6203 = vmatpush1.bf16.msra.mxu0 %v5678
    %6204 = vmatprep.subr.bf16.mxu0 %v5685
    %6205 = vmatpush1.bf16.msra.mxu0 %v5684
    %6206 = vmatprep.subr.bf16.mxu0 %v5691
    %6207 = vmatpush1.bf16.msra.mxu0 %v5690
    %6208 = vmatprep.mubr.bf16.mxu0 %v4407
    %6209 = vmatmul.mubr.bf16.gmra.mrb[0].mxu0 %v4406
    %v6210 = vpop.f32.mrb[0].mxu0
    %v6211 = vadd.f32 %v4709, %v6210
    %v6212 = vpop.f32.mrb[0].mxu0
    %v6213 = vadd.f32 %v4713, %v6212
    %v6214 = vpop.f32.mrb[0].mxu0
    %v6215 = vpop.f32.mrb[0].mxu0
    %6216 = vdwg.mxu0
    %6217 = vmatprep.subr.bf16.mxu0 %v5697
    %6218 = vmatpush1.bf16.msra.mxu0 %v5696
    %6219 = vmatprep.subr.bf16.mxu0 %v5703
    %6220 = vmatpush1.bf16.msra.mxu0 %v5702
    %6221 = vmatprep.subr.bf16.mxu0 %v5709
    %6222 = vmatpush1.bf16.msra.mxu0 %v5708
    %6223 = vmatprep.subr.bf16.mxu0 %v5715
    %6224 = vmatpush1.bf16.msra.mxu0 %v5714
    %6225 = vmatprep.subr.bf16.mxu0 %v5721
    %6226 = vmatpush1.bf16.msra.mxu0 %v5720
    %6227 = vmatprep.subr.bf16.mxu0 %v5727
    %6228 = vmatpush1.bf16.msra.mxu0 %v5726
    %6229 = vmatprep.subr.bf16.mxu0 %v5733
    %6230 = vmatpush1.bf16.msra.mxu0 %v5732
    %6231 = vmatprep.subr.bf16.mxu0 %v5739
    %6232 = vmatpush1.bf16.msra.mxu0 %v5738
    %6233 = vmatprep.subr.bf16.mxu0 %v5745
    %6234 = vmatpush1.bf16.msra.mxu0 %v5744
    %6235 = vmatprep.subr.bf16.mxu0 %v5751
    %6236 = vmatpush1.bf16.msra.mxu0 %v5750
    %6237 = vmatprep.subr.bf16.mxu0 %v5757
    %6238 = vmatpush1.bf16.msra.mxu0 %v5756
    %6239 = vmatprep.subr.bf16.mxu0 %v5763
    %6240 = vmatpush1.bf16.msra.mxu0 %v5762
    %6241 = vmatprep.subr.bf16.mxu0 %v5769
    %6242 = vmatpush1.bf16.msra.mxu0 %v5768
    %6243 = vmatprep.subr.bf16.mxu0 %v5775
    %6244 = vmatpush1.bf16.msra.mxu0 %v5774
    %6245 = vmatprep.subr.bf16.mxu0 %v5781
    %6246 = vmatpush1.bf16.msra.mxu0 %v5780
    %6247 = vmatprep.subr.bf16.mxu0 %v5787
    %6248 = vmatpush1.bf16.msra.mxu0 %v5786
    %6249 = vmatprep.mubr.bf16.mxu0 %v4409
    %6250 = vmatmul.mubr.bf16.gmra.mrb[0].mxu0 %v4408
    %v6251 = vpop.f32.mrb[0].mxu0
    %v6252 = vadd.f32 %v6211, %v6251
    %v6253 = vpop.f32.mrb[0].mxu0
    %v6254 = vadd.f32 %v6213, %v6253
    %v6255 = vpop.f32.mrb[0].mxu0
    %v6256 = vpop.f32.mrb[0].mxu0
    %6257 = vdwg.mxu0
    %6258 = vmatprep.subr.bf16.mxu0 %v5793
    %6259 = vmatpush1.bf16.msra.mxu0 %v5792
    %6260 = vmatprep.subr.bf16.mxu0 %v5799
    %6261 = vmatpush1.bf16.msra.mxu0 %v5798
    %6262 = vmatprep.subr.bf16.mxu0 %v5805
    %6263 = vmatpush1.bf16.msra.mxu0 %v5804
    %6264 = vmatprep.subr.bf16.mxu0 %v5811
    %6265 = vmatpush1.bf16.msra.mxu0 %v5810
    %6266 = vmatprep.subr.bf16.mxu0 %v5817
    %6267 = vmatpush1.bf16.msra.mxu0 %v5816
    %6268 = vmatprep.subr.bf16.mxu0 %v5823
    %6269 = vmatpush1.bf16.msra.mxu0 %v5822
    %6270 = vmatprep.subr.bf16.mxu0 %v5829
    %6271 = vmatpush1.bf16.msra.mxu0 %v5828
    %6272 = vmatprep.subr.bf16.mxu0 %v5835
    %6273 = vmatpush1.bf16.msra.mxu0 %v5834
    %6274 = vmatprep.subr.bf16.mxu0 %v5841
    %6275 = vmatpush1.bf16.msra.mxu0 %v5840
    %6276 = vmatprep.subr.bf16.mxu0 %v5847
    %6277 = vmatpush1.bf16.msra.mxu0 %v5846
    %6278 = vmatprep.subr.bf16.mxu0 %v5853
    %6279 = vmatpush1.bf16.msra.mxu0 %v5852
    %6280 = vmatprep.subr.bf16.mxu0 %v5859
    %6281 = vmatpush1.bf16.msra.mxu0 %v5858
    %6282 = vmatprep.subr.bf16.mxu0 %v5865
    %6283 = vmatpush1.bf16.msra.mxu0 %v5864
    %6284 = vmatprep.subr.bf16.mxu0 %v5871
    %6285 = vmatpush1.bf16.msra.mxu0 %v5870
    %6286 = vmatprep.subr.bf16.mxu0 %v5877
    %6287 = vmatpush1.bf16.msra.mxu0 %v5876
    %6288 = vmatprep.subr.bf16.mxu0 %v5883
    %6289 = vmatpush1.bf16.msra.mxu0 %v5882
    %6290 = vmatprep.mubr.bf16.mxu0 %v4411
    %6291 = vmatmul.mubr.bf16.gmra.mrb[0].mxu0 %v4410
    %v6292 = vpop.f32.mrb[0].mxu0
    %v6293 = vadd.f32 %v6252, %v6292
    %v6294 = vpop.f32.mrb[0].mxu0
    %v6295 = vadd.f32 %v6254, %v6294
    %v6296 = vpop.f32.mrb[0].mxu0
    %v6297 = vpop.f32.mrb[0].mxu0
    %6298 = vdwg.mxu0
    %6299 = vmatprep.subr.bf16.mxu0 %v5603
    %6300 = vmatpush1.bf16.msra.mxu0 %v5602
    %6301 = vmatprep.subr.bf16.mxu0 %v5609
    %6302 = vmatpush1.bf16.msra.mxu0 %v5608
    %6303 = vmatprep.subr.bf16.mxu0 %v5615
    %6304 = vmatpush1.bf16.msra.mxu0 %v5614
    %6305 = vmatprep.subr.bf16.mxu0 %v5621
    %6306 = vmatpush1.bf16.msra.mxu0 %v5620
    %6307 = vmatprep.subr.bf16.mxu0 %v5627
    %6308 = vmatpush1.bf16.msra.mxu0 %v5626
    %6309 = vmatprep.subr.bf16.mxu0 %v5633
    %6310 = vmatpush1.bf16.msra.mxu0 %v5632
    %6311 = vmatprep.subr.bf16.mxu0 %v5639
    %6312 = vmatpush1.bf16.msra.mxu0 %v5638
    %6313 = vmatprep.subr.bf16.mxu0 %v5645
    %6314 = vmatpush1.bf16.msra.mxu0 %v5644
    %6315 = vmatprep.subr.bf16.mxu0 %v5651
    %6316 = vmatpush1.bf16.msra.mxu0 %v5650
    %6317 = vmatprep.subr.bf16.mxu0 %v5657
    %6318 = vmatpush1.bf16.msra.mxu0 %v5656
    %6319 = vmatprep.subr.bf16.mxu0 %v5663
    %6320 = vmatpush1.bf16.msra.mxu0 %v5662
    %6321 = vmatprep.subr.bf16.mxu0 %v5669
    %6322 = vmatpush1.bf16.msra.mxu0 %v5668
    %6323 = vmatprep.subr.bf16.mxu0 %v5675
    %6324 = vmatpush1.bf16.msra.mxu0 %v5674
    %6325 = vmatprep.subr.bf16.mxu0 %v5681
    %6326 = vmatpush1.bf16.msra.mxu0 %v5680
    %6327 = vmatprep.subr.bf16.mxu0 %v5687
    %6328 = vmatpush1.bf16.msra.mxu0 %v5686
    %6329 = vmatprep.subr.bf16.mxu0 %v5693
    %6330 = vmatpush1.bf16.msra.mxu0 %v5692
    %6331 = vmatprep.mubr.bf16.mxu0 %v4407
    %6332 = vmatmul.mubr.bf16.gmra.mrb[0].mxu0 %v4406
    %v6333 = vpop.f32.mrb[0].mxu0
    %v6334 = vadd.f32 %v4717, %v6333
    %v6335 = vpop.f32.mrb[0].mxu0
    %v6336 = vadd.f32 %v4721, %v6335
    %v6337 = vpop.f32.mrb[0].mxu0
    %v6338 = vpop.f32.mrb[0].mxu0
    %6339 = vdwg.mxu0
    %6340 = vmatprep.subr.bf16.mxu0 %v5699
    %6341 = vmatpush1.bf16.msra.mxu0 %v5698
    %6342 = vmatprep.subr.bf16.mxu0 %v5705
    %6343 = vmatpush1.bf16.msra.mxu0 %v5704
    %6344 = vmatprep.subr.bf16.mxu0 %v5711
    %6345 = vmatpush1.bf16.msra.mxu0 %v5710
    %6346 = vmatprep.subr.bf16.mxu0 %v5717
    %6347 = vmatpush1.bf16.msra.mxu0 %v5716
    %6348 = vmatprep.subr.bf16.mxu0 %v5723
    %6349 = vmatpush1.bf16.msra.mxu0 %v5722
    %6350 = vmatprep.subr.bf16.mxu0 %v5729
    %6351 = vmatpush1.bf16.msra.mxu0 %v5728
    %6352 = vmatprep.subr.bf16.mxu0 %v5735
    %6353 = vmatpush1.bf16.msra.mxu0 %v5734
    %6354 = vmatprep.subr.bf16.mxu0 %v5741
    %6355 = vmatpush1.bf16.msra.mxu0 %v5740
    %6356 = vmatprep.subr.bf16.mxu0 %v5747
    %6357 = vmatpush1.bf16.msra.mxu0 %v5746
    %6358 = vmatprep.subr.bf16.mxu0 %v5753
    %6359 = vmatpush1.bf16.msra.mxu0 %v5752
    %6360 = vmatprep.subr.bf16.mxu0 %v5759
    %6361 = vmatpush1.bf16.msra.mxu0 %v5758
    %6362 = vmatprep.subr.bf16.mxu0 %v5765
    %6363 = vmatpush1.bf16.msra.mxu0 %v5764
    %6364 = vmatprep.subr.bf16.mxu0 %v5771
    %6365 = vmatpush1.bf16.msra.mxu0 %v5770
    %6366 = vmatprep.subr.bf16.mxu0 %v5777
    %6367 = vmatpush1.bf16.msra.mxu0 %v5776
    %6368 = vmatprep.subr.bf16.mxu0 %v5783
    %6369 = vmatpush1.bf16.msra.mxu0 %v5782
    %6370 = vmatprep.subr.bf16.mxu0 %v5789
    %6371 = vmatpush1.bf16.msra.mxu0 %v5788
    %6372 = vmatprep.mubr.bf16.mxu0 %v4409
    %6373 = vmatmul.mubr.bf16.gmra.mrb[0].mxu0 %v4408
    %v6374 = vpop.f32.mrb[0].mxu0
    %v6375 = vadd.f32 %v6334, %v6374
    %v6376 = vpop.f32.mrb[0].mxu0
    %v6377 = vadd.f32 %v6336, %v6376
    %v6378 = vpop.f32.mrb[0].mxu0
    %v6379 = vpop.f32.mrb[0].mxu0
    %6380 = vdwg.mxu0
    %6381 = vmatprep.subr.bf16.mxu0 %v5795
    %6382 = vmatpush1.bf16.msra.mxu0 %v5794
    %6383 = vmatprep.subr.bf16.mxu0 %v5801
    %6384 = vmatpush1.bf16.msra.mxu0 %v5800
    %6385 = vmatprep.subr.bf16.mxu0 %v5807
    %6386 = vmatpush1.bf16.msra.mxu0 %v5806
    %6387 = vmatprep.subr.bf16.mxu0 %v5813
    %6388 = vmatpush1.bf16.msra.mxu0 %v5812
    %6389 = vmatprep.subr.bf16.mxu0 %v5819
    %6390 = vmatpush1.bf16.msra.mxu0 %v5818
    %6391 = vmatprep.subr.bf16.mxu0 %v5825
    %6392 = vmatpush1.bf16.msra.mxu0 %v5824
    %6393 = vmatprep.subr.bf16.mxu0 %v5831
    %6394 = vmatpush1.bf16.msra.mxu0 %v5830
    %6395 = vmatprep.subr.bf16.mxu0 %v5837
    %6396 = vmatpush1.bf16.msra.mxu0 %v5836
    %6397 = vmatprep.subr.bf16.mxu0 %v5843
    %6398 = vmatpush1.bf16.msra.mxu0 %v5842
    %6399 = vmatprep.subr.bf16.mxu0 %v5849
    %6400 = vmatpush1.bf16.msra.mxu0 %v5848
    %6401 = vmatprep.subr.bf16.mxu0 %v5855
    %6402 = vmatpush1.bf16.msra.mxu0 %v5854
    %6403 = vmatprep.subr.bf16.mxu0 %v5861
    %6404 = vmatpush1.bf16.msra.mxu0 %v5860
    %6405 = vmatprep.subr.bf16.mxu0 %v5867
    %6406 = vmatpush1.bf16.msra.mxu0 %v5866
    %6407 = vmatprep.subr.bf16.mxu0 %v5873
    %6408 = vmatpush1.bf16.msra.mxu0 %v5872
    %6409 = vmatprep.subr.bf16.mxu0 %v5879
    %6410 = vmatpush1.bf16.msra.mxu0 %v5878
    %6411 = vmatprep.subr.bf16.mxu0 %v5885
    %6412 = vmatpush1.bf16.msra.mxu0 %v5884
    %6413 = vmatprep.mubr.bf16.mxu0 %v4411
    %6414 = vmatmul.mubr.bf16.gmra.mrb[0].mxu0 %v4410
    %v6415 = vpop.f32.mrb[0].mxu0
    %v6416 = vadd.f32 %v6375, %v6415
    %v6417 = vpop.f32.mrb[0].mxu0
    %v6418 = vadd.f32 %v6377, %v6417
    %v6419 = vpop.f32.mrb[0].mxu0
    %v6420 = vpop.f32.mrb[0].mxu0
    %6421 = vdwg.mxu0
    %6422 = vmatprep.subr.bf16.mxu0 %v5605
    %6423 = vmatpush1.bf16.msra.mxu0 %v5604
    %6424 = vmatprep.subr.bf16.mxu0 %v5611
    %6425 = vmatpush1.bf16.msra.mxu0 %v5610
    %6426 = vmatprep.subr.bf16.mxu0 %v5617
    %6427 = vmatpush1.bf16.msra.mxu0 %v5616
    %6428 = vmatprep.subr.bf16.mxu0 %v5623
    %6429 = vmatpush1.bf16.msra.mxu0 %v5622
    %6430 = vmatprep.subr.bf16.mxu0 %v5629
    %6431 = vmatpush1.bf16.msra.mxu0 %v5628
    %6432 = vmatprep.subr.bf16.mxu0 %v5635
    %6433 = vmatpush1.bf16.msra.mxu0 %v5634
    %6434 = vmatprep.subr.bf16.mxu0 %v5641
    %6435 = vmatpush1.bf16.msra.mxu0 %v5640
    %6436 = vmatprep.subr.bf16.mxu0 %v5647
    %6437 = vmatpush1.bf16.msra.mxu0 %v5646
    %6438 = vmatprep.subr.bf16.mxu0 %v5653
    %6439 = vmatpush1.bf16.msra.mxu0 %v5652
    %6440 = vmatprep.subr.bf16.mxu0 %v5659
    %6441 = vmatpush1.bf16.msra.mxu0 %v5658
    %6442 = vmatprep.subr.bf16.mxu0 %v5665
    %6443 = vmatpush1.bf16.msra.mxu0 %v5664
    %6444 = vmatprep.subr.bf16.mxu0 %v5671
    %6445 = vmatpush1.bf16.msra.mxu0 %v5670
    %6446 = vmatprep.subr.bf16.mxu0 %v5677
    %6447 = vmatpush1.bf16.msra.mxu0 %v5676
    %6448 = vmatprep.subr.bf16.mxu0 %v5683
    %6449 = vmatpush1.bf16.msra.mxu0 %v5682
    %6450 = vmatprep.subr.bf16.mxu0 %v5689
    %6451 = vmatpush1.bf16.msra.mxu0 %v5688
    %6452 = vmatprep.subr.bf16.mxu0 %v5695
    %6453 = vmatpush1.bf16.msra.mxu0 %v5694
    %6454 = vmatprep.mubr.bf16.mxu0 %v4407
    %6455 = vmatmul.mubr.bf16.gmra.mrb[0].mxu0 %v4406
    %v6456 = vpop.f32.mrb[0].mxu0
    %v6457 = vadd.f32 %v4725, %v6456
    %v6458 = vpop.f32.mrb[0].mxu0
    %v6459 = vadd.f32 %v4729, %v6458
    %v6460 = vpop.f32.mrb[0].mxu0
    %v6461 = vpop.f32.mrb[0].mxu0
    %6462 = vdwg.mxu0
    %6463 = vmatprep.subr.bf16.mxu0 %v5701
    %6464 = vmatpush1.bf16.msra.mxu0 %v5700
    %6465 = vmatprep.subr.bf16.mxu0 %v5707
    %6466 = vmatpush1.bf16.msra.mxu0 %v5706
    %6467 = vmatprep.subr.bf16.mxu0 %v5713
    %6468 = vmatpush1.bf16.msra.mxu0 %v5712
    %6469 = vmatprep.subr.bf16.mxu0 %v5719
    %6470 = vmatpush1.bf16.msra.mxu0 %v5718
    %6471 = vmatprep.subr.bf16.mxu0 %v5725
    %6472 = vmatpush1.bf16.msra.mxu0 %v5724
    %6473 = vmatprep.subr.bf16.mxu0 %v5731
    %6474 = vmatpush1.bf16.msra.mxu0 %v5730
    %6475 = vmatprep.subr.bf16.mxu0 %v5737
    %6476 = vmatpush1.bf16.msra.mxu0 %v5736
    %6477 = vmatprep.subr.bf16.mxu0 %v5743
    %6478 = vmatpush1.bf16.msra.mxu0 %v5742
    %6479 = vmatprep.subr.bf16.mxu0 %v5749
    %6480 = vmatpush1.bf16.msra.mxu0 %v5748
    %6481 = vmatprep.subr.bf16.mxu0 %v5755
    %6482 = vmatpush1.bf16.msra.mxu0 %v5754
    %6483 = vmatprep.subr.bf16.mxu0 %v5761
    %6484 = vmatpush1.bf16.msra.mxu0 %v5760
    %6485 = vmatprep.subr.bf16.mxu0 %v5767
    %6486 = vmatpush1.bf16.msra.mxu0 %v5766
    %6487 = vmatprep.subr.bf16.mxu0 %v5773
    %6488 = vmatpush1.bf16.msra.mxu0 %v5772
    %6489 = vmatprep.subr.bf16.mxu0 %v5779
    %6490 = vmatpush1.bf16.msra.mxu0 %v5778
    %6491 = vmatprep.subr.bf16.mxu0 %v5785
    %6492 = vmatpush1.bf16.msra.mxu0 %v5784
    %6493 = vmatprep.subr.bf16.mxu0 %v5791
    %6494 = vmatpush1.bf16.msra.mxu0 %v5790
    %6495 = vmatprep.mubr.bf16.mxu0 %v4409
    %6496 = vmatmul.mubr.bf16.gmra.mrb[0].mxu0 %v4408
    %v6497 = vpop.f32.mrb[0].mxu0
    %v6498 = vadd.f32 %v6457, %v6497
    %v6499 = vpop.f32.mrb[0].mxu0
    %v6500 = vadd.f32 %v6459, %v6499
    %v6501 = vpop.f32.mrb[0].mxu0
    %v6502 = vpop.f32.mrb[0].mxu0
    %6503 = vdwg.mxu0
    %6504 = vmatprep.subr.bf16.mxu0 %v5797
    %6505 = vmatpush1.bf16.msra.mxu0 %v5796
    %6506 = vmatprep.subr.bf16.mxu0 %v5803
    %6507 = vmatpush1.bf16.msra.mxu0 %v5802
    %6508 = vmatprep.subr.bf16.mxu0 %v5809
    %6509 = vmatpush1.bf16.msra.mxu0 %v5808
    %6510 = vmatprep.subr.bf16.mxu0 %v5815
    %6511 = vmatpush1.bf16.msra.mxu0 %v5814
    %6512 = vmatprep.subr.bf16.mxu0 %v5821
    %6513 = vmatpush1.bf16.msra.mxu0 %v5820
    %6514 = vmatprep.subr.bf16.mxu0 %v5827
    %6515 = vmatpush1.bf16.msra.mxu0 %v5826
    %6516 = vmatprep.subr.bf16.mxu0 %v5833
    %6517 = vmatpush1.bf16.msra.mxu0 %v5832
    %6518 = vmatprep.subr.bf16.mxu0 %v5839
    %6519 = vmatpush1.bf16.msra.mxu0 %v5838
    %6520 = vmatprep.subr.bf16.mxu0 %v5845
    %6521 = vmatpush1.bf16.msra.mxu0 %v5844
    %6522 = vmatprep.subr.bf16.mxu0 %v5851
    %6523 = vmatpush1.bf16.msra.mxu0 %v5850
    %6524 = vmatprep.subr.bf16.mxu0 %v5857
    %6525 = vmatpush1.bf16.msra.mxu0 %v5856
    %6526 = vmatprep.subr.bf16.mxu0 %v5863
    %6527 = vmatpush1.bf16.msra.mxu0 %v5862
    %6528 = vmatprep.subr.bf16.mxu0 %v5869
    %6529 = vmatpush1.bf16.msra.mxu0 %v5868
    %6530 = vmatprep.subr.bf16.mxu0 %v5875
    %6531 = vmatpush1.bf16.msra.mxu0 %v5874
    %6532 = vmatprep.subr.bf16.mxu0 %v5881
    %6533 = vmatpush1.bf16.msra.mxu0 %v5880
    %6534 = vmatprep.subr.bf16.mxu0 %v5887
    %6535 = vmatpush1.bf16.msra.mxu0 %v5886
    %6536 = vmatprep.mubr.bf16.mxu0 %v4411
    %6537 = vmatmul.mubr.bf16.gmra.mrb[0].mxu0 %v4410
    %v6538 = vpop.f32.mrb[0].mxu0
    %v6539 = vadd.f32 %v6498, %v6538
    %v6540 = vpop.f32.mrb[0].mxu0
    %v6541 = vadd.f32 %v6500, %v6540
    %v6542 = vpop.f32.mrb[0].mxu0
    %v6543 = vpop.f32.mrb[0].mxu0
    %6544 = vdwg.mxu0
    %v6545 = vstv %s4404
    %v6546 = vmul.f32 %v6545, %v4398
    %v6547 = vmul.f32 %v6545, %v4399
    %v6548 = vmul.f32 %v6545, %v4400
    %v6549 = vmul.f32 %v6545, %v4401
    %v6550 = vmul.f32 %v6545, %v4402
    %v6551 = vmul.f32 %v6545, %v4403
    %v6552 = vadd.f32 %v6293, %v6546
    %v6553 = vadd.f32 %v6295, %v6547
    %v6554 = vadd.f32 %v6416, %v6548
    %v6555 = vadd.f32 %v6418, %v6549
    %v6556 = vadd.f32 %v6539, %v6550
    %v6557 = vadd.f32 %v6541, %v6551
    %v6558 = vstv %s4405
    %v6559 = vmul.f32 %v6558, %v6552
    %v6560 = vmul.f32 %v6558, %v6553
    %v6561 = vmul.f32 %v6558, %v6554
    %v6562 = vmul.f32 %v6558, %v6555
    %v6563 = vmul.f32 %v6558, %v6556
    %v6564 = vmul.f32 %v6558, %v6557
    %v6565 = vmax.f32 %v6552, %v6559
    %v6566 = vmax.f32 %v6553, %v6560
    %v6567 = vmax.f32 %v6554, %v6561
    %v6568 = vmax.f32 %v6555, %v6562
    %v6569 = vmax.f32 %v6556, %v6563
    %v6570 = vmax.f32 %v6557, %v6564
    %s6571 = sld [smem:[#allocation2 + $0x6]]
    %s6572 = sld [smem:[#allocation2 + $0x7]]
    %v6573 = vpack.c.bf16 %v6565, %v6565
    %v6574 = vpack.c.bf16 %v6566, %v6566
    %v6575 = vpack.c.bf16 %v6567, %v6567
    %v6576 = vpack.c.bf16 %v6568, %v6568
    %v6577 = vpack.c.bf16 %v6569, %v6569
    %v6578 = vpack.c.bf16 %v6570, %v6570
    %s6579 = scalar_lea.vmem [#allocation7], 6912
    %v6580 = vld [vmem:[%s6579] sm:$0xff]
    %v6581 = vld [vmem:[%s6579 + $0x8] sm:$0xff]
    %v6582 = vld [vmem:[%s6579 + $0x10] sm:$0xff]
    %v6583 = vld [vmem:[%s6579 + $0x18] sm:$0xff]
    %v6584 = vld [vmem:[%s6579 + $0x20] sm:$0xff]
    %v6585 = vld [vmem:[%s6579 + $0x28] sm:$0xff]
    %v6586 = vld [vmem:[%s6579 + $0x30] sm:$0xff]
    %v6587 = vld [vmem:[%s6579 + $0x38] sm:$0xff]
    %v6588 = vld [vmem:[%s6579 + $0x40] sm:$0xff]
    %v6589 = vld [vmem:[%s6579 + $0x48] sm:$0xff]
    %v6590 = vld [vmem:[%s6579 + $0x50] sm:$0xff]
    %v6591 = vld [vmem:[%s6579 + $0x58] sm:$0xff]
    %v6592 = vld [vmem:[%s6579 + $0x60] sm:$0xff]
    %v6593 = vld [vmem:[%s6579 + $0x68] sm:$0xff]
    %v6594 = vld [vmem:[%s6579 + $0x70] sm:$0xff]
    %v6595 = vld [vmem:[%s6579 + $0x78] sm:$0xff]
    %v6596 = vld [vmem:[%s6579 + $0x80] sm:$0xff]
    %v6597 = vld [vmem:[%s6579 + $0x88] sm:$0xff]
    %v6598 = vld [vmem:[%s6579 + $0x90] sm:$0xff]
    %v6599 = vld [vmem:[%s6579 + $0x98] sm:$0xff]
    %v6600 = vld [vmem:[%s6579 + $0xa0] sm:$0xff]
    %v6601 = vld [vmem:[%s6579 + $0xa8] sm:$0xff]
    %v6602 = vld [vmem:[%s6579 + $0xb0] sm:$0xff]
    %v6603 = vld [vmem:[%s6579 + $0xb8] sm:$0xff]
    %v6604 = vld [vmem:[%s6579 + $0xc0] sm:$0xff]
    %v6605 = vld [vmem:[%s6579 + $0xc8] sm:$0xff]
    %v6606 = vld [vmem:[%s6579 + $0xd0] sm:$0xff]
    %v6607 = vld [vmem:[%s6579 + $0xd8] sm:$0xff]
    %v6608 = vld [vmem:[%s6579 + $0xe0] sm:$0xff]
    %v6609 = vld [vmem:[%s6579 + $0xe8] sm:$0xff]
    %v6610 = vld [vmem:[%s6579 + $0xf0] sm:$0xff]
    %v6611 = vld [vmem:[%s6579 + $0xf8] sm:$0xff]
    %v6612 = vld [vmem:[%s6579 + $0x100] sm:$0xff]
    %v6613 = vld [vmem:[%s6579 + $0x108] sm:$0xff]
    %v6614 = vld [vmem:[%s6579 + $0x110] sm:$0xff]
    %v6615 = vld [vmem:[%s6579 + $0x118] sm:$0xff]
    %v6616 = vld [vmem:[%s6579 + $0x120] sm:$0xff]
    %v6617 = vld [vmem:[%s6579 + $0x128] sm:$0xff]
    %v6618 = vld [vmem:[%s6579 + $0x130] sm:$0xff]
    %v6619 = vld [vmem:[%s6579 + $0x138] sm:$0xff]
    %v6620 = vld [vmem:[%s6579 + $0x140] sm:$0xff]
    %v6621 = vld [vmem:[%s6579 + $0x148] sm:$0xff]
    %v6622 = vld [vmem:[%s6579 + $0x150] sm:$0xff]
    %v6623 = vld [vmem:[%s6579 + $0x158] sm:$0xff]
    %v6624 = vld [vmem:[%s6579 + $0x160] sm:$0xff]
    %v6625 = vld [vmem:[%s6579 + $0x168] sm:$0xff]
    %v6626 = vld [vmem:[%s6579 + $0x170] sm:$0xff]
    %v6627 = vld [vmem:[%s6579 + $0x178] sm:$0xff]
    %v6628 = vld [vmem:[%s6579 + $0x180] sm:$0xff]
    %v6629 = vld [vmem:[%s6579 + $0x188] sm:$0xff]
    %v6630 = vld [vmem:[%s6579 + $0x190] sm:$0xff]
    %v6631 = vld [vmem:[%s6579 + $0x198] sm:$0xff]
    %v6632 = vld [vmem:[%s6579 + $0x1a0] sm:$0xff]
    %v6633 = vld [vmem:[%s6579 + $0x1a8] sm:$0xff]
    %v6634 = vld [vmem:[%s6579 + $0x1b0] sm:$0xff]
    %v6635 = vld [vmem:[%s6579 + $0x1b8] sm:$0xff]
    %v6636 = vld [vmem:[%s6579 + $0x1c0] sm:$0xff]
    %v6637 = vld [vmem:[%s6579 + $0x1c8] sm:$0xff]
    %v6638 = vld [vmem:[%s6579 + $0x1d0] sm:$0xff]
    %v6639 = vld [vmem:[%s6579 + $0x1d8] sm:$0xff]
    %v6640 = vld [vmem:[%s6579 + $0x1e0] sm:$0xff]
    %v6641 = vld [vmem:[%s6579 + $0x1e8] sm:$0xff]
    %v6642 = vld [vmem:[%s6579 + $0x1f0] sm:$0xff]
    %v6643 = vld [vmem:[%s6579 + $0x1f8] sm:$0xff]
    %v6644 = vld [vmem:[%s6579 + $0x200] sm:$0xff]
    %v6645 = vld [vmem:[%s6579 + $0x208] sm:$0xff]
    %v6646 = vld [vmem:[%s6579 + $0x210] sm:$0xff]
    %v6647 = vld [vmem:[%s6579 + $0x218] sm:$0xff]
    %v6648 = vld [vmem:[%s6579 + $0x220] sm:$0xff]
    %v6649 = vld [vmem:[%s6579 + $0x228] sm:$0xff]
    %v6650 = vld [vmem:[%s6579 + $0x230] sm:$0xff]
    %v6651 = vld [vmem:[%s6579 + $0x238] sm:$0xff]
    %v6652 = vld [vmem:[%s6579 + $0x240] sm:$0xff]
    %v6653 = vld [vmem:[%s6579 + $0x248] sm:$0xff]
    %v6654 = vld [vmem:[%s6579 + $0x250] sm:$0xff]
    %v6655 = vld [vmem:[%s6579 + $0x258] sm:$0xff]
    %v6656 = vld [vmem:[%s6579 + $0x260] sm:$0xff]
    %v6657 = vld [vmem:[%s6579 + $0x268] sm:$0xff]
    %v6658 = vld [vmem:[%s6579 + $0x270] sm:$0xff]
    %v6659 = vld [vmem:[%s6579 + $0x278] sm:$0xff]
    %v6660 = vld [vmem:[%s6579 + $0x280] sm:$0xff]
    %v6661 = vld [vmem:[%s6579 + $0x288] sm:$0xff]
    %v6662 = vld [vmem:[%s6579 + $0x290] sm:$0xff]
    %v6663 = vld [vmem:[%s6579 + $0x298] sm:$0xff]
    %v6664 = vld [vmem:[%s6579 + $0x2a0] sm:$0xff]
    %v6665 = vld [vmem:[%s6579 + $0x2a8] sm:$0xff]
    %v6666 = vld [vmem:[%s6579 + $0x2b0] sm:$0xff]
    %v6667 = vld [vmem:[%s6579 + $0x2b8] sm:$0xff]
    %v6668 = vld [vmem:[%s6579 + $0x2c0] sm:$0xff]
    %v6669 = vld [vmem:[%s6579 + $0x2c8] sm:$0xff]
    %v6670 = vld [vmem:[%s6579 + $0x2d0] sm:$0xff]
    %v6671 = vld [vmem:[%s6579 + $0x2d8] sm:$0xff]
    %v6672 = vld [vmem:[%s6579 + $0x2e0] sm:$0xff]
    %v6673 = vld [vmem:[%s6579 + $0x2e8] sm:$0xff]
    %v6674 = vld [vmem:[%s6579 + $0x2f0] sm:$0xff]
    %v6675 = vld [vmem:[%s6579 + $0x2f8] sm:$0xff]
    %v6676 = vld [vmem:[%s6579 + $0x300] sm:$0xff]
    %v6677 = vld [vmem:[%s6579 + $0x308] sm:$0xff]
    %v6678 = vld [vmem:[%s6579 + $0x310] sm:$0xff]
    %v6679 = vld [vmem:[%s6579 + $0x318] sm:$0xff]
    %v6680 = vld [vmem:[%s6579 + $0x320] sm:$0xff]
    %v6681 = vld [vmem:[%s6579 + $0x328] sm:$0xff]
    %v6682 = vld [vmem:[%s6579 + $0x330] sm:$0xff]
    %v6683 = vld [vmem:[%s6579 + $0x338] sm:$0xff]
    %v6684 = vld [vmem:[%s6579 + $0x340] sm:$0xff]
    %v6685 = vld [vmem:[%s6579 + $0x348] sm:$0xff]
    %v6686 = vld [vmem:[%s6579 + $0x350] sm:$0xff]
    %v6687 = vld [vmem:[%s6579 + $0x358] sm:$0xff]
    %v6688 = vld [vmem:[%s6579 + $0x360] sm:$0xff]
    %v6689 = vld [vmem:[%s6579 + $0x368] sm:$0xff]
    %v6690 = vld [vmem:[%s6579 + $0x370] sm:$0xff]
    %v6691 = vld [vmem:[%s6579 + $0x378] sm:$0xff]
    %v6692 = vld [vmem:[%s6579 + $0x380] sm:$0xff]
    %v6693 = vld [vmem:[%s6579 + $0x388] sm:$0xff]
    %v6694 = vld [vmem:[%s6579 + $0x390] sm:$0xff]
    %v6695 = vld [vmem:[%s6579 + $0x398] sm:$0xff]
    %v6696 = vld [vmem:[%s6579 + $0x3a0] sm:$0xff]
    %v6697 = vld [vmem:[%s6579 + $0x3a8] sm:$0xff]
    %v6698 = vld [vmem:[%s6579 + $0x3b0] sm:$0xff]
    %v6699 = vld [vmem:[%s6579 + $0x3b8] sm:$0xff]
    %v6700 = vld [vmem:[%s6579 + $0x3c0] sm:$0xff]
    %v6701 = vld [vmem:[%s6579 + $0x3c8] sm:$0xff]
    %v6702 = vld [vmem:[%s6579 + $0x3d0] sm:$0xff]
    %v6703 = vld [vmem:[%s6579 + $0x3d8] sm:$0xff]
    %v6704 = vld [vmem:[%s6579 + $0x3e0] sm:$0xff]
    %v6705 = vld [vmem:[%s6579 + $0x3e8] sm:$0xff]
    %v6706 = vld [vmem:[%s6579 + $0x3f0] sm:$0xff]
    %v6707 = vld [vmem:[%s6579 + $0x3f8] sm:$0xff]
    %v6708 = vld [vmem:[%s6579 + $0x400] sm:$0xff]
    %v6709 = vld [vmem:[%s6579 + $0x408] sm:$0xff]
    %v6710 = vld [vmem:[%s6579 + $0x410] sm:$0xff]
    %v6711 = vld [vmem:[%s6579 + $0x418] sm:$0xff]
    %v6712 = vld [vmem:[%s6579 + $0x420] sm:$0xff]
    %v6713 = vld [vmem:[%s6579 + $0x428] sm:$0xff]
    %v6714 = vld [vmem:[%s6579 + $0x430] sm:$0xff]
    %v6715 = vld [vmem:[%s6579 + $0x438] sm:$0xff]
    %v6716 = vld [vmem:[%s6579 + $0x440] sm:$0xff]
    %v6717 = vld [vmem:[%s6579 + $0x448] sm:$0xff]
    %v6718 = vld [vmem:[%s6579 + $0x450] sm:$0xff]
    %v6719 = vld [vmem:[%s6579 + $0x458] sm:$0xff]
    %v6720 = vld [vmem:[%s6579 + $0x460] sm:$0xff]
    %v6721 = vld [vmem:[%s6579 + $0x468] sm:$0xff]
    %v6722 = vld [vmem:[%s6579 + $0x470] sm:$0xff]
    %v6723 = vld [vmem:[%s6579 + $0x478] sm:$0xff]
    %v6724 = vld [vmem:[%s6579 + $0x480] sm:$0xff]
    %v6725 = vld [vmem:[%s6579 + $0x488] sm:$0xff]
    %v6726 = vld [vmem:[%s6579 + $0x490] sm:$0xff]
    %v6727 = vld [vmem:[%s6579 + $0x498] sm:$0xff]
    %v6728 = vld [vmem:[%s6579 + $0x4a0] sm:$0xff]
    %v6729 = vld [vmem:[%s6579 + $0x4a8] sm:$0xff]
    %v6730 = vld [vmem:[%s6579 + $0x4b0] sm:$0xff]
    %v6731 = vld [vmem:[%s6579 + $0x4b8] sm:$0xff]
    %v6732 = vld [vmem:[%s6579 + $0x4c0] sm:$0xff]
    %v6733 = vld [vmem:[%s6579 + $0x4c8] sm:$0xff]
    %v6734 = vld [vmem:[%s6579 + $0x4d0] sm:$0xff]
    %v6735 = vld [vmem:[%s6579 + $0x4d8] sm:$0xff]
    %v6736 = vld [vmem:[%s6579 + $0x4e0] sm:$0xff]
    %v6737 = vld [vmem:[%s6579 + $0x4e8] sm:$0xff]
    %v6738 = vld [vmem:[%s6579 + $0x4f0] sm:$0xff]
    %v6739 = vld [vmem:[%s6579 + $0x4f8] sm:$0xff]
    %v6740 = vld [vmem:[%s6579 + $0x500] sm:$0xff]
    %v6741 = vld [vmem:[%s6579 + $0x508] sm:$0xff]
    %v6742 = vld [vmem:[%s6579 + $0x510] sm:$0xff]
    %v6743 = vld [vmem:[%s6579 + $0x518] sm:$0xff]
    %v6744 = vld [vmem:[%s6579 + $0x520] sm:$0xff]
    %v6745 = vld [vmem:[%s6579 + $0x528] sm:$0xff]
    %v6746 = vld [vmem:[%s6579 + $0x530] sm:$0xff]
    %v6747 = vld [vmem:[%s6579 + $0x538] sm:$0xff]
    %v6748 = vld [vmem:[%s6579 + $0x540] sm:$0xff]
    %v6749 = vld [vmem:[%s6579 + $0x548] sm:$0xff]
    %v6750 = vld [vmem:[%s6579 + $0x550] sm:$0xff]
    %v6751 = vld [vmem:[%s6579 + $0x558] sm:$0xff]
    %v6752 = vld [vmem:[%s6579 + $0x560] sm:$0xff]
    %v6753 = vld [vmem:[%s6579 + $0x568] sm:$0xff]
    %v6754 = vld [vmem:[%s6579 + $0x570] sm:$0xff]
    %v6755 = vld [vmem:[%s6579 + $0x578] sm:$0xff]
    %v6756 = vld [vmem:[%s6579 + $0x580] sm:$0xff]
    %v6757 = vld [vmem:[%s6579 + $0x588] sm:$0xff]
    %v6758 = vld [vmem:[%s6579 + $0x590] sm:$0xff]
    %v6759 = vld [vmem:[%s6579 + $0x598] sm:$0xff]
    %v6760 = vld [vmem:[%s6579 + $0x5a0] sm:$0xff]
    %v6761 = vld [vmem:[%s6579 + $0x5a8] sm:$0xff]
    %v6762 = vld [vmem:[%s6579 + $0x5b0] sm:$0xff]
    %v6763 = vld [vmem:[%s6579 + $0x5b8] sm:$0xff]
    %v6764 = vld [vmem:[%s6579 + $0x5c0] sm:$0xff]
    %v6765 = vld [vmem:[%s6579 + $0x5c8] sm:$0xff]
    %v6766 = vld [vmem:[%s6579 + $0x5d0] sm:$0xff]
    %v6767 = vld [vmem:[%s6579 + $0x5d8] sm:$0xff]
    %v6768 = vld [vmem:[%s6579 + $0x5e0] sm:$0xff]
    %v6769 = vld [vmem:[%s6579 + $0x5e8] sm:$0xff]
    %v6770 = vld [vmem:[%s6579 + $0x5f0] sm:$0xff]
    %v6771 = vld [vmem:[%s6579 + $0x5f8] sm:$0xff]
    %v6772 = vld [vmem:[%s6579 + $0x600] sm:$0xff]
    %v6773 = vld [vmem:[%s6579 + $0x608] sm:$0xff]
    %v6774 = vld [vmem:[%s6579 + $0x610] sm:$0xff]
    %v6775 = vld [vmem:[%s6579 + $0x618] sm:$0xff]
    %v6776 = vld [vmem:[%s6579 + $0x620] sm:$0xff]
    %v6777 = vld [vmem:[%s6579 + $0x628] sm:$0xff]
    %v6778 = vld [vmem:[%s6579 + $0x630] sm:$0xff]
    %v6779 = vld [vmem:[%s6579 + $0x638] sm:$0xff]
    %v6780 = vld [vmem:[%s6579 + $0x640] sm:$0xff]
    %v6781 = vld [vmem:[%s6579 + $0x648] sm:$0xff]
    %v6782 = vld [vmem:[%s6579 + $0x650] sm:$0xff]
    %v6783 = vld [vmem:[%s6579 + $0x658] sm:$0xff]
    %v6784 = vld [vmem:[%s6579 + $0x660] sm:$0xff]
    %v6785 = vld [vmem:[%s6579 + $0x668] sm:$0xff]
    %v6786 = vld [vmem:[%s6579 + $0x670] sm:$0xff]
    %v6787 = vld [vmem:[%s6579 + $0x678] sm:$0xff]
    %v6788 = vld [vmem:[%s6579 + $0x680] sm:$0xff]
    %v6789 = vld [vmem:[%s6579 + $0x688] sm:$0xff]
    %v6790 = vld [vmem:[%s6579 + $0x690] sm:$0xff]
    %v6791 = vld [vmem:[%s6579 + $0x698] sm:$0xff]
    %v6792 = vld [vmem:[%s6579 + $0x6a0] sm:$0xff]
    %v6793 = vld [vmem:[%s6579 + $0x6a8] sm:$0xff]
    %v6794 = vld [vmem:[%s6579 + $0x6b0] sm:$0xff]
    %v6795 = vld [vmem:[%s6579 + $0x6b8] sm:$0xff]
    %v6796 = vld [vmem:[%s6579 + $0x6c0] sm:$0xff]
    %v6797 = vld [vmem:[%s6579 + $0x6c8] sm:$0xff]
    %v6798 = vld [vmem:[%s6579 + $0x6d0] sm:$0xff]
    %v6799 = vld [vmem:[%s6579 + $0x6d8] sm:$0xff]
    %v6800 = vld [vmem:[%s6579 + $0x6e0] sm:$0xff]
    %v6801 = vld [vmem:[%s6579 + $0x6e8] sm:$0xff]
    %v6802 = vld [vmem:[%s6579 + $0x6f0] sm:$0xff]
    %v6803 = vld [vmem:[%s6579 + $0x6f8] sm:$0xff]
    %v6804 = vld [vmem:[%s6579 + $0x700] sm:$0xff]
    %v6805 = vld [vmem:[%s6579 + $0x708] sm:$0xff]
    %v6806 = vld [vmem:[%s6579 + $0x710] sm:$0xff]
    %v6807 = vld [vmem:[%s6579 + $0x718] sm:$0xff]
    %v6808 = vld [vmem:[%s6579 + $0x720] sm:$0xff]
    %v6809 = vld [vmem:[%s6579 + $0x728] sm:$0xff]
    %v6810 = vld [vmem:[%s6579 + $0x730] sm:$0xff]
    %v6811 = vld [vmem:[%s6579 + $0x738] sm:$0xff]
    %v6812 = vld [vmem:[%s6579 + $0x740] sm:$0xff]
    %v6813 = vld [vmem:[%s6579 + $0x748] sm:$0xff]
    %v6814 = vld [vmem:[%s6579 + $0x750] sm:$0xff]
    %v6815 = vld [vmem:[%s6579 + $0x758] sm:$0xff]
    %v6816 = vld [vmem:[%s6579 + $0x760] sm:$0xff]
    %v6817 = vld [vmem:[%s6579 + $0x768] sm:$0xff]
    %v6818 = vld [vmem:[%s6579 + $0x770] sm:$0xff]
    %v6819 = vld [vmem:[%s6579 + $0x778] sm:$0xff]
    %v6820 = vld [vmem:[%s6579 + $0x780] sm:$0xff]
    %v6821 = vld [vmem:[%s6579 + $0x788] sm:$0xff]
    %v6822 = vld [vmem:[%s6579 + $0x790] sm:$0xff]
    %v6823 = vld [vmem:[%s6579 + $0x798] sm:$0xff]
    %v6824 = vld [vmem:[%s6579 + $0x7a0] sm:$0xff]
    %v6825 = vld [vmem:[%s6579 + $0x7a8] sm:$0xff]
    %v6826 = vld [vmem:[%s6579 + $0x7b0] sm:$0xff]
    %v6827 = vld [vmem:[%s6579 + $0x7b8] sm:$0xff]
    %v6828 = vld [vmem:[%s6579 + $0x7c0] sm:$0xff]
    %v6829 = vld [vmem:[%s6579 + $0x7c8] sm:$0xff]
    %v6830 = vld [vmem:[%s6579 + $0x7d0] sm:$0xff]
    %v6831 = vld [vmem:[%s6579 + $0x7d8] sm:$0xff]
    %v6832 = vld [vmem:[%s6579 + $0x7e0] sm:$0xff]
    %v6833 = vld [vmem:[%s6579 + $0x7e8] sm:$0xff]
    %v6834 = vld [vmem:[%s6579 + $0x7f0] sm:$0xff]
    %v6835 = vld [vmem:[%s6579 + $0x7f8] sm:$0xff]
    %v6836 = vld [vmem:[%s6579 + $0x800] sm:$0xff]
    %v6837 = vld [vmem:[%s6579 + $0x808] sm:$0xff]
    %v6838 = vld [vmem:[%s6579 + $0x810] sm:$0xff]
    %v6839 = vld [vmem:[%s6579 + $0x818] sm:$0xff]
    %v6840 = vld [vmem:[%s6579 + $0x820] sm:$0xff]
    %v6841 = vld [vmem:[%s6579 + $0x828] sm:$0xff]
    %v6842 = vld [vmem:[%s6579 + $0x830] sm:$0xff]
    %v6843 = vld [vmem:[%s6579 + $0x838] sm:$0xff]
    %v6844 = vld [vmem:[%s6579 + $0x840] sm:$0xff]
    %v6845 = vld [vmem:[%s6579 + $0x848] sm:$0xff]
    %v6846 = vld [vmem:[%s6579 + $0x850] sm:$0xff]
    %v6847 = vld [vmem:[%s6579 + $0x858] sm:$0xff]
    %v6848 = vld [vmem:[%s6579 + $0x860] sm:$0xff]
    %v6849 = vld [vmem:[%s6579 + $0x868] sm:$0xff]
    %v6850 = vld [vmem:[%s6579 + $0x870] sm:$0xff]
    %v6851 = vld [vmem:[%s6579 + $0x878] sm:$0xff]
    %v6852 = vld [vmem:[%s6579 + $0x880] sm:$0xff]
    %v6853 = vld [vmem:[%s6579 + $0x888] sm:$0xff]
    %v6854 = vld [vmem:[%s6579 + $0x890] sm:$0xff]
    %v6855 = vld [vmem:[%s6579 + $0x898] sm:$0xff]
    %v6856 = vld [vmem:[%s6579 + $0x8a0] sm:$0xff]
    %v6857 = vld [vmem:[%s6579 + $0x8a8] sm:$0xff]
    %v6858 = vld [vmem:[%s6579 + $0x8b0] sm:$0xff]
    %v6859 = vld [vmem:[%s6579 + $0x8b8] sm:$0xff]
    %v6860 = vld [vmem:[%s6579 + $0x8c0] sm:$0xff]
    %v6861 = vld [vmem:[%s6579 + $0x8c8] sm:$0xff]
    %v6862 = vld [vmem:[%s6579 + $0x8d0] sm:$0xff]
    %v6863 = vld [vmem:[%s6579 + $0x8d8] sm:$0xff]
    %v6864 = vld [vmem:[%s6579 + $0x8e0] sm:$0xff]
    %v6865 = vld [vmem:[%s6579 + $0x8e8] sm:$0xff]
    %v6866 = vld [vmem:[%s6579 + $0x8f0] sm:$0xff]
    %v6867 = vld [vmem:[%s6579 + $0x8f8] sm:$0xff]
    %s6868 = scalar_lea.vmem [#allocation9], 3
    %v6869 = vld [vmem:[%s6868] ss:$8 sm:$0xf]
    %v6870 = vld [vmem:[%s6868] ss:$8 sm:$0x30]
    %v6871 = vor.u32 %v6869, %v6870
    %v6873 = vlaneseq
    %v6874 = vshrl.u32 %v6873, 7
    %v6875 = vsub.s32 0, %v6874
    %v6876 = vrot.slane %v6871, %v6875
    %v6877 = vlaneseq
    %v6878 = vshrl.u32 %v6877, 7
    %v6879 = vsub.s32 1, %v6878
    %v6880 = vrot.slane %v6871, %v6879
    %v6881 = vlaneseq
    %v6882 = vshrl.u32 %v6881, 7
    %v6883 = vsub.s32 2, %v6882
    %v6884 = vrot.slane %v6871, %v6883
    %v6885 = vlaneseq
    %v6886 = vshrl.u32 %v6885, 7
    %v6887 = vsub.s32 3, %v6886
    %v6888 = vrot.slane %v6871, %v6887
    %v6889 = vlaneseq
    %v6890 = vshrl.u32 %v6889, 7
    %v6891 = vsub.s32 4, %v6890
    %v6892 = vrot.slane %v6871, %v6891
    %v6893 = vlaneseq
    %v6894 = vshrl.u32 %v6893, 7
    %v6895 = vsub.s32 5, %v6894
    %v6896 = vrot.slane %v6871, %v6895
    %v7191 = vunpack.c.l.b16 %v6580
    %v7192 = vunpack.c.h.b16 %v6580
    %v7193 = vunpack.c.l.b16 %v6581
    %v7194 = vunpack.c.h.b16 %v6581
    %v7195 = vunpack.c.l.b16 %v6582
    %v7196 = vunpack.c.h.b16 %v6582
    %v7197 = vunpack.c.l.b16 %v6583
    %v7198 = vunpack.c.h.b16 %v6583
    %v7199 = vunpack.c.l.b16 %v6584
    %v7200 = vunpack.c.h.b16 %v6584
    %v7201 = vunpack.c.l.b16 %v6585
    %v7202 = vunpack.c.h.b16 %v6585
    %v7203 = vunpack.c.l.b16 %v6586
    %v7204 = vunpack.c.h.b16 %v6586
    %v7205 = vunpack.c.l.b16 %v6587
    %v7206 = vunpack.c.h.b16 %v6587
    %v7207 = vunpack.c.l.b16 %v6588
    %v7208 = vunpack.c.h.b16 %v6588
    %v7209 = vunpack.c.l.b16 %v6589
    %v7210 = vunpack.c.h.b16 %v6589
    %v7211 = vunpack.c.l.b16 %v6590
    %v7212 = vunpack.c.h.b16 %v6590
    %v7213 = vunpack.c.l.b16 %v6591
    %v7214 = vunpack.c.h.b16 %v6591
    %v7215 = vunpack.c.l.b16 %v6592
    %v7216 = vunpack.c.h.b16 %v6592
    %v7217 = vunpack.c.l.b16 %v6593
    %v7218 = vunpack.c.h.b16 %v6593
    %v7219 = vunpack.c.l.b16 %v6594
    %v7220 = vunpack.c.h.b16 %v6594
    %v7221 = vunpack.c.l.b16 %v6595
    %v7222 = vunpack.c.h.b16 %v6595
    %v7223 = vunpack.c.l.b16 %v6596
    %v7224 = vunpack.c.h.b16 %v6596
    %v7225 = vunpack.c.l.b16 %v6597
    %v7226 = vunpack.c.h.b16 %v6597
    %v7227 = vunpack.c.l.b16 %v6598
    %v7228 = vunpack.c.h.b16 %v6598
    %v7229 = vunpack.c.l.b16 %v6599
    %v7230 = vunpack.c.h.b16 %v6599
    %v7231 = vunpack.c.l.b16 %v6600
    %v7232 = vunpack.c.h.b16 %v6600
    %v7233 = vunpack.c.l.b16 %v6601
    %v7234 = vunpack.c.h.b16 %v6601
    %v7235 = vunpack.c.l.b16 %v6602
    %v7236 = vunpack.c.h.b16 %v6602
    %v7237 = vunpack.c.l.b16 %v6603
    %v7238 = vunpack.c.h.b16 %v6603
    %v7239 = vunpack.c.l.b16 %v6604
    %v7240 = vunpack.c.h.b16 %v6604
    %v7241 = vunpack.c.l.b16 %v6605
    %v7242 = vunpack.c.h.b16 %v6605
    %v7243 = vunpack.c.l.b16 %v6606
    %v7244 = vunpack.c.h.b16 %v6606
    %v7245 = vunpack.c.l.b16 %v6607
    %v7246 = vunpack.c.h.b16 %v6607
    %v7247 = vunpack.c.l.b16 %v6608
    %v7248 = vunpack.c.h.b16 %v6608
    %v7249 = vunpack.c.l.b16 %v6609
    %v7250 = vunpack.c.h.b16 %v6609
    %v7251 = vunpack.c.l.b16 %v6610
    %v7252 = vunpack.c.h.b16 %v6610
    %v7253 = vunpack.c.l.b16 %v6611
    %v7254 = vunpack.c.h.b16 %v6611
    %v7255 = vunpack.c.l.b16 %v6612
    %v7256 = vunpack.c.h.b16 %v6612
    %v7257 = vunpack.c.l.b16 %v6613
    %v7258 = vunpack.c.h.b16 %v6613
    %v7259 = vunpack.c.l.b16 %v6614
    %v7260 = vunpack.c.h.b16 %v6614
    %v7261 = vunpack.c.l.b16 %v6615
    %v7262 = vunpack.c.h.b16 %v6615
    %v7263 = vunpack.c.l.b16 %v6616
    %v7264 = vunpack.c.h.b16 %v6616
    %v7265 = vunpack.c.l.b16 %v6617
    %v7266 = vunpack.c.h.b16 %v6617
    %v7267 = vunpack.c.l.b16 %v6618
    %v7268 = vunpack.c.h.b16 %v6618
    %v7269 = vunpack.c.l.b16 %v6619
    %v7270 = vunpack.c.h.b16 %v6619
    %v7271 = vunpack.c.l.b16 %v6620
    %v7272 = vunpack.c.h.b16 %v6620
    %v7273 = vunpack.c.l.b16 %v6621
    %v7274 = vunpack.c.h.b16 %v6621
    %v7275 = vunpack.c.l.b16 %v6622
    %v7276 = vunpack.c.h.b16 %v6622
    %v7277 = vunpack.c.l.b16 %v6623
    %v7278 = vunpack.c.h.b16 %v6623
    %v7279 = vunpack.c.l.b16 %v6624
    %v7280 = vunpack.c.h.b16 %v6624
    %v7281 = vunpack.c.l.b16 %v6625
    %v7282 = vunpack.c.h.b16 %v6625
    %v7283 = vunpack.c.l.b16 %v6626
    %v7284 = vunpack.c.h.b16 %v6626
    %v7285 = vunpack.c.l.b16 %v6627
    %v7286 = vunpack.c.h.b16 %v6627
    %v7287 = vunpack.c.l.b16 %v6628
    %v7288 = vunpack.c.h.b16 %v6628
    %v7289 = vunpack.c.l.b16 %v6629
    %v7290 = vunpack.c.h.b16 %v6629
    %v7291 = vunpack.c.l.b16 %v6630
    %v7292 = vunpack.c.h.b16 %v6630
    %v7293 = vunpack.c.l.b16 %v6631
    %v7294 = vunpack.c.h.b16 %v6631
    %v7295 = vunpack.c.l.b16 %v6632
    %v7296 = vunpack.c.h.b16 %v6632
    %v7297 = vunpack.c.l.b16 %v6633
    %v7298 = vunpack.c.h.b16 %v6633
    %v7299 = vunpack.c.l.b16 %v6634
    %v7300 = vunpack.c.h.b16 %v6634
    %v7301 = vunpack.c.l.b16 %v6635
    %v7302 = vunpack.c.h.b16 %v6635
    %v7303 = vunpack.c.l.b16 %v6636
    %v7304 = vunpack.c.h.b16 %v6636
    %v7305 = vunpack.c.l.b16 %v6637
    %v7306 = vunpack.c.h.b16 %v6637
    %v7307 = vunpack.c.l.b16 %v6638
    %v7308 = vunpack.c.h.b16 %v6638
    %v7309 = vunpack.c.l.b16 %v6639
    %v7310 = vunpack.c.h.b16 %v6639
    %v7311 = vunpack.c.l.b16 %v6640
    %v7312 = vunpack.c.h.b16 %v6640
    %v7313 = vunpack.c.l.b16 %v6641
    %v7314 = vunpack.c.h.b16 %v6641
    %v7315 = vunpack.c.l.b16 %v6642
    %v7316 = vunpack.c.h.b16 %v6642
    %v7317 = vunpack.c.l.b16 %v6643
    %v7318 = vunpack.c.h.b16 %v6643
    %v7319 = vunpack.c.l.b16 %v6644
    %v7320 = vunpack.c.h.b16 %v6644
    %v7321 = vunpack.c.l.b16 %v6645
    %v7322 = vunpack.c.h.b16 %v6645
    %v7323 = vunpack.c.l.b16 %v6646
    %v7324 = vunpack.c.h.b16 %v6646
    %v7325 = vunpack.c.l.b16 %v6647
    %v7326 = vunpack.c.h.b16 %v6647
    %v7327 = vunpack.c.l.b16 %v6648
    %v7328 = vunpack.c.h.b16 %v6648
    %v7329 = vunpack.c.l.b16 %v6649
    %v7330 = vunpack.c.h.b16 %v6649
    %v7331 = vunpack.c.l.b16 %v6650
    %v7332 = vunpack.c.h.b16 %v6650
    %v7333 = vunpack.c.l.b16 %v6651
    %v7334 = vunpack.c.h.b16 %v6651
    %v7335 = vunpack.c.l.b16 %v6652
    %v7336 = vunpack.c.h.b16 %v6652
    %v7337 = vunpack.c.l.b16 %v6653
    %v7338 = vunpack.c.h.b16 %v6653
    %v7339 = vunpack.c.l.b16 %v6654
    %v7340 = vunpack.c.h.b16 %v6654
    %v7341 = vunpack.c.l.b16 %v6655
    %v7342 = vunpack.c.h.b16 %v6655
    %v7343 = vunpack.c.l.b16 %v6656
    %v7344 = vunpack.c.h.b16 %v6656
    %v7345 = vunpack.c.l.b16 %v6657
    %v7346 = vunpack.c.h.b16 %v6657
    %v7347 = vunpack.c.l.b16 %v6658
    %v7348 = vunpack.c.h.b16 %v6658
    %v7349 = vunpack.c.l.b16 %v6659
    %v7350 = vunpack.c.h.b16 %v6659
    %v7351 = vunpack.c.l.b16 %v6660
    %v7352 = vunpack.c.h.b16 %v6660
    %v7353 = vunpack.c.l.b16 %v6661
    %v7354 = vunpack.c.h.b16 %v6661
    %v7355 = vunpack.c.l.b16 %v6662
    %v7356 = vunpack.c.h.b16 %v6662
    %v7357 = vunpack.c.l.b16 %v6663
    %v7358 = vunpack.c.h.b16 %v6663
    %v7359 = vunpack.c.l.b16 %v6664
    %v7360 = vunpack.c.h.b16 %v6664
    %v7361 = vunpack.c.l.b16 %v6665
    %v7362 = vunpack.c.h.b16 %v6665
    %v7363 = vunpack.c.l.b16 %v6666
    %v7364 = vunpack.c.h.b16 %v6666
    %v7365 = vunpack.c.l.b16 %v6667
    %v7366 = vunpack.c.h.b16 %v6667
    %v7367 = vunpack.c.l.b16 %v6668
    %v7368 = vunpack.c.h.b16 %v6668
    %v7369 = vunpack.c.l.b16 %v6669
    %v7370 = vunpack.c.h.b16 %v6669
    %v7371 = vunpack.c.l.b16 %v6670
    %v7372 = vunpack.c.h.b16 %v6670
    %v7373 = vunpack.c.l.b16 %v6671
    %v7374 = vunpack.c.h.b16 %v6671
    %v7375 = vunpack.c.l.b16 %v6672
    %v7376 = vunpack.c.h.b16 %v6672
    %v7377 = vunpack.c.l.b16 %v6673
    %v7378 = vunpack.c.h.b16 %v6673
    %v7379 = vunpack.c.l.b16 %v6674
    %v7380 = vunpack.c.h.b16 %v6674
    %v7381 = vunpack.c.l.b16 %v6675
    %v7382 = vunpack.c.h.b16 %v6675
    %v7383 = vunpack.c.l.b16 %v6676
    %v7384 = vunpack.c.h.b16 %v6676
    %v7385 = vunpack.c.l.b16 %v6677
    %v7386 = vunpack.c.h.b16 %v6677
    %v7387 = vunpack.c.l.b16 %v6678
    %v7388 = vunpack.c.h.b16 %v6678
    %v7389 = vunpack.c.l.b16 %v6679
    %v7390 = vunpack.c.h.b16 %v6679
    %v7391 = vunpack.c.l.b16 %v6680
    %v7392 = vunpack.c.h.b16 %v6680
    %v7393 = vunpack.c.l.b16 %v6681
    %v7394 = vunpack.c.h.b16 %v6681
    %v7395 = vunpack.c.l.b16 %v6682
    %v7396 = vunpack.c.h.b16 %v6682
    %v7397 = vunpack.c.l.b16 %v6683
    %v7398 = vunpack.c.h.b16 %v6683
    %v7399 = vunpack.c.l.b16 %v6684
    %v7400 = vunpack.c.h.b16 %v6684
    %v7401 = vunpack.c.l.b16 %v6685
    %v7402 = vunpack.c.h.b16 %v6685
    %v7403 = vunpack.c.l.b16 %v6686
    %v7404 = vunpack.c.h.b16 %v6686
    %v7405 = vunpack.c.l.b16 %v6687
    %v7406 = vunpack.c.h.b16 %v6687
    %v7407 = vunpack.c.l.b16 %v6688
    %v7408 = vunpack.c.h.b16 %v6688
    %v7409 = vunpack.c.l.b16 %v6689
    %v7410 = vunpack.c.h.b16 %v6689
    %v7411 = vunpack.c.l.b16 %v6690
    %v7412 = vunpack.c.h.b16 %v6690
    %v7413 = vunpack.c.l.b16 %v6691
    %v7414 = vunpack.c.h.b16 %v6691
    %v7415 = vunpack.c.l.b16 %v6692
    %v7416 = vunpack.c.h.b16 %v6692
    %v7417 = vunpack.c.l.b16 %v6693
    %v7418 = vunpack.c.h.b16 %v6693
    %v7419 = vunpack.c.l.b16 %v6694
    %v7420 = vunpack.c.h.b16 %v6694
    %v7421 = vunpack.c.l.b16 %v6695
    %v7422 = vunpack.c.h.b16 %v6695
    %v7423 = vunpack.c.l.b16 %v6696
    %v7424 = vunpack.c.h.b16 %v6696
    %v7425 = vunpack.c.l.b16 %v6697
    %v7426 = vunpack.c.h.b16 %v6697
    %v7427 = vunpack.c.l.b16 %v6698
    %v7428 = vunpack.c.h.b16 %v6698
    %v7429 = vunpack.c.l.b16 %v6699
    %v7430 = vunpack.c.h.b16 %v6699
    %v7431 = vunpack.c.l.b16 %v6700
    %v7432 = vunpack.c.h.b16 %v6700
    %v7433 = vunpack.c.l.b16 %v6701
    %v7434 = vunpack.c.h.b16 %v6701
    %v7435 = vunpack.c.l.b16 %v6702
    %v7436 = vunpack.c.h.b16 %v6702
    %v7437 = vunpack.c.l.b16 %v6703
    %v7438 = vunpack.c.h.b16 %v6703
    %v7439 = vunpack.c.l.b16 %v6704
    %v7440 = vunpack.c.h.b16 %v6704
    %v7441 = vunpack.c.l.b16 %v6705
    %v7442 = vunpack.c.h.b16 %v6705
    %v7443 = vunpack.c.l.b16 %v6706
    %v7444 = vunpack.c.h.b16 %v6706
    %v7445 = vunpack.c.l.b16 %v6707
    %v7446 = vunpack.c.h.b16 %v6707
    %v7447 = vunpack.c.l.b16 %v6708
    %v7448 = vunpack.c.h.b16 %v6708
    %v7449 = vunpack.c.l.b16 %v6709
    %v7450 = vunpack.c.h.b16 %v6709
    %v7451 = vunpack.c.l.b16 %v6710
    %v7452 = vunpack.c.h.b16 %v6710
    %v7453 = vunpack.c.l.b16 %v6711
    %v7454 = vunpack.c.h.b16 %v6711
    %v7455 = vunpack.c.l.b16 %v6712
    %v7456 = vunpack.c.h.b16 %v6712
    %v7457 = vunpack.c.l.b16 %v6713
    %v7458 = vunpack.c.h.b16 %v6713
    %v7459 = vunpack.c.l.b16 %v6714
    %v7460 = vunpack.c.h.b16 %v6714
    %v7461 = vunpack.c.l.b16 %v6715
    %v7462 = vunpack.c.h.b16 %v6715
    %v7463 = vunpack.c.l.b16 %v6716
    %v7464 = vunpack.c.h.b16 %v6716
    %v7465 = vunpack.c.l.b16 %v6717
    %v7466 = vunpack.c.h.b16 %v6717
    %v7467 = vunpack.c.l.b16 %v6718
    %v7468 = vunpack.c.h.b16 %v6718
    %v7469 = vunpack.c.l.b16 %v6719
    %v7470 = vunpack.c.h.b16 %v6719
    %v7471 = vunpack.c.l.b16 %v6720
    %v7472 = vunpack.c.h.b16 %v6720
    %v7473 = vunpack.c.l.b16 %v6721
    %v7474 = vunpack.c.h.b16 %v6721
    %v7475 = vunpack.c.l.b16 %v6722
    %v7476 = vunpack.c.h.b16 %v6722
    %v7477 = vunpack.c.l.b16 %v6723
    %v7478 = vunpack.c.h.b16 %v6723
    %v7479 = vunpack.c.l.b16 %v6724
    %v7480 = vunpack.c.h.b16 %v6724
    %v7481 = vunpack.c.l.b16 %v6725
    %v7482 = vunpack.c.h.b16 %v6725
    %v7483 = vunpack.c.l.b16 %v6726
    %v7484 = vunpack.c.h.b16 %v6726
    %v7485 = vunpack.c.l.b16 %v6727
    %v7486 = vunpack.c.h.b16 %v6727
    %v7487 = vunpack.c.l.b16 %v6728
    %v7488 = vunpack.c.h.b16 %v6728
    %v7489 = vunpack.c.l.b16 %v6729
    %v7490 = vunpack.c.h.b16 %v6729
    %v7491 = vunpack.c.l.b16 %v6730
    %v7492 = vunpack.c.h.b16 %v6730
    %v7493 = vunpack.c.l.b16 %v6731
    %v7494 = vunpack.c.h.b16 %v6731
    %v7495 = vunpack.c.l.b16 %v6732
    %v7496 = vunpack.c.h.b16 %v6732
    %v7497 = vunpack.c.l.b16 %v6733
    %v7498 = vunpack.c.h.b16 %v6733
    %v7499 = vunpack.c.l.b16 %v6734
    %v7500 = vunpack.c.h.b16 %v6734
    %v7501 = vunpack.c.l.b16 %v6735
    %v7502 = vunpack.c.h.b16 %v6735
    %v7503 = vunpack.c.l.b16 %v6736
    %v7504 = vunpack.c.h.b16 %v6736
    %v7505 = vunpack.c.l.b16 %v6737
    %v7506 = vunpack.c.h.b16 %v6737
    %v7507 = vunpack.c.l.b16 %v6738
    %v7508 = vunpack.c.h.b16 %v6738
    %v7509 = vunpack.c.l.b16 %v6739
    %v7510 = vunpack.c.h.b16 %v6739
    %v7511 = vunpack.c.l.b16 %v6740
    %v7512 = vunpack.c.h.b16 %v6740
    %v7513 = vunpack.c.l.b16 %v6741
    %v7514 = vunpack.c.h.b16 %v6741
    %v7515 = vunpack.c.l.b16 %v6742
    %v7516 = vunpack.c.h.b16 %v6742
    %v7517 = vunpack.c.l.b16 %v6743
    %v7518 = vunpack.c.h.b16 %v6743
    %v7519 = vunpack.c.l.b16 %v6744
    %v7520 = vunpack.c.h.b16 %v6744
    %v7521 = vunpack.c.l.b16 %v6745
    %v7522 = vunpack.c.h.b16 %v6745
    %v7523 = vunpack.c.l.b16 %v6746
    %v7524 = vunpack.c.h.b16 %v6746
    %v7525 = vunpack.c.l.b16 %v6747
    %v7526 = vunpack.c.h.b16 %v6747
    %v7527 = vunpack.c.l.b16 %v6748
    %v7528 = vunpack.c.h.b16 %v6748
    %v7529 = vunpack.c.l.b16 %v6749
    %v7530 = vunpack.c.h.b16 %v6749
    %v7531 = vunpack.c.l.b16 %v6750
    %v7532 = vunpack.c.h.b16 %v6750
    %v7533 = vunpack.c.l.b16 %v6751
    %v7534 = vunpack.c.h.b16 %v6751
    %v7535 = vunpack.c.l.b16 %v6752
    %v7536 = vunpack.c.h.b16 %v6752
    %v7537 = vunpack.c.l.b16 %v6753
    %v7538 = vunpack.c.h.b16 %v6753
    %v7539 = vunpack.c.l.b16 %v6754
    %v7540 = vunpack.c.h.b16 %v6754
    %v7541 = vunpack.c.l.b16 %v6755
    %v7542 = vunpack.c.h.b16 %v6755
    %v7543 = vunpack.c.l.b16 %v6756
    %v7544 = vunpack.c.h.b16 %v6756
    %v7545 = vunpack.c.l.b16 %v6757
    %v7546 = vunpack.c.h.b16 %v6757
    %v7547 = vunpack.c.l.b16 %v6758
    %v7548 = vunpack.c.h.b16 %v6758
    %v7549 = vunpack.c.l.b16 %v6759
    %v7550 = vunpack.c.h.b16 %v6759
    %v7551 = vunpack.c.l.b16 %v6760
    %v7552 = vunpack.c.h.b16 %v6760
    %v7553 = vunpack.c.l.b16 %v6761
    %v7554 = vunpack.c.h.b16 %v6761
    %v7555 = vunpack.c.l.b16 %v6762
    %v7556 = vunpack.c.h.b16 %v6762
    %v7557 = vunpack.c.l.b16 %v6763
    %v7558 = vunpack.c.h.b16 %v6763
    %v7559 = vunpack.c.l.b16 %v6764
    %v7560 = vunpack.c.h.b16 %v6764
    %v7561 = vunpack.c.l.b16 %v6765
    %v7562 = vunpack.c.h.b16 %v6765
    %v7563 = vunpack.c.l.b16 %v6766
    %v7564 = vunpack.c.h.b16 %v6766
    %v7565 = vunpack.c.l.b16 %v6767
    %v7566 = vunpack.c.h.b16 %v6767
    %v7567 = vunpack.c.l.b16 %v6768
    %v7568 = vunpack.c.h.b16 %v6768
    %v7569 = vunpack.c.l.b16 %v6769
    %v7570 = vunpack.c.h.b16 %v6769
    %v7571 = vunpack.c.l.b16 %v6770
    %v7572 = vunpack.c.h.b16 %v6770
    %v7573 = vunpack.c.l.b16 %v6771
    %v7574 = vunpack.c.h.b16 %v6771
    %v7575 = vunpack.c.l.b16 %v6772
    %v7576 = vunpack.c.h.b16 %v6772
    %v7577 = vunpack.c.l.b16 %v6773
    %v7578 = vunpack.c.h.b16 %v6773
    %v7579 = vunpack.c.l.b16 %v6774
    %v7580 = vunpack.c.h.b16 %v6774
    %v7581 = vunpack.c.l.b16 %v6775
    %v7582 = vunpack.c.h.b16 %v6775
    %v7583 = vunpack.c.l.b16 %v6776
    %v7584 = vunpack.c.h.b16 %v6776
    %v7585 = vunpack.c.l.b16 %v6777
    %v7586 = vunpack.c.h.b16 %v6777
    %v7587 = vunpack.c.l.b16 %v6778
    %v7588 = vunpack.c.h.b16 %v6778
    %v7589 = vunpack.c.l.b16 %v6779
    %v7590 = vunpack.c.h.b16 %v6779
    %v7591 = vunpack.c.l.b16 %v6780
    %v7592 = vunpack.c.h.b16 %v6780
    %v7593 = vunpack.c.l.b16 %v6781
    %v7594 = vunpack.c.h.b16 %v6781
    %v7595 = vunpack.c.l.b16 %v6782
    %v7596 = vunpack.c.h.b16 %v6782
    %v7597 = vunpack.c.l.b16 %v6783
    %v7598 = vunpack.c.h.b16 %v6783
    %v7599 = vunpack.c.l.b16 %v6784
    %v7600 = vunpack.c.h.b16 %v6784
    %v7601 = vunpack.c.l.b16 %v6785
    %v7602 = vunpack.c.h.b16 %v6785
    %v7603 = vunpack.c.l.b16 %v6786
    %v7604 = vunpack.c.h.b16 %v6786
    %v7605 = vunpack.c.l.b16 %v6787
    %v7606 = vunpack.c.h.b16 %v6787
    %v7607 = vunpack.c.l.b16 %v6788
    %v7608 = vunpack.c.h.b16 %v6788
    %v7609 = vunpack.c.l.b16 %v6789
    %v7610 = vunpack.c.h.b16 %v6789
    %v7611 = vunpack.c.l.b16 %v6790
    %v7612 = vunpack.c.h.b16 %v6790
    %v7613 = vunpack.c.l.b16 %v6791
    %v7614 = vunpack.c.h.b16 %v6791
    %v7615 = vunpack.c.l.b16 %v6792
    %v7616 = vunpack.c.h.b16 %v6792
    %v7617 = vunpack.c.l.b16 %v6793
    %v7618 = vunpack.c.h.b16 %v6793
    %v7619 = vunpack.c.l.b16 %v6794
    %v7620 = vunpack.c.h.b16 %v6794
    %v7621 = vunpack.c.l.b16 %v6795
    %v7622 = vunpack.c.h.b16 %v6795
    %v7623 = vunpack.c.l.b16 %v6796
    %v7624 = vunpack.c.h.b16 %v6796
    %v7625 = vunpack.c.l.b16 %v6797
    %v7626 = vunpack.c.h.b16 %v6797
    %v7627 = vunpack.c.l.b16 %v6798
    %v7628 = vunpack.c.h.b16 %v6798
    %v7629 = vunpack.c.l.b16 %v6799
    %v7630 = vunpack.c.h.b16 %v6799
    %v7631 = vunpack.c.l.b16 %v6800
    %v7632 = vunpack.c.h.b16 %v6800
    %v7633 = vunpack.c.l.b16 %v6801
    %v7634 = vunpack.c.h.b16 %v6801
    %v7635 = vunpack.c.l.b16 %v6802
    %v7636 = vunpack.c.h.b16 %v6802
    %v7637 = vunpack.c.l.b16 %v6803
    %v7638 = vunpack.c.h.b16 %v6803
    %v7639 = vunpack.c.l.b16 %v6804
    %v7640 = vunpack.c.h.b16 %v6804
    %v7641 = vunpack.c.l.b16 %v6805
    %v7642 = vunpack.c.h.b16 %v6805
    %v7643 = vunpack.c.l.b16 %v6806
    %v7644 = vunpack.c.h.b16 %v6806
    %v7645 = vunpack.c.l.b16 %v6807
    %v7646 = vunpack.c.h.b16 %v6807
    %v7647 = vunpack.c.l.b16 %v6808
    %v7648 = vunpack.c.h.b16 %v6808
    %v7649 = vunpack.c.l.b16 %v6809
    %v7650 = vunpack.c.h.b16 %v6809
    %v7651 = vunpack.c.l.b16 %v6810
    %v7652 = vunpack.c.h.b16 %v6810
    %v7653 = vunpack.c.l.b16 %v6811
    %v7654 = vunpack.c.h.b16 %v6811
    %v7655 = vunpack.c.l.b16 %v6812
    %v7656 = vunpack.c.h.b16 %v6812
    %v7657 = vunpack.c.l.b16 %v6813
    %v7658 = vunpack.c.h.b16 %v6813
    %v7659 = vunpack.c.l.b16 %v6814
    %v7660 = vunpack.c.h.b16 %v6814
    %v7661 = vunpack.c.l.b16 %v6815
    %v7662 = vunpack.c.h.b16 %v6815
    %v7663 = vunpack.c.l.b16 %v6816
    %v7664 = vunpack.c.h.b16 %v6816
    %v7665 = vunpack.c.l.b16 %v6817
    %v7666 = vunpack.c.h.b16 %v6817
    %v7667 = vunpack.c.l.b16 %v6818
    %v7668 = vunpack.c.h.b16 %v6818
    %v7669 = vunpack.c.l.b16 %v6819
    %v7670 = vunpack.c.h.b16 %v6819
    %v7671 = vunpack.c.l.b16 %v6820
    %v7672 = vunpack.c.h.b16 %v6820
    %v7673 = vunpack.c.l.b16 %v6821
    %v7674 = vunpack.c.h.b16 %v6821
    %v7675 = vunpack.c.l.b16 %v6822
    %v7676 = vunpack.c.h.b16 %v6822
    %v7677 = vunpack.c.l.b16 %v6823
    %v7678 = vunpack.c.h.b16 %v6823
    %v7679 = vunpack.c.l.b16 %v6824
    %v7680 = vunpack.c.h.b16 %v6824
    %v7681 = vunpack.c.l.b16 %v6825
    %v7682 = vunpack.c.h.b16 %v6825
    %v7683 = vunpack.c.l.b16 %v6826
    %v7684 = vunpack.c.h.b16 %v6826
    %v7685 = vunpack.c.l.b16 %v6827
    %v7686 = vunpack.c.h.b16 %v6827
    %v7687 = vunpack.c.l.b16 %v6828
    %v7688 = vunpack.c.h.b16 %v6828
    %v7689 = vunpack.c.l.b16 %v6829
    %v7690 = vunpack.c.h.b16 %v6829
    %v7691 = vunpack.c.l.b16 %v6830
    %v7692 = vunpack.c.h.b16 %v6830
    %v7693 = vunpack.c.l.b16 %v6831
    %v7694 = vunpack.c.h.b16 %v6831
    %v7695 = vunpack.c.l.b16 %v6832
    %v7696 = vunpack.c.h.b16 %v6832
    %v7697 = vunpack.c.l.b16 %v6833
    %v7698 = vunpack.c.h.b16 %v6833
    %v7699 = vunpack.c.l.b16 %v6834
    %v7700 = vunpack.c.h.b16 %v6834
    %v7701 = vunpack.c.l.b16 %v6835
    %v7702 = vunpack.c.h.b16 %v6835
    %v7703 = vunpack.c.l.b16 %v6836
    %v7704 = vunpack.c.h.b16 %v6836
    %v7705 = vunpack.c.l.b16 %v6837
    %v7706 = vunpack.c.h.b16 %v6837
    %v7707 = vunpack.c.l.b16 %v6838
    %v7708 = vunpack.c.h.b16 %v6838
    %v7709 = vunpack.c.l.b16 %v6839
    %v7710 = vunpack.c.h.b16 %v6839
    %v7711 = vunpack.c.l.b16 %v6840
    %v7712 = vunpack.c.h.b16 %v6840
    %v7713 = vunpack.c.l.b16 %v6841
    %v7714 = vunpack.c.h.b16 %v6841
    %v7715 = vunpack.c.l.b16 %v6842
    %v7716 = vunpack.c.h.b16 %v6842
    %v7717 = vunpack.c.l.b16 %v6843
    %v7718 = vunpack.c.h.b16 %v6843
    %v7719 = vunpack.c.l.b16 %v6844
    %v7720 = vunpack.c.h.b16 %v6844
    %v7721 = vunpack.c.l.b16 %v6845
    %v7722 = vunpack.c.h.b16 %v6845
    %v7723 = vunpack.c.l.b16 %v6846
    %v7724 = vunpack.c.h.b16 %v6846
    %v7725 = vunpack.c.l.b16 %v6847
    %v7726 = vunpack.c.h.b16 %v6847
    %v7727 = vunpack.c.l.b16 %v6848
    %v7728 = vunpack.c.h.b16 %v6848
    %v7729 = vunpack.c.l.b16 %v6849
    %v7730 = vunpack.c.h.b16 %v6849
    %v7731 = vunpack.c.l.b16 %v6850
    %v7732 = vunpack.c.h.b16 %v6850
    %v7733 = vunpack.c.l.b16 %v6851
    %v7734 = vunpack.c.h.b16 %v6851
    %v7735 = vunpack.c.l.b16 %v6852
    %v7736 = vunpack.c.h.b16 %v6852
    %v7737 = vunpack.c.l.b16 %v6853
    %v7738 = vunpack.c.h.b16 %v6853
    %v7739 = vunpack.c.l.b16 %v6854
    %v7740 = vunpack.c.h.b16 %v6854
    %v7741 = vunpack.c.l.b16 %v6855
    %v7742 = vunpack.c.h.b16 %v6855
    %v7743 = vunpack.c.l.b16 %v6856
    %v7744 = vunpack.c.h.b16 %v6856
    %v7745 = vunpack.c.l.b16 %v6857
    %v7746 = vunpack.c.h.b16 %v6857
    %v7747 = vunpack.c.l.b16 %v6858
    %v7748 = vunpack.c.h.b16 %v6858
    %v7749 = vunpack.c.l.b16 %v6859
    %v7750 = vunpack.c.h.b16 %v6859
    %v7751 = vunpack.c.l.b16 %v6860
    %v7752 = vunpack.c.h.b16 %v6860
    %v7753 = vunpack.c.l.b16 %v6861
    %v7754 = vunpack.c.h.b16 %v6861
    %v7755 = vunpack.c.l.b16 %v6862
    %v7756 = vunpack.c.h.b16 %v6862
    %v7757 = vunpack.c.l.b16 %v6863
    %v7758 = vunpack.c.h.b16 %v6863
    %v7759 = vunpack.c.l.b16 %v6864
    %v7760 = vunpack.c.h.b16 %v6864
    %v7761 = vunpack.c.l.b16 %v6865
    %v7762 = vunpack.c.h.b16 %v6865
    %v7763 = vunpack.c.l.b16 %v6866
    %v7764 = vunpack.c.h.b16 %v6866
    %v7765 = vunpack.c.l.b16 %v6867
    %v7766 = vunpack.c.h.b16 %v6867
    %v7767 = vpack.c.b16 %v7197, %v7191
    %v7768 = vpack.c.b16 %v7198, %v7192
    %v7769 = vpack.c.b16 %v7199, %v7193
    %v7770 = vpack.c.b16 %v7200, %v7194
    %v7771 = vpack.c.b16 %v7201, %v7195
    %v7772 = vpack.c.b16 %v7202, %v7196
    %v7773 = vpack.c.b16 %v7209, %v7203
    %v7774 = vpack.c.b16 %v7210, %v7204
    %v7775 = vpack.c.b16 %v7211, %v7205
    %v7776 = vpack.c.b16 %v7212, %v7206
    %v7777 = vpack.c.b16 %v7213, %v7207
    %v7778 = vpack.c.b16 %v7214, %v7208
    %v7779 = vpack.c.b16 %v7221, %v7215
    %v7780 = vpack.c.b16 %v7222, %v7216
    %v7781 = vpack.c.b16 %v7223, %v7217
    %v7782 = vpack.c.b16 %v7224, %v7218
    %v7783 = vpack.c.b16 %v7225, %v7219
    %v7784 = vpack.c.b16 %v7226, %v7220
    %v7785 = vpack.c.b16 %v7233, %v7227
    %v7786 = vpack.c.b16 %v7234, %v7228
    %v7787 = vpack.c.b16 %v7235, %v7229
    %v7788 = vpack.c.b16 %v7236, %v7230
    %v7789 = vpack.c.b16 %v7237, %v7231
    %v7790 = vpack.c.b16 %v7238, %v7232
    %v7791 = vpack.c.b16 %v7245, %v7239
    %v7792 = vpack.c.b16 %v7246, %v7240
    %v7793 = vpack.c.b16 %v7247, %v7241
    %v7794 = vpack.c.b16 %v7248, %v7242
    %v7795 = vpack.c.b16 %v7249, %v7243
    %v7796 = vpack.c.b16 %v7250, %v7244
    %v7797 = vpack.c.b16 %v7257, %v7251
    %v7798 = vpack.c.b16 %v7258, %v7252
    %v7799 = vpack.c.b16 %v7259, %v7253
    %v7800 = vpack.c.b16 %v7260, %v7254
    %v7801 = vpack.c.b16 %v7261, %v7255
    %v7802 = vpack.c.b16 %v7262, %v7256
    %v7803 = vpack.c.b16 %v7269, %v7263
    %v7804 = vpack.c.b16 %v7270, %v7264
    %v7805 = vpack.c.b16 %v7271, %v7265
    %v7806 = vpack.c.b16 %v7272, %v7266
    %v7807 = vpack.c.b16 %v7273, %v7267
    %v7808 = vpack.c.b16 %v7274, %v7268
    %v7809 = vpack.c.b16 %v7281, %v7275
    %v7810 = vpack.c.b16 %v7282, %v7276
    %v7811 = vpack.c.b16 %v7283, %v7277
    %v7812 = vpack.c.b16 %v7284, %v7278
    %v7813 = vpack.c.b16 %v7285, %v7279
    %v7814 = vpack.c.b16 %v7286, %v7280
    %v7815 = vpack.c.b16 %v7293, %v7287
    %v7816 = vpack.c.b16 %v7294, %v7288
    %v7817 = vpack.c.b16 %v7295, %v7289
    %v7818 = vpack.c.b16 %v7296, %v7290
    %v7819 = vpack.c.b16 %v7297, %v7291
    %v7820 = vpack.c.b16 %v7298, %v7292
    %v7821 = vpack.c.b16 %v7305, %v7299
    %v7822 = vpack.c.b16 %v7306, %v7300
    %v7823 = vpack.c.b16 %v7307, %v7301
    %v7824 = vpack.c.b16 %v7308, %v7302
    %v7825 = vpack.c.b16 %v7309, %v7303
    %v7826 = vpack.c.b16 %v7310, %v7304
    %v7827 = vpack.c.b16 %v7317, %v7311
    %v7828 = vpack.c.b16 %v7318, %v7312
    %v7829 = vpack.c.b16 %v7319, %v7313
    %v7830 = vpack.c.b16 %v7320, %v7314
    %v7831 = vpack.c.b16 %v7321, %v7315
    %v7832 = vpack.c.b16 %v7322, %v7316
    %v7833 = vpack.c.b16 %v7329, %v7323
    %v7834 = vpack.c.b16 %v7330, %v7324
    %v7835 = vpack.c.b16 %v7331, %v7325
    %v7836 = vpack.c.b16 %v7332, %v7326
    %v7837 = vpack.c.b16 %v7333, %v7327
    %v7838 = vpack.c.b16 %v7334, %v7328
    %v7839 = vpack.c.b16 %v7341, %v7335
    %v7840 = vpack.c.b16 %v7342, %v7336
    %v7841 = vpack.c.b16 %v7343, %v7337
    %v7842 = vpack.c.b16 %v7344, %v7338
    %v7843 = vpack.c.b16 %v7345, %v7339
    %v7844 = vpack.c.b16 %v7346, %v7340
    %v7845 = vpack.c.b16 %v7353, %v7347
    %v7846 = vpack.c.b16 %v7354, %v7348
    %v7847 = vpack.c.b16 %v7355, %v7349
    %v7848 = vpack.c.b16 %v7356, %v7350
    %v7849 = vpack.c.b16 %v7357, %v7351
    %v7850 = vpack.c.b16 %v7358, %v7352
    %v7851 = vpack.c.b16 %v7365, %v7359
    %v7852 = vpack.c.b16 %v7366, %v7360
    %v7853 = vpack.c.b16 %v7367, %v7361
    %v7854 = vpack.c.b16 %v7368, %v7362
    %v7855 = vpack.c.b16 %v7369, %v7363
    %v7856 = vpack.c.b16 %v7370, %v7364
    %v7857 = vpack.c.b16 %v7377, %v7371
    %v7858 = vpack.c.b16 %v7378, %v7372
    %v7859 = vpack.c.b16 %v7379, %v7373
    %v7860 = vpack.c.b16 %v7380, %v7374
    %v7861 = vpack.c.b16 %v7381, %v7375
    %v7862 = vpack.c.b16 %v7382, %v7376
    %v7863 = vpack.c.b16 %v7389, %v7383
    %v7864 = vpack.c.b16 %v7390, %v7384
    %v7865 = vpack.c.b16 %v7391, %v7385
    %v7866 = vpack.c.b16 %v7392, %v7386
    %v7867 = vpack.c.b16 %v7393, %v7387
    %v7868 = vpack.c.b16 %v7394, %v7388
    %v7869 = vpack.c.b16 %v7401, %v7395
    %v7870 = vpack.c.b16 %v7402, %v7396
    %v7871 = vpack.c.b16 %v7403, %v7397
    %v7872 = vpack.c.b16 %v7404, %v7398
    %v7873 = vpack.c.b16 %v7405, %v7399
    %v7874 = vpack.c.b16 %v7406, %v7400
    %v7875 = vpack.c.b16 %v7413, %v7407
    %v7876 = vpack.c.b16 %v7414, %v7408
    %v7877 = vpack.c.b16 %v7415, %v7409
    %v7878 = vpack.c.b16 %v7416, %v7410
    %v7879 = vpack.c.b16 %v7417, %v7411
    %v7880 = vpack.c.b16 %v7418, %v7412
    %v7881 = vpack.c.b16 %v7425, %v7419
    %v7882 = vpack.c.b16 %v7426, %v7420
    %v7883 = vpack.c.b16 %v7427, %v7421
    %v7884 = vpack.c.b16 %v7428, %v7422
    %v7885 = vpack.c.b16 %v7429, %v7423
    %v7886 = vpack.c.b16 %v7430, %v7424
    %v7887 = vpack.c.b16 %v7437, %v7431
    %v7888 = vpack.c.b16 %v7438, %v7432
    %v7889 = vpack.c.b16 %v7439, %v7433
    %v7890 = vpack.c.b16 %v7440, %v7434
    %v7891 = vpack.c.b16 %v7441, %v7435
    %v7892 = vpack.c.b16 %v7442, %v7436
    %v7893 = vpack.c.b16 %v7449, %v7443
    %v7894 = vpack.c.b16 %v7450, %v7444
    %v7895 = vpack.c.b16 %v7451, %v7445
    %v7896 = vpack.c.b16 %v7452, %v7446
    %v7897 = vpack.c.b16 %v7453, %v7447
    %v7898 = vpack.c.b16 %v7454, %v7448
    %v7899 = vpack.c.b16 %v7461, %v7455
    %v7900 = vpack.c.b16 %v7462, %v7456
    %v7901 = vpack.c.b16 %v7463, %v7457
    %v7902 = vpack.c.b16 %v7464, %v7458
    %v7903 = vpack.c.b16 %v7465, %v7459
    %v7904 = vpack.c.b16 %v7466, %v7460
    %v7905 = vpack.c.b16 %v7473, %v7467
    %v7906 = vpack.c.b16 %v7474, %v7468
    %v7907 = vpack.c.b16 %v7475, %v7469
    %v7908 = vpack.c.b16 %v7476, %v7470
    %v7909 = vpack.c.b16 %v7477, %v7471
    %v7910 = vpack.c.b16 %v7478, %v7472
    %v7911 = vpack.c.b16 %v7485, %v7479
    %v7912 = vpack.c.b16 %v7486, %v7480
    %v7913 = vpack.c.b16 %v7487, %v7481
    %v7914 = vpack.c.b16 %v7488, %v7482
    %v7915 = vpack.c.b16 %v7489, %v7483
    %v7916 = vpack.c.b16 %v7490, %v7484
    %v7917 = vpack.c.b16 %v7497, %v7491
    %v7918 = vpack.c.b16 %v7498, %v7492
    %v7919 = vpack.c.b16 %v7499, %v7493
    %v7920 = vpack.c.b16 %v7500, %v7494
    %v7921 = vpack.c.b16 %v7501, %v7495
    %v7922 = vpack.c.b16 %v7502, %v7496
    %v7923 = vpack.c.b16 %v7509, %v7503
    %v7924 = vpack.c.b16 %v7510, %v7504
    %v7925 = vpack.c.b16 %v7511, %v7505
    %v7926 = vpack.c.b16 %v7512, %v7506
    %v7927 = vpack.c.b16 %v7513, %v7507
    %v7928 = vpack.c.b16 %v7514, %v7508
    %v7929 = vpack.c.b16 %v7521, %v7515
    %v7930 = vpack.c.b16 %v7522, %v7516
    %v7931 = vpack.c.b16 %v7523, %v7517
    %v7932 = vpack.c.b16 %v7524, %v7518
    %v7933 = vpack.c.b16 %v7525, %v7519
    %v7934 = vpack.c.b16 %v7526, %v7520
    %v7935 = vpack.c.b16 %v7533, %v7527
    %v7936 = vpack.c.b16 %v7534, %v7528
    %v7937 = vpack.c.b16 %v7535, %v7529
    %v7938 = vpack.c.b16 %v7536, %v7530
    %v7939 = vpack.c.b16 %v7537, %v7531
    %v7940 = vpack.c.b16 %v7538, %v7532
    %v7941 = vpack.c.b16 %v7545, %v7539
    %v7942 = vpack.c.b16 %v7546, %v7540
    %v7943 = vpack.c.b16 %v7547, %v7541
    %v7944 = vpack.c.b16 %v7548, %v7542
    %v7945 = vpack.c.b16 %v7549, %v7543
    %v7946 = vpack.c.b16 %v7550, %v7544
    %v7947 = vpack.c.b16 %v7557, %v7551
    %v7948 = vpack.c.b16 %v7558, %v7552
    %v7949 = vpack.c.b16 %v7559, %v7553
    %v7950 = vpack.c.b16 %v7560, %v7554
    %v7951 = vpack.c.b16 %v7561, %v7555
    %v7952 = vpack.c.b16 %v7562, %v7556
    %v7953 = vpack.c.b16 %v7569, %v7563
    %v7954 = vpack.c.b16 %v7570, %v7564
    %v7955 = vpack.c.b16 %v7571, %v7565
    %v7956 = vpack.c.b16 %v7572, %v7566
    %v7957 = vpack.c.b16 %v7573, %v7567
    %v7958 = vpack.c.b16 %v7574, %v7568
    %v7959 = vpack.c.b16 %v7581, %v7575
    %v7960 = vpack.c.b16 %v7582, %v7576
    %v7961 = vpack.c.b16 %v7583, %v7577
    %v7962 = vpack.c.b16 %v7584, %v7578
    %v7963 = vpack.c.b16 %v7585, %v7579
    %v7964 = vpack.c.b16 %v7586, %v7580
    %v7965 = vpack.c.b16 %v7593, %v7587
    %v7966 = vpack.c.b16 %v7594, %v7588
    %v7967 = vpack.c.b16 %v7595, %v7589
    %v7968 = vpack.c.b16 %v7596, %v7590
    %v7969 = vpack.c.b16 %v7597, %v7591
    %v7970 = vpack.c.b16 %v7598, %v7592
    %v7971 = vpack.c.b16 %v7605, %v7599
    %v7972 = vpack.c.b16 %v7606, %v7600
    %v7973 = vpack.c.b16 %v7607, %v7601
    %v7974 = vpack.c.b16 %v7608, %v7602
    %v7975 = vpack.c.b16 %v7609, %v7603
    %v7976 = vpack.c.b16 %v7610, %v7604
    %v7977 = vpack.c.b16 %v7617, %v7611
    %v7978 = vpack.c.b16 %v7618, %v7612
    %v7979 = vpack.c.b16 %v7619, %v7613
    %v7980 = vpack.c.b16 %v7620, %v7614
    %v7981 = vpack.c.b16 %v7621, %v7615
    %v7982 = vpack.c.b16 %v7622, %v7616
    %v7983 = vpack.c.b16 %v7629, %v7623
    %v7984 = vpack.c.b16 %v7630, %v7624
    %v7985 = vpack.c.b16 %v7631, %v7625
    %v7986 = vpack.c.b16 %v7632, %v7626
    %v7987 = vpack.c.b16 %v7633, %v7627
    %v7988 = vpack.c.b16 %v7634, %v7628
    %v7989 = vpack.c.b16 %v7641, %v7635
    %v7990 = vpack.c.b16 %v7642, %v7636
    %v7991 = vpack.c.b16 %v7643, %v7637
    %v7992 = vpack.c.b16 %v7644, %v7638
    %v7993 = vpack.c.b16 %v7645, %v7639
    %v7994 = vpack.c.b16 %v7646, %v7640
    %v7995 = vpack.c.b16 %v7653, %v7647
    %v7996 = vpack.c.b16 %v7654, %v7648
    %v7997 = vpack.c.b16 %v7655, %v7649
    %v7998 = vpack.c.b16 %v7656, %v7650
    %v7999 = vpack.c.b16 %v7657, %v7651
    %v8000 = vpack.c.b16 %v7658, %v7652
    %v8001 = vpack.c.b16 %v7665, %v7659
    %v8002 = vpack.c.b16 %v7666, %v7660
    %v8003 = vpack.c.b16 %v7667, %v7661
    %v8004 = vpack.c.b16 %v7668, %v7662
    %v8005 = vpack.c.b16 %v7669, %v7663
    %v8006 = vpack.c.b16 %v7670, %v7664
    %v8007 = vpack.c.b16 %v7677, %v7671
    %v8008 = vpack.c.b16 %v7678, %v7672
    %v8009 = vpack.c.b16 %v7679, %v7673
    %v8010 = vpack.c.b16 %v7680, %v7674
    %v8011 = vpack.c.b16 %v7681, %v7675
    %v8012 = vpack.c.b16 %v7682, %v7676
    %v8013 = vpack.c.b16 %v7689, %v7683
    %v8014 = vpack.c.b16 %v7690, %v7684
    %v8015 = vpack.c.b16 %v7691, %v7685
    %v8016 = vpack.c.b16 %v7692, %v7686
    %v8017 = vpack.c.b16 %v7693, %v7687
    %v8018 = vpack.c.b16 %v7694, %v7688
    %v8019 = vpack.c.b16 %v7701, %v7695
    %v8020 = vpack.c.b16 %v7702, %v7696
    %v8021 = vpack.c.b16 %v7703, %v7697
    %v8022 = vpack.c.b16 %v7704, %v7698
    %v8023 = vpack.c.b16 %v7705, %v7699
    %v8024 = vpack.c.b16 %v7706, %v7700
    %v8025 = vpack.c.b16 %v7713, %v7707
    %v8026 = vpack.c.b16 %v7714, %v7708
    %v8027 = vpack.c.b16 %v7715, %v7709
    %v8028 = vpack.c.b16 %v7716, %v7710
    %v8029 = vpack.c.b16 %v7717, %v7711
    %v8030 = vpack.c.b16 %v7718, %v7712
    %v8031 = vpack.c.b16 %v7725, %v7719
    %v8032 = vpack.c.b16 %v7726, %v7720
    %v8033 = vpack.c.b16 %v7727, %v7721
    %v8034 = vpack.c.b16 %v7728, %v7722
    %v8035 = vpack.c.b16 %v7729, %v7723
    %v8036 = vpack.c.b16 %v7730, %v7724
    %v8037 = vpack.c.b16 %v7737, %v7731
    %v8038 = vpack.c.b16 %v7738, %v7732
    %v8039 = vpack.c.b16 %v7739, %v7733
    %v8040 = vpack.c.b16 %v7740, %v7734
    %v8041 = vpack.c.b16 %v7741, %v7735
    %v8042 = vpack.c.b16 %v7742, %v7736
    %v8043 = vpack.c.b16 %v7749, %v7743
    %v8044 = vpack.c.b16 %v7750, %v7744
    %v8045 = vpack.c.b16 %v7751, %v7745
    %v8046 = vpack.c.b16 %v7752, %v7746
    %v8047 = vpack.c.b16 %v7753, %v7747
    %v8048 = vpack.c.b16 %v7754, %v7748
    %v8049 = vpack.c.b16 %v7761, %v7755
    %v8050 = vpack.c.b16 %v7762, %v7756
    %v8051 = vpack.c.b16 %v7763, %v7757
    %v8052 = vpack.c.b16 %v7764, %v7758
    %v8053 = vpack.c.b16 %v7765, %v7759
    %v8054 = vpack.c.b16 %v7766, %v7760
    %8343 = vmatprep.subr.bf16.mxu0 %v7768
    %8344 = vmatpush1.bf16.msra.mxu0 %v7767
    %8345 = vmatprep.subr.bf16.mxu0 %v7774
    %8346 = vmatpush1.bf16.msra.mxu0 %v7773
    %8347 = vmatprep.subr.bf16.mxu0 %v7780
    %8348 = vmatpush1.bf16.msra.mxu0 %v7779
    %8349 = vmatprep.subr.bf16.mxu0 %v7786
    %8350 = vmatpush1.bf16.msra.mxu0 %v7785
    %8351 = vmatprep.subr.bf16.mxu0 %v7792
    %8352 = vmatpush1.bf16.msra.mxu0 %v7791
    %8353 = vmatprep.subr.bf16.mxu0 %v7798
    %8354 = vmatpush1.bf16.msra.mxu0 %v7797
    %8355 = vmatprep.subr.bf16.mxu0 %v7804
    %8356 = vmatpush1.bf16.msra.mxu0 %v7803
    %8357 = vmatprep.subr.bf16.mxu0 %v7810
    %8358 = vmatpush1.bf16.msra.mxu0 %v7809
    %8359 = vmatprep.subr.bf16.mxu0 %v7816
    %8360 = vmatpush1.bf16.msra.mxu0 %v7815
    %8361 = vmatprep.subr.bf16.mxu0 %v7822
    %8362 = vmatpush1.bf16.msra.mxu0 %v7821
    %8363 = vmatprep.subr.bf16.mxu0 %v7828
    %8364 = vmatpush1.bf16.msra.mxu0 %v7827
    %8365 = vmatprep.subr.bf16.mxu0 %v7834
    %8366 = vmatpush1.bf16.msra.mxu0 %v7833
    %8367 = vmatprep.subr.bf16.mxu0 %v7840
    %8368 = vmatpush1.bf16.msra.mxu0 %v7839
    %8369 = vmatprep.subr.bf16.mxu0 %v7846
    %8370 = vmatpush1.bf16.msra.mxu0 %v7845
    %8371 = vmatprep.subr.bf16.mxu0 %v7852
    %8372 = vmatpush1.bf16.msra.mxu0 %v7851
    %8373 = vmatprep.subr.bf16.mxu0 %v7858
    %8374 = vmatpush1.bf16.msra.mxu0 %v7857
    %8375 = vmatprep.mubr.bf16.mxu0 %v6574
    %8376 = vmatmul.mubr.bf16.gmra.mrb[0].mxu0 %v6573
    %v8377 = vpop.f32.mrb[0].mxu0
    %v8378 = vadd.f32 %v6876, %v8377
    %v8379 = vpop.f32.mrb[0].mxu0
    %v8380 = vadd.f32 %v6880, %v8379
    %v8381 = vpop.f32.mrb[0].mxu0
    %v8382 = vpop.f32.mrb[0].mxu0
    %8383 = vdwg.mxu0
    %8384 = vmatprep.subr.bf16.mxu0 %v7864
    %8385 = vmatpush1.bf16.msra.mxu0 %v7863
    %8386 = vmatprep.subr.bf16.mxu0 %v7870
    %8387 = vmatpush1.bf16.msra.mxu0 %v7869
    %8388 = vmatprep.subr.bf16.mxu0 %v7876
    %8389 = vmatpush1.bf16.msra.mxu0 %v7875
    %8390 = vmatprep.subr.bf16.mxu0 %v7882
    %8391 = vmatpush1.bf16.msra.mxu0 %v7881
    %8392 = vmatprep.subr.bf16.mxu0 %v7888
    %8393 = vmatpush1.bf16.msra.mxu0 %v7887
    %8394 = vmatprep.subr.bf16.mxu0 %v7894
    %8395 = vmatpush1.bf16.msra.mxu0 %v7893
    %8396 = vmatprep.subr.bf16.mxu0 %v7900
    %8397 = vmatpush1.bf16.msra.mxu0 %v7899
    %8398 = vmatprep.subr.bf16.mxu0 %v7906
    %8399 = vmatpush1.bf16.msra.mxu0 %v7905
    %8400 = vmatprep.subr.bf16.mxu0 %v7912
    %8401 = vmatpush1.bf16.msra.mxu0 %v7911
    %8402 = vmatprep.subr.bf16.mxu0 %v7918
    %8403 = vmatpush1.bf16.msra.mxu0 %v7917
    %8404 = vmatprep.subr.bf16.mxu0 %v7924
    %8405 = vmatpush1.bf16.msra.mxu0 %v7923
    %8406 = vmatprep.subr.bf16.mxu0 %v7930
    %8407 = vmatpush1.bf16.msra.mxu0 %v7929
    %8408 = vmatprep.subr.bf16.mxu0 %v7936
    %8409 = vmatpush1.bf16.msra.mxu0 %v7935
    %8410 = vmatprep.subr.bf16.mxu0 %v7942
    %8411 = vmatpush1.bf16.msra.mxu0 %v7941
    %8412 = vmatprep.subr.bf16.mxu0 %v7948
    %8413 = vmatpush1.bf16.msra.mxu0 %v7947
    %8414 = vmatprep.subr.bf16.mxu0 %v7954
    %8415 = vmatpush1.bf16.msra.mxu0 %v7953
    %8416 = vmatprep.mubr.bf16.mxu0 %v6576
    %8417 = vmatmul.mubr.bf16.gmra.mrb[0].mxu0 %v6575
    %v8418 = vpop.f32.mrb[0].mxu0
    %v8419 = vadd.f32 %v8378, %v8418
    %v8420 = vpop.f32.mrb[0].mxu0
    %v8421 = vadd.f32 %v8380, %v8420
    %v8422 = vpop.f32.mrb[0].mxu0
    %v8423 = vpop.f32.mrb[0].mxu0
    %8424 = vdwg.mxu0
    %8425 = vmatprep.subr.bf16.mxu0 %v7960
    %8426 = vmatpush1.bf16.msra.mxu0 %v7959
    %8427 = vmatprep.subr.bf16.mxu0 %v7966
    %8428 = vmatpush1.bf16.msra.mxu0 %v7965
    %8429 = vmatprep.subr.bf16.mxu0 %v7972
    %8430 = vmatpush1.bf16.msra.mxu0 %v7971
    %8431 = vmatprep.subr.bf16.mxu0 %v7978
    %8432 = vmatpush1.bf16.msra.mxu0 %v7977
    %8433 = vmatprep.subr.bf16.mxu0 %v7984
    %8434 = vmatpush1.bf16.msra.mxu0 %v7983
    %8435 = vmatprep.subr.bf16.mxu0 %v7990
    %8436 = vmatpush1.bf16.msra.mxu0 %v7989
    %8437 = vmatprep.subr.bf16.mxu0 %v7996
    %8438 = vmatpush1.bf16.msra.mxu0 %v7995
    %8439 = vmatprep.subr.bf16.mxu0 %v8002
    %8440 = vmatpush1.bf16.msra.mxu0 %v8001
    %8441 = vmatprep.subr.bf16.mxu0 %v8008
    %8442 = vmatpush1.bf16.msra.mxu0 %v8007
    %8443 = vmatprep.subr.bf16.mxu0 %v8014
    %8444 = vmatpush1.bf16.msra.mxu0 %v8013
    %8445 = vmatprep.subr.bf16.mxu0 %v8020
    %8446 = vmatpush1.bf16.msra.mxu0 %v8019
    %8447 = vmatprep.subr.bf16.mxu0 %v8026
    %8448 = vmatpush1.bf16.msra.mxu0 %v8025
    %8449 = vmatprep.subr.bf16.mxu0 %v8032
    %8450 = vmatpush1.bf16.msra.mxu0 %v8031
    %8451 = vmatprep.subr.bf16.mxu0 %v8038
    %8452 = vmatpush1.bf16.msra.mxu0 %v8037
    %8453 = vmatprep.subr.bf16.mxu0 %v8044
    %8454 = vmatpush1.bf16.msra.mxu0 %v8043
    %8455 = vmatprep.subr.bf16.mxu0 %v8050
    %8456 = vmatpush1.bf16.msra.mxu0 %v8049
    %8457 = vmatprep.mubr.bf16.mxu0 %v6578
    %8458 = vmatmul.mubr.bf16.gmra.mrb[0].mxu0 %v6577
    %v8459 = vpop.f32.mrb[0].mxu0
    %v8460 = vadd.f32 %v8419, %v8459
    %v8461 = vpop.f32.mrb[0].mxu0
    %v8462 = vadd.f32 %v8421, %v8461
    %v8463 = vpop.f32.mrb[0].mxu0
    %v8464 = vpop.f32.mrb[0].mxu0
    %8465 = vdwg.mxu0
    %8466 = vmatprep.subr.bf16.mxu0 %v7770
    %8467 = vmatpush1.bf16.msra.mxu0 %v7769
    %8468 = vmatprep.subr.bf16.mxu0 %v7776
    %8469 = vmatpush1.bf16.msra.mxu0 %v7775
    %8470 = vmatprep.subr.bf16.mxu0 %v7782
    %8471 = vmatpush1.bf16.msra.mxu0 %v7781
    %8472 = vmatprep.subr.bf16.mxu0 %v7788
    %8473 = vmatpush1.bf16.msra.mxu0 %v7787
    %8474 = vmatprep.subr.bf16.mxu0 %v7794
    %8475 = vmatpush1.bf16.msra.mxu0 %v7793
    %8476 = vmatprep.subr.bf16.mxu0 %v7800
    %8477 = vmatpush1.bf16.msra.mxu0 %v7799
    %8478 = vmatprep.subr.bf16.mxu0 %v7806
    %8479 = vmatpush1.bf16.msra.mxu0 %v7805
    %8480 = vmatprep.subr.bf16.mxu0 %v7812
    %8481 = vmatpush1.bf16.msra.mxu0 %v7811
    %8482 = vmatprep.subr.bf16.mxu0 %v7818
    %8483 = vmatpush1.bf16.msra.mxu0 %v7817
    %8484 = vmatprep.subr.bf16.mxu0 %v7824
    %8485 = vmatpush1.bf16.msra.mxu0 %v7823
    %8486 = vmatprep.subr.bf16.mxu0 %v7830
    %8487 = vmatpush1.bf16.msra.mxu0 %v7829
    %8488 = vmatprep.subr.bf16.mxu0 %v7836
    %8489 = vmatpush1.bf16.msra.mxu0 %v7835
    %8490 = vmatprep.subr.bf16.mxu0 %v7842
    %8491 = vmatpush1.bf16.msra.mxu0 %v7841
    %8492 = vmatprep.subr.bf16.mxu0 %v7848
    %8493 = vmatpush1.bf16.msra.mxu0 %v7847
    %8494 = vmatprep.subr.bf16.mxu0 %v7854
    %8495 = vmatpush1.bf16.msra.mxu0 %v7853
    %8496 = vmatprep.subr.bf16.mxu0 %v7860
    %8497 = vmatpush1.bf16.msra.mxu0 %v7859
    %8498 = vmatprep.mubr.bf16.mxu0 %v6574
    %8499 = vmatmul.mubr.bf16.gmra.mrb[0].mxu0 %v6573
    %v8500 = vpop.f32.mrb[0].mxu0
    %v8501 = vadd.f32 %v6884, %v8500
    %v8502 = vpop.f32.mrb[0].mxu0
    %v8503 = vadd.f32 %v6888, %v8502
    %v8504 = vpop.f32.mrb[0].mxu0
    %v8505 = vpop.f32.mrb[0].mxu0
    %8506 = vdwg.mxu0
    %8507 = vmatprep.subr.bf16.mxu0 %v7866
    %8508 = vmatpush1.bf16.msra.mxu0 %v7865
    %8509 = vmatprep.subr.bf16.mxu0 %v7872
    %8510 = vmatpush1.bf16.msra.mxu0 %v7871
    %8511 = vmatprep.subr.bf16.mxu0 %v7878
    %8512 = vmatpush1.bf16.msra.mxu0 %v7877
    %8513 = vmatprep.subr.bf16.mxu0 %v7884
    %8514 = vmatpush1.bf16.msra.mxu0 %v7883
    %8515 = vmatprep.subr.bf16.mxu0 %v7890
    %8516 = vmatpush1.bf16.msra.mxu0 %v7889
    %8517 = vmatprep.subr.bf16.mxu0 %v7896
    %8518 = vmatpush1.bf16.msra.mxu0 %v7895
    %8519 = vmatprep.subr.bf16.mxu0 %v7902
    %8520 = vmatpush1.bf16.msra.mxu0 %v7901
    %8521 = vmatprep.subr.bf16.mxu0 %v7908
    %8522 = vmatpush1.bf16.msra.mxu0 %v7907
    %8523 = vmatprep.subr.bf16.mxu0 %v7914
    %8524 = vmatpush1.bf16.msra.mxu0 %v7913
    %8525 = vmatprep.subr.bf16.mxu0 %v7920
    %8526 = vmatpush1.bf16.msra.mxu0 %v7919
    %8527 = vmatprep.subr.bf16.mxu0 %v7926
    %8528 = vmatpush1.bf16.msra.mxu0 %v7925
    %8529 = vmatprep.subr.bf16.mxu0 %v7932
    %8530 = vmatpush1.bf16.msra.mxu0 %v7931
    %8531 = vmatprep.subr.bf16.mxu0 %v7938
    %8532 = vmatpush1.bf16.msra.mxu0 %v7937
    %8533 = vmatprep.subr.bf16.mxu0 %v7944
    %8534 = vmatpush1.bf16.msra.mxu0 %v7943
    %8535 = vmatprep.subr.bf16.mxu0 %v7950
    %8536 = vmatpush1.bf16.msra.mxu0 %v7949
    %8537 = vmatprep.subr.bf16.mxu0 %v7956
    %8538 = vmatpush1.bf16.msra.mxu0 %v7955
    %8539 = vmatprep.mubr.bf16.mxu0 %v6576
    %8540 = vmatmul.mubr.bf16.gmra.mrb[0].mxu0 %v6575
    %v8541 = vpop.f32.mrb[0].mxu0
    %v8542 = vadd.f32 %v8501, %v8541
    %v8543 = vpop.f32.mrb[0].mxu0
    %v8544 = vadd.f32 %v8503, %v8543
    %v8545 = vpop.f32.mrb[0].mxu0
    %v8546 = vpop.f32.mrb[0].mxu0
    %8547 = vdwg.mxu0
    %8548 = vmatprep.subr.bf16.mxu0 %v7962
    %8549 = vmatpush1.bf16.msra.mxu0 %v7961
    %8550 = vmatprep.subr.bf16.mxu0 %v7968
    %8551 = vmatpush1.bf16.msra.mxu0 %v7967
    %8552 = vmatprep.subr.bf16.mxu0 %v7974
    %8553 = vmatpush1.bf16.msra.mxu0 %v7973
    %8554 = vmatprep.subr.bf16.mxu0 %v7980
    %8555 = vmatpush1.bf16.msra.mxu0 %v7979
    %8556 = vmatprep.subr.bf16.mxu0 %v7986
    %8557 = vmatpush1.bf16.msra.mxu0 %v7985
    %8558 = vmatprep.subr.bf16.mxu0 %v7992
    %8559 = vmatpush1.bf16.msra.mxu0 %v7991
    %8560 = vmatprep.subr.bf16.mxu0 %v7998
    %8561 = vmatpush1.bf16.msra.mxu0 %v7997
    %8562 = vmatprep.subr.bf16.mxu0 %v8004
    %8563 = vmatpush1.bf16.msra.mxu0 %v8003
    %8564 = vmatprep.subr.bf16.mxu0 %v8010
    %8565 = vmatpush1.bf16.msra.mxu0 %v8009
    %8566 = vmatprep.subr.bf16.mxu0 %v8016
    %8567 = vmatpush1.bf16.msra.mxu0 %v8015
    %8568 = vmatprep.subr.bf16.mxu0 %v8022
    %8569 = vmatpush1.bf16.msra.mxu0 %v8021
    %8570 = vmatprep.subr.bf16.mxu0 %v8028
    %8571 = vmatpush1.bf16.msra.mxu0 %v8027
    %8572 = vmatprep.subr.bf16.mxu0 %v8034
    %8573 = vmatpush1.bf16.msra.mxu0 %v8033
    %8574 = vmatprep.subr.bf16.mxu0 %v8040
    %8575 = vmatpush1.bf16.msra.mxu0 %v8039
    %8576 = vmatprep.subr.bf16.mxu0 %v8046
    %8577 = vmatpush1.bf16.msra.mxu0 %v8045
    %8578 = vmatprep.subr.bf16.mxu0 %v8052
    %8579 = vmatpush1.bf16.msra.mxu0 %v8051
    %8580 = vmatprep.mubr.bf16.mxu0 %v6578
    %8581 = vmatmul.mubr.bf16.gmra.mrb[0].mxu0 %v6577
    %v8582 = vpop.f32.mrb[0].mxu0
    %v8583 = vadd.f32 %v8542, %v8582
    %v8584 = vpop.f32.mrb[0].mxu0
    %v8585 = vadd.f32 %v8544, %v8584
    %v8586 = vpop.f32.mrb[0].mxu0
    %v8587 = vpop.f32.mrb[0].mxu0
    %8588 = vdwg.mxu0
    %8589 = vmatprep.subr.bf16.mxu0 %v7772
    %8590 = vmatpush1.bf16.msra.mxu0 %v7771
    %8591 = vmatprep.subr.bf16.mxu0 %v7778
    %8592 = vmatpush1.bf16.msra.mxu0 %v7777
    %8593 = vmatprep.subr.bf16.mxu0 %v7784
    %8594 = vmatpush1.bf16.msra.mxu0 %v7783
    %8595 = vmatprep.subr.bf16.mxu0 %v7790
    %8596 = vmatpush1.bf16.msra.mxu0 %v7789
    %8597 = vmatprep.subr.bf16.mxu0 %v7796
    %8598 = vmatpush1.bf16.msra.mxu0 %v7795
    %8599 = vmatprep.subr.bf16.mxu0 %v7802
    %8600 = vmatpush1.bf16.msra.mxu0 %v7801
    %8601 = vmatprep.subr.bf16.mxu0 %v7808
    %8602 = vmatpush1.bf16.msra.mxu0 %v7807
    %8603 = vmatprep.subr.bf16.mxu0 %v7814
    %8604 = vmatpush1.bf16.msra.mxu0 %v7813
    %8605 = vmatprep.subr.bf16.mxu0 %v7820
    %8606 = vmatpush1.bf16.msra.mxu0 %v7819
    %8607 = vmatprep.subr.bf16.mxu0 %v7826
    %8608 = vmatpush1.bf16.msra.mxu0 %v7825
    %8609 = vmatprep.subr.bf16.mxu0 %v7832
    %8610 = vmatpush1.bf16.msra.mxu0 %v7831
    %8611 = vmatprep.subr.bf16.mxu0 %v7838
    %8612 = vmatpush1.bf16.msra.mxu0 %v7837
    %8613 = vmatprep.subr.bf16.mxu0 %v7844
    %8614 = vmatpush1.bf16.msra.mxu0 %v7843
    %8615 = vmatprep.subr.bf16.mxu0 %v7850
    %8616 = vmatpush1.bf16.msra.mxu0 %v7849
    %8617 = vmatprep.subr.bf16.mxu0 %v7856
    %8618 = vmatpush1.bf16.msra.mxu0 %v7855
    %8619 = vmatprep.subr.bf16.mxu0 %v7862
    %8620 = vmatpush1.bf16.msra.mxu0 %v7861
    %8621 = vmatprep.mubr.bf16.mxu0 %v6574
    %8622 = vmatmul.mubr.bf16.gmra.mrb[0].mxu0 %v6573
    %v8623 = vpop.f32.mrb[0].mxu0
    %v8624 = vadd.f32 %v6892, %v8623
    %v8625 = vpop.f32.mrb[0].mxu0
    %v8626 = vadd.f32 %v6896, %v8625
    %v8627 = vpop.f32.mrb[0].mxu0
    %v8628 = vpop.f32.mrb[0].mxu0
    %8629 = vdwg.mxu0
    %8630 = vmatprep.subr.bf16.mxu0 %v7868
    %8631 = vmatpush1.bf16.msra.mxu0 %v7867
    %8632 = vmatprep.subr.bf16.mxu0 %v7874
    %8633 = vmatpush1.bf16.msra.mxu0 %v7873
    %8634 = vmatprep.subr.bf16.mxu0 %v7880
    %8635 = vmatpush1.bf16.msra.mxu0 %v7879
    %8636 = vmatprep.subr.bf16.mxu0 %v7886
    %8637 = vmatpush1.bf16.msra.mxu0 %v7885
    %8638 = vmatprep.subr.bf16.mxu0 %v7892
    %8639 = vmatpush1.bf16.msra.mxu0 %v7891
    %8640 = vmatprep.subr.bf16.mxu0 %v7898
    %8641 = vmatpush1.bf16.msra.mxu0 %v7897
    %8642 = vmatprep.subr.bf16.mxu0 %v7904
    %8643 = vmatpush1.bf16.msra.mxu0 %v7903
    %8644 = vmatprep.subr.bf16.mxu0 %v7910
    %8645 = vmatpush1.bf16.msra.mxu0 %v7909
    %8646 = vmatprep.subr.bf16.mxu0 %v7916
    %8647 = vmatpush1.bf16.msra.mxu0 %v7915
    %8648 = vmatprep.subr.bf16.mxu0 %v7922
    %8649 = vmatpush1.bf16.msra.mxu0 %v7921
    %8650 = vmatprep.subr.bf16.mxu0 %v7928
    %8651 = vmatpush1.bf16.msra.mxu0 %v7927
    %8652 = vmatprep.subr.bf16.mxu0 %v7934
    %8653 = vmatpush1.bf16.msra.mxu0 %v7933
    %8654 = vmatprep.subr.bf16.mxu0 %v7940
    %8655 = vmatpush1.bf16.msra.mxu0 %v7939
    %8656 = vmatprep.subr.bf16.mxu0 %v7946
    %8657 = vmatpush1.bf16.msra.mxu0 %v7945
    %8658 = vmatprep.subr.bf16.mxu0 %v7952
    %8659 = vmatpush1.bf16.msra.mxu0 %v7951
    %8660 = vmatprep.subr.bf16.mxu0 %v7958
    %8661 = vmatpush1.bf16.msra.mxu0 %v7957
    %8662 = vmatprep.mubr.bf16.mxu0 %v6576
    %8663 = vmatmul.mubr.bf16.gmra.mrb[0].mxu0 %v6575
    %v8664 = vpop.f32.mrb[0].mxu0
    %v8665 = vadd.f32 %v8624, %v8664
    %v8666 = vpop.f32.mrb[0].mxu0
    %v8667 = vadd.f32 %v8626, %v8666
    %v8668 = vpop.f32.mrb[0].mxu0
    %v8669 = vpop.f32.mrb[0].mxu0
    %8670 = vdwg.mxu0
    %8671 = vmatprep.subr.bf16.mxu0 %v7964
    %8672 = vmatpush1.bf16.msra.mxu0 %v7963
    %8673 = vmatprep.subr.bf16.mxu0 %v7970
    %8674 = vmatpush1.bf16.msra.mxu0 %v7969
    %8675 = vmatprep.subr.bf16.mxu0 %v7976
    %8676 = vmatpush1.bf16.msra.mxu0 %v7975
    %8677 = vmatprep.subr.bf16.mxu0 %v7982
    %8678 = vmatpush1.bf16.msra.mxu0 %v7981
    %8679 = vmatprep.subr.bf16.mxu0 %v7988
    %8680 = vmatpush1.bf16.msra.mxu0 %v7987
    %8681 = vmatprep.subr.bf16.mxu0 %v7994
    %8682 = vmatpush1.bf16.msra.mxu0 %v7993
    %8683 = vmatprep.subr.bf16.mxu0 %v8000
    %8684 = vmatpush1.bf16.msra.mxu0 %v7999
    %8685 = vmatprep.subr.bf16.mxu0 %v8006
    %8686 = vmatpush1.bf16.msra.mxu0 %v8005
    %8687 = vmatprep.subr.bf16.mxu0 %v8012
    %8688 = vmatpush1.bf16.msra.mxu0 %v8011
    %8689 = vmatprep.subr.bf16.mxu0 %v8018
    %8690 = vmatpush1.bf16.msra.mxu0 %v8017
    %8691 = vmatprep.subr.bf16.mxu0 %v8024
    %8692 = vmatpush1.bf16.msra.mxu0 %v8023
    %8693 = vmatprep.subr.bf16.mxu0 %v8030
    %8694 = vmatpush1.bf16.msra.mxu0 %v8029
    %8695 = vmatprep.subr.bf16.mxu0 %v8036
    %8696 = vmatpush1.bf16.msra.mxu0 %v8035
    %8697 = vmatprep.subr.bf16.mxu0 %v8042
    %8698 = vmatpush1.bf16.msra.mxu0 %v8041
    %8699 = vmatprep.subr.bf16.mxu0 %v8048
    %8700 = vmatpush1.bf16.msra.mxu0 %v8047
    %8701 = vmatprep.subr.bf16.mxu0 %v8054
    %8702 = vmatpush1.bf16.msra.mxu0 %v8053
    %8703 = vmatprep.mubr.bf16.mxu0 %v6578
    %8704 = vmatmul.mubr.bf16.gmra.mrb[0].mxu0 %v6577
    %v8705 = vpop.f32.mrb[0].mxu0
    %v8706 = vadd.f32 %v8665, %v8705
    %v8707 = vpop.f32.mrb[0].mxu0
    %v8708 = vadd.f32 %v8667, %v8707
    %v8709 = vpop.f32.mrb[0].mxu0
    %v8710 = vpop.f32.mrb[0].mxu0
    %8711 = vdwg.mxu0
    %v8712 = vstv %s6571
    %v8713 = vmul.f32 %v8712, %v6565
    %v8714 = vmul.f32 %v8712, %v6566
    %v8715 = vmul.f32 %v8712, %v6567
    %v8716 = vmul.f32 %v8712, %v6568
    %v8717 = vmul.f32 %v8712, %v6569
    %v8718 = vmul.f32 %v8712, %v6570
    %v8719 = vadd.f32 %v8460, %v8713
    %v8720 = vadd.f32 %v8462, %v8714
    %v8721 = vadd.f32 %v8583, %v8715
    %v8722 = vadd.f32 %v8585, %v8716
    %v8723 = vadd.f32 %v8706, %v8717
    %v8724 = vadd.f32 %v8708, %v8718
    %v8725 = vstv %s6572
    %v8726 = vmul.f32 %v8725, %v8719
    %v8727 = vmul.f32 %v8725, %v8720
    %v8728 = vmul.f32 %v8725, %v8721
    %v8729 = vmul.f32 %v8725, %v8722
    %v8730 = vmul.f32 %v8725, %v8723
    %v8731 = vmul.f32 %v8725, %v8724
    %v8732 = vmax.f32 %v8719, %v8726
    %v8733 = vmax.f32 %v8720, %v8727
    %v8734 = vmax.f32 %v8721, %v8728
    %v8735 = vmax.f32 %v8722, %v8729
    %v8736 = vmax.f32 %v8723, %v8730
    %v8737 = vmax.f32 %v8724, %v8731
    %s8738 = sld [smem:[#allocation2 + $0x8]]
    %s8739 = sld [smem:[#allocation2 + $0x9]]
    %v8740 = vpack.c.bf16 %v8732, %v8732
    %v8741 = vpack.c.bf16 %v8733, %v8733
    %v8742 = vpack.c.bf16 %v8734, %v8734
    %v8743 = vpack.c.bf16 %v8735, %v8735
    %v8744 = vpack.c.bf16 %v8736, %v8736
    %v8745 = vpack.c.bf16 %v8737, %v8737
    %s8746 = scalar_lea.vmem [#allocation7], 9216
    %v8747 = vld [vmem:[%s8746] sm:$0xff]
    %v8748 = vld [vmem:[%s8746 + $0x8] sm:$0xff]
    %v8749 = vld [vmem:[%s8746 + $0x10] sm:$0xff]
    %v8750 = vld [vmem:[%s8746 + $0x18] sm:$0xff]
    %v8751 = vld [vmem:[%s8746 + $0x20] sm:$0xff]
    %v8752 = vld [vmem:[%s8746 + $0x28] sm:$0xff]
    %v8753 = vld [vmem:[%s8746 + $0x30] sm:$0xff]
    %v8754 = vld [vmem:[%s8746 + $0x38] sm:$0xff]
    %v8755 = vld [vmem:[%s8746 + $0x40] sm:$0xff]
    %v8756 = vld [vmem:[%s8746 + $0x48] sm:$0xff]
    %v8757 = vld [vmem:[%s8746 + $0x50] sm:$0xff]
    %v8758 = vld [vmem:[%s8746 + $0x58] sm:$0xff]
    %v8759 = vld [vmem:[%s8746 + $0x60] sm:$0xff]
    %v8760 = vld [vmem:[%s8746 + $0x68] sm:$0xff]
    %v8761 = vld [vmem:[%s8746 + $0x70] sm:$0xff]
    %v8762 = vld [vmem:[%s8746 + $0x78] sm:$0xff]
    %v8763 = vld [vmem:[%s8746 + $0x80] sm:$0xff]
    %v8764 = vld [vmem:[%s8746 + $0x88] sm:$0xff]
    %v8765 = vld [vmem:[%s8746 + $0x90] sm:$0xff]
    %v8766 = vld [vmem:[%s8746 + $0x98] sm:$0xff]
    %v8767 = vld [vmem:[%s8746 + $0xa0] sm:$0xff]
    %v8768 = vld [vmem:[%s8746 + $0xa8] sm:$0xff]
    %v8769 = vld [vmem:[%s8746 + $0xb0] sm:$0xff]
    %v8770 = vld [vmem:[%s8746 + $0xb8] sm:$0xff]
    %v8771 = vld [vmem:[%s8746 + $0xc0] sm:$0xff]
    %v8772 = vld [vmem:[%s8746 + $0xc8] sm:$0xff]
    %v8773 = vld [vmem:[%s8746 + $0xd0] sm:$0xff]
    %v8774 = vld [vmem:[%s8746 + $0xd8] sm:$0xff]
    %v8775 = vld [vmem:[%s8746 + $0xe0] sm:$0xff]
    %v8776 = vld [vmem:[%s8746 + $0xe8] sm:$0xff]
    %v8777 = vld [vmem:[%s8746 + $0xf0] sm:$0xff]
    %v8778 = vld [vmem:[%s8746 + $0xf8] sm:$0xff]
    %v8779 = vld [vmem:[%s8746 + $0x100] sm:$0xff]
    %v8780 = vld [vmem:[%s8746 + $0x108] sm:$0xff]
    %v8781 = vld [vmem:[%s8746 + $0x110] sm:$0xff]
    %v8782 = vld [vmem:[%s8746 + $0x118] sm:$0xff]
    %v8783 = vld [vmem:[%s8746 + $0x120] sm:$0xff]
    %v8784 = vld [vmem:[%s8746 + $0x128] sm:$0xff]
    %v8785 = vld [vmem:[%s8746 + $0x130] sm:$0xff]
    %v8786 = vld [vmem:[%s8746 + $0x138] sm:$0xff]
    %v8787 = vld [vmem:[%s8746 + $0x140] sm:$0xff]
    %v8788 = vld [vmem:[%s8746 + $0x148] sm:$0xff]
    %v8789 = vld [vmem:[%s8746 + $0x150] sm:$0xff]
    %v8790 = vld [vmem:[%s8746 + $0x158] sm:$0xff]
    %v8791 = vld [vmem:[%s8746 + $0x160] sm:$0xff]
    %v8792 = vld [vmem:[%s8746 + $0x168] sm:$0xff]
    %v8793 = vld [vmem:[%s8746 + $0x170] sm:$0xff]
    %v8794 = vld [vmem:[%s8746 + $0x178] sm:$0xff]
    %v8795 = vld [vmem:[%s8746 + $0x180] sm:$0xff]
    %v8796 = vld [vmem:[%s8746 + $0x188] sm:$0xff]
    %v8797 = vld [vmem:[%s8746 + $0x190] sm:$0xff]
    %v8798 = vld [vmem:[%s8746 + $0x198] sm:$0xff]
    %v8799 = vld [vmem:[%s8746 + $0x1a0] sm:$0xff]
    %v8800 = vld [vmem:[%s8746 + $0x1a8] sm:$0xff]
    %v8801 = vld [vmem:[%s8746 + $0x1b0] sm:$0xff]
    %v8802 = vld [vmem:[%s8746 + $0x1b8] sm:$0xff]
    %v8803 = vld [vmem:[%s8746 + $0x1c0] sm:$0xff]
    %v8804 = vld [vmem:[%s8746 + $0x1c8] sm:$0xff]
    %v8805 = vld [vmem:[%s8746 + $0x1d0] sm:$0xff]
    %v8806 = vld [vmem:[%s8746 + $0x1d8] sm:$0xff]
    %v8807 = vld [vmem:[%s8746 + $0x1e0] sm:$0xff]
    %v8808 = vld [vmem:[%s8746 + $0x1e8] sm:$0xff]
    %v8809 = vld [vmem:[%s8746 + $0x1f0] sm:$0xff]
    %v8810 = vld [vmem:[%s8746 + $0x1f8] sm:$0xff]
    %v8811 = vld [vmem:[%s8746 + $0x200] sm:$0xff]
    %v8812 = vld [vmem:[%s8746 + $0x208] sm:$0xff]
    %v8813 = vld [vmem:[%s8746 + $0x210] sm:$0xff]
    %v8814 = vld [vmem:[%s8746 + $0x218] sm:$0xff]
    %v8815 = vld [vmem:[%s8746 + $0x220] sm:$0xff]
    %v8816 = vld [vmem:[%s8746 + $0x228] sm:$0xff]
    %v8817 = vld [vmem:[%s8746 + $0x230] sm:$0xff]
    %v8818 = vld [vmem:[%s8746 + $0x238] sm:$0xff]
    %v8819 = vld [vmem:[%s8746 + $0x240] sm:$0xff]
    %v8820 = vld [vmem:[%s8746 + $0x248] sm:$0xff]
    %v8821 = vld [vmem:[%s8746 + $0x250] sm:$0xff]
    %v8822 = vld [vmem:[%s8746 + $0x258] sm:$0xff]
    %v8823 = vld [vmem:[%s8746 + $0x260] sm:$0xff]
    %v8824 = vld [vmem:[%s8746 + $0x268] sm:$0xff]
    %v8825 = vld [vmem:[%s8746 + $0x270] sm:$0xff]
    %v8826 = vld [vmem:[%s8746 + $0x278] sm:$0xff]
    %v8827 = vld [vmem:[%s8746 + $0x280] sm:$0xff]
    %v8828 = vld [vmem:[%s8746 + $0x288] sm:$0xff]
    %v8829 = vld [vmem:[%s8746 + $0x290] sm:$0xff]
    %v8830 = vld [vmem:[%s8746 + $0x298] sm:$0xff]
    %v8831 = vld [vmem:[%s8746 + $0x2a0] sm:$0xff]
    %v8832 = vld [vmem:[%s8746 + $0x2a8] sm:$0xff]
    %v8833 = vld [vmem:[%s8746 + $0x2b0] sm:$0xff]
    %v8834 = vld [vmem:[%s8746 + $0x2b8] sm:$0xff]
    %v8835 = vld [vmem:[%s8746 + $0x2c0] sm:$0xff]
    %v8836 = vld [vmem:[%s8746 + $0x2c8] sm:$0xff]
    %v8837 = vld [vmem:[%s8746 + $0x2d0] sm:$0xff]
    %v8838 = vld [vmem:[%s8746 + $0x2d8] sm:$0xff]
    %v8839 = vld [vmem:[%s8746 + $0x2e0] sm:$0xff]
    %v8840 = vld [vmem:[%s8746 + $0x2e8] sm:$0xff]
    %v8841 = vld [vmem:[%s8746 + $0x2f0] sm:$0xff]
    %v8842 = vld [vmem:[%s8746 + $0x2f8] sm:$0xff]
    %v8843 = vld [vmem:[%s8746 + $0x300] sm:$0xff]
    %v8844 = vld [vmem:[%s8746 + $0x308] sm:$0xff]
    %v8845 = vld [vmem:[%s8746 + $0x310] sm:$0xff]
    %v8846 = vld [vmem:[%s8746 + $0x318] sm:$0xff]
    %v8847 = vld [vmem:[%s8746 + $0x320] sm:$0xff]
    %v8848 = vld [vmem:[%s8746 + $0x328] sm:$0xff]
    %v8849 = vld [vmem:[%s8746 + $0x330] sm:$0xff]
    %v8850 = vld [vmem:[%s8746 + $0x338] sm:$0xff]
    %v8851 = vld [vmem:[%s8746 + $0x340] sm:$0xff]
    %v8852 = vld [vmem:[%s8746 + $0x348] sm:$0xff]
    %v8853 = vld [vmem:[%s8746 + $0x350] sm:$0xff]
    %v8854 = vld [vmem:[%s8746 + $0x358] sm:$0xff]
    %v8855 = vld [vmem:[%s8746 + $0x360] sm:$0xff]
    %v8856 = vld [vmem:[%s8746 + $0x368] sm:$0xff]
    %v8857 = vld [vmem:[%s8746 + $0x370] sm:$0xff]
    %v8858 = vld [vmem:[%s8746 + $0x378] sm:$0xff]
    %v8859 = vld [vmem:[%s8746 + $0x380] sm:$0xff]
    %v8860 = vld [vmem:[%s8746 + $0x388] sm:$0xff]
    %v8861 = vld [vmem:[%s8746 + $0x390] sm:$0xff]
    %v8862 = vld [vmem:[%s8746 + $0x398] sm:$0xff]
    %v8863 = vld [vmem:[%s8746 + $0x3a0] sm:$0xff]
    %v8864 = vld [vmem:[%s8746 + $0x3a8] sm:$0xff]
    %v8865 = vld [vmem:[%s8746 + $0x3b0] sm:$0xff]
    %v8866 = vld [vmem:[%s8746 + $0x3b8] sm:$0xff]
    %v8867 = vld [vmem:[%s8746 + $0x3c0] sm:$0xff]
    %v8868 = vld [vmem:[%s8746 + $0x3c8] sm:$0xff]
    %v8869 = vld [vmem:[%s8746 + $0x3d0] sm:$0xff]
    %v8870 = vld [vmem:[%s8746 + $0x3d8] sm:$0xff]
    %v8871 = vld [vmem:[%s8746 + $0x3e0] sm:$0xff]
    %v8872 = vld [vmem:[%s8746 + $0x3e8] sm:$0xff]
    %v8873 = vld [vmem:[%s8746 + $0x3f0] sm:$0xff]
    %v8874 = vld [vmem:[%s8746 + $0x3f8] sm:$0xff]
    %v8875 = vld [vmem:[%s8746 + $0x400] sm:$0xff]
    %v8876 = vld [vmem:[%s8746 + $0x408] sm:$0xff]
    %v8877 = vld [vmem:[%s8746 + $0x410] sm:$0xff]
    %v8878 = vld [vmem:[%s8746 + $0x418] sm:$0xff]
    %v8879 = vld [vmem:[%s8746 + $0x420] sm:$0xff]
    %v8880 = vld [vmem:[%s8746 + $0x428] sm:$0xff]
    %v8881 = vld [vmem:[%s8746 + $0x430] sm:$0xff]
    %v8882 = vld [vmem:[%s8746 + $0x438] sm:$0xff]
    %v8883 = vld [vmem:[%s8746 + $0x440] sm:$0xff]
    %v8884 = vld [vmem:[%s8746 + $0x448] sm:$0xff]
    %v8885 = vld [vmem:[%s8746 + $0x450] sm:$0xff]
    %v8886 = vld [vmem:[%s8746 + $0x458] sm:$0xff]
    %v8887 = vld [vmem:[%s8746 + $0x460] sm:$0xff]
    %v8888 = vld [vmem:[%s8746 + $0x468] sm:$0xff]
    %v8889 = vld [vmem:[%s8746 + $0x470] sm:$0xff]
    %v8890 = vld [vmem:[%s8746 + $0x478] sm:$0xff]
    %v8891 = vld [vmem:[%s8746 + $0x480] sm:$0xff]
    %v8892 = vld [vmem:[%s8746 + $0x488] sm:$0xff]
    %v8893 = vld [vmem:[%s8746 + $0x490] sm:$0xff]
    %v8894 = vld [vmem:[%s8746 + $0x498] sm:$0xff]
    %v8895 = vld [vmem:[%s8746 + $0x4a0] sm:$0xff]
    %v8896 = vld [vmem:[%s8746 + $0x4a8] sm:$0xff]
    %v8897 = vld [vmem:[%s8746 + $0x4b0] sm:$0xff]
    %v8898 = vld [vmem:[%s8746 + $0x4b8] sm:$0xff]
    %v8899 = vld [vmem:[%s8746 + $0x4c0] sm:$0xff]
    %v8900 = vld [vmem:[%s8746 + $0x4c8] sm:$0xff]
    %v8901 = vld [vmem:[%s8746 + $0x4d0] sm:$0xff]
    %v8902 = vld [vmem:[%s8746 + $0x4d8] sm:$0xff]
    %v8903 = vld [vmem:[%s8746 + $0x4e0] sm:$0xff]
    %v8904 = vld [vmem:[%s8746 + $0x4e8] sm:$0xff]
    %v8905 = vld [vmem:[%s8746 + $0x4f0] sm:$0xff]
    %v8906 = vld [vmem:[%s8746 + $0x4f8] sm:$0xff]
    %v8907 = vld [vmem:[%s8746 + $0x500] sm:$0xff]
    %v8908 = vld [vmem:[%s8746 + $0x508] sm:$0xff]
    %v8909 = vld [vmem:[%s8746 + $0x510] sm:$0xff]
    %v8910 = vld [vmem:[%s8746 + $0x518] sm:$0xff]
    %v8911 = vld [vmem:[%s8746 + $0x520] sm:$0xff]
    %v8912 = vld [vmem:[%s8746 + $0x528] sm:$0xff]
    %v8913 = vld [vmem:[%s8746 + $0x530] sm:$0xff]
    %v8914 = vld [vmem:[%s8746 + $0x538] sm:$0xff]
    %v8915 = vld [vmem:[%s8746 + $0x540] sm:$0xff]
    %v8916 = vld [vmem:[%s8746 + $0x548] sm:$0xff]
    %v8917 = vld [vmem:[%s8746 + $0x550] sm:$0xff]
    %v8918 = vld [vmem:[%s8746 + $0x558] sm:$0xff]
    %v8919 = vld [vmem:[%s8746 + $0x560] sm:$0xff]
    %v8920 = vld [vmem:[%s8746 + $0x568] sm:$0xff]
    %v8921 = vld [vmem:[%s8746 + $0x570] sm:$0xff]
    %v8922 = vld [vmem:[%s8746 + $0x578] sm:$0xff]
    %v8923 = vld [vmem:[%s8746 + $0x580] sm:$0xff]
    %v8924 = vld [vmem:[%s8746 + $0x588] sm:$0xff]
    %v8925 = vld [vmem:[%s8746 + $0x590] sm:$0xff]
    %v8926 = vld [vmem:[%s8746 + $0x598] sm:$0xff]
    %v8927 = vld [vmem:[%s8746 + $0x5a0] sm:$0xff]
    %v8928 = vld [vmem:[%s8746 + $0x5a8] sm:$0xff]
    %v8929 = vld [vmem:[%s8746 + $0x5b0] sm:$0xff]
    %v8930 = vld [vmem:[%s8746 + $0x5b8] sm:$0xff]
    %v8931 = vld [vmem:[%s8746 + $0x5c0] sm:$0xff]
    %v8932 = vld [vmem:[%s8746 + $0x5c8] sm:$0xff]
    %v8933 = vld [vmem:[%s8746 + $0x5d0] sm:$0xff]
    %v8934 = vld [vmem:[%s8746 + $0x5d8] sm:$0xff]
    %v8935 = vld [vmem:[%s8746 + $0x5e0] sm:$0xff]
    %v8936 = vld [vmem:[%s8746 + $0x5e8] sm:$0xff]
    %v8937 = vld [vmem:[%s8746 + $0x5f0] sm:$0xff]
    %v8938 = vld [vmem:[%s8746 + $0x5f8] sm:$0xff]
    %v8939 = vld [vmem:[%s8746 + $0x600] sm:$0xff]
    %v8940 = vld [vmem:[%s8746 + $0x608] sm:$0xff]
    %v8941 = vld [vmem:[%s8746 + $0x610] sm:$0xff]
    %v8942 = vld [vmem:[%s8746 + $0x618] sm:$0xff]
    %v8943 = vld [vmem:[%s8746 + $0x620] sm:$0xff]
    %v8944 = vld [vmem:[%s8746 + $0x628] sm:$0xff]
    %v8945 = vld [vmem:[%s8746 + $0x630] sm:$0xff]
    %v8946 = vld [vmem:[%s8746 + $0x638] sm:$0xff]
    %v8947 = vld [vmem:[%s8746 + $0x640] sm:$0xff]
    %v8948 = vld [vmem:[%s8746 + $0x648] sm:$0xff]
    %v8949 = vld [vmem:[%s8746 + $0x650] sm:$0xff]
    %v8950 = vld [vmem:[%s8746 + $0x658] sm:$0xff]
    %v8951 = vld [vmem:[%s8746 + $0x660] sm:$0xff]
    %v8952 = vld [vmem:[%s8746 + $0x668] sm:$0xff]
    %v8953 = vld [vmem:[%s8746 + $0x670] sm:$0xff]
    %v8954 = vld [vmem:[%s8746 + $0x678] sm:$0xff]
    %v8955 = vld [vmem:[%s8746 + $0x680] sm:$0xff]
    %v8956 = vld [vmem:[%s8746 + $0x688] sm:$0xff]
    %v8957 = vld [vmem:[%s8746 + $0x690] sm:$0xff]
    %v8958 = vld [vmem:[%s8746 + $0x698] sm:$0xff]
    %v8959 = vld [vmem:[%s8746 + $0x6a0] sm:$0xff]
    %v8960 = vld [vmem:[%s8746 + $0x6a8] sm:$0xff]
    %v8961 = vld [vmem:[%s8746 + $0x6b0] sm:$0xff]
    %v8962 = vld [vmem:[%s8746 + $0x6b8] sm:$0xff]
    %v8963 = vld [vmem:[%s8746 + $0x6c0] sm:$0xff]
    %v8964 = vld [vmem:[%s8746 + $0x6c8] sm:$0xff]
    %v8965 = vld [vmem:[%s8746 + $0x6d0] sm:$0xff]
    %v8966 = vld [vmem:[%s8746 + $0x6d8] sm:$0xff]
    %v8967 = vld [vmem:[%s8746 + $0x6e0] sm:$0xff]
    %v8968 = vld [vmem:[%s8746 + $0x6e8] sm:$0xff]
    %v8969 = vld [vmem:[%s8746 + $0x6f0] sm:$0xff]
    %v8970 = vld [vmem:[%s8746 + $0x6f8] sm:$0xff]
    %v8971 = vld [vmem:[%s8746 + $0x700] sm:$0xff]
    %v8972 = vld [vmem:[%s8746 + $0x708] sm:$0xff]
    %v8973 = vld [vmem:[%s8746 + $0x710] sm:$0xff]
    %v8974 = vld [vmem:[%s8746 + $0x718] sm:$0xff]
    %v8975 = vld [vmem:[%s8746 + $0x720] sm:$0xff]
    %v8976 = vld [vmem:[%s8746 + $0x728] sm:$0xff]
    %v8977 = vld [vmem:[%s8746 + $0x730] sm:$0xff]
    %v8978 = vld [vmem:[%s8746 + $0x738] sm:$0xff]
    %v8979 = vld [vmem:[%s8746 + $0x740] sm:$0xff]
    %v8980 = vld [vmem:[%s8746 + $0x748] sm:$0xff]
    %v8981 = vld [vmem:[%s8746 + $0x750] sm:$0xff]
    %v8982 = vld [vmem:[%s8746 + $0x758] sm:$0xff]
    %v8983 = vld [vmem:[%s8746 + $0x760] sm:$0xff]
    %v8984 = vld [vmem:[%s8746 + $0x768] sm:$0xff]
    %v8985 = vld [vmem:[%s8746 + $0x770] sm:$0xff]
    %v8986 = vld [vmem:[%s8746 + $0x778] sm:$0xff]
    %v8987 = vld [vmem:[%s8746 + $0x780] sm:$0xff]
    %v8988 = vld [vmem:[%s8746 + $0x788] sm:$0xff]
    %v8989 = vld [vmem:[%s8746 + $0x790] sm:$0xff]
    %v8990 = vld [vmem:[%s8746 + $0x798] sm:$0xff]
    %v8991 = vld [vmem:[%s8746 + $0x7a0] sm:$0xff]
    %v8992 = vld [vmem:[%s8746 + $0x7a8] sm:$0xff]
    %v8993 = vld [vmem:[%s8746 + $0x7b0] sm:$0xff]
    %v8994 = vld [vmem:[%s8746 + $0x7b8] sm:$0xff]
    %v8995 = vld [vmem:[%s8746 + $0x7c0] sm:$0xff]
    %v8996 = vld [vmem:[%s8746 + $0x7c8] sm:$0xff]
    %v8997 = vld [vmem:[%s8746 + $0x7d0] sm:$0xff]
    %v8998 = vld [vmem:[%s8746 + $0x7d8] sm:$0xff]
    %v8999 = vld [vmem:[%s8746 + $0x7e0] sm:$0xff]
    %v9000 = vld [vmem:[%s8746 + $0x7e8] sm:$0xff]
    %v9001 = vld [vmem:[%s8746 + $0x7f0] sm:$0xff]
    %v9002 = vld [vmem:[%s8746 + $0x7f8] sm:$0xff]
    %v9003 = vld [vmem:[%s8746 + $0x800] sm:$0xff]
    %v9004 = vld [vmem:[%s8746 + $0x808] sm:$0xff]
    %v9005 = vld [vmem:[%s8746 + $0x810] sm:$0xff]
    %v9006 = vld [vmem:[%s8746 + $0x818] sm:$0xff]
    %v9007 = vld [vmem:[%s8746 + $0x820] sm:$0xff]
    %v9008 = vld [vmem:[%s8746 + $0x828] sm:$0xff]
    %v9009 = vld [vmem:[%s8746 + $0x830] sm:$0xff]
    %v9010 = vld [vmem:[%s8746 + $0x838] sm:$0xff]
    %v9011 = vld [vmem:[%s8746 + $0x840] sm:$0xff]
    %v9012 = vld [vmem:[%s8746 + $0x848] sm:$0xff]
    %v9013 = vld [vmem:[%s8746 + $0x850] sm:$0xff]
    %v9014 = vld [vmem:[%s8746 + $0x858] sm:$0xff]
    %v9015 = vld [vmem:[%s8746 + $0x860] sm:$0xff]
    %v9016 = vld [vmem:[%s8746 + $0x868] sm:$0xff]
    %v9017 = vld [vmem:[%s8746 + $0x870] sm:$0xff]
    %v9018 = vld [vmem:[%s8746 + $0x878] sm:$0xff]
    %v9019 = vld [vmem:[%s8746 + $0x880] sm:$0xff]
    %v9020 = vld [vmem:[%s8746 + $0x888] sm:$0xff]
    %v9021 = vld [vmem:[%s8746 + $0x890] sm:$0xff]
    %v9022 = vld [vmem:[%s8746 + $0x898] sm:$0xff]
    %v9023 = vld [vmem:[%s8746 + $0x8a0] sm:$0xff]
    %v9024 = vld [vmem:[%s8746 + $0x8a8] sm:$0xff]
    %v9025 = vld [vmem:[%s8746 + $0x8b0] sm:$0xff]
    %v9026 = vld [vmem:[%s8746 + $0x8b8] sm:$0xff]
    %v9027 = vld [vmem:[%s8746 + $0x8c0] sm:$0xff]
    %v9028 = vld [vmem:[%s8746 + $0x8c8] sm:$0xff]
    %v9029 = vld [vmem:[%s8746 + $0x8d0] sm:$0xff]
    %v9030 = vld [vmem:[%s8746 + $0x8d8] sm:$0xff]
    %v9031 = vld [vmem:[%s8746 + $0x8e0] sm:$0xff]
    %v9032 = vld [vmem:[%s8746 + $0x8e8] sm:$0xff]
    %v9033 = vld [vmem:[%s8746 + $0x8f0] sm:$0xff]
    %v9034 = vld [vmem:[%s8746 + $0x8f8] sm:$0xff]
    %s9035 = scalar_lea.vmem [#allocation9], 4
    %v9036 = vld [vmem:[%s9035] ss:$8 sm:$0xf]
    %v9037 = vld [vmem:[%s9035] ss:$8 sm:$0x30]
    %v9038 = vor.u32 %v9036, %v9037
    %v9040 = vlaneseq
    %v9041 = vshrl.u32 %v9040, 7
    %v9042 = vsub.s32 0, %v9041
    %v9043 = vrot.slane %v9038, %v9042
    %v9044 = vlaneseq
    %v9045 = vshrl.u32 %v9044, 7
    %v9046 = vsub.s32 1, %v9045
    %v9047 = vrot.slane %v9038, %v9046
    %v9048 = vlaneseq
    %v9049 = vshrl.u32 %v9048, 7
    %v9050 = vsub.s32 2, %v9049
    %v9051 = vrot.slane %v9038, %v9050
    %v9052 = vlaneseq
    %v9053 = vshrl.u32 %v9052, 7
    %v9054 = vsub.s32 3, %v9053
    %v9055 = vrot.slane %v9038, %v9054
    %v9056 = vlaneseq
    %v9057 = vshrl.u32 %v9056, 7
    %v9058 = vsub.s32 4, %v9057
    %v9059 = vrot.slane %v9038, %v9058
    %v9060 = vlaneseq
    %v9061 = vshrl.u32 %v9060, 7
    %v9062 = vsub.s32 5, %v9061
    %v9063 = vrot.slane %v9038, %v9062
    %v9358 = vunpack.c.l.b16 %v8747
    %v9359 = vunpack.c.h.b16 %v8747
    %v9360 = vunpack.c.l.b16 %v8748
    %v9361 = vunpack.c.h.b16 %v8748
    %v9362 = vunpack.c.l.b16 %v8749
    %v9363 = vunpack.c.h.b16 %v8749
    %v9364 = vunpack.c.l.b16 %v8750
    %v9365 = vunpack.c.h.b16 %v8750
    %v9366 = vunpack.c.l.b16 %v8751
    %v9367 = vunpack.c.h.b16 %v8751
    %v9368 = vunpack.c.l.b16 %v8752
    %v9369 = vunpack.c.h.b16 %v8752
    %v9370 = vunpack.c.l.b16 %v8753
    %v9371 = vunpack.c.h.b16 %v8753
    %v9372 = vunpack.c.l.b16 %v8754
    %v9373 = vunpack.c.h.b16 %v8754
    %v9374 = vunpack.c.l.b16 %v8755
    %v9375 = vunpack.c.h.b16 %v8755
    %v9376 = vunpack.c.l.b16 %v8756
    %v9377 = vunpack.c.h.b16 %v8756
    %v9378 = vunpack.c.l.b16 %v8757
    %v9379 = vunpack.c.h.b16 %v8757
    %v9380 = vunpack.c.l.b16 %v8758
    %v9381 = vunpack.c.h.b16 %v8758
    %v9382 = vunpack.c.l.b16 %v8759
    %v9383 = vunpack.c.h.b16 %v8759
    %v9384 = vunpack.c.l.b16 %v8760
    %v9385 = vunpack.c.h.b16 %v8760
    %v9386 = vunpack.c.l.b16 %v8761
    %v9387 = vunpack.c.h.b16 %v8761
    %v9388 = vunpack.c.l.b16 %v8762
    %v9389 = vunpack.c.h.b16 %v8762
    %v9390 = vunpack.c.l.b16 %v8763
    %v9391 = vunpack.c.h.b16 %v8763
    %v9392 = vunpack.c.l.b16 %v8764
    %v9393 = vunpack.c.h.b16 %v8764
    %v9394 = vunpack.c.l.b16 %v8765
    %v9395 = vunpack.c.h.b16 %v8765
    %v9396 = vunpack.c.l.b16 %v8766
    %v9397 = vunpack.c.h.b16 %v8766
    %v9398 = vunpack.c.l.b16 %v8767
    %v9399 = vunpack.c.h.b16 %v8767
    %v9400 = vunpack.c.l.b16 %v8768
    %v9401 = vunpack.c.h.b16 %v8768
    %v9402 = vunpack.c.l.b16 %v8769
    %v9403 = vunpack.c.h.b16 %v8769
    %v9404 = vunpack.c.l.b16 %v8770
    %v9405 = vunpack.c.h.b16 %v8770
    %v9406 = vunpack.c.l.b16 %v8771
    %v9407 = vunpack.c.h.b16 %v8771
    %v9408 = vunpack.c.l.b16 %v8772
    %v9409 = vunpack.c.h.b16 %v8772
    %v9410 = vunpack.c.l.b16 %v8773
    %v9411 = vunpack.c.h.b16 %v8773
    %v9412 = vunpack.c.l.b16 %v8774
    %v9413 = vunpack.c.h.b16 %v8774
    %v9414 = vunpack.c.l.b16 %v8775
    %v9415 = vunpack.c.h.b16 %v8775
    %v9416 = vunpack.c.l.b16 %v8776
    %v9417 = vunpack.c.h.b16 %v8776
    %v9418 = vunpack.c.l.b16 %v8777
    %v9419 = vunpack.c.h.b16 %v8777
    %v9420 = vunpack.c.l.b16 %v8778
    %v9421 = vunpack.c.h.b16 %v8778
    %v9422 = vunpack.c.l.b16 %v8779
    %v9423 = vunpack.c.h.b16 %v8779
    %v9424 = vunpack.c.l.b16 %v8780
    %v9425 = vunpack.c.h.b16 %v8780
    %v9426 = vunpack.c.l.b16 %v8781
    %v9427 = vunpack.c.h.b16 %v8781
    %v9428 = vunpack.c.l.b16 %v8782
    %v9429 = vunpack.c.h.b16 %v8782
    %v9430 = vunpack.c.l.b16 %v8783
    %v9431 = vunpack.c.h.b16 %v8783
    %v9432 = vunpack.c.l.b16 %v8784
    %v9433 = vunpack.c.h.b16 %v8784
    %v9434 = vunpack.c.l.b16 %v8785
    %v9435 = vunpack.c.h.b16 %v8785
    %v9436 = vunpack.c.l.b16 %v8786
    %v9437 = vunpack.c.h.b16 %v8786
    %v9438 = vunpack.c.l.b16 %v8787
    %v9439 = vunpack.c.h.b16 %v8787
    %v9440 = vunpack.c.l.b16 %v8788
    %v9441 = vunpack.c.h.b16 %v8788
    %v9442 = vunpack.c.l.b16 %v8789
    %v9443 = vunpack.c.h.b16 %v8789
    %v9444 = vunpack.c.l.b16 %v8790
    %v9445 = vunpack.c.h.b16 %v8790
    %v9446 = vunpack.c.l.b16 %v8791
    %v9447 = vunpack.c.h.b16 %v8791
    %v9448 = vunpack.c.l.b16 %v8792
    %v9449 = vunpack.c.h.b16 %v8792
    %v9450 = vunpack.c.l.b16 %v8793
    %v9451 = vunpack.c.h.b16 %v8793
    %v9452 = vunpack.c.l.b16 %v8794
    %v9453 = vunpack.c.h.b16 %v8794
    %v9454 = vunpack.c.l.b16 %v8795
    %v9455 = vunpack.c.h.b16 %v8795
    %v9456 = vunpack.c.l.b16 %v8796
    %v9457 = vunpack.c.h.b16 %v8796
    %v9458 = vunpack.c.l.b16 %v8797
    %v9459 = vunpack.c.h.b16 %v8797
    %v9460 = vunpack.c.l.b16 %v8798
    %v9461 = vunpack.c.h.b16 %v8798
    %v9462 = vunpack.c.l.b16 %v8799
    %v9463 = vunpack.c.h.b16 %v8799
    %v9464 = vunpack.c.l.b16 %v8800
    %v9465 = vunpack.c.h.b16 %v8800
    %v9466 = vunpack.c.l.b16 %v8801
    %v9467 = vunpack.c.h.b16 %v8801
    %v9468 = vunpack.c.l.b16 %v8802
    %v9469 = vunpack.c.h.b16 %v8802
    %v9470 = vunpack.c.l.b16 %v8803
    %v9471 = vunpack.c.h.b16 %v8803
    %v9472 = vunpack.c.l.b16 %v8804
    %v9473 = vunpack.c.h.b16 %v8804
    %v9474 = vunpack.c.l.b16 %v8805
    %v9475 = vunpack.c.h.b16 %v8805
    %v9476 = vunpack.c.l.b16 %v8806
    %v9477 = vunpack.c.h.b16 %v8806
    %v9478 = vunpack.c.l.b16 %v8807
    %v9479 = vunpack.c.h.b16 %v8807
    %v9480 = vunpack.c.l.b16 %v8808
    %v9481 = vunpack.c.h.b16 %v8808
    %v9482 = vunpack.c.l.b16 %v8809
    %v9483 = vunpack.c.h.b16 %v8809
    %v9484 = vunpack.c.l.b16 %v8810
    %v9485 = vunpack.c.h.b16 %v8810
    %v9486 = vunpack.c.l.b16 %v8811
    %v9487 = vunpack.c.h.b16 %v8811
    %v9488 = vunpack.c.l.b16 %v8812
    %v9489 = vunpack.c.h.b16 %v8812
    %v9490 = vunpack.c.l.b16 %v8813
    %v9491 = vunpack.c.h.b16 %v8813
    %v9492 = vunpack.c.l.b16 %v8814
    %v9493 = vunpack.c.h.b16 %v8814
    %v9494 = vunpack.c.l.b16 %v8815
    %v9495 = vunpack.c.h.b16 %v8815
    %v9496 = vunpack.c.l.b16 %v8816
    %v9497 = vunpack.c.h.b16 %v8816
    %v9498 = vunpack.c.l.b16 %v8817
    %v9499 = vunpack.c.h.b16 %v8817
    %v9500 = vunpack.c.l.b16 %v8818
    %v9501 = vunpack.c.h.b16 %v8818
    %v9502 = vunpack.c.l.b16 %v8819
    %v9503 = vunpack.c.h.b16 %v8819
    %v9504 = vunpack.c.l.b16 %v8820
    %v9505 = vunpack.c.h.b16 %v8820
    %v9506 = vunpack.c.l.b16 %v8821
    %v9507 = vunpack.c.h.b16 %v8821
    %v9508 = vunpack.c.l.b16 %v8822
    %v9509 = vunpack.c.h.b16 %v8822
    %v9510 = vunpack.c.l.b16 %v8823
    %v9511 = vunpack.c.h.b16 %v8823
    %v9512 = vunpack.c.l.b16 %v8824
    %v9513 = vunpack.c.h.b16 %v8824
    %v9514 = vunpack.c.l.b16 %v8825
    %v9515 = vunpack.c.h.b16 %v8825
    %v9516 = vunpack.c.l.b16 %v8826
    %v9517 = vunpack.c.h.b16 %v8826
    %v9518 = vunpack.c.l.b16 %v8827
    %v9519 = vunpack.c.h.b16 %v8827
    %v9520 = vunpack.c.l.b16 %v8828
    %v9521 = vunpack.c.h.b16 %v8828
    %v9522 = vunpack.c.l.b16 %v8829
    %v9523 = vunpack.c.h.b16 %v8829
    %v9524 = vunpack.c.l.b16 %v8830
    %v9525 = vunpack.c.h.b16 %v8830
    %v9526 = vunpack.c.l.b16 %v8831
    %v9527 = vunpack.c.h.b16 %v8831
    %v9528 = vunpack.c.l.b16 %v8832
    %v9529 = vunpack.c.h.b16 %v8832
    %v9530 = vunpack.c.l.b16 %v8833
    %v9531 = vunpack.c.h.b16 %v8833
    %v9532 = vunpack.c.l.b16 %v8834
    %v9533 = vunpack.c.h.b16 %v8834
    %v9534 = vunpack.c.l.b16 %v8835
    %v9535 = vunpack.c.h.b16 %v8835
    %v9536 = vunpack.c.l.b16 %v8836
    %v9537 = vunpack.c.h.b16 %v8836
    %v9538 = vunpack.c.l.b16 %v8837
    %v9539 = vunpack.c.h.b16 %v8837
    %v9540 = vunpack.c.l.b16 %v8838
    %v9541 = vunpack.c.h.b16 %v8838
    %v9542 = vunpack.c.l.b16 %v8839
    %v9543 = vunpack.c.h.b16 %v8839
    %v9544 = vunpack.c.l.b16 %v8840
    %v9545 = vunpack.c.h.b16 %v8840
    %v9546 = vunpack.c.l.b16 %v8841
    %v9547 = vunpack.c.h.b16 %v8841
    %v9548 = vunpack.c.l.b16 %v8842
    %v9549 = vunpack.c.h.b16 %v8842
    %v9550 = vunpack.c.l.b16 %v8843
    %v9551 = vunpack.c.h.b16 %v8843
    %v9552 = vunpack.c.l.b16 %v8844
    %v9553 = vunpack.c.h.b16 %v8844
    %v9554 = vunpack.c.l.b16 %v8845
    %v9555 = vunpack.c.h.b16 %v8845
    %v9556 = vunpack.c.l.b16 %v8846
    %v9557 = vunpack.c.h.b16 %v8846
    %v9558 = vunpack.c.l.b16 %v8847
    %v9559 = vunpack.c.h.b16 %v8847
    %v9560 = vunpack.c.l.b16 %v8848
    %v9561 = vunpack.c.h.b16 %v8848
    %v9562 = vunpack.c.l.b16 %v8849
    %v9563 = vunpack.c.h.b16 %v8849
    %v9564 = vunpack.c.l.b16 %v8850
    %v9565 = vunpack.c.h.b16 %v8850
    %v9566 = vunpack.c.l.b16 %v8851
    %v9567 = vunpack.c.h.b16 %v8851
    %v9568 = vunpack.c.l.b16 %v8852
    %v9569 = vunpack.c.h.b16 %v8852
    %v9570 = vunpack.c.l.b16 %v8853
    %v9571 = vunpack.c.h.b16 %v8853
    %v9572 = vunpack.c.l.b16 %v8854
    %v9573 = vunpack.c.h.b16 %v8854
    %v9574 = vunpack.c.l.b16 %v8855
    %v9575 = vunpack.c.h.b16 %v8855
    %v9576 = vunpack.c.l.b16 %v8856
    %v9577 = vunpack.c.h.b16 %v8856
    %v9578 = vunpack.c.l.b16 %v8857
    %v9579 = vunpack.c.h.b16 %v8857
    %v9580 = vunpack.c.l.b16 %v8858
    %v9581 = vunpack.c.h.b16 %v8858
    %v9582 = vunpack.c.l.b16 %v8859
    %v9583 = vunpack.c.h.b16 %v8859
    %v9584 = vunpack.c.l.b16 %v8860
    %v9585 = vunpack.c.h.b16 %v8860
    %v9586 = vunpack.c.l.b16 %v8861
    %v9587 = vunpack.c.h.b16 %v8861
    %v9588 = vunpack.c.l.b16 %v8862
    %v9589 = vunpack.c.h.b16 %v8862
    %v9590 = vunpack.c.l.b16 %v8863
    %v9591 = vunpack.c.h.b16 %v8863
    %v9592 = vunpack.c.l.b16 %v8864
    %v9593 = vunpack.c.h.b16 %v8864
    %v9594 = vunpack.c.l.b16 %v8865
    %v9595 = vunpack.c.h.b16 %v8865
    %v9596 = vunpack.c.l.b16 %v8866
    %v9597 = vunpack.c.h.b16 %v8866
    %v9598 = vunpack.c.l.b16 %v8867
    %v9599 = vunpack.c.h.b16 %v8867
    %v9600 = vunpack.c.l.b16 %v8868
    %v9601 = vunpack.c.h.b16 %v8868
    %v9602 = vunpack.c.l.b16 %v8869
    %v9603 = vunpack.c.h.b16 %v8869
    %v9604 = vunpack.c.l.b16 %v8870
    %v9605 = vunpack.c.h.b16 %v8870
    %v9606 = vunpack.c.l.b16 %v8871
    %v9607 = vunpack.c.h.b16 %v8871
    %v9608 = vunpack.c.l.b16 %v8872
    %v9609 = vunpack.c.h.b16 %v8872
    %v9610 = vunpack.c.l.b16 %v8873
    %v9611 = vunpack.c.h.b16 %v8873
    %v9612 = vunpack.c.l.b16 %v8874
    %v9613 = vunpack.c.h.b16 %v8874
    %v9614 = vunpack.c.l.b16 %v8875
    %v9615 = vunpack.c.h.b16 %v8875
    %v9616 = vunpack.c.l.b16 %v8876
    %v9617 = vunpack.c.h.b16 %v8876
    %v9618 = vunpack.c.l.b16 %v8877
    %v9619 = vunpack.c.h.b16 %v8877
    %v9620 = vunpack.c.l.b16 %v8878
    %v9621 = vunpack.c.h.b16 %v8878
    %v9622 = vunpack.c.l.b16 %v8879
    %v9623 = vunpack.c.h.b16 %v8879
    %v9624 = vunpack.c.l.b16 %v8880
    %v9625 = vunpack.c.h.b16 %v8880
    %v9626 = vunpack.c.l.b16 %v8881
    %v9627 = vunpack.c.h.b16 %v8881
    %v9628 = vunpack.c.l.b16 %v8882
    %v9629 = vunpack.c.h.b16 %v8882
    %v9630 = vunpack.c.l.b16 %v8883
    %v9631 = vunpack.c.h.b16 %v8883
    %v9632 = vunpack.c.l.b16 %v8884
    %v9633 = vunpack.c.h.b16 %v8884
    %v9634 = vunpack.c.l.b16 %v8885
    %v9635 = vunpack.c.h.b16 %v8885
    %v9636 = vunpack.c.l.b16 %v8886
    %v9637 = vunpack.c.h.b16 %v8886
    %v9638 = vunpack.c.l.b16 %v8887
    %v9639 = vunpack.c.h.b16 %v8887
    %v9640 = vunpack.c.l.b16 %v8888
    %v9641 = vunpack.c.h.b16 %v8888
    %v9642 = vunpack.c.l.b16 %v8889
    %v9643 = vunpack.c.h.b16 %v8889
    %v9644 = vunpack.c.l.b16 %v8890
    %v9645 = vunpack.c.h.b16 %v8890
    %v9646 = vunpack.c.l.b16 %v8891
    %v9647 = vunpack.c.h.b16 %v8891
    %v9648 = vunpack.c.l.b16 %v8892
    %v9649 = vunpack.c.h.b16 %v8892
    %v9650 = vunpack.c.l.b16 %v8893
    %v9651 = vunpack.c.h.b16 %v8893
    %v9652 = vunpack.c.l.b16 %v8894
    %v9653 = vunpack.c.h.b16 %v8894
    %v9654 = vunpack.c.l.b16 %v8895
    %v9655 = vunpack.c.h.b16 %v8895
    %v9656 = vunpack.c.l.b16 %v8896
    %v9657 = vunpack.c.h.b16 %v8896
    %v9658 = vunpack.c.l.b16 %v8897
    %v9659 = vunpack.c.h.b16 %v8897
    %v9660 = vunpack.c.l.b16 %v8898
    %v9661 = vunpack.c.h.b16 %v8898
    %v9662 = vunpack.c.l.b16 %v8899
    %v9663 = vunpack.c.h.b16 %v8899
    %v9664 = vunpack.c.l.b16 %v8900
    %v9665 = vunpack.c.h.b16 %v8900
    %v9666 = vunpack.c.l.b16 %v8901
    %v9667 = vunpack.c.h.b16 %v8901
    %v9668 = vunpack.c.l.b16 %v8902
    %v9669 = vunpack.c.h.b16 %v8902
    %v9670 = vunpack.c.l.b16 %v8903
    %v9671 = vunpack.c.h.b16 %v8903
    %v9672 = vunpack.c.l.b16 %v8904
    %v9673 = vunpack.c.h.b16 %v8904
    %v9674 = vunpack.c.l.b16 %v8905
    %v9675 = vunpack.c.h.b16 %v8905
    %v9676 = vunpack.c.l.b16 %v8906
    %v9677 = vunpack.c.h.b16 %v8906
    %v9678 = vunpack.c.l.b16 %v8907
    %v9679 = vunpack.c.h.b16 %v8907
    %v9680 = vunpack.c.l.b16 %v8908
    %v9681 = vunpack.c.h.b16 %v8908
    %v9682 = vunpack.c.l.b16 %v8909
    %v9683 = vunpack.c.h.b16 %v8909
    %v9684 = vunpack.c.l.b16 %v8910
    %v9685 = vunpack.c.h.b16 %v8910
    %v9686 = vunpack.c.l.b16 %v8911
    %v9687 = vunpack.c.h.b16 %v8911
    %v9688 = vunpack.c.l.b16 %v8912
    %v9689 = vunpack.c.h.b16 %v8912
    %v9690 = vunpack.c.l.b16 %v8913
    %v9691 = vunpack.c.h.b16 %v8913
    %v9692 = vunpack.c.l.b16 %v8914
    %v9693 = vunpack.c.h.b16 %v8914
    %v9694 = vunpack.c.l.b16 %v8915
    %v9695 = vunpack.c.h.b16 %v8915
    %v9696 = vunpack.c.l.b16 %v8916
    %v9697 = vunpack.c.h.b16 %v8916
    %v9698 = vunpack.c.l.b16 %v8917
    %v9699 = vunpack.c.h.b16 %v8917
    %v9700 = vunpack.c.l.b16 %v8918
    %v9701 = vunpack.c.h.b16 %v8918
    %v9702 = vunpack.c.l.b16 %v8919
    %v9703 = vunpack.c.h.b16 %v8919
    %v9704 = vunpack.c.l.b16 %v8920
    %v9705 = vunpack.c.h.b16 %v8920
    %v9706 = vunpack.c.l.b16 %v8921
    %v9707 = vunpack.c.h.b16 %v8921
    %v9708 = vunpack.c.l.b16 %v8922
    %v9709 = vunpack.c.h.b16 %v8922
    %v9710 = vunpack.c.l.b16 %v8923
    %v9711 = vunpack.c.h.b16 %v8923
    %v9712 = vunpack.c.l.b16 %v8924
    %v9713 = vunpack.c.h.b16 %v8924
    %v9714 = vunpack.c.l.b16 %v8925
    %v9715 = vunpack.c.h.b16 %v8925
    %v9716 = vunpack.c.l.b16 %v8926
    %v9717 = vunpack.c.h.b16 %v8926
    %v9718 = vunpack.c.l.b16 %v8927
    %v9719 = vunpack.c.h.b16 %v8927
    %v9720 = vunpack.c.l.b16 %v8928
    %v9721 = vunpack.c.h.b16 %v8928
    %v9722 = vunpack.c.l.b16 %v8929
    %v9723 = vunpack.c.h.b16 %v8929
    %v9724 = vunpack.c.l.b16 %v8930
    %v9725 = vunpack.c.h.b16 %v8930
    %v9726 = vunpack.c.l.b16 %v8931
    %v9727 = vunpack.c.h.b16 %v8931
    %v9728 = vunpack.c.l.b16 %v8932
    %v9729 = vunpack.c.h.b16 %v8932
    %v9730 = vunpack.c.l.b16 %v8933
    %v9731 = vunpack.c.h.b16 %v8933
    %v9732 = vunpack.c.l.b16 %v8934
    %v9733 = vunpack.c.h.b16 %v8934
    %v9734 = vunpack.c.l.b16 %v8935
    %v9735 = vunpack.c.h.b16 %v8935
    %v9736 = vunpack.c.l.b16 %v8936
    %v9737 = vunpack.c.h.b16 %v8936
    %v9738 = vunpack.c.l.b16 %v8937
    %v9739 = vunpack.c.h.b16 %v8937
    %v9740 = vunpack.c.l.b16 %v8938
    %v9741 = vunpack.c.h.b16 %v8938
    %v9742 = vunpack.c.l.b16 %v8939
    %v9743 = vunpack.c.h.b16 %v8939
    %v9744 = vunpack.c.l.b16 %v8940
    %v9745 = vunpack.c.h.b16 %v8940
    %v9746 = vunpack.c.l.b16 %v8941
    %v9747 = vunpack.c.h.b16 %v8941
    %v9748 = vunpack.c.l.b16 %v8942
    %v9749 = vunpack.c.h.b16 %v8942
    %v9750 = vunpack.c.l.b16 %v8943
    %v9751 = vunpack.c.h.b16 %v8943
    %v9752 = vunpack.c.l.b16 %v8944
    %v9753 = vunpack.c.h.b16 %v8944
    %v9754 = vunpack.c.l.b16 %v8945
    %v9755 = vunpack.c.h.b16 %v8945
    %v9756 = vunpack.c.l.b16 %v8946
    %v9757 = vunpack.c.h.b16 %v8946
    %v9758 = vunpack.c.l.b16 %v8947
    %v9759 = vunpack.c.h.b16 %v8947
    %v9760 = vunpack.c.l.b16 %v8948
    %v9761 = vunpack.c.h.b16 %v8948
    %v9762 = vunpack.c.l.b16 %v8949
    %v9763 = vunpack.c.h.b16 %v8949
    %v9764 = vunpack.c.l.b16 %v8950
    %v9765 = vunpack.c.h.b16 %v8950
    %v9766 = vunpack.c.l.b16 %v8951
    %v9767 = vunpack.c.h.b16 %v8951
    %v9768 = vunpack.c.l.b16 %v8952
    %v9769 = vunpack.c.h.b16 %v8952
    %v9770 = vunpack.c.l.b16 %v8953
    %v9771 = vunpack.c.h.b16 %v8953
    %v9772 = vunpack.c.l.b16 %v8954
    %v9773 = vunpack.c.h.b16 %v8954
    %v9774 = vunpack.c.l.b16 %v8955
    %v9775 = vunpack.c.h.b16 %v8955
    %v9776 = vunpack.c.l.b16 %v8956
    %v9777 = vunpack.c.h.b16 %v8956
    %v9778 = vunpack.c.l.b16 %v8957
    %v9779 = vunpack.c.h.b16 %v8957
    %v9780 = vunpack.c.l.b16 %v8958
    %v9781 = vunpack.c.h.b16 %v8958
    %v9782 = vunpack.c.l.b16 %v8959
    %v9783 = vunpack.c.h.b16 %v8959
    %v9784 = vunpack.c.l.b16 %v8960
    %v9785 = vunpack.c.h.b16 %v8960
    %v9786 = vunpack.c.l.b16 %v8961
    %v9787 = vunpack.c.h.b16 %v8961
    %v9788 = vunpack.c.l.b16 %v8962
    %v9789 = vunpack.c.h.b16 %v8962
    %v9790 = vunpack.c.l.b16 %v8963
    %v9791 = vunpack.c.h.b16 %v8963
    %v9792 = vunpack.c.l.b16 %v8964
    %v9793 = vunpack.c.h.b16 %v8964
    %v9794 = vunpack.c.l.b16 %v8965
    %v9795 = vunpack.c.h.b16 %v8965
    %v9796 = vunpack.c.l.b16 %v8966
    %v9797 = vunpack.c.h.b16 %v8966
    %v9798 = vunpack.c.l.b16 %v8967
    %v9799 = vunpack.c.h.b16 %v8967
    %v9800 = vunpack.c.l.b16 %v8968
    %v9801 = vunpack.c.h.b16 %v8968
    %v9802 = vunpack.c.l.b16 %v8969
    %v9803 = vunpack.c.h.b16 %v8969
    %v9804 = vunpack.c.l.b16 %v8970
    %v9805 = vunpack.c.h.b16 %v8970
    %v9806 = vunpack.c.l.b16 %v8971
    %v9807 = vunpack.c.h.b16 %v8971
    %v9808 = vunpack.c.l.b16 %v8972
    %v9809 = vunpack.c.h.b16 %v8972
    %v9810 = vunpack.c.l.b16 %v8973
    %v9811 = vunpack.c.h.b16 %v8973
    %v9812 = vunpack.c.l.b16 %v8974
    %v9813 = vunpack.c.h.b16 %v8974
    %v9814 = vunpack.c.l.b16 %v8975
    %v9815 = vunpack.c.h.b16 %v8975
    %v9816 = vunpack.c.l.b16 %v8976
    %v9817 = vunpack.c.h.b16 %v8976
    %v9818 = vunpack.c.l.b16 %v8977
    %v9819 = vunpack.c.h.b16 %v8977
    %v9820 = vunpack.c.l.b16 %v8978
    %v9821 = vunpack.c.h.b16 %v8978
    %v9822 = vunpack.c.l.b16 %v8979
    %v9823 = vunpack.c.h.b16 %v8979
    %v9824 = vunpack.c.l.b16 %v8980
    %v9825 = vunpack.c.h.b16 %v8980
    %v9826 = vunpack.c.l.b16 %v8981
    %v9827 = vunpack.c.h.b16 %v8981
    %v9828 = vunpack.c.l.b16 %v8982
    %v9829 = vunpack.c.h.b16 %v8982
    %v9830 = vunpack.c.l.b16 %v8983
    %v9831 = vunpack.c.h.b16 %v8983
    %v9832 = vunpack.c.l.b16 %v8984
    %v9833 = vunpack.c.h.b16 %v8984
    %v9834 = vunpack.c.l.b16 %v8985
    %v9835 = vunpack.c.h.b16 %v8985
    %v9836 = vunpack.c.l.b16 %v8986
    %v9837 = vunpack.c.h.b16 %v8986
    %v9838 = vunpack.c.l.b16 %v8987
    %v9839 = vunpack.c.h.b16 %v8987
    %v9840 = vunpack.c.l.b16 %v8988
    %v9841 = vunpack.c.h.b16 %v8988
    %v9842 = vunpack.c.l.b16 %v8989
    %v9843 = vunpack.c.h.b16 %v8989
    %v9844 = vunpack.c.l.b16 %v8990
    %v9845 = vunpack.c.h.b16 %v8990
    %v9846 = vunpack.c.l.b16 %v8991
    %v9847 = vunpack.c.h.b16 %v8991
    %v9848 = vunpack.c.l.b16 %v8992
    %v9849 = vunpack.c.h.b16 %v8992
    %v9850 = vunpack.c.l.b16 %v8993
    %v9851 = vunpack.c.h.b16 %v8993
    %v9852 = vunpack.c.l.b16 %v8994
    %v9853 = vunpack.c.h.b16 %v8994
    %v9854 = vunpack.c.l.b16 %v8995
    %v9855 = vunpack.c.h.b16 %v8995
    %v9856 = vunpack.c.l.b16 %v8996
    %v9857 = vunpack.c.h.b16 %v8996
    %v9858 = vunpack.c.l.b16 %v8997
    %v9859 = vunpack.c.h.b16 %v8997
    %v9860 = vunpack.c.l.b16 %v8998
    %v9861 = vunpack.c.h.b16 %v8998
    %v9862 = vunpack.c.l.b16 %v8999
    %v9863 = vunpack.c.h.b16 %v8999
    %v9864 = vunpack.c.l.b16 %v9000
    %v9865 = vunpack.c.h.b16 %v9000
    %v9866 = vunpack.c.l.b16 %v9001
    %v9867 = vunpack.c.h.b16 %v9001
    %v9868 = vunpack.c.l.b16 %v9002
    %v9869 = vunpack.c.h.b16 %v9002
    %v9870 = vunpack.c.l.b16 %v9003
    %v9871 = vunpack.c.h.b16 %v9003
    %v9872 = vunpack.c.l.b16 %v9004
    %v9873 = vunpack.c.h.b16 %v9004
    %v9874 = vunpack.c.l.b16 %v9005
    %v9875 = vunpack.c.h.b16 %v9005
    %v9876 = vunpack.c.l.b16 %v9006
    %v9877 = vunpack.c.h.b16 %v9006
    %v9878 = vunpack.c.l.b16 %v9007
    %v9879 = vunpack.c.h.b16 %v9007
    %v9880 = vunpack.c.l.b16 %v9008
    %v9881 = vunpack.c.h.b16 %v9008
    %v9882 = vunpack.c.l.b16 %v9009
    %v9883 = vunpack.c.h.b16 %v9009
    %v9884 = vunpack.c.l.b16 %v9010
    %v9885 = vunpack.c.h.b16 %v9010
    %v9886 = vunpack.c.l.b16 %v9011
    %v9887 = vunpack.c.h.b16 %v9011
    %v9888 = vunpack.c.l.b16 %v9012
    %v9889 = vunpack.c.h.b16 %v9012
    %v9890 = vunpack.c.l.b16 %v9013
    %v9891 = vunpack.c.h.b16 %v9013
    %v9892 = vunpack.c.l.b16 %v9014
    %v9893 = vunpack.c.h.b16 %v9014
    %v9894 = vunpack.c.l.b16 %v9015
    %v9895 = vunpack.c.h.b16 %v9015
    %v9896 = vunpack.c.l.b16 %v9016
    %v9897 = vunpack.c.h.b16 %v9016
    %v9898 = vunpack.c.l.b16 %v9017
    %v9899 = vunpack.c.h.b16 %v9017
    %v9900 = vunpack.c.l.b16 %v9018
    %v9901 = vunpack.c.h.b16 %v9018
    %v9902 = vunpack.c.l.b16 %v9019
    %v9903 = vunpack.c.h.b16 %v9019
    %v9904 = vunpack.c.l.b16 %v9020
    %v9905 = vunpack.c.h.b16 %v9020
    %v9906 = vunpack.c.l.b16 %v9021
    %v9907 = vunpack.c.h.b16 %v9021
    %v9908 = vunpack.c.l.b16 %v9022
    %v9909 = vunpack.c.h.b16 %v9022
    %v9910 = vunpack.c.l.b16 %v9023
    %v9911 = vunpack.c.h.b16 %v9023
    %v9912 = vunpack.c.l.b16 %v9024
    %v9913 = vunpack.c.h.b16 %v9024
    %v9914 = vunpack.c.l.b16 %v9025
    %v9915 = vunpack.c.h.b16 %v9025
    %v9916 = vunpack.c.l.b16 %v9026
    %v9917 = vunpack.c.h.b16 %v9026
    %v9918 = vunpack.c.l.b16 %v9027
    %v9919 = vunpack.c.h.b16 %v9027
    %v9920 = vunpack.c.l.b16 %v9028
    %v9921 = vunpack.c.h.b16 %v9028
    %v9922 = vunpack.c.l.b16 %v9029
    %v9923 = vunpack.c.h.b16 %v9029
    %v9924 = vunpack.c.l.b16 %v9030
    %v9925 = vunpack.c.h.b16 %v9030
    %v9926 = vunpack.c.l.b16 %v9031
    %v9927 = vunpack.c.h.b16 %v9031
    %v9928 = vunpack.c.l.b16 %v9032
    %v9929 = vunpack.c.h.b16 %v9032
    %v9930 = vunpack.c.l.b16 %v9033
    %v9931 = vunpack.c.h.b16 %v9033
    %v9932 = vunpack.c.l.b16 %v9034
    %v9933 = vunpack.c.h.b16 %v9034
    %v9934 = vpack.c.b16 %v9364, %v9358
    %v9935 = vpack.c.b16 %v9365, %v9359
    %v9936 = vpack.c.b16 %v9366, %v9360
    %v9937 = vpack.c.b16 %v9367, %v9361
    %v9938 = vpack.c.b16 %v9368, %v9362
    %v9939 = vpack.c.b16 %v9369, %v9363
    %v9940 = vpack.c.b16 %v9376, %v9370
    %v9941 = vpack.c.b16 %v9377, %v9371
    %v9942 = vpack.c.b16 %v9378, %v9372
    %v9943 = vpack.c.b16 %v9379, %v9373
    %v9944 = vpack.c.b16 %v9380, %v9374
    %v9945 = vpack.c.b16 %v9381, %v9375
    %v9946 = vpack.c.b16 %v9388, %v9382
    %v9947 = vpack.c.b16 %v9389, %v9383
    %v9948 = vpack.c.b16 %v9390, %v9384
    %v9949 = vpack.c.b16 %v9391, %v9385
    %v9950 = vpack.c.b16 %v9392, %v9386
    %v9951 = vpack.c.b16 %v9393, %v9387
    %v9952 = vpack.c.b16 %v9400, %v9394
    %v9953 = vpack.c.b16 %v9401, %v9395
    %v9954 = vpack.c.b16 %v9402, %v9396
    %v9955 = vpack.c.b16 %v9403, %v9397
    %v9956 = vpack.c.b16 %v9404, %v9398
    %v9957 = vpack.c.b16 %v9405, %v9399
    %v9958 = vpack.c.b16 %v9412, %v9406
    %v9959 = vpack.c.b16 %v9413, %v9407
    %v9960 = vpack.c.b16 %v9414, %v9408
    %v9961 = vpack.c.b16 %v9415, %v9409
    %v9962 = vpack.c.b16 %v9416, %v9410
    %v9963 = vpack.c.b16 %v9417, %v9411
    %v9964 = vpack.c.b16 %v9424, %v9418
    %v9965 = vpack.c.b16 %v9425, %v9419
    %v9966 = vpack.c.b16 %v9426, %v9420
    %v9967 = vpack.c.b16 %v9427, %v9421
    %v9968 = vpack.c.b16 %v9428, %v9422
    %v9969 = vpack.c.b16 %v9429, %v9423
    %v9970 = vpack.c.b16 %v9436, %v9430
    %v9971 = vpack.c.b16 %v9437, %v9431
    %v9972 = vpack.c.b16 %v9438, %v9432
    %v9973 = vpack.c.b16 %v9439, %v9433
    %v9974 = vpack.c.b16 %v9440, %v9434
    %v9975 = vpack.c.b16 %v9441, %v9435
    %v9976 = vpack.c.b16 %v9448, %v9442
    %v9977 = vpack.c.b16 %v9449, %v9443
    %v9978 = vpack.c.b16 %v9450, %v9444
    %v9979 = vpack.c.b16 %v9451, %v9445
    %v9980 = vpack.c.b16 %v9452, %v9446
    %v9981 = vpack.c.b16 %v9453, %v9447
    %v9982 = vpack.c.b16 %v9460, %v9454
    %v9983 = vpack.c.b16 %v9461, %v9455
    %v9984 = vpack.c.b16 %v9462, %v9456
    %v9985 = vpack.c.b16 %v9463, %v9457
    %v9986 = vpack.c.b16 %v9464, %v9458
    %v9987 = vpack.c.b16 %v9465, %v9459
    %v9988 = vpack.c.b16 %v9472, %v9466
    %v9989 = vpack.c.b16 %v9473, %v9467
    %v9990 = vpack.c.b16 %v9474, %v9468
    %v9991 = vpack.c.b16 %v9475, %v9469
    %v9992 = vpack.c.b16 %v9476, %v9470
    %v9993 = vpack.c.b16 %v9477, %v9471
    %v9994 = vpack.c.b16 %v9484, %v9478
    %v9995 = vpack.c.b16 %v9485, %v9479
    %v9996 = vpack.c.b16 %v9486, %v9480
    %v9997 = vpack.c.b16 %v9487, %v9481
    %v9998 = vpack.c.b16 %v9488, %v9482
    %v9999 = vpack.c.b16 %v9489, %v9483
    %v10000 = vpack.c.b16 %v9496, %v9490
    %v10001 = vpack.c.b16 %v9497, %v9491
    %v10002 = vpack.c.b16 %v9498, %v9492
    %v10003 = vpack.c.b16 %v9499, %v9493
    %v10004 = vpack.c.b16 %v9500, %v9494
    %v10005 = vpack.c.b16 %v9501, %v9495
    %v10006 = vpack.c.b16 %v9508, %v9502
    %v10007 = vpack.c.b16 %v9509, %v9503
    %v10008 = vpack.c.b16 %v9510, %v9504
    %v10009 = vpack.c.b16 %v9511, %v9505
    %v10010 = vpack.c.b16 %v9512, %v9506
    %v10011 = vpack.c.b16 %v9513, %v9507
    %v10012 = vpack.c.b16 %v9520, %v9514
    %v10013 = vpack.c.b16 %v9521, %v9515
    %v10014 = vpack.c.b16 %v9522, %v9516
    %v10015 = vpack.c.b16 %v9523, %v9517
    %v10016 = vpack.c.b16 %v9524, %v9518
    %v10017 = vpack.c.b16 %v9525, %v9519
    %v10018 = vpack.c.b16 %v9532, %v9526
    %v10019 = vpack.c.b16 %v9533, %v9527
    %v10020 = vpack.c.b16 %v9534, %v9528
    %v10021 = vpack.c.b16 %v9535, %v9529
    %v10022 = vpack.c.b16 %v9536, %v9530
    %v10023 = vpack.c.b16 %v9537, %v9531
    %v10024 = vpack.c.b16 %v9544, %v9538
    %v10025 = vpack.c.b16 %v9545, %v9539
    %v10026 = vpack.c.b16 %v9546, %v9540
    %v10027 = vpack.c.b16 %v9547, %v9541
    %v10028 = vpack.c.b16 %v9548, %v9542
    %v10029 = vpack.c.b16 %v9549, %v9543
    %v10030 = vpack.c.b16 %v9556, %v9550
    %v10031 = vpack.c.b16 %v9557, %v9551
    %v10032 = vpack.c.b16 %v9558, %v9552
    %v10033 = vpack.c.b16 %v9559, %v9553
    %v10034 = vpack.c.b16 %v9560, %v9554
    %v10035 = vpack.c.b16 %v9561, %v9555
    %v10036 = vpack.c.b16 %v9568, %v9562
    %v10037 = vpack.c.b16 %v9569, %v9563
    %v10038 = vpack.c.b16 %v9570, %v9564
    %v10039 = vpack.c.b16 %v9571, %v9565
    %v10040 = vpack.c.b16 %v9572, %v9566
    %v10041 = vpack.c.b16 %v9573, %v9567
    %v10042 = vpack.c.b16 %v9580, %v9574
    %v10043 = vpack.c.b16 %v9581, %v9575
    %v10044 = vpack.c.b16 %v9582, %v9576
    %v10045 = vpack.c.b16 %v9583, %v9577
    %v10046 = vpack.c.b16 %v9584, %v9578
    %v10047 = vpack.c.b16 %v9585, %v9579
    %v10048 = vpack.c.b16 %v9592, %v9586
    %v10049 = vpack.c.b16 %v9593, %v9587
    %v10050 = vpack.c.b16 %v9594, %v9588
    %v10051 = vpack.c.b16 %v9595, %v9589
    %v10052 = vpack.c.b16 %v9596, %v9590
    %v10053 = vpack.c.b16 %v9597, %v9591
    %v10054 = vpack.c.b16 %v9604, %v9598
    %v10055 = vpack.c.b16 %v9605, %v9599
    %v10056 = vpack.c.b16 %v9606, %v9600
    %v10057 = vpack.c.b16 %v9607, %v9601
    %v10058 = vpack.c.b16 %v9608, %v9602
    %v10059 = vpack.c.b16 %v9609, %v9603
    %v10060 = vpack.c.b16 %v9616, %v9610
    %v10061 = vpack.c.b16 %v9617, %v9611
    %v10062 = vpack.c.b16 %v9618, %v9612
    %v10063 = vpack.c.b16 %v9619, %v9613
    %v10064 = vpack.c.b16 %v9620, %v9614
    %v10065 = vpack.c.b16 %v9621, %v9615
    %v10066 = vpack.c.b16 %v9628, %v9622
    %v10067 = vpack.c.b16 %v9629, %v9623
    %v10068 = vpack.c.b16 %v9630, %v9624
    %v10069 = vpack.c.b16 %v9631, %v9625
    %v10070 = vpack.c.b16 %v9632, %v9626
    %v10071 = vpack.c.b16 %v9633, %v9627
    %v10072 = vpack.c.b16 %v9640, %v9634
    %v10073 = vpack.c.b16 %v9641, %v9635
    %v10074 = vpack.c.b16 %v9642, %v9636
    %v10075 = vpack.c.b16 %v9643, %v9637
    %v10076 = vpack.c.b16 %v9644, %v9638
    %v10077 = vpack.c.b16 %v9645, %v9639
    %v10078 = vpack.c.b16 %v9652, %v9646
    %v10079 = vpack.c.b16 %v9653, %v9647
    %v10080 = vpack.c.b16 %v9654, %v9648
    %v10081 = vpack.c.b16 %v9655, %v9649
    %v10082 = vpack.c.b16 %v9656, %v9650
    %v10083 = vpack.c.b16 %v9657, %v9651
    %v10084 = vpack.c.b16 %v9664, %v9658
    %v10085 = vpack.c.b16 %v9665, %v9659
    %v10086 = vpack.c.b16 %v9666, %v9660
    %v10087 = vpack.c.b16 %v9667, %v9661
    %v10088 = vpack.c.b16 %v9668, %v9662
    %v10089 = vpack.c.b16 %v9669, %v9663
    %v10090 = vpack.c.b16 %v9676, %v9670
    %v10091 = vpack.c.b16 %v9677, %v9671
    %v10092 = vpack.c.b16 %v9678, %v9672
    %v10093 = vpack.c.b16 %v9679, %v9673
    %v10094 = vpack.c.b16 %v9680, %v9674
    %v10095 = vpack.c.b16 %v9681, %v9675
    %v10096 = vpack.c.b16 %v9688, %v9682
    %v10097 = vpack.c.b16 %v9689, %v9683
    %v10098 = vpack.c.b16 %v9690, %v9684
    %v10099 = vpack.c.b16 %v9691, %v9685
    %v10100 = vpack.c.b16 %v9692, %v9686
    %v10101 = vpack.c.b16 %v9693, %v9687
    %v10102 = vpack.c.b16 %v9700, %v9694
    %v10103 = vpack.c.b16 %v9701, %v9695
    %v10104 = vpack.c.b16 %v9702, %v9696
    %v10105 = vpack.c.b16 %v9703, %v9697
    %v10106 = vpack.c.b16 %v9704, %v9698
    %v10107 = vpack.c.b16 %v9705, %v9699
    %v10108 = vpack.c.b16 %v9712, %v9706
    %v10109 = vpack.c.b16 %v9713, %v9707
    %v10110 = vpack.c.b16 %v9714, %v9708
    %v10111 = vpack.c.b16 %v9715, %v9709
    %v10112 = vpack.c.b16 %v9716, %v9710
    %v10113 = vpack.c.b16 %v9717, %v9711
    %v10114 = vpack.c.b16 %v9724, %v9718
    %v10115 = vpack.c.b16 %v9725, %v9719
    %v10116 = vpack.c.b16 %v9726, %v9720
    %v10117 = vpack.c.b16 %v9727, %v9721
    %v10118 = vpack.c.b16 %v9728, %v9722
    %v10119 = vpack.c.b16 %v9729, %v9723
    %v10120 = vpack.c.b16 %v9736, %v9730
    %v10121 = vpack.c.b16 %v9737, %v9731
    %v10122 = vpack.c.b16 %v9738, %v9732
    %v10123 = vpack.c.b16 %v9739, %v9733
    %v10124 = vpack.c.b16 %v9740, %v9734
    %v10125 = vpack.c.b16 %v9741, %v9735
    %v10126 = vpack.c.b16 %v9748, %v9742
    %v10127 = vpack.c.b16 %v9749, %v9743
    %v10128 = vpack.c.b16 %v9750, %v9744
    %v10129 = vpack.c.b16 %v9751, %v9745
    %v10130 = vpack.c.b16 %v9752, %v9746
    %v10131 = vpack.c.b16 %v9753, %v9747
    %v10132 = vpack.c.b16 %v9760, %v9754
    %v10133 = vpack.c.b16 %v9761, %v9755
    %v10134 = vpack.c.b16 %v9762, %v9756
    %v10135 = vpack.c.b16 %v9763, %v9757
    %v10136 = vpack.c.b16 %v9764, %v9758
    %v10137 = vpack.c.b16 %v9765, %v9759
    %v10138 = vpack.c.b16 %v9772, %v9766
    %v10139 = vpack.c.b16 %v9773, %v9767
    %v10140 = vpack.c.b16 %v9774, %v9768
    %v10141 = vpack.c.b16 %v9775, %v9769
    %v10142 = vpack.c.b16 %v9776, %v9770
    %v10143 = vpack.c.b16 %v9777, %v9771
    %v10144 = vpack.c.b16 %v9784, %v9778
    %v10145 = vpack.c.b16 %v9785, %v9779
    %v10146 = vpack.c.b16 %v9786, %v9780
    %v10147 = vpack.c.b16 %v9787, %v9781
    %v10148 = vpack.c.b16 %v9788, %v9782
    %v10149 = vpack.c.b16 %v9789, %v9783
    %v10150 = vpack.c.b16 %v9796, %v9790
    %v10151 = vpack.c.b16 %v9797, %v9791
    %v10152 = vpack.c.b16 %v9798, %v9792
    %v10153 = vpack.c.b16 %v9799, %v9793
    %v10154 = vpack.c.b16 %v9800, %v9794
    %v10155 = vpack.c.b16 %v9801, %v9795
    %v10156 = vpack.c.b16 %v9808, %v9802
    %v10157 = vpack.c.b16 %v9809, %v9803
    %v10158 = vpack.c.b16 %v9810, %v9804
    %v10159 = vpack.c.b16 %v9811, %v9805
    %v10160 = vpack.c.b16 %v9812, %v9806
    %v10161 = vpack.c.b16 %v9813, %v9807
    %v10162 = vpack.c.b16 %v9820, %v9814
    %v10163 = vpack.c.b16 %v9821, %v9815
    %v10164 = vpack.c.b16 %v9822, %v9816
    %v10165 = vpack.c.b16 %v9823, %v9817
    %v10166 = vpack.c.b16 %v9824, %v9818
    %v10167 = vpack.c.b16 %v9825, %v9819
    %v10168 = vpack.c.b16 %v9832, %v9826
    %v10169 = vpack.c.b16 %v9833, %v9827
    %v10170 = vpack.c.b16 %v9834, %v9828
    %v10171 = vpack.c.b16 %v9835, %v9829
    %v10172 = vpack.c.b16 %v9836, %v9830
    %v10173 = vpack.c.b16 %v9837, %v9831
    %v10174 = vpack.c.b16 %v9844, %v9838
    %v10175 = vpack.c.b16 %v9845, %v9839
    %v10176 = vpack.c.b16 %v9846, %v9840
    %v10177 = vpack.c.b16 %v9847, %v9841
    %v10178 = vpack.c.b16 %v9848, %v9842
    %v10179 = vpack.c.b16 %v9849, %v9843
    %v10180 = vpack.c.b16 %v9856, %v9850
    %v10181 = vpack.c.b16 %v9857, %v9851
    %v10182 = vpack.c.b16 %v9858, %v9852
    %v10183 = vpack.c.b16 %v9859, %v9853
    %v10184 = vpack.c.b16 %v9860, %v9854
    %v10185 = vpack.c.b16 %v9861, %v9855
    %v10186 = vpack.c.b16 %v9868, %v9862
    %v10187 = vpack.c.b16 %v9869, %v9863
    %v10188 = vpack.c.b16 %v9870, %v9864
    %v10189 = vpack.c.b16 %v9871, %v9865
    %v10190 = vpack.c.b16 %v9872, %v9866
    %v10191 = vpack.c.b16 %v9873, %v9867
    %v10192 = vpack.c.b16 %v9880, %v9874
    %v10193 = vpack.c.b16 %v9881, %v9875
    %v10194 = vpack.c.b16 %v9882, %v9876
    %v10195 = vpack.c.b16 %v9883, %v9877
    %v10196 = vpack.c.b16 %v9884, %v9878
    %v10197 = vpack.c.b16 %v9885, %v9879
    %v10198 = vpack.c.b16 %v9892, %v9886
    %v10199 = vpack.c.b16 %v9893, %v9887
    %v10200 = vpack.c.b16 %v9894, %v9888
    %v10201 = vpack.c.b16 %v9895, %v9889
    %v10202 = vpack.c.b16 %v9896, %v9890
    %v10203 = vpack.c.b16 %v9897, %v9891
    %v10204 = vpack.c.b16 %v9904, %v9898
    %v10205 = vpack.c.b16 %v9905, %v9899
    %v10206 = vpack.c.b16 %v9906, %v9900
    %v10207 = vpack.c.b16 %v9907, %v9901
    %v10208 = vpack.c.b16 %v9908, %v9902
    %v10209 = vpack.c.b16 %v9909, %v9903
    %v10210 = vpack.c.b16 %v9916, %v9910
    %v10211 = vpack.c.b16 %v9917, %v9911
    %v10212 = vpack.c.b16 %v9918, %v9912
    %v10213 = vpack.c.b16 %v9919, %v9913
    %v10214 = vpack.c.b16 %v9920, %v9914
    %v10215 = vpack.c.b16 %v9921, %v9915
    %v10216 = vpack.c.b16 %v9928, %v9922
    %v10217 = vpack.c.b16 %v9929, %v9923
    %v10218 = vpack.c.b16 %v9930, %v9924
    %v10219 = vpack.c.b16 %v9931, %v9925
    %v10220 = vpack.c.b16 %v9932, %v9926
    %v10221 = vpack.c.b16 %v9933, %v9927
    %10510 = vmatprep.subr.bf16.mxu0 %v9935
    %10511 = vmatpush1.bf16.msra.mxu0 %v9934
    %10512 = vmatprep.subr.bf16.mxu0 %v9941
    %10513 = vmatpush1.bf16.msra.mxu0 %v9940
    %10514 = vmatprep.subr.bf16.mxu0 %v9947
    %10515 = vmatpush1.bf16.msra.mxu0 %v9946
    %10516 = vmatprep.subr.bf16.mxu0 %v9953
    %10517 = vmatpush1.bf16.msra.mxu0 %v9952
    %10518 = vmatprep.subr.bf16.mxu0 %v9959
    %10519 = vmatpush1.bf16.msra.mxu0 %v9958
    %10520 = vmatprep.subr.bf16.mxu0 %v9965
    %10521 = vmatpush1.bf16.msra.mxu0 %v9964
    %10522 = vmatprep.subr.bf16.mxu0 %v9971
    %10523 = vmatpush1.bf16.msra.mxu0 %v9970
    %10524 = vmatprep.subr.bf16.mxu0 %v9977
    %10525 = vmatpush1.bf16.msra.mxu0 %v9976
    %10526 = vmatprep.subr.bf16.mxu0 %v9983
    %10527 = vmatpush1.bf16.msra.mxu0 %v9982
    %10528 = vmatprep.subr.bf16.mxu0 %v9989
    %10529 = vmatpush1.bf16.msra.mxu0 %v9988
    %10530 = vmatprep.subr.bf16.mxu0 %v9995
    %10531 = vmatpush1.bf16.msra.mxu0 %v9994
    %10532 = vmatprep.subr.bf16.mxu0 %v10001
    %10533 = vmatpush1.bf16.msra.mxu0 %v10000
    %10534 = vmatprep.subr.bf16.mxu0 %v10007
    %10535 = vmatpush1.bf16.msra.mxu0 %v10006
    %10536 = vmatprep.subr.bf16.mxu0 %v10013
    %10537 = vmatpush1.bf16.msra.mxu0 %v10012
    %10538 = vmatprep.subr.bf16.mxu0 %v10019
    %10539 = vmatpush1.bf16.msra.mxu0 %v10018
    %10540 = vmatprep.subr.bf16.mxu0 %v10025
    %10541 = vmatpush1.bf16.msra.mxu0 %v10024
    %10542 = vmatprep.mubr.bf16.mxu0 %v8741
    %10543 = vmatmul.mubr.bf16.gmra.mrb[0].mxu0 %v8740
    %v10544 = vpop.f32.mrb[0].mxu0
    %v10545 = vadd.f32 %v9043, %v10544
    %v10546 = vpop.f32.mrb[0].mxu0
    %v10547 = vadd.f32 %v9047, %v10546
    %v10548 = vpop.f32.mrb[0].mxu0
    %v10549 = vpop.f32.mrb[0].mxu0
    %10550 = vdwg.mxu0
    %10551 = vmatprep.subr.bf16.mxu0 %v10031
    %10552 = vmatpush1.bf16.msra.mxu0 %v10030
    %10553 = vmatprep.subr.bf16.mxu0 %v10037
    %10554 = vmatpush1.bf16.msra.mxu0 %v10036
    %10555 = vmatprep.subr.bf16.mxu0 %v10043
    %10556 = vmatpush1.bf16.msra.mxu0 %v10042
    %10557 = vmatprep.subr.bf16.mxu0 %v10049
    %10558 = vmatpush1.bf16.msra.mxu0 %v10048
    %10559 = vmatprep.subr.bf16.mxu0 %v10055
    %10560 = vmatpush1.bf16.msra.mxu0 %v10054
    %10561 = vmatprep.subr.bf16.mxu0 %v10061
    %10562 = vmatpush1.bf16.msra.mxu0 %v10060
    %10563 = vmatprep.subr.bf16.mxu0 %v10067
    %10564 = vmatpush1.bf16.msra.mxu0 %v10066
    %10565 = vmatprep.subr.bf16.mxu0 %v10073
    %10566 = vmatpush1.bf16.msra.mxu0 %v10072
    %10567 = vmatprep.subr.bf16.mxu0 %v10079
    %10568 = vmatpush1.bf16.msra.mxu0 %v10078
    %10569 = vmatprep.subr.bf16.mxu0 %v10085
    %10570 = vmatpush1.bf16.msra.mxu0 %v10084
    %10571 = vmatprep.subr.bf16.mxu0 %v10091
    %10572 = vmatpush1.bf16.msra.mxu0 %v10090
    %10573 = vmatprep.subr.bf16.mxu0 %v10097
    %10574 = vmatpush1.bf16.msra.mxu0 %v10096
    %10575 = vmatprep.subr.bf16.mxu0 %v10103
    %10576 = vmatpush1.bf16.msra.mxu0 %v10102
    %10577 = vmatprep.subr.bf16.mxu0 %v10109
    %10578 = vmatpush1.bf16.msra.mxu0 %v10108
    %10579 = vmatprep.subr.bf16.mxu0 %v10115
    %10580 = vmatpush1.bf16.msra.mxu0 %v10114
    %10581 = vmatprep.subr.bf16.mxu0 %v10121
    %10582 = vmatpush1.bf16.msra.mxu0 %v10120
    %10583 = vmatprep.mubr.bf16.mxu0 %v8743
    %10584 = vmatmul.mubr.bf16.gmra.mrb[0].mxu0 %v8742
    %v10585 = vpop.f32.mrb[0].mxu0
    %v10586 = vadd.f32 %v10545, %v10585
    %v10587 = vpop.f32.mrb[0].mxu0
    %v10588 = vadd.f32 %v10547, %v10587
    %v10589 = vpop.f32.mrb[0].mxu0
    %v10590 = vpop.f32.mrb[0].mxu0
    %10591 = vdwg.mxu0
    %10592 = vmatprep.subr.bf16.mxu0 %v10127
    %10593 = vmatpush1.bf16.msra.mxu0 %v10126
    %10594 = vmatprep.subr.bf16.mxu0 %v10133
    %10595 = vmatpush1.bf16.msra.mxu0 %v10132
    %10596 = vmatprep.subr.bf16.mxu0 %v10139
    %10597 = vmatpush1.bf16.msra.mxu0 %v10138
    %10598 = vmatprep.subr.bf16.mxu0 %v10145
    %10599 = vmatpush1.bf16.msra.mxu0 %v10144
    %10600 = vmatprep.subr.bf16.mxu0 %v10151
    %10601 = vmatpush1.bf16.msra.mxu0 %v10150
    %10602 = vmatprep.subr.bf16.mxu0 %v10157
    %10603 = vmatpush1.bf16.msra.mxu0 %v10156
    %10604 = vmatprep.subr.bf16.mxu0 %v10163
    %10605 = vmatpush1.bf16.msra.mxu0 %v10162
    %10606 = vmatprep.subr.bf16.mxu0 %v10169
    %10607 = vmatpush1.bf16.msra.mxu0 %v10168
    %10608 = vmatprep.subr.bf16.mxu0 %v10175
    %10609 = vmatpush1.bf16.msra.mxu0 %v10174
    %10610 = vmatprep.subr.bf16.mxu0 %v10181
    %10611 = vmatpush1.bf16.msra.mxu0 %v10180
    %10612 = vmatprep.subr.bf16.mxu0 %v10187
    %10613 = vmatpush1.bf16.msra.mxu0 %v10186
    %10614 = vmatprep.subr.bf16.mxu0 %v10193
    %10615 = vmatpush1.bf16.msra.mxu0 %v10192
    %10616 = vmatprep.subr.bf16.mxu0 %v10199
    %10617 = vmatpush1.bf16.msra.mxu0 %v10198
    %10618 = vmatprep.subr.bf16.mxu0 %v10205
    %10619 = vmatpush1.bf16.msra.mxu0 %v10204
    %10620 = vmatprep.subr.bf16.mxu0 %v10211
    %10621 = vmatpush1.bf16.msra.mxu0 %v10210
    %10622 = vmatprep.subr.bf16.mxu0 %v10217
    %10623 = vmatpush1.bf16.msra.mxu0 %v10216
    %10624 = vmatprep.mubr.bf16.mxu0 %v8745
    %10625 = vmatmul.mubr.bf16.gmra.mrb[0].mxu0 %v8744
    %v10626 = vpop.f32.mrb[0].mxu0
    %v10627 = vadd.f32 %v10586, %v10626
    %v10628 = vpop.f32.mrb[0].mxu0
    %v10629 = vadd.f32 %v10588, %v10628
    %v10630 = vpop.f32.mrb[0].mxu0
    %v10631 = vpop.f32.mrb[0].mxu0
    %10632 = vdwg.mxu0
    %10633 = vmatprep.subr.bf16.mxu0 %v9937
    %10634 = vmatpush1.bf16.msra.mxu0 %v9936
    %10635 = vmatprep.subr.bf16.mxu0 %v9943
    %10636 = vmatpush1.bf16.msra.mxu0 %v9942
    %10637 = vmatprep.subr.bf16.mxu0 %v9949
    %10638 = vmatpush1.bf16.msra.mxu0 %v9948
    %10639 = vmatprep.subr.bf16.mxu0 %v9955
    %10640 = vmatpush1.bf16.msra.mxu0 %v9954
    %10641 = vmatprep.subr.bf16.mxu0 %v9961
    %10642 = vmatpush1.bf16.msra.mxu0 %v9960
    %10643 = vmatprep.subr.bf16.mxu0 %v9967
    %10644 = vmatpush1.bf16.msra.mxu0 %v9966
    %10645 = vmatprep.subr.bf16.mxu0 %v9973
    %10646 = vmatpush1.bf16.msra.mxu0 %v9972
    %10647 = vmatprep.subr.bf16.mxu0 %v9979
    %10648 = vmatpush1.bf16.msra.mxu0 %v9978
    %10649 = vmatprep.subr.bf16.mxu0 %v9985
    %10650 = vmatpush1.bf16.msra.mxu0 %v9984
    %10651 = vmatprep.subr.bf16.mxu0 %v9991
    %10652 = vmatpush1.bf16.msra.mxu0 %v9990
    %10653 = vmatprep.subr.bf16.mxu0 %v9997
    %10654 = vmatpush1.bf16.msra.mxu0 %v9996
    %10655 = vmatprep.subr.bf16.mxu0 %v10003
    %10656 = vmatpush1.bf16.msra.mxu0 %v10002
    %10657 = vmatprep.subr.bf16.mxu0 %v10009
    %10658 = vmatpush1.bf16.msra.mxu0 %v10008
    %10659 = vmatprep.subr.bf16.mxu0 %v10015
    %10660 = vmatpush1.bf16.msra.mxu0 %v10014
    %10661 = vmatprep.subr.bf16.mxu0 %v10021
    %10662 = vmatpush1.bf16.msra.mxu0 %v10020
    %10663 = vmatprep.subr.bf16.mxu0 %v10027
    %10664 = vmatpush1.bf16.msra.mxu0 %v10026
    %10665 = vmatprep.mubr.bf16.mxu0 %v8741
    %10666 = vmatmul.mubr.bf16.gmra.mrb[0].mxu0 %v8740
    %v10667 = vpop.f32.mrb[0].mxu0
    %v10668 = vadd.f32 %v9051, %v10667
    %v10669 = vpop.f32.mrb[0].mxu0
    %v10670 = vadd.f32 %v9055, %v10669
    %v10671 = vpop.f32.mrb[0].mxu0
    %v10672 = vpop.f32.mrb[0].mxu0
    %10673 = vdwg.mxu0
    %10674 = vmatprep.subr.bf16.mxu0 %v10033
    %10675 = vmatpush1.bf16.msra.mxu0 %v10032
    %10676 = vmatprep.subr.bf16.mxu0 %v10039
    %10677 = vmatpush1.bf16.msra.mxu0 %v10038
    %10678 = vmatprep.subr.bf16.mxu0 %v10045
    %10679 = vmatpush1.bf16.msra.mxu0 %v10044
    %10680 = vmatprep.subr.bf16.mxu0 %v10051
    %10681 = vmatpush1.bf16.msra.mxu0 %v10050
    %10682 = vmatprep.subr.bf16.mxu0 %v10057
    %10683 = vmatpush1.bf16.msra.mxu0 %v10056
    %10684 = vmatprep.subr.bf16.mxu0 %v10063
    %10685 = vmatpush1.bf16.msra.mxu0 %v10062
    %10686 = vmatprep.subr.bf16.mxu0 %v10069
    %10687 = vmatpush1.bf16.msra.mxu0 %v10068
    %10688 = vmatprep.subr.bf16.mxu0 %v10075
    %10689 = vmatpush1.bf16.msra.mxu0 %v10074
    %10690 = vmatprep.subr.bf16.mxu0 %v10081
    %10691 = vmatpush1.bf16.msra.mxu0 %v10080
    %10692 = vmatprep.subr.bf16.mxu0 %v10087
    %10693 = vmatpush1.bf16.msra.mxu0 %v10086
    %10694 = vmatprep.subr.bf16.mxu0 %v10093
    %10695 = vmatpush1.bf16.msra.mxu0 %v10092
    %10696 = vmatprep.subr.bf16.mxu0 %v10099
    %10697 = vmatpush1.bf16.msra.mxu0 %v10098
    %10698 = vmatprep.subr.bf16.mxu0 %v10105
    %10699 = vmatpush1.bf16.msra.mxu0 %v10104
    %10700 = vmatprep.subr.bf16.mxu0 %v10111
    %10701 = vmatpush1.bf16.msra.mxu0 %v10110
    %10702 = vmatprep.subr.bf16.mxu0 %v10117
    %10703 = vmatpush1.bf16.msra.mxu0 %v10116
    %10704 = vmatprep.subr.bf16.mxu0 %v10123
    %10705 = vmatpush1.bf16.msra.mxu0 %v10122
    %10706 = vmatprep.mubr.bf16.mxu0 %v8743
    %10707 = vmatmul.mubr.bf16.gmra.mrb[0].mxu0 %v8742
    %v10708 = vpop.f32.mrb[0].mxu0
    %v10709 = vadd.f32 %v10668, %v10708
    %v10710 = vpop.f32.mrb[0].mxu0
    %v10711 = vadd.f32 %v10670, %v10710
    %v10712 = vpop.f32.mrb[0].mxu0
    %v10713 = vpop.f32.mrb[0].mxu0
    %10714 = vdwg.mxu0
    %10715 = vmatprep.subr.bf16.mxu0 %v10129
    %10716 = vmatpush1.bf16.msra.mxu0 %v10128
    %10717 = vmatprep.subr.bf16.mxu0 %v10135
    %10718 = vmatpush1.bf16.msra.mxu0 %v10134
    %10719 = vmatprep.subr.bf16.mxu0 %v10141
    %10720 = vmatpush1.bf16.msra.mxu0 %v10140
    %10721 = vmatprep.subr.bf16.mxu0 %v10147
    %10722 = vmatpush1.bf16.msra.mxu0 %v10146
    %10723 = vmatprep.subr.bf16.mxu0 %v10153
    %10724 = vmatpush1.bf16.msra.mxu0 %v10152
    %10725 = vmatprep.subr.bf16.mxu0 %v10159
    %10726 = vmatpush1.bf16.msra.mxu0 %v10158
    %10727 = vmatprep.subr.bf16.mxu0 %v10165
    %10728 = vmatpush1.bf16.msra.mxu0 %v10164
    %10729 = vmatprep.subr.bf16.mxu0 %v10171
    %10730 = vmatpush1.bf16.msra.mxu0 %v10170
    %10731 = vmatprep.subr.bf16.mxu0 %v10177
    %10732 = vmatpush1.bf16.msra.mxu0 %v10176
    %10733 = vmatprep.subr.bf16.mxu0 %v10183
    %10734 = vmatpush1.bf16.msra.mxu0 %v10182
    %10735 = vmatprep.subr.bf16.mxu0 %v10189
    %10736 = vmatpush1.bf16.msra.mxu0 %v10188
    %10737 = vmatprep.subr.bf16.mxu0 %v10195
    %10738 = vmatpush1.bf16.msra.mxu0 %v10194
    %10739 = vmatprep.subr.bf16.mxu0 %v10201
    %10740 = vmatpush1.bf16.msra.mxu0 %v10200
    %10741 = vmatprep.subr.bf16.mxu0 %v10207
    %10742 = vmatpush1.bf16.msra.mxu0 %v10206
    %10743 = vmatprep.subr.bf16.mxu0 %v10213
    %10744 = vmatpush1.bf16.msra.mxu0 %v10212
    %10745 = vmatprep.subr.bf16.mxu0 %v10219
    %10746 = vmatpush1.bf16.msra.mxu0 %v10218
    %10747 = vmatprep.mubr.bf16.mxu0 %v8745
    %10748 = vmatmul.mubr.bf16.gmra.mrb[0].mxu0 %v8744
    %v10749 = vpop.f32.mrb[0].mxu0
    %v10750 = vadd.f32 %v10709, %v10749
    %v10751 = vpop.f32.mrb[0].mxu0
    %v10752 = vadd.f32 %v10711, %v10751
    %v10753 = vpop.f32.mrb[0].mxu0
    %v10754 = vpop.f32.mrb[0].mxu0
    %10755 = vdwg.mxu0
    %10756 = vmatprep.subr.bf16.mxu0 %v9939
    %10757 = vmatpush1.bf16.msra.mxu0 %v9938
    %10758 = vmatprep.subr.bf16.mxu0 %v9945
    %10759 = vmatpush1.bf16.msra.mxu0 %v9944
    %10760 = vmatprep.subr.bf16.mxu0 %v9951
    %10761 = vmatpush1.bf16.msra.mxu0 %v9950
    %10762 = vmatprep.subr.bf16.mxu0 %v9957
    %10763 = vmatpush1.bf16.msra.mxu0 %v9956
    %10764 = vmatprep.subr.bf16.mxu0 %v9963
    %10765 = vmatpush1.bf16.msra.mxu0 %v9962
    %10766 = vmatprep.subr.bf16.mxu0 %v9969
    %10767 = vmatpush1.bf16.msra.mxu0 %v9968
    %10768 = vmatprep.subr.bf16.mxu0 %v9975
    %10769 = vmatpush1.bf16.msra.mxu0 %v9974
    %10770 = vmatprep.subr.bf16.mxu0 %v9981
    %10771 = vmatpush1.bf16.msra.mxu0 %v9980
    %10772 = vmatprep.subr.bf16.mxu0 %v9987
    %10773 = vmatpush1.bf16.msra.mxu0 %v9986
    %10774 = vmatprep.subr.bf16.mxu0 %v9993
    %10775 = vmatpush1.bf16.msra.mxu0 %v9992
    %10776 = vmatprep.subr.bf16.mxu0 %v9999
    %10777 = vmatpush1.bf16.msra.mxu0 %v9998
    %10778 = vmatprep.subr.bf16.mxu0 %v10005
    %10779 = vmatpush1.bf16.msra.mxu0 %v10004
    %10780 = vmatprep.subr.bf16.mxu0 %v10011
    %10781 = vmatpush1.bf16.msra.mxu0 %v10010
    %10782 = vmatprep.subr.bf16.mxu0 %v10017
    %10783 = vmatpush1.bf16.msra.mxu0 %v10016
    %10784 = vmatprep.subr.bf16.mxu0 %v10023
    %10785 = vmatpush1.bf16.msra.mxu0 %v10022
    %10786 = vmatprep.subr.bf16.mxu0 %v10029
    %10787 = vmatpush1.bf16.msra.mxu0 %v10028
    %10788 = vmatprep.mubr.bf16.mxu0 %v8741
    %10789 = vmatmul.mubr.bf16.gmra.mrb[0].mxu0 %v8740
    %v10790 = vpop.f32.mrb[0].mxu0
    %v10791 = vadd.f32 %v9059, %v10790
    %v10792 = vpop.f32.mrb[0].mxu0
    %v10793 = vadd.f32 %v9063, %v10792
    %v10794 = vpop.f32.mrb[0].mxu0
    %v10795 = vpop.f32.mrb[0].mxu0
    %10796 = vdwg.mxu0
    %10797 = vmatprep.subr.bf16.mxu0 %v10035
    %10798 = vmatpush1.bf16.msra.mxu0 %v10034
    %10799 = vmatprep.subr.bf16.mxu0 %v10041
    %10800 = vmatpush1.bf16.msra.mxu0 %v10040
    %10801 = vmatprep.subr.bf16.mxu0 %v10047
    %10802 = vmatpush1.bf16.msra.mxu0 %v10046
    %10803 = vmatprep.subr.bf16.mxu0 %v10053
    %10804 = vmatpush1.bf16.msra.mxu0 %v10052
    %10805 = vmatprep.subr.bf16.mxu0 %v10059
    %10806 = vmatpush1.bf16.msra.mxu0 %v10058
    %10807 = vmatprep.subr.bf16.mxu0 %v10065
    %10808 = vmatpush1.bf16.msra.mxu0 %v10064
    %10809 = vmatprep.subr.bf16.mxu0 %v10071
    %10810 = vmatpush1.bf16.msra.mxu0 %v10070
    %10811 = vmatprep.subr.bf16.mxu0 %v10077
    %10812 = vmatpush1.bf16.msra.mxu0 %v10076
    %10813 = vmatprep.subr.bf16.mxu0 %v10083
    %10814 = vmatpush1.bf16.msra.mxu0 %v10082
    %10815 = vmatprep.subr.bf16.mxu0 %v10089
    %10816 = vmatpush1.bf16.msra.mxu0 %v10088
    %10817 = vmatprep.subr.bf16.mxu0 %v10095
    %10818 = vmatpush1.bf16.msra.mxu0 %v10094
    %10819 = vmatprep.subr.bf16.mxu0 %v10101
    %10820 = vmatpush1.bf16.msra.mxu0 %v10100
    %10821 = vmatprep.subr.bf16.mxu0 %v10107
    %10822 = vmatpush1.bf16.msra.mxu0 %v10106
    %10823 = vmatprep.subr.bf16.mxu0 %v10113
    %10824 = vmatpush1.bf16.msra.mxu0 %v10112
    %10825 = vmatprep.subr.bf16.mxu0 %v10119
    %10826 = vmatpush1.bf16.msra.mxu0 %v10118
    %10827 = vmatprep.subr.bf16.mxu0 %v10125
    %10828 = vmatpush1.bf16.msra.mxu0 %v10124
    %10829 = vmatprep.mubr.bf16.mxu0 %v8743
    %10830 = vmatmul.mubr.bf16.gmra.mrb[0].mxu0 %v8742
    %v10831 = vpop.f32.mrb[0].mxu0
    %v10832 = vadd.f32 %v10791, %v10831
    %v10833 = vpop.f32.mrb[0].mxu0
    %v10834 = vadd.f32 %v10793, %v10833
    %v10835 = vpop.f32.mrb[0].mxu0
    %v10836 = vpop.f32.mrb[0].mxu0
    %10837 = vdwg.mxu0
    %10838 = vmatprep.subr.bf16.mxu0 %v10131
    %10839 = vmatpush1.bf16.msra.mxu0 %v10130
    %10840 = vmatprep.subr.bf16.mxu0 %v10137
    %10841 = vmatpush1.bf16.msra.mxu0 %v10136
    %10842 = vmatprep.subr.bf16.mxu0 %v10143
    %10843 = vmatpush1.bf16.msra.mxu0 %v10142
    %10844 = vmatprep.subr.bf16.mxu0 %v10149
    %10845 = vmatpush1.bf16.msra.mxu0 %v10148
    %10846 = vmatprep.subr.bf16.mxu0 %v10155
    %10847 = vmatpush1.bf16.msra.mxu0 %v10154
    %10848 = vmatprep.subr.bf16.mxu0 %v10161
    %10849 = vmatpush1.bf16.msra.mxu0 %v10160
    %10850 = vmatprep.subr.bf16.mxu0 %v10167
    %10851 = vmatpush1.bf16.msra.mxu0 %v10166
    %10852 = vmatprep.subr.bf16.mxu0 %v10173
    %10853 = vmatpush1.bf16.msra.mxu0 %v10172
    %10854 = vmatprep.subr.bf16.mxu0 %v10179
    %10855 = vmatpush1.bf16.msra.mxu0 %v10178
    %10856 = vmatprep.subr.bf16.mxu0 %v10185
    %10857 = vmatpush1.bf16.msra.mxu0 %v10184
    %10858 = vmatprep.subr.bf16.mxu0 %v10191
    %10859 = vmatpush1.bf16.msra.mxu0 %v10190
    %10860 = vmatprep.subr.bf16.mxu0 %v10197
    %10861 = vmatpush1.bf16.msra.mxu0 %v10196
    %10862 = vmatprep.subr.bf16.mxu0 %v10203
    %10863 = vmatpush1.bf16.msra.mxu0 %v10202
    %10864 = vmatprep.subr.bf16.mxu0 %v10209
    %10865 = vmatpush1.bf16.msra.mxu0 %v10208
    %10866 = vmatprep.subr.bf16.mxu0 %v10215
    %10867 = vmatpush1.bf16.msra.mxu0 %v10214
    %10868 = vmatprep.subr.bf16.mxu0 %v10221
    %10869 = vmatpush1.bf16.msra.mxu0 %v10220
    %10870 = vmatprep.mubr.bf16.mxu0 %v8745
    %10871 = vmatmul.mubr.bf16.gmra.mrb[0].mxu0 %v8744
    %v10872 = vpop.f32.mrb[0].mxu0
    %v10873 = vadd.f32 %v10832, %v10872
    %v10874 = vpop.f32.mrb[0].mxu0
    %v10875 = vadd.f32 %v10834, %v10874
    %v10876 = vpop.f32.mrb[0].mxu0
    %v10877 = vpop.f32.mrb[0].mxu0
    %10878 = vdwg.mxu0
    %v10879 = vstv %s8738
    %v10880 = vmul.f32 %v10879, %v8732
    %v10881 = vmul.f32 %v10879, %v8733
    %v10882 = vmul.f32 %v10879, %v8734
    %v10883 = vmul.f32 %v10879, %v8735
    %v10884 = vmul.f32 %v10879, %v8736
    %v10885 = vmul.f32 %v10879, %v8737
    %v10886 = vadd.f32 %v10627, %v10880
    %v10887 = vadd.f32 %v10629, %v10881
    %v10888 = vadd.f32 %v10750, %v10882
    %v10889 = vadd.f32 %v10752, %v10883
    %v10890 = vadd.f32 %v10873, %v10884
    %v10891 = vadd.f32 %v10875, %v10885
    %v10892 = vstv %s8739
    %v10893 = vmul.f32 %v10892, %v10886
    %v10894 = vmul.f32 %v10892, %v10887
    %v10895 = vmul.f32 %v10892, %v10888
    %v10896 = vmul.f32 %v10892, %v10889
    %v10897 = vmul.f32 %v10892, %v10890
    %v10898 = vmul.f32 %v10892, %v10891
    %v10899 = vmax.f32 %v10886, %v10893
    %v10900 = vmax.f32 %v10887, %v10894
    %v10901 = vmax.f32 %v10888, %v10895
    %v10902 = vmax.f32 %v10889, %v10896
    %v10903 = vmax.f32 %v10890, %v10897
    %v10904 = vmax.f32 %v10891, %v10898
    %s10905 = sld [smem:[#allocation2 + $0xa]]
    %s10906 = sld [smem:[#allocation2 + $0xb]]
    %v10907 = vpack.c.bf16 %v10899, %v10899
    %v10908 = vpack.c.bf16 %v10900, %v10900
    %v10909 = vpack.c.bf16 %v10901, %v10901
    %v10910 = vpack.c.bf16 %v10902, %v10902
    %v10911 = vpack.c.bf16 %v10903, %v10903
    %v10912 = vpack.c.bf16 %v10904, %v10904
    %s10913 = scalar_lea.vmem [#allocation7], 11520
    %v10914 = vld [vmem:[%s10913] sm:$0xff]
    %v10915 = vld [vmem:[%s10913 + $0x8] sm:$0xff]
    %v10916 = vld [vmem:[%s10913 + $0x10] sm:$0xff]
    %v10917 = vld [vmem:[%s10913 + $0x18] sm:$0xff]
    %v10918 = vld [vmem:[%s10913 + $0x20] sm:$0xff]
    %v10919 = vld [vmem:[%s10913 + $0x28] sm:$0xff]
    %v10920 = vld [vmem:[%s10913 + $0x30] sm:$0xff]
    %v10921 = vld [vmem:[%s10913 + $0x38] sm:$0xff]
    %v10922 = vld [vmem:[%s10913 + $0x40] sm:$0xff]
    %v10923 = vld [vmem:[%s10913 + $0x48] sm:$0xff]
    %v10924 = vld [vmem:[%s10913 + $0x50] sm:$0xff]
    %v10925 = vld [vmem:[%s10913 + $0x58] sm:$0xff]
    %v10926 = vld [vmem:[%s10913 + $0x60] sm:$0xff]
    %v10927 = vld [vmem:[%s10913 + $0x68] sm:$0xff]
    %v10928 = vld [vmem:[%s10913 + $0x70] sm:$0xff]
    %v10929 = vld [vmem:[%s10913 + $0x78] sm:$0xff]
    %v10930 = vld [vmem:[%s10913 + $0x80] sm:$0xff]
    %v10931 = vld [vmem:[%s10913 + $0x88] sm:$0xff]
    %v10932 = vld [vmem:[%s10913 + $0x90] sm:$0xff]
    %v10933 = vld [vmem:[%s10913 + $0x98] sm:$0xff]
    %v10934 = vld [vmem:[%s10913 + $0xa0] sm:$0xff]
    %v10935 = vld [vmem:[%s10913 + $0xa8] sm:$0xff]
    %v10936 = vld [vmem:[%s10913 + $0xb0] sm:$0xff]
    %v10937 = vld [vmem:[%s10913 + $0xb8] sm:$0xff]
    %v10938 = vld [vmem:[%s10913 + $0xc0] sm:$0xff]
    %v10939 = vld [vmem:[%s10913 + $0xc8] sm:$0xff]
    %v10940 = vld [vmem:[%s10913 + $0xd0] sm:$0xff]
    %v10941 = vld [vmem:[%s10913 + $0xd8] sm:$0xff]
    %v10942 = vld [vmem:[%s10913 + $0xe0] sm:$0xff]
    %v10943 = vld [vmem:[%s10913 + $0xe8] sm:$0xff]
    %v10944 = vld [vmem:[%s10913 + $0xf0] sm:$0xff]
    %v10945 = vld [vmem:[%s10913 + $0xf8] sm:$0xff]
    %v10946 = vld [vmem:[%s10913 + $0x100] sm:$0xff]
    %v10947 = vld [vmem:[%s10913 + $0x108] sm:$0xff]
    %v10948 = vld [vmem:[%s10913 + $0x110] sm:$0xff]
    %v10949 = vld [vmem:[%s10913 + $0x118] sm:$0xff]
    %v10950 = vld [vmem:[%s10913 + $0x120] sm:$0xff]
    %v10951 = vld [vmem:[%s10913 + $0x128] sm:$0xff]
    %v10952 = vld [vmem:[%s10913 + $0x130] sm:$0xff]
    %v10953 = vld [vmem:[%s10913 + $0x138] sm:$0xff]
    %v10954 = vld [vmem:[%s10913 + $0x140] sm:$0xff]
    %v10955 = vld [vmem:[%s10913 + $0x148] sm:$0xff]
    %v10956 = vld [vmem:[%s10913 + $0x150] sm:$0xff]
    %v10957 = vld [vmem:[%s10913 + $0x158] sm:$0xff]
    %v10958 = vld [vmem:[%s10913 + $0x160] sm:$0xff]
    %v10959 = vld [vmem:[%s10913 + $0x168] sm:$0xff]
    %v10960 = vld [vmem:[%s10913 + $0x170] sm:$0xff]
    %v10961 = vld [vmem:[%s10913 + $0x178] sm:$0xff]
    %v10962 = vld [vmem:[%s10913 + $0x180] sm:$0xff]
    %v10963 = vld [vmem:[%s10913 + $0x188] sm:$0xff]
    %v10964 = vld [vmem:[%s10913 + $0x190] sm:$0xff]
    %v10965 = vld [vmem:[%s10913 + $0x198] sm:$0xff]
    %v10966 = vld [vmem:[%s10913 + $0x1a0] sm:$0xff]
    %v10967 = vld [vmem:[%s10913 + $0x1a8] sm:$0xff]
    %v10968 = vld [vmem:[%s10913 + $0x1b0] sm:$0xff]
    %v10969 = vld [vmem:[%s10913 + $0x1b8] sm:$0xff]
    %v10970 = vld [vmem:[%s10913 + $0x1c0] sm:$0xff]
    %v10971 = vld [vmem:[%s10913 + $0x1c8] sm:$0xff]
    %v10972 = vld [vmem:[%s10913 + $0x1d0] sm:$0xff]
    %v10973 = vld [vmem:[%s10913 + $0x1d8] sm:$0xff]
    %v10974 = vld [vmem:[%s10913 + $0x1e0] sm:$0xff]
    %v10975 = vld [vmem:[%s10913 + $0x1e8] sm:$0xff]
    %v10976 = vld [vmem:[%s10913 + $0x1f0] sm:$0xff]
    %v10977 = vld [vmem:[%s10913 + $0x1f8] sm:$0xff]
    %v10978 = vld [vmem:[%s10913 + $0x200] sm:$0xff]
    %v10979 = vld [vmem:[%s10913 + $0x208] sm:$0xff]
    %v10980 = vld [vmem:[%s10913 + $0x210] sm:$0xff]
    %v10981 = vld [vmem:[%s10913 + $0x218] sm:$0xff]
    %v10982 = vld [vmem:[%s10913 + $0x220] sm:$0xff]
    %v10983 = vld [vmem:[%s10913 + $0x228] sm:$0xff]
    %v10984 = vld [vmem:[%s10913 + $0x230] sm:$0xff]
    %v10985 = vld [vmem:[%s10913 + $0x238] sm:$0xff]
    %v10986 = vld [vmem:[%s10913 + $0x240] sm:$0xff]
    %v10987 = vld [vmem:[%s10913 + $0x248] sm:$0xff]
    %v10988 = vld [vmem:[%s10913 + $0x250] sm:$0xff]
    %v10989 = vld [vmem:[%s10913 + $0x258] sm:$0xff]
    %v10990 = vld [vmem:[%s10913 + $0x260] sm:$0xff]
    %v10991 = vld [vmem:[%s10913 + $0x268] sm:$0xff]
    %v10992 = vld [vmem:[%s10913 + $0x270] sm:$0xff]
    %v10993 = vld [vmem:[%s10913 + $0x278] sm:$0xff]
    %v10994 = vld [vmem:[%s10913 + $0x280] sm:$0xff]
    %v10995 = vld [vmem:[%s10913 + $0x288] sm:$0xff]
    %v10996 = vld [vmem:[%s10913 + $0x290] sm:$0xff]
    %v10997 = vld [vmem:[%s10913 + $0x298] sm:$0xff]
    %v10998 = vld [vmem:[%s10913 + $0x2a0] sm:$0xff]
    %v10999 = vld [vmem:[%s10913 + $0x2a8] sm:$0xff]
    %v11000 = vld [vmem:[%s10913 + $0x2b0] sm:$0xff]
    %v11001 = vld [vmem:[%s10913 + $0x2b8] sm:$0xff]
    %v11002 = vld [vmem:[%s10913 + $0x2c0] sm:$0xff]
    %v11003 = vld [vmem:[%s10913 + $0x2c8] sm:$0xff]
    %v11004 = vld [vmem:[%s10913 + $0x2d0] sm:$0xff]
    %v11005 = vld [vmem:[%s10913 + $0x2d8] sm:$0xff]
    %v11006 = vld [vmem:[%s10913 + $0x2e0] sm:$0xff]
    %v11007 = vld [vmem:[%s10913 + $0x2e8] sm:$0xff]
    %v11008 = vld [vmem:[%s10913 + $0x2f0] sm:$0xff]
    %v11009 = vld [vmem:[%s10913 + $0x2f8] sm:$0xff]
    %v11010 = vld [vmem:[%s10913 + $0x300] sm:$0xff]
    %v11011 = vld [vmem:[%s10913 + $0x308] sm:$0xff]
    %v11012 = vld [vmem:[%s10913 + $0x310] sm:$0xff]
    %v11013 = vld [vmem:[%s10913 + $0x318] sm:$0xff]
    %v11014 = vld [vmem:[%s10913 + $0x320] sm:$0xff]
    %v11015 = vld [vmem:[%s10913 + $0x328] sm:$0xff]
    %v11016 = vld [vmem:[%s10913 + $0x330] sm:$0xff]
    %v11017 = vld [vmem:[%s10913 + $0x338] sm:$0xff]
    %v11018 = vld [vmem:[%s10913 + $0x340] sm:$0xff]
    %v11019 = vld [vmem:[%s10913 + $0x348] sm:$0xff]
    %v11020 = vld [vmem:[%s10913 + $0x350] sm:$0xff]
    %v11021 = vld [vmem:[%s10913 + $0x358] sm:$0xff]
    %v11022 = vld [vmem:[%s10913 + $0x360] sm:$0xff]
    %v11023 = vld [vmem:[%s10913 + $0x368] sm:$0xff]
    %v11024 = vld [vmem:[%s10913 + $0x370] sm:$0xff]
    %v11025 = vld [vmem:[%s10913 + $0x378] sm:$0xff]
    %v11026 = vld [vmem:[%s10913 + $0x380] sm:$0xff]
    %v11027 = vld [vmem:[%s10913 + $0x388] sm:$0xff]
    %v11028 = vld [vmem:[%s10913 + $0x390] sm:$0xff]
    %v11029 = vld [vmem:[%s10913 + $0x398] sm:$0xff]
    %v11030 = vld [vmem:[%s10913 + $0x3a0] sm:$0xff]
    %v11031 = vld [vmem:[%s10913 + $0x3a8] sm:$0xff]
    %v11032 = vld [vmem:[%s10913 + $0x3b0] sm:$0xff]
    %v11033 = vld [vmem:[%s10913 + $0x3b8] sm:$0xff]
    %v11034 = vld [vmem:[%s10913 + $0x3c0] sm:$0xff]
    %v11035 = vld [vmem:[%s10913 + $0x3c8] sm:$0xff]
    %v11036 = vld [vmem:[%s10913 + $0x3d0] sm:$0xff]
    %v11037 = vld [vmem:[%s10913 + $0x3d8] sm:$0xff]
    %v11038 = vld [vmem:[%s10913 + $0x3e0] sm:$0xff]
    %v11039 = vld [vmem:[%s10913 + $0x3e8] sm:$0xff]
    %v11040 = vld [vmem:[%s10913 + $0x3f0] sm:$0xff]
    %v11041 = vld [vmem:[%s10913 + $0x3f8] sm:$0xff]
    %v11042 = vld [vmem:[%s10913 + $0x400] sm:$0xff]
    %v11043 = vld [vmem:[%s10913 + $0x408] sm:$0xff]
    %v11044 = vld [vmem:[%s10913 + $0x410] sm:$0xff]
    %v11045 = vld [vmem:[%s10913 + $0x418] sm:$0xff]
    %v11046 = vld [vmem:[%s10913 + $0x420] sm:$0xff]
    %v11047 = vld [vmem:[%s10913 + $0x428] sm:$0xff]
    %v11048 = vld [vmem:[%s10913 + $0x430] sm:$0xff]
    %v11049 = vld [vmem:[%s10913 + $0x438] sm:$0xff]
    %v11050 = vld [vmem:[%s10913 + $0x440] sm:$0xff]
    %v11051 = vld [vmem:[%s10913 + $0x448] sm:$0xff]
    %v11052 = vld [vmem:[%s10913 + $0x450] sm:$0xff]
    %v11053 = vld [vmem:[%s10913 + $0x458] sm:$0xff]
    %v11054 = vld [vmem:[%s10913 + $0x460] sm:$0xff]
    %v11055 = vld [vmem:[%s10913 + $0x468] sm:$0xff]
    %v11056 = vld [vmem:[%s10913 + $0x470] sm:$0xff]
    %v11057 = vld [vmem:[%s10913 + $0x478] sm:$0xff]
    %v11058 = vld [vmem:[%s10913 + $0x480] sm:$0xff]
    %v11059 = vld [vmem:[%s10913 + $0x488] sm:$0xff]
    %v11060 = vld [vmem:[%s10913 + $0x490] sm:$0xff]
    %v11061 = vld [vmem:[%s10913 + $0x498] sm:$0xff]
    %v11062 = vld [vmem:[%s10913 + $0x4a0] sm:$0xff]
    %v11063 = vld [vmem:[%s10913 + $0x4a8] sm:$0xff]
    %v11064 = vld [vmem:[%s10913 + $0x4b0] sm:$0xff]
    %v11065 = vld [vmem:[%s10913 + $0x4b8] sm:$0xff]
    %v11066 = vld [vmem:[%s10913 + $0x4c0] sm:$0xff]
    %v11067 = vld [vmem:[%s10913 + $0x4c8] sm:$0xff]
    %v11068 = vld [vmem:[%s10913 + $0x4d0] sm:$0xff]
    %v11069 = vld [vmem:[%s10913 + $0x4d8] sm:$0xff]
    %v11070 = vld [vmem:[%s10913 + $0x4e0] sm:$0xff]
    %v11071 = vld [vmem:[%s10913 + $0x4e8] sm:$0xff]
    %v11072 = vld [vmem:[%s10913 + $0x4f0] sm:$0xff]
    %v11073 = vld [vmem:[%s10913 + $0x4f8] sm:$0xff]
    %v11074 = vld [vmem:[%s10913 + $0x500] sm:$0xff]
    %v11075 = vld [vmem:[%s10913 + $0x508] sm:$0xff]
    %v11076 = vld [vmem:[%s10913 + $0x510] sm:$0xff]
    %v11077 = vld [vmem:[%s10913 + $0x518] sm:$0xff]
    %v11078 = vld [vmem:[%s10913 + $0x520] sm:$0xff]
    %v11079 = vld [vmem:[%s10913 + $0x528] sm:$0xff]
    %v11080 = vld [vmem:[%s10913 + $0x530] sm:$0xff]
    %v11081 = vld [vmem:[%s10913 + $0x538] sm:$0xff]
    %v11082 = vld [vmem:[%s10913 + $0x540] sm:$0xff]
    %v11083 = vld [vmem:[%s10913 + $0x548] sm:$0xff]
    %v11084 = vld [vmem:[%s10913 + $0x550] sm:$0xff]
    %v11085 = vld [vmem:[%s10913 + $0x558] sm:$0xff]
    %v11086 = vld [vmem:[%s10913 + $0x560] sm:$0xff]
    %v11087 = vld [vmem:[%s10913 + $0x568] sm:$0xff]
    %v11088 = vld [vmem:[%s10913 + $0x570] sm:$0xff]
    %v11089 = vld [vmem:[%s10913 + $0x578] sm:$0xff]
    %v11090 = vld [vmem:[%s10913 + $0x580] sm:$0xff]
    %v11091 = vld [vmem:[%s10913 + $0x588] sm:$0xff]
    %v11092 = vld [vmem:[%s10913 + $0x590] sm:$0xff]
    %v11093 = vld [vmem:[%s10913 + $0x598] sm:$0xff]
    %v11094 = vld [vmem:[%s10913 + $0x5a0] sm:$0xff]
    %v11095 = vld [vmem:[%s10913 + $0x5a8] sm:$0xff]
    %v11096 = vld [vmem:[%s10913 + $0x5b0] sm:$0xff]
    %v11097 = vld [vmem:[%s10913 + $0x5b8] sm:$0xff]
    %v11098 = vld [vmem:[%s10913 + $0x5c0] sm:$0xff]
    %v11099 = vld [vmem:[%s10913 + $0x5c8] sm:$0xff]
    %v11100 = vld [vmem:[%s10913 + $0x5d0] sm:$0xff]
    %v11101 = vld [vmem:[%s10913 + $0x5d8] sm:$0xff]
    %v11102 = vld [vmem:[%s10913 + $0x5e0] sm:$0xff]
    %v11103 = vld [vmem:[%s10913 + $0x5e8] sm:$0xff]
    %v11104 = vld [vmem:[%s10913 + $0x5f0] sm:$0xff]
    %v11105 = vld [vmem:[%s10913 + $0x5f8] sm:$0xff]
    %v11106 = vld [vmem:[%s10913 + $0x600] sm:$0xff]
    %v11107 = vld [vmem:[%s10913 + $0x608] sm:$0xff]
    %v11108 = vld [vmem:[%s10913 + $0x610] sm:$0xff]
    %v11109 = vld [vmem:[%s10913 + $0x618] sm:$0xff]
    %v11110 = vld [vmem:[%s10913 + $0x620] sm:$0xff]
    %v11111 = vld [vmem:[%s10913 + $0x628] sm:$0xff]
    %v11112 = vld [vmem:[%s10913 + $0x630] sm:$0xff]
    %v11113 = vld [vmem:[%s10913 + $0x638] sm:$0xff]
    %v11114 = vld [vmem:[%s10913 + $0x640] sm:$0xff]
    %v11115 = vld [vmem:[%s10913 + $0x648] sm:$0xff]
    %v11116 = vld [vmem:[%s10913 + $0x650] sm:$0xff]
    %v11117 = vld [vmem:[%s10913 + $0x658] sm:$0xff]
    %v11118 = vld [vmem:[%s10913 + $0x660] sm:$0xff]
    %v11119 = vld [vmem:[%s10913 + $0x668] sm:$0xff]
    %v11120 = vld [vmem:[%s10913 + $0x670] sm:$0xff]
    %v11121 = vld [vmem:[%s10913 + $0x678] sm:$0xff]
    %v11122 = vld [vmem:[%s10913 + $0x680] sm:$0xff]
    %v11123 = vld [vmem:[%s10913 + $0x688] sm:$0xff]
    %v11124 = vld [vmem:[%s10913 + $0x690] sm:$0xff]
    %v11125 = vld [vmem:[%s10913 + $0x698] sm:$0xff]
    %v11126 = vld [vmem:[%s10913 + $0x6a0] sm:$0xff]
    %v11127 = vld [vmem:[%s10913 + $0x6a8] sm:$0xff]
    %v11128 = vld [vmem:[%s10913 + $0x6b0] sm:$0xff]
    %v11129 = vld [vmem:[%s10913 + $0x6b8] sm:$0xff]
    %v11130 = vld [vmem:[%s10913 + $0x6c0] sm:$0xff]
    %v11131 = vld [vmem:[%s10913 + $0x6c8] sm:$0xff]
    %v11132 = vld [vmem:[%s10913 + $0x6d0] sm:$0xff]
    %v11133 = vld [vmem:[%s10913 + $0x6d8] sm:$0xff]
    %v11134 = vld [vmem:[%s10913 + $0x6e0] sm:$0xff]
    %v11135 = vld [vmem:[%s10913 + $0x6e8] sm:$0xff]
    %v11136 = vld [vmem:[%s10913 + $0x6f0] sm:$0xff]
    %v11137 = vld [vmem:[%s10913 + $0x6f8] sm:$0xff]
    %v11138 = vld [vmem:[%s10913 + $0x700] sm:$0xff]
    %v11139 = vld [vmem:[%s10913 + $0x708] sm:$0xff]
    %v11140 = vld [vmem:[%s10913 + $0x710] sm:$0xff]
    %v11141 = vld [vmem:[%s10913 + $0x718] sm:$0xff]
    %v11142 = vld [vmem:[%s10913 + $0x720] sm:$0xff]
    %v11143 = vld [vmem:[%s10913 + $0x728] sm:$0xff]
    %v11144 = vld [vmem:[%s10913 + $0x730] sm:$0xff]
    %v11145 = vld [vmem:[%s10913 + $0x738] sm:$0xff]
    %v11146 = vld [vmem:[%s10913 + $0x740] sm:$0xff]
    %v11147 = vld [vmem:[%s10913 + $0x748] sm:$0xff]
    %v11148 = vld [vmem:[%s10913 + $0x750] sm:$0xff]
    %v11149 = vld [vmem:[%s10913 + $0x758] sm:$0xff]
    %v11150 = vld [vmem:[%s10913 + $0x760] sm:$0xff]
    %v11151 = vld [vmem:[%s10913 + $0x768] sm:$0xff]
    %v11152 = vld [vmem:[%s10913 + $0x770] sm:$0xff]
    %v11153 = vld [vmem:[%s10913 + $0x778] sm:$0xff]
    %v11154 = vld [vmem:[%s10913 + $0x780] sm:$0xff]
    %v11155 = vld [vmem:[%s10913 + $0x788] sm:$0xff]
    %v11156 = vld [vmem:[%s10913 + $0x790] sm:$0xff]
    %v11157 = vld [vmem:[%s10913 + $0x798] sm:$0xff]
    %v11158 = vld [vmem:[%s10913 + $0x7a0] sm:$0xff]
    %v11159 = vld [vmem:[%s10913 + $0x7a8] sm:$0xff]
    %v11160 = vld [vmem:[%s10913 + $0x7b0] sm:$0xff]
    %v11161 = vld [vmem:[%s10913 + $0x7b8] sm:$0xff]
    %v11162 = vld [vmem:[%s10913 + $0x7c0] sm:$0xff]
    %v11163 = vld [vmem:[%s10913 + $0x7c8] sm:$0xff]
    %v11164 = vld [vmem:[%s10913 + $0x7d0] sm:$0xff]
    %v11165 = vld [vmem:[%s10913 + $0x7d8] sm:$0xff]
    %v11166 = vld [vmem:[%s10913 + $0x7e0] sm:$0xff]
    %v11167 = vld [vmem:[%s10913 + $0x7e8] sm:$0xff]
    %v11168 = vld [vmem:[%s10913 + $0x7f0] sm:$0xff]
    %v11169 = vld [vmem:[%s10913 + $0x7f8] sm:$0xff]
    %v11170 = vld [vmem:[%s10913 + $0x800] sm:$0xff]
    %v11171 = vld [vmem:[%s10913 + $0x808] sm:$0xff]
    %v11172 = vld [vmem:[%s10913 + $0x810] sm:$0xff]
    %v11173 = vld [vmem:[%s10913 + $0x818] sm:$0xff]
    %v11174 = vld [vmem:[%s10913 + $0x820] sm:$0xff]
    %v11175 = vld [vmem:[%s10913 + $0x828] sm:$0xff]
    %v11176 = vld [vmem:[%s10913 + $0x830] sm:$0xff]
    %v11177 = vld [vmem:[%s10913 + $0x838] sm:$0xff]
    %v11178 = vld [vmem:[%s10913 + $0x840] sm:$0xff]
    %v11179 = vld [vmem:[%s10913 + $0x848] sm:$0xff]
    %v11180 = vld [vmem:[%s10913 + $0x850] sm:$0xff]
    %v11181 = vld [vmem:[%s10913 + $0x858] sm:$0xff]
    %v11182 = vld [vmem:[%s10913 + $0x860] sm:$0xff]
    %v11183 = vld [vmem:[%s10913 + $0x868] sm:$0xff]
    %v11184 = vld [vmem:[%s10913 + $0x870] sm:$0xff]
    %v11185 = vld [vmem:[%s10913 + $0x878] sm:$0xff]
    %v11186 = vld [vmem:[%s10913 + $0x880] sm:$0xff]
    %v11187 = vld [vmem:[%s10913 + $0x888] sm:$0xff]
    %v11188 = vld [vmem:[%s10913 + $0x890] sm:$0xff]
    %v11189 = vld [vmem:[%s10913 + $0x898] sm:$0xff]
    %v11190 = vld [vmem:[%s10913 + $0x8a0] sm:$0xff]
    %v11191 = vld [vmem:[%s10913 + $0x8a8] sm:$0xff]
    %v11192 = vld [vmem:[%s10913 + $0x8b0] sm:$0xff]
    %v11193 = vld [vmem:[%s10913 + $0x8b8] sm:$0xff]
    %v11194 = vld [vmem:[%s10913 + $0x8c0] sm:$0xff]
    %v11195 = vld [vmem:[%s10913 + $0x8c8] sm:$0xff]
    %v11196 = vld [vmem:[%s10913 + $0x8d0] sm:$0xff]
    %v11197 = vld [vmem:[%s10913 + $0x8d8] sm:$0xff]
    %v11198 = vld [vmem:[%s10913 + $0x8e0] sm:$0xff]
    %v11199 = vld [vmem:[%s10913 + $0x8e8] sm:$0xff]
    %v11200 = vld [vmem:[%s10913 + $0x8f0] sm:$0xff]
    %v11201 = vld [vmem:[%s10913 + $0x8f8] sm:$0xff]
    %s11202 = scalar_lea.vmem [#allocation9], 5
    %v11203 = vld [vmem:[%s11202] ss:$8 sm:$0xf]
    %v11204 = vld [vmem:[%s11202] ss:$8 sm:$0x30]
    %v11205 = vor.u32 %v11203, %v11204
    %v11207 = vlaneseq
    %v11208 = vshrl.u32 %v11207, 7
    %v11209 = vsub.s32 0, %v11208
    %v11210 = vrot.slane %v11205, %v11209
    %v11211 = vlaneseq
    %v11212 = vshrl.u32 %v11211, 7
    %v11213 = vsub.s32 1, %v11212
    %v11214 = vrot.slane %v11205, %v11213
    %v11215 = vlaneseq
    %v11216 = vshrl.u32 %v11215, 7
    %v11217 = vsub.s32 2, %v11216
    %v11218 = vrot.slane %v11205, %v11217
    %v11219 = vlaneseq
    %v11220 = vshrl.u32 %v11219, 7
    %v11221 = vsub.s32 3, %v11220
    %v11222 = vrot.slane %v11205, %v11221
    %v11223 = vlaneseq
    %v11224 = vshrl.u32 %v11223, 7
    %v11225 = vsub.s32 4, %v11224
    %v11226 = vrot.slane %v11205, %v11225
    %v11227 = vlaneseq
    %v11228 = vshrl.u32 %v11227, 7
    %v11229 = vsub.s32 5, %v11228
    %v11230 = vrot.slane %v11205, %v11229
    %v11525 = vunpack.c.l.b16 %v10914
    %v11526 = vunpack.c.h.b16 %v10914
    %v11527 = vunpack.c.l.b16 %v10915
    %v11528 = vunpack.c.h.b16 %v10915
    %v11529 = vunpack.c.l.b16 %v10916
    %v11530 = vunpack.c.h.b16 %v10916
    %v11531 = vunpack.c.l.b16 %v10917
    %v11532 = vunpack.c.h.b16 %v10917
    %v11533 = vunpack.c.l.b16 %v10918
    %v11534 = vunpack.c.h.b16 %v10918
    %v11535 = vunpack.c.l.b16 %v10919
    %v11536 = vunpack.c.h.b16 %v10919
    %v11537 = vunpack.c.l.b16 %v10920
    %v11538 = vunpack.c.h.b16 %v10920
    %v11539 = vunpack.c.l.b16 %v10921
    %v11540 = vunpack.c.h.b16 %v10921
    %v11541 = vunpack.c.l.b16 %v10922
    %v11542 = vunpack.c.h.b16 %v10922
    %v11543 = vunpack.c.l.b16 %v10923
    %v11544 = vunpack.c.h.b16 %v10923
    %v11545 = vunpack.c.l.b16 %v10924
    %v11546 = vunpack.c.h.b16 %v10924
    %v11547 = vunpack.c.l.b16 %v10925
    %v11548 = vunpack.c.h.b16 %v10925
    %v11549 = vunpack.c.l.b16 %v10926
    %v11550 = vunpack.c.h.b16 %v10926
    %v11551 = vunpack.c.l.b16 %v10927
    %v11552 = vunpack.c.h.b16 %v10927
    %v11553 = vunpack.c.l.b16 %v10928
    %v11554 = vunpack.c.h.b16 %v10928
    %v11555 = vunpack.c.l.b16 %v10929
    %v11556 = vunpack.c.h.b16 %v10929
    %v11557 = vunpack.c.l.b16 %v10930
    %v11558 = vunpack.c.h.b16 %v10930
    %v11559 = vunpack.c.l.b16 %v10931
    %v11560 = vunpack.c.h.b16 %v10931
    %v11561 = vunpack.c.l.b16 %v10932
    %v11562 = vunpack.c.h.b16 %v10932
    %v11563 = vunpack.c.l.b16 %v10933
    %v11564 = vunpack.c.h.b16 %v10933
    %v11565 = vunpack.c.l.b16 %v10934
    %v11566 = vunpack.c.h.b16 %v10934
    %v11567 = vunpack.c.l.b16 %v10935
    %v11568 = vunpack.c.h.b16 %v10935
    %v11569 = vunpack.c.l.b16 %v10936
    %v11570 = vunpack.c.h.b16 %v10936
    %v11571 = vunpack.c.l.b16 %v10937
    %v11572 = vunpack.c.h.b16 %v10937
    %v11573 = vunpack.c.l.b16 %v10938
    %v11574 = vunpack.c.h.b16 %v10938
    %v11575 = vunpack.c.l.b16 %v10939
    %v11576 = vunpack.c.h.b16 %v10939
    %v11577 = vunpack.c.l.b16 %v10940
    %v11578 = vunpack.c.h.b16 %v10940
    %v11579 = vunpack.c.l.b16 %v10941
    %v11580 = vunpack.c.h.b16 %v10941
    %v11581 = vunpack.c.l.b16 %v10942
    %v11582 = vunpack.c.h.b16 %v10942
    %v11583 = vunpack.c.l.b16 %v10943
    %v11584 = vunpack.c.h.b16 %v10943
    %v11585 = vunpack.c.l.b16 %v10944
    %v11586 = vunpack.c.h.b16 %v10944
    %v11587 = vunpack.c.l.b16 %v10945
    %v11588 = vunpack.c.h.b16 %v10945
    %v11589 = vunpack.c.l.b16 %v10946
    %v11590 = vunpack.c.h.b16 %v10946
    %v11591 = vunpack.c.l.b16 %v10947
    %v11592 = vunpack.c.h.b16 %v10947
    %v11593 = vunpack.c.l.b16 %v10948
    %v11594 = vunpack.c.h.b16 %v10948
    %v11595 = vunpack.c.l.b16 %v10949
    %v11596 = vunpack.c.h.b16 %v10949
    %v11597 = vunpack.c.l.b16 %v10950
    %v11598 = vunpack.c.h.b16 %v10950
    %v11599 = vunpack.c.l.b16 %v10951
    %v11600 = vunpack.c.h.b16 %v10951
    %v11601 = vunpack.c.l.b16 %v10952
    %v11602 = vunpack.c.h.b16 %v10952
    %v11603 = vunpack.c.l.b16 %v10953
    %v11604 = vunpack.c.h.b16 %v10953
    %v11605 = vunpack.c.l.b16 %v10954
    %v11606 = vunpack.c.h.b16 %v10954
    %v11607 = vunpack.c.l.b16 %v10955
    %v11608 = vunpack.c.h.b16 %v10955
    %v11609 = vunpack.c.l.b16 %v10956
    %v11610 = vunpack.c.h.b16 %v10956
    %v11611 = vunpack.c.l.b16 %v10957
    %v11612 = vunpack.c.h.b16 %v10957
    %v11613 = vunpack.c.l.b16 %v10958
    %v11614 = vunpack.c.h.b16 %v10958
    %v11615 = vunpack.c.l.b16 %v10959
    %v11616 = vunpack.c.h.b16 %v10959
    %v11617 = vunpack.c.l.b16 %v10960
    %v11618 = vunpack.c.h.b16 %v10960
    %v11619 = vunpack.c.l.b16 %v10961
    %v11620 = vunpack.c.h.b16 %v10961
    %v11621 = vunpack.c.l.b16 %v10962
    %v11622 = vunpack.c.h.b16 %v10962
    %v11623 = vunpack.c.l.b16 %v10963
    %v11624 = vunpack.c.h.b16 %v10963
    %v11625 = vunpack.c.l.b16 %v10964
    %v11626 = vunpack.c.h.b16 %v10964
    %v11627 = vunpack.c.l.b16 %v10965
    %v11628 = vunpack.c.h.b16 %v10965
    %v11629 = vunpack.c.l.b16 %v10966
    %v11630 = vunpack.c.h.b16 %v10966
    %v11631 = vunpack.c.l.b16 %v10967
    %v11632 = vunpack.c.h.b16 %v10967
    %v11633 = vunpack.c.l.b16 %v10968
    %v11634 = vunpack.c.h.b16 %v10968
    %v11635 = vunpack.c.l.b16 %v10969
    %v11636 = vunpack.c.h.b16 %v10969
    %v11637 = vunpack.c.l.b16 %v10970
    %v11638 = vunpack.c.h.b16 %v10970
    %v11639 = vunpack.c.l.b16 %v10971
    %v11640 = vunpack.c.h.b16 %v10971
    %v11641 = vunpack.c.l.b16 %v10972
    %v11642 = vunpack.c.h.b16 %v10972
    %v11643 = vunpack.c.l.b16 %v10973
    %v11644 = vunpack.c.h.b16 %v10973
    %v11645 = vunpack.c.l.b16 %v10974
    %v11646 = vunpack.c.h.b16 %v10974
    %v11647 = vunpack.c.l.b16 %v10975
    %v11648 = vunpack.c.h.b16 %v10975
    %v11649 = vunpack.c.l.b16 %v10976
    %v11650 = vunpack.c.h.b16 %v10976
    %v11651 = vunpack.c.l.b16 %v10977
    %v11652 = vunpack.c.h.b16 %v10977
    %v11653 = vunpack.c.l.b16 %v10978
    %v11654 = vunpack.c.h.b16 %v10978
    %v11655 = vunpack.c.l.b16 %v10979
    %v11656 = vunpack.c.h.b16 %v10979
    %v11657 = vunpack.c.l.b16 %v10980
    %v11658 = vunpack.c.h.b16 %v10980
    %v11659 = vunpack.c.l.b16 %v10981
    %v11660 = vunpack.c.h.b16 %v10981
    %v11661 = vunpack.c.l.b16 %v10982
    %v11662 = vunpack.c.h.b16 %v10982
    %v11663 = vunpack.c.l.b16 %v10983
    %v11664 = vunpack.c.h.b16 %v10983
    %v11665 = vunpack.c.l.b16 %v10984
    %v11666 = vunpack.c.h.b16 %v10984
    %v11667 = vunpack.c.l.b16 %v10985
    %v11668 = vunpack.c.h.b16 %v10985
    %v11669 = vunpack.c.l.b16 %v10986
    %v11670 = vunpack.c.h.b16 %v10986
    %v11671 = vunpack.c.l.b16 %v10987
    %v11672 = vunpack.c.h.b16 %v10987
    %v11673 = vunpack.c.l.b16 %v10988
    %v11674 = vunpack.c.h.b16 %v10988
    %v11675 = vunpack.c.l.b16 %v10989
    %v11676 = vunpack.c.h.b16 %v10989
    %v11677 = vunpack.c.l.b16 %v10990
    %v11678 = vunpack.c.h.b16 %v10990
    %v11679 = vunpack.c.l.b16 %v10991
    %v11680 = vunpack.c.h.b16 %v10991
    %v11681 = vunpack.c.l.b16 %v10992
    %v11682 = vunpack.c.h.b16 %v10992
    %v11683 = vunpack.c.l.b16 %v10993
    %v11684 = vunpack.c.h.b16 %v10993
    %v11685 = vunpack.c.l.b16 %v10994
    %v11686 = vunpack.c.h.b16 %v10994
    %v11687 = vunpack.c.l.b16 %v10995
    %v11688 = vunpack.c.h.b16 %v10995
    %v11689 = vunpack.c.l.b16 %v10996
    %v11690 = vunpack.c.h.b16 %v10996
    %v11691 = vunpack.c.l.b16 %v10997
    %v11692 = vunpack.c.h.b16 %v10997
    %v11693 = vunpack.c.l.b16 %v10998
    %v11694 = vunpack.c.h.b16 %v10998
    %v11695 = vunpack.c.l.b16 %v10999
    %v11696 = vunpack.c.h.b16 %v10999
    %v11697 = vunpack.c.l.b16 %v11000
    %v11698 = vunpack.c.h.b16 %v11000
    %v11699 = vunpack.c.l.b16 %v11001
    %v11700 = vunpack.c.h.b16 %v11001
    %v11701 = vunpack.c.l.b16 %v11002
    %v11702 = vunpack.c.h.b16 %v11002
    %v11703 = vunpack.c.l.b16 %v11003
    %v11704 = vunpack.c.h.b16 %v11003
    %v11705 = vunpack.c.l.b16 %v11004
    %v11706 = vunpack.c.h.b16 %v11004
    %v11707 = vunpack.c.l.b16 %v11005
    %v11708 = vunpack.c.h.b16 %v11005
    %v11709 = vunpack.c.l.b16 %v11006
    %v11710 = vunpack.c.h.b16 %v11006
    %v11711 = vunpack.c.l.b16 %v11007
    %v11712 = vunpack.c.h.b16 %v11007
    %v11713 = vunpack.c.l.b16 %v11008
    %v11714 = vunpack.c.h.b16 %v11008
    %v11715 = vunpack.c.l.b16 %v11009
    %v11716 = vunpack.c.h.b16 %v11009
    %v11717 = vunpack.c.l.b16 %v11010
    %v11718 = vunpack.c.h.b16 %v11010
    %v11719 = vunpack.c.l.b16 %v11011
    %v11720 = vunpack.c.h.b16 %v11011
    %v11721 = vunpack.c.l.b16 %v11012
    %v11722 = vunpack.c.h.b16 %v11012
    %v11723 = vunpack.c.l.b16 %v11013
    %v11724 = vunpack.c.h.b16 %v11013
    %v11725 = vunpack.c.l.b16 %v11014
    %v11726 = vunpack.c.h.b16 %v11014
    %v11727 = vunpack.c.l.b16 %v11015
    %v11728 = vunpack.c.h.b16 %v11015
    %v11729 = vunpack.c.l.b16 %v11016
    %v11730 = vunpack.c.h.b16 %v11016
    %v11731 = vunpack.c.l.b16 %v11017
    %v11732 = vunpack.c.h.b16 %v11017
    %v11733 = vunpack.c.l.b16 %v11018
    %v11734 = vunpack.c.h.b16 %v11018
    %v11735 = vunpack.c.l.b16 %v11019
    %v11736 = vunpack.c.h.b16 %v11019
    %v11737 = vunpack.c.l.b16 %v11020
    %v11738 = vunpack.c.h.b16 %v11020
    %v11739 = vunpack.c.l.b16 %v11021
    %v11740 = vunpack.c.h.b16 %v11021
    %v11741 = vunpack.c.l.b16 %v11022
    %v11742 = vunpack.c.h.b16 %v11022
    %v11743 = vunpack.c.l.b16 %v11023
    %v11744 = vunpack.c.h.b16 %v11023
    %v11745 = vunpack.c.l.b16 %v11024
    %v11746 = vunpack.c.h.b16 %v11024
    %v11747 = vunpack.c.l.b16 %v11025
    %v11748 = vunpack.c.h.b16 %v11025
    %v11749 = vunpack.c.l.b16 %v11026
    %v11750 = vunpack.c.h.b16 %v11026
    %v11751 = vunpack.c.l.b16 %v11027
    %v11752 = vunpack.c.h.b16 %v11027
    %v11753 = vunpack.c.l.b16 %v11028
    %v11754 = vunpack.c.h.b16 %v11028
    %v11755 = vunpack.c.l.b16 %v11029
    %v11756 = vunpack.c.h.b16 %v11029
    %v11757 = vunpack.c.l.b16 %v11030
    %v11758 = vunpack.c.h.b16 %v11030
    %v11759 = vunpack.c.l.b16 %v11031
    %v11760 = vunpack.c.h.b16 %v11031
    %v11761 = vunpack.c.l.b16 %v11032
    %v11762 = vunpack.c.h.b16 %v11032
    %v11763 = vunpack.c.l.b16 %v11033
    %v11764 = vunpack.c.h.b16 %v11033
    %v11765 = vunpack.c.l.b16 %v11034
    %v11766 = vunpack.c.h.b16 %v11034
    %v11767 = vunpack.c.l.b16 %v11035
    %v11768 = vunpack.c.h.b16 %v11035
    %v11769 = vunpack.c.l.b16 %v11036
    %v11770 = vunpack.c.h.b16 %v11036
    %v11771 = vunpack.c.l.b16 %v11037
    %v11772 = vunpack.c.h.b16 %v11037
    %v11773 = vunpack.c.l.b16 %v11038
    %v11774 = vunpack.c.h.b16 %v11038
    %v11775 = vunpack.c.l.b16 %v11039
    %v11776 = vunpack.c.h.b16 %v11039
    %v11777 = vunpack.c.l.b16 %v11040
    %v11778 = vunpack.c.h.b16 %v11040
    %v11779 = vunpack.c.l.b16 %v11041
    %v11780 = vunpack.c.h.b16 %v11041
    %v11781 = vunpack.c.l.b16 %v11042
    %v11782 = vunpack.c.h.b16 %v11042
    %v11783 = vunpack.c.l.b16 %v11043
    %v11784 = vunpack.c.h.b16 %v11043
    %v11785 = vunpack.c.l.b16 %v11044
    %v11786 = vunpack.c.h.b16 %v11044
    %v11787 = vunpack.c.l.b16 %v11045
    %v11788 = vunpack.c.h.b16 %v11045
    %v11789 = vunpack.c.l.b16 %v11046
    %v11790 = vunpack.c.h.b16 %v11046
    %v11791 = vunpack.c.l.b16 %v11047
    %v11792 = vunpack.c.h.b16 %v11047
    %v11793 = vunpack.c.l.b16 %v11048
    %v11794 = vunpack.c.h.b16 %v11048
    %v11795 = vunpack.c.l.b16 %v11049
    %v11796 = vunpack.c.h.b16 %v11049
    %v11797 = vunpack.c.l.b16 %v11050
    %v11798 = vunpack.c.h.b16 %v11050
    %v11799 = vunpack.c.l.b16 %v11051
    %v11800 = vunpack.c.h.b16 %v11051
    %v11801 = vunpack.c.l.b16 %v11052
    %v11802 = vunpack.c.h.b16 %v11052
    %v11803 = vunpack.c.l.b16 %v11053
    %v11804 = vunpack.c.h.b16 %v11053
    %v11805 = vunpack.c.l.b16 %v11054
    %v11806 = vunpack.c.h.b16 %v11054
    %v11807 = vunpack.c.l.b16 %v11055
    %v11808 = vunpack.c.h.b16 %v11055
    %v11809 = vunpack.c.l.b16 %v11056
    %v11810 = vunpack.c.h.b16 %v11056
    %v11811 = vunpack.c.l.b16 %v11057
    %v11812 = vunpack.c.h.b16 %v11057
    %v11813 = vunpack.c.l.b16 %v11058
    %v11814 = vunpack.c.h.b16 %v11058
    %v11815 = vunpack.c.l.b16 %v11059
    %v11816 = vunpack.c.h.b16 %v11059
    %v11817 = vunpack.c.l.b16 %v11060
    %v11818 = vunpack.c.h.b16 %v11060
    %v11819 = vunpack.c.l.b16 %v11061
    %v11820 = vunpack.c.h.b16 %v11061
    %v11821 = vunpack.c.l.b16 %v11062
    %v11822 = vunpack.c.h.b16 %v11062
    %v11823 = vunpack.c.l.b16 %v11063
    %v11824 = vunpack.c.h.b16 %v11063
    %v11825 = vunpack.c.l.b16 %v11064
    %v11826 = vunpack.c.h.b16 %v11064
    %v11827 = vunpack.c.l.b16 %v11065
    %v11828 = vunpack.c.h.b16 %v11065
    %v11829 = vunpack.c.l.b16 %v11066
    %v11830 = vunpack.c.h.b16 %v11066
    %v11831 = vunpack.c.l.b16 %v11067
    %v11832 = vunpack.c.h.b16 %v11067
    %v11833 = vunpack.c.l.b16 %v11068
    %v11834 = vunpack.c.h.b16 %v11068
    %v11835 = vunpack.c.l.b16 %v11069
    %v11836 = vunpack.c.h.b16 %v11069
    %v11837 = vunpack.c.l.b16 %v11070
    %v11838 = vunpack.c.h.b16 %v11070
    %v11839 = vunpack.c.l.b16 %v11071
    %v11840 = vunpack.c.h.b16 %v11071
    %v11841 = vunpack.c.l.b16 %v11072
    %v11842 = vunpack.c.h.b16 %v11072
    %v11843 = vunpack.c.l.b16 %v11073
    %v11844 = vunpack.c.h.b16 %v11073
    %v11845 = vunpack.c.l.b16 %v11074
    %v11846 = vunpack.c.h.b16 %v11074
    %v11847 = vunpack.c.l.b16 %v11075
    %v11848 = vunpack.c.h.b16 %v11075
    %v11849 = vunpack.c.l.b16 %v11076
    %v11850 = vunpack.c.h.b16 %v11076
    %v11851 = vunpack.c.l.b16 %v11077
    %v11852 = vunpack.c.h.b16 %v11077
    %v11853 = vunpack.c.l.b16 %v11078
    %v11854 = vunpack.c.h.b16 %v11078
    %v11855 = vunpack.c.l.b16 %v11079
    %v11856 = vunpack.c.h.b16 %v11079
    %v11857 = vunpack.c.l.b16 %v11080
    %v11858 = vunpack.c.h.b16 %v11080
    %v11859 = vunpack.c.l.b16 %v11081
    %v11860 = vunpack.c.h.b16 %v11081
    %v11861 = vunpack.c.l.b16 %v11082
    %v11862 = vunpack.c.h.b16 %v11082
    %v11863 = vunpack.c.l.b16 %v11083
    %v11864 = vunpack.c.h.b16 %v11083
    %v11865 = vunpack.c.l.b16 %v11084
    %v11866 = vunpack.c.h.b16 %v11084
    %v11867 = vunpack.c.l.b16 %v11085
    %v11868 = vunpack.c.h.b16 %v11085
    %v11869 = vunpack.c.l.b16 %v11086
    %v11870 = vunpack.c.h.b16 %v11086
    %v11871 = vunpack.c.l.b16 %v11087
    %v11872 = vunpack.c.h.b16 %v11087
    %v11873 = vunpack.c.l.b16 %v11088
    %v11874 = vunpack.c.h.b16 %v11088
    %v11875 = vunpack.c.l.b16 %v11089
    %v11876 = vunpack.c.h.b16 %v11089
    %v11877 = vunpack.c.l.b16 %v11090
    %v11878 = vunpack.c.h.b16 %v11090
    %v11879 = vunpack.c.l.b16 %v11091
    %v11880 = vunpack.c.h.b16 %v11091
    %v11881 = vunpack.c.l.b16 %v11092
    %v11882 = vunpack.c.h.b16 %v11092
    %v11883 = vunpack.c.l.b16 %v11093
    %v11884 = vunpack.c.h.b16 %v11093
    %v11885 = vunpack.c.l.b16 %v11094
    %v11886 = vunpack.c.h.b16 %v11094
    %v11887 = vunpack.c.l.b16 %v11095
    %v11888 = vunpack.c.h.b16 %v11095
    %v11889 = vunpack.c.l.b16 %v11096
    %v11890 = vunpack.c.h.b16 %v11096
    %v11891 = vunpack.c.l.b16 %v11097
    %v11892 = vunpack.c.h.b16 %v11097
    %v11893 = vunpack.c.l.b16 %v11098
    %v11894 = vunpack.c.h.b16 %v11098
    %v11895 = vunpack.c.l.b16 %v11099
    %v11896 = vunpack.c.h.b16 %v11099
    %v11897 = vunpack.c.l.b16 %v11100
    %v11898 = vunpack.c.h.b16 %v11100
    %v11899 = vunpack.c.l.b16 %v11101
    %v11900 = vunpack.c.h.b16 %v11101
    %v11901 = vunpack.c.l.b16 %v11102
    %v11902 = vunpack.c.h.b16 %v11102
    %v11903 = vunpack.c.l.b16 %v11103
    %v11904 = vunpack.c.h.b16 %v11103
    %v11905 = vunpack.c.l.b16 %v11104
    %v11906 = vunpack.c.h.b16 %v11104
    %v11907 = vunpack.c.l.b16 %v11105
    %v11908 = vunpack.c.h.b16 %v11105
    %v11909 = vunpack.c.l.b16 %v11106
    %v11910 = vunpack.c.h.b16 %v11106
    %v11911 = vunpack.c.l.b16 %v11107
    %v11912 = vunpack.c.h.b16 %v11107
    %v11913 = vunpack.c.l.b16 %v11108
    %v11914 = vunpack.c.h.b16 %v11108
    %v11915 = vunpack.c.l.b16 %v11109
    %v11916 = vunpack.c.h.b16 %v11109
    %v11917 = vunpack.c.l.b16 %v11110
    %v11918 = vunpack.c.h.b16 %v11110
    %v11919 = vunpack.c.l.b16 %v11111
    %v11920 = vunpack.c.h.b16 %v11111
    %v11921 = vunpack.c.l.b16 %v11112
    %v11922 = vunpack.c.h.b16 %v11112
    %v11923 = vunpack.c.l.b16 %v11113
    %v11924 = vunpack.c.h.b16 %v11113
    %v11925 = vunpack.c.l.b16 %v11114
    %v11926 = vunpack.c.h.b16 %v11114
    %v11927 = vunpack.c.l.b16 %v11115
    %v11928 = vunpack.c.h.b16 %v11115
    %v11929 = vunpack.c.l.b16 %v11116
    %v11930 = vunpack.c.h.b16 %v11116
    %v11931 = vunpack.c.l.b16 %v11117
    %v11932 = vunpack.c.h.b16 %v11117
    %v11933 = vunpack.c.l.b16 %v11118
    %v11934 = vunpack.c.h.b16 %v11118
    %v11935 = vunpack.c.l.b16 %v11119
    %v11936 = vunpack.c.h.b16 %v11119
    %v11937 = vunpack.c.l.b16 %v11120
    %v11938 = vunpack.c.h.b16 %v11120
    %v11939 = vunpack.c.l.b16 %v11121
    %v11940 = vunpack.c.h.b16 %v11121
    %v11941 = vunpack.c.l.b16 %v11122
    %v11942 = vunpack.c.h.b16 %v11122
    %v11943 = vunpack.c.l.b16 %v11123
    %v11944 = vunpack.c.h.b16 %v11123
    %v11945 = vunpack.c.l.b16 %v11124
    %v11946 = vunpack.c.h.b16 %v11124
    %v11947 = vunpack.c.l.b16 %v11125
    %v11948 = vunpack.c.h.b16 %v11125
    %v11949 = vunpack.c.l.b16 %v11126
    %v11950 = vunpack.c.h.b16 %v11126
    %v11951 = vunpack.c.l.b16 %v11127
    %v11952 = vunpack.c.h.b16 %v11127
    %v11953 = vunpack.c.l.b16 %v11128
    %v11954 = vunpack.c.h.b16 %v11128
    %v11955 = vunpack.c.l.b16 %v11129
    %v11956 = vunpack.c.h.b16 %v11129
    %v11957 = vunpack.c.l.b16 %v11130
    %v11958 = vunpack.c.h.b16 %v11130
    %v11959 = vunpack.c.l.b16 %v11131
    %v11960 = vunpack.c.h.b16 %v11131
    %v11961 = vunpack.c.l.b16 %v11132
    %v11962 = vunpack.c.h.b16 %v11132
    %v11963 = vunpack.c.l.b16 %v11133
    %v11964 = vunpack.c.h.b16 %v11133
    %v11965 = vunpack.c.l.b16 %v11134
    %v11966 = vunpack.c.h.b16 %v11134
    %v11967 = vunpack.c.l.b16 %v11135
    %v11968 = vunpack.c.h.b16 %v11135
    %v11969 = vunpack.c.l.b16 %v11136
    %v11970 = vunpack.c.h.b16 %v11136
    %v11971 = vunpack.c.l.b16 %v11137
    %v11972 = vunpack.c.h.b16 %v11137
    %v11973 = vunpack.c.l.b16 %v11138
    %v11974 = vunpack.c.h.b16 %v11138
    %v11975 = vunpack.c.l.b16 %v11139
    %v11976 = vunpack.c.h.b16 %v11139
    %v11977 = vunpack.c.l.b16 %v11140
    %v11978 = vunpack.c.h.b16 %v11140
    %v11979 = vunpack.c.l.b16 %v11141
    %v11980 = vunpack.c.h.b16 %v11141
    %v11981 = vunpack.c.l.b16 %v11142
    %v11982 = vunpack.c.h.b16 %v11142
    %v11983 = vunpack.c.l.b16 %v11143
    %v11984 = vunpack.c.h.b16 %v11143
    %v11985 = vunpack.c.l.b16 %v11144
    %v11986 = vunpack.c.h.b16 %v11144
    %v11987 = vunpack.c.l.b16 %v11145
    %v11988 = vunpack.c.h.b16 %v11145
    %v11989 = vunpack.c.l.b16 %v11146
    %v11990 = vunpack.c.h.b16 %v11146
    %v11991 = vunpack.c.l.b16 %v11147
    %v11992 = vunpack.c.h.b16 %v11147
    %v11993 = vunpack.c.l.b16 %v11148
    %v11994 = vunpack.c.h.b16 %v11148
    %v11995 = vunpack.c.l.b16 %v11149
    %v11996 = vunpack.c.h.b16 %v11149
    %v11997 = vunpack.c.l.b16 %v11150
    %v11998 = vunpack.c.h.b16 %v11150
    %v11999 = vunpack.c.l.b16 %v11151
    %v12000 = vunpack.c.h.b16 %v11151
    %v12001 = vunpack.c.l.b16 %v11152
    %v12002 = vunpack.c.h.b16 %v11152
    %v12003 = vunpack.c.l.b16 %v11153
    %v12004 = vunpack.c.h.b16 %v11153
    %v12005 = vunpack.c.l.b16 %v11154
    %v12006 = vunpack.c.h.b16 %v11154
    %v12007 = vunpack.c.l.b16 %v11155
    %v12008 = vunpack.c.h.b16 %v11155
    %v12009 = vunpack.c.l.b16 %v11156
    %v12010 = vunpack.c.h.b16 %v11156
    %v12011 = vunpack.c.l.b16 %v11157
    %v12012 = vunpack.c.h.b16 %v11157
    %v12013 = vunpack.c.l.b16 %v11158
    %v12014 = vunpack.c.h.b16 %v11158
    %v12015 = vunpack.c.l.b16 %v11159
    %v12016 = vunpack.c.h.b16 %v11159
    %v12017 = vunpack.c.l.b16 %v11160
    %v12018 = vunpack.c.h.b16 %v11160
    %v12019 = vunpack.c.l.b16 %v11161
    %v12020 = vunpack.c.h.b16 %v11161
    %v12021 = vunpack.c.l.b16 %v11162
    %v12022 = vunpack.c.h.b16 %v11162
    %v12023 = vunpack.c.l.b16 %v11163
    %v12024 = vunpack.c.h.b16 %v11163
    %v12025 = vunpack.c.l.b16 %v11164
    %v12026 = vunpack.c.h.b16 %v11164
    %v12027 = vunpack.c.l.b16 %v11165
    %v12028 = vunpack.c.h.b16 %v11165
    %v12029 = vunpack.c.l.b16 %v11166
    %v12030 = vunpack.c.h.b16 %v11166
    %v12031 = vunpack.c.l.b16 %v11167
    %v12032 = vunpack.c.h.b16 %v11167
    %v12033 = vunpack.c.l.b16 %v11168
    %v12034 = vunpack.c.h.b16 %v11168
    %v12035 = vunpack.c.l.b16 %v11169
    %v12036 = vunpack.c.h.b16 %v11169
    %v12037 = vunpack.c.l.b16 %v11170
    %v12038 = vunpack.c.h.b16 %v11170
    %v12039 = vunpack.c.l.b16 %v11171
    %v12040 = vunpack.c.h.b16 %v11171
    %v12041 = vunpack.c.l.b16 %v11172
    %v12042 = vunpack.c.h.b16 %v11172
    %v12043 = vunpack.c.l.b16 %v11173
    %v12044 = vunpack.c.h.b16 %v11173
    %v12045 = vunpack.c.l.b16 %v11174
    %v12046 = vunpack.c.h.b16 %v11174
    %v12047 = vunpack.c.l.b16 %v11175
    %v12048 = vunpack.c.h.b16 %v11175
    %v12049 = vunpack.c.l.b16 %v11176
    %v12050 = vunpack.c.h.b16 %v11176
    %v12051 = vunpack.c.l.b16 %v11177
    %v12052 = vunpack.c.h.b16 %v11177
    %v12053 = vunpack.c.l.b16 %v11178
    %v12054 = vunpack.c.h.b16 %v11178
    %v12055 = vunpack.c.l.b16 %v11179
    %v12056 = vunpack.c.h.b16 %v11179
    %v12057 = vunpack.c.l.b16 %v11180
    %v12058 = vunpack.c.h.b16 %v11180
    %v12059 = vunpack.c.l.b16 %v11181
    %v12060 = vunpack.c.h.b16 %v11181
    %v12061 = vunpack.c.l.b16 %v11182
    %v12062 = vunpack.c.h.b16 %v11182
    %v12063 = vunpack.c.l.b16 %v11183
    %v12064 = vunpack.c.h.b16 %v11183
    %v12065 = vunpack.c.l.b16 %v11184
    %v12066 = vunpack.c.h.b16 %v11184
    %v12067 = vunpack.c.l.b16 %v11185
    %v12068 = vunpack.c.h.b16 %v11185
    %v12069 = vunpack.c.l.b16 %v11186
    %v12070 = vunpack.c.h.b16 %v11186
    %v12071 = vunpack.c.l.b16 %v11187
    %v12072 = vunpack.c.h.b16 %v11187
    %v12073 = vunpack.c.l.b16 %v11188
    %v12074 = vunpack.c.h.b16 %v11188
    %v12075 = vunpack.c.l.b16 %v11189
    %v12076 = vunpack.c.h.b16 %v11189
    %v12077 = vunpack.c.l.b16 %v11190
    %v12078 = vunpack.c.h.b16 %v11190
    %v12079 = vunpack.c.l.b16 %v11191
    %v12080 = vunpack.c.h.b16 %v11191
    %v12081 = vunpack.c.l.b16 %v11192
    %v12082 = vunpack.c.h.b16 %v11192
    %v12083 = vunpack.c.l.b16 %v11193
    %v12084 = vunpack.c.h.b16 %v11193
    %v12085 = vunpack.c.l.b16 %v11194
    %v12086 = vunpack.c.h.b16 %v11194
    %v12087 = vunpack.c.l.b16 %v11195
    %v12088 = vunpack.c.h.b16 %v11195
    %v12089 = vunpack.c.l.b16 %v11196
    %v12090 = vunpack.c.h.b16 %v11196
    %v12091 = vunpack.c.l.b16 %v11197
    %v12092 = vunpack.c.h.b16 %v11197
    %v12093 = vunpack.c.l.b16 %v11198
    %v12094 = vunpack.c.h.b16 %v11198
    %v12095 = vunpack.c.l.b16 %v11199
    %v12096 = vunpack.c.h.b16 %v11199
    %v12097 = vunpack.c.l.b16 %v11200
    %v12098 = vunpack.c.h.b16 %v11200
    %v12099 = vunpack.c.l.b16 %v11201
    %v12100 = vunpack.c.h.b16 %v11201
    %v12101 = vpack.c.b16 %v11531, %v11525
    %v12102 = vpack.c.b16 %v11532, %v11526
    %v12103 = vpack.c.b16 %v11533, %v11527
    %v12104 = vpack.c.b16 %v11534, %v11528
    %v12105 = vpack.c.b16 %v11535, %v11529
    %v12106 = vpack.c.b16 %v11536, %v11530
    %v12107 = vpack.c.b16 %v11543, %v11537
    %v12108 = vpack.c.b16 %v11544, %v11538
    %v12109 = vpack.c.b16 %v11545, %v11539
    %v12110 = vpack.c.b16 %v11546, %v11540
    %v12111 = vpack.c.b16 %v11547, %v11541
    %v12112 = vpack.c.b16 %v11548, %v11542
    %v12113 = vpack.c.b16 %v11555, %v11549
    %v12114 = vpack.c.b16 %v11556, %v11550
    %v12115 = vpack.c.b16 %v11557, %v11551
    %v12116 = vpack.c.b16 %v11558, %v11552
    %v12117 = vpack.c.b16 %v11559, %v11553
    %v12118 = vpack.c.b16 %v11560, %v11554
    %v12119 = vpack.c.b16 %v11567, %v11561
    %v12120 = vpack.c.b16 %v11568, %v11562
    %v12121 = vpack.c.b16 %v11569, %v11563
    %v12122 = vpack.c.b16 %v11570, %v11564
    %v12123 = vpack.c.b16 %v11571, %v11565
    %v12124 = vpack.c.b16 %v11572, %v11566
    %v12125 = vpack.c.b16 %v11579, %v11573
    %v12126 = vpack.c.b16 %v11580, %v11574
    %v12127 = vpack.c.b16 %v11581, %v11575
    %v12128 = vpack.c.b16 %v11582, %v11576
    %v12129 = vpack.c.b16 %v11583, %v11577
    %v12130 = vpack.c.b16 %v11584, %v11578
    %v12131 = vpack.c.b16 %v11591, %v11585
    %v12132 = vpack.c.b16 %v11592, %v11586
    %v12133 = vpack.c.b16 %v11593, %v11587
    %v12134 = vpack.c.b16 %v11594, %v11588
    %v12135 = vpack.c.b16 %v11595, %v11589
    %v12136 = vpack.c.b16 %v11596, %v11590
    %v12137 = vpack.c.b16 %v11603, %v11597
    %v12138 = vpack.c.b16 %v11604, %v11598
    %v12139 = vpack.c.b16 %v11605, %v11599
    %v12140 = vpack.c.b16 %v11606, %v11600
    %v12141 = vpack.c.b16 %v11607, %v11601
    %v12142 = vpack.c.b16 %v11608, %v11602
    %v12143 = vpack.c.b16 %v11615, %v11609
    %v12144 = vpack.c.b16 %v11616, %v11610
    %v12145 = vpack.c.b16 %v11617, %v11611
    %v12146 = vpack.c.b16 %v11618, %v11612
    %v12147 = vpack.c.b16 %v11619, %v11613
    %v12148 = vpack.c.b16 %v11620, %v11614
    %v12149 = vpack.c.b16 %v11627, %v11621
    %v12150 = vpack.c.b16 %v11628, %v11622
    %v12151 = vpack.c.b16 %v11629, %v11623
    %v12152 = vpack.c.b16 %v11630, %v11624
    %v12153 = vpack.c.b16 %v11631, %v11625
    %v12154 = vpack.c.b16 %v11632, %v11626
    %v12155 = vpack.c.b16 %v11639, %v11633
    %v12156 = vpack.c.b16 %v11640, %v11634
    %v12157 = vpack.c.b16 %v11641, %v11635
    %v12158 = vpack.c.b16 %v11642, %v11636
    %v12159 = vpack.c.b16 %v11643, %v11637
    %v12160 = vpack.c.b16 %v11644, %v11638
    %v12161 = vpack.c.b16 %v11651, %v11645
    %v12162 = vpack.c.b16 %v11652, %v11646
    %v12163 = vpack.c.b16 %v11653, %v11647
    %v12164 = vpack.c.b16 %v11654, %v11648
    %v12165 = vpack.c.b16 %v11655, %v11649
    %v12166 = vpack.c.b16 %v11656, %v11650
    %v12167 = vpack.c.b16 %v11663, %v11657
    %v12168 = vpack.c.b16 %v11664, %v11658
    %v12169 = vpack.c.b16 %v11665, %v11659
    %v12170 = vpack.c.b16 %v11666, %v11660
    %v12171 = vpack.c.b16 %v11667, %v11661
    %v12172 = vpack.c.b16 %v11668, %v11662
    %v12173 = vpack.c.b16 %v11675, %v11669
    %v12174 = vpack.c.b16 %v11676, %v11670
    %v12175 = vpack.c.b16 %v11677, %v11671
    %v12176 = vpack.c.b16 %v11678, %v11672
    %v12177 = vpack.c.b16 %v11679, %v11673
    %v12178 = vpack.c.b16 %v11680, %v11674
    %v12179 = vpack.c.b16 %v11687, %v11681
    %v12180 = vpack.c.b16 %v11688, %v11682
    %v12181 = vpack.c.b16 %v11689, %v11683
    %v12182 = vpack.c.b16 %v11690, %v11684
    %v12183 = vpack.c.b16 %v11691, %v11685
    %v12184 = vpack.c.b16 %v11692, %v11686
    %v12185 = vpack.c.b16 %v11699, %v11693
    %v12186 = vpack.c.b16 %v11700, %v11694
    %v12187 = vpack.c.b16 %v11701, %v11695
    %v12188 = vpack.c.b16 %v11702, %v11696
    %v12189 = vpack.c.b16 %v11703, %v11697
    %v12190 = vpack.c.b16 %v11704, %v11698
    %v12191 = vpack.c.b16 %v11711, %v11705
    %v12192 = vpack.c.b16 %v11712, %v11706
    %v12193 = vpack.c.b16 %v11713, %v11707
    %v12194 = vpack.c.b16 %v11714, %v11708
    %v12195 = vpack.c.b16 %v11715, %v11709
    %v12196 = vpack.c.b16 %v11716, %v11710
    %v12197 = vpack.c.b16 %v11723, %v11717
    %v12198 = vpack.c.b16 %v11724, %v11718
    %v12199 = vpack.c.b16 %v11725, %v11719
    %v12200 = vpack.c.b16 %v11726, %v11720
    %v12201 = vpack.c.b16 %v11727, %v11721
    %v12202 = vpack.c.b16 %v11728, %v11722
    %v12203 = vpack.c.b16 %v11735, %v11729
    %v12204 = vpack.c.b16 %v11736, %v11730
    %v12205 = vpack.c.b16 %v11737, %v11731
    %v12206 = vpack.c.b16 %v11738, %v11732
    %v12207 = vpack.c.b16 %v11739, %v11733
    %v12208 = vpack.c.b16 %v11740, %v11734
    %v12209 = vpack.c.b16 %v11747, %v11741
    %v12210 = vpack.c.b16 %v11748, %v11742
    %v12211 = vpack.c.b16 %v11749, %v11743
    %v12212 = vpack.c.b16 %v11750, %v11744
    %v12213 = vpack.c.b16 %v11751, %v11745
    %v12214 = vpack.c.b16 %v11752, %v11746
    %v12215 = vpack.c.b16 %v11759, %v11753
    %v12216 = vpack.c.b16 %v11760, %v11754
    %v12217 = vpack.c.b16 %v11761, %v11755
    %v12218 = vpack.c.b16 %v11762, %v11756
    %v12219 = vpack.c.b16 %v11763, %v11757
    %v12220 = vpack.c.b16 %v11764, %v11758
    %v12221 = vpack.c.b16 %v11771, %v11765
    %v12222 = vpack.c.b16 %v11772, %v11766
    %v12223 = vpack.c.b16 %v11773, %v11767
    %v12224 = vpack.c.b16 %v11774, %v11768
    %v12225 = vpack.c.b16 %v11775, %v11769
    %v12226 = vpack.c.b16 %v11776, %v11770
    %v12227 = vpack.c.b16 %v11783, %v11777
    %v12228 = vpack.c.b16 %v11784, %v11778
    %v12229 = vpack.c.b16 %v11785, %v11779
    %v12230 = vpack.c.b16 %v11786, %v11780
    %v12231 = vpack.c.b16 %v11787, %v11781
    %v12232 = vpack.c.b16 %v11788, %v11782
    %v12233 = vpack.c.b16 %v11795, %v11789
    %v12234 = vpack.c.b16 %v11796, %v11790
    %v12235 = vpack.c.b16 %v11797, %v11791
    %v12236 = vpack.c.b16 %v11798, %v11792
    %v12237 = vpack.c.b16 %v11799, %v11793
    %v12238 = vpack.c.b16 %v11800, %v11794
    %v12239 = vpack.c.b16 %v11807, %v11801
    %v12240 = vpack.c.b16 %v11808, %v11802
    %v12241 = vpack.c.b16 %v11809, %v11803
    %v12242 = vpack.c.b16 %v11810, %v11804
    %v12243 = vpack.c.b16 %v11811, %v11805
    %v12244 = vpack.c.b16 %v11812, %v11806
    %v12245 = vpack.c.b16 %v11819, %v11813
    %v12246 = vpack.c.b16 %v11820, %v11814
    %v12247 = vpack.c.b16 %v11821, %v11815
    %v12248 = vpack.c.b16 %v11822, %v11816
    %v12249 = vpack.c.b16 %v11823, %v11817
    %v12250 = vpack.c.b16 %v11824, %v11818
    %v12251 = vpack.c.b16 %v11831, %v11825
    %v12252 = vpack.c.b16 %v11832, %v11826
    %v12253 = vpack.c.b16 %v11833, %v11827
    %v12254 = vpack.c.b16 %v11834, %v11828
    %v12255 = vpack.c.b16 %v11835, %v11829
    %v12256 = vpack.c.b16 %v11836, %v11830
    %v12257 = vpack.c.b16 %v11843, %v11837
    %v12258 = vpack.c.b16 %v11844, %v11838
    %v12259 = vpack.c.b16 %v11845, %v11839
    %v12260 = vpack.c.b16 %v11846, %v11840
    %v12261 = vpack.c.b16 %v11847, %v11841
    %v12262 = vpack.c.b16 %v11848, %v11842
    %v12263 = vpack.c.b16 %v11855, %v11849
    %v12264 = vpack.c.b16 %v11856, %v11850
    %v12265 = vpack.c.b16 %v11857, %v11851
    %v12266 = vpack.c.b16 %v11858, %v11852
    %v12267 = vpack.c.b16 %v11859, %v11853
    %v12268 = vpack.c.b16 %v11860, %v11854
    %v12269 = vpack.c.b16 %v11867, %v11861
    %v12270 = vpack.c.b16 %v11868, %v11862
    %v12271 = vpack.c.b16 %v11869, %v11863
    %v12272 = vpack.c.b16 %v11870, %v11864
    %v12273 = vpack.c.b16 %v11871, %v11865
    %v12274 = vpack.c.b16 %v11872, %v11866
    %v12275 = vpack.c.b16 %v11879, %v11873
    %v12276 = vpack.c.b16 %v11880, %v11874
    %v12277 = vpack.c.b16 %v11881, %v11875
    %v12278 = vpack.c.b16 %v11882, %v11876
    %v12279 = vpack.c.b16 %v11883, %v11877
    %v12280 = vpack.c.b16 %v11884, %v11878
    %v12281 = vpack.c.b16 %v11891, %v11885
    %v12282 = vpack.c.b16 %v11892, %v11886
    %v12283 = vpack.c.b16 %v11893, %v11887
    %v12284 = vpack.c.b16 %v11894, %v11888
    %v12285 = vpack.c.b16 %v11895, %v11889
    %v12286 = vpack.c.b16 %v11896, %v11890
    %v12287 = vpack.c.b16 %v11903, %v11897
    %v12288 = vpack.c.b16 %v11904, %v11898
    %v12289 = vpack.c.b16 %v11905, %v11899
    %v12290 = vpack.c.b16 %v11906, %v11900
    %v12291 = vpack.c.b16 %v11907, %v11901
    %v12292 = vpack.c.b16 %v11908, %v11902
    %v12293 = vpack.c.b16 %v11915, %v11909
    %v12294 = vpack.c.b16 %v11916, %v11910
    %v12295 = vpack.c.b16 %v11917, %v11911
    %v12296 = vpack.c.b16 %v11918, %v11912
    %v12297 = vpack.c.b16 %v11919, %v11913
    %v12298 = vpack.c.b16 %v11920, %v11914
    %v12299 = vpack.c.b16 %v11927, %v11921
    %v12300 = vpack.c.b16 %v11928, %v11922
    %v12301 = vpack.c.b16 %v11929, %v11923
    %v12302 = vpack.c.b16 %v11930, %v11924
    %v12303 = vpack.c.b16 %v11931, %v11925
    %v12304 = vpack.c.b16 %v11932, %v11926
    %v12305 = vpack.c.b16 %v11939, %v11933
    %v12306 = vpack.c.b16 %v11940, %v11934
    %v12307 = vpack.c.b16 %v11941, %v11935
    %v12308 = vpack.c.b16 %v11942, %v11936
    %v12309 = vpack.c.b16 %v11943, %v11937
    %v12310 = vpack.c.b16 %v11944, %v11938
    %v12311 = vpack.c.b16 %v11951, %v11945
    %v12312 = vpack.c.b16 %v11952, %v11946
    %v12313 = vpack.c.b16 %v11953, %v11947
    %v12314 = vpack.c.b16 %v11954, %v11948
    %v12315 = vpack.c.b16 %v11955, %v11949
    %v12316 = vpack.c.b16 %v11956, %v11950
    %v12317 = vpack.c.b16 %v11963, %v11957
    %v12318 = vpack.c.b16 %v11964, %v11958
    %v12319 = vpack.c.b16 %v11965, %v11959
    %v12320 = vpack.c.b16 %v11966, %v11960
    %v12321 = vpack.c.b16 %v11967, %v11961
    %v12322 = vpack.c.b16 %v11968, %v11962
    %v12323 = vpack.c.b16 %v11975, %v11969
    %v12324 = vpack.c.b16 %v11976, %v11970
    %v12325 = vpack.c.b16 %v11977, %v11971
    %v12326 = vpack.c.b16 %v11978, %v11972
    %v12327 = vpack.c.b16 %v11979, %v11973
    %v12328 = vpack.c.b16 %v11980, %v11974
    %v12329 = vpack.c.b16 %v11987, %v11981
    %v12330 = vpack.c.b16 %v11988, %v11982
    %v12331 = vpack.c.b16 %v11989, %v11983
    %v12332 = vpack.c.b16 %v11990, %v11984
    %v12333 = vpack.c.b16 %v11991, %v11985
    %v12334 = vpack.c.b16 %v11992, %v11986
    %v12335 = vpack.c.b16 %v11999, %v11993
    %v12336 = vpack.c.b16 %v12000, %v11994
    %v12337 = vpack.c.b16 %v12001, %v11995
    %v12338 = vpack.c.b16 %v12002, %v11996
    %v12339 = vpack.c.b16 %v12003, %v11997
    %v12340 = vpack.c.b16 %v12004, %v11998
    %v12341 = vpack.c.b16 %v12011, %v12005
    %v12342 = vpack.c.b16 %v12012, %v12006
    %v12343 = vpack.c.b16 %v12013, %v12007
    %v12344 = vpack.c.b16 %v12014, %v12008
    %v12345 = vpack.c.b16 %v12015, %v12009
    %v12346 = vpack.c.b16 %v12016, %v12010
    %v12347 = vpack.c.b16 %v12023, %v12017
    %v12348 = vpack.c.b16 %v12024, %v12018
    %v12349 = vpack.c.b16 %v12025, %v12019
    %v12350 = vpack.c.b16 %v12026, %v12020
    %v12351 = vpack.c.b16 %v12027, %v12021
    %v12352 = vpack.c.b16 %v12028, %v12022
    %v12353 = vpack.c.b16 %v12035, %v12029
    %v12354 = vpack.c.b16 %v12036, %v12030
    %v12355 = vpack.c.b16 %v12037, %v12031
    %v12356 = vpack.c.b16 %v12038, %v12032
    %v12357 = vpack.c.b16 %v12039, %v12033
    %v12358 = vpack.c.b16 %v12040, %v12034
    %v12359 = vpack.c.b16 %v12047, %v12041
    %v12360 = vpack.c.b16 %v12048, %v12042
    %v12361 = vpack.c.b16 %v12049, %v12043
    %v12362 = vpack.c.b16 %v12050, %v12044
    %v12363 = vpack.c.b16 %v12051, %v12045
    %v12364 = vpack.c.b16 %v12052, %v12046
    %v12365 = vpack.c.b16 %v12059, %v12053
    %v12366 = vpack.c.b16 %v12060, %v12054
    %v12367 = vpack.c.b16 %v12061, %v12055
    %v12368 = vpack.c.b16 %v12062, %v12056
    %v12369 = vpack.c.b16 %v12063, %v12057
    %v12370 = vpack.c.b16 %v12064, %v12058
    %v12371 = vpack.c.b16 %v12071, %v12065
    %v12372 = vpack.c.b16 %v12072, %v12066
    %v12373 = vpack.c.b16 %v12073, %v12067
    %v12374 = vpack.c.b16 %v12074, %v12068
    %v12375 = vpack.c.b16 %v12075, %v12069
    %v12376 = vpack.c.b16 %v12076, %v12070
    %v12377 = vpack.c.b16 %v12083, %v12077
    %v12378 = vpack.c.b16 %v12084, %v12078
    %v12379 = vpack.c.b16 %v12085, %v12079
    %v12380 = vpack.c.b16 %v12086, %v12080
    %v12381 = vpack.c.b16 %v12087, %v12081
    %v12382 = vpack.c.b16 %v12088, %v12082
    %v12383 = vpack.c.b16 %v12095, %v12089
    %v12384 = vpack.c.b16 %v12096, %v12090
    %v12385 = vpack.c.b16 %v12097, %v12091
    %v12386 = vpack.c.b16 %v12098, %v12092
    %v12387 = vpack.c.b16 %v12099, %v12093
    %v12388 = vpack.c.b16 %v12100, %v12094
    %12677 = vmatprep.subr.bf16.mxu0 %v12102
    %12678 = vmatpush1.bf16.msra.mxu0 %v12101
    %12679 = vmatprep.subr.bf16.mxu0 %v12108
    %12680 = vmatpush1.bf16.msra.mxu0 %v12107
    %12681 = vmatprep.subr.bf16.mxu0 %v12114
    %12682 = vmatpush1.bf16.msra.mxu0 %v12113
    %12683 = vmatprep.subr.bf16.mxu0 %v12120
    %12684 = vmatpush1.bf16.msra.mxu0 %v12119
    %12685 = vmatprep.subr.bf16.mxu0 %v12126
    %12686 = vmatpush1.bf16.msra.mxu0 %v12125
    %12687 = vmatprep.subr.bf16.mxu0 %v12132
    %12688 = vmatpush1.bf16.msra.mxu0 %v12131
    %12689 = vmatprep.subr.bf16.mxu0 %v12138
    %12690 = vmatpush1.bf16.msra.mxu0 %v12137
    %12691 = vmatprep.subr.bf16.mxu0 %v12144
    %12692 = vmatpush1.bf16.msra.mxu0 %v12143
    %12693 = vmatprep.subr.bf16.mxu0 %v12150
    %12694 = vmatpush1.bf16.msra.mxu0 %v12149
    %12695 = vmatprep.subr.bf16.mxu0 %v12156
    %12696 = vmatpush1.bf16.msra.mxu0 %v12155
    %12697 = vmatprep.subr.bf16.mxu0 %v12162
    %12698 = vmatpush1.bf16.msra.mxu0 %v12161
    %12699 = vmatprep.subr.bf16.mxu0 %v12168
    %12700 = vmatpush1.bf16.msra.mxu0 %v12167
    %12701 = vmatprep.subr.bf16.mxu0 %v12174
    %12702 = vmatpush1.bf16.msra.mxu0 %v12173
    %12703 = vmatprep.subr.bf16.mxu0 %v12180
    %12704 = vmatpush1.bf16.msra.mxu0 %v12179
    %12705 = vmatprep.subr.bf16.mxu0 %v12186
    %12706 = vmatpush1.bf16.msra.mxu0 %v12185
    %12707 = vmatprep.subr.bf16.mxu0 %v12192
    %12708 = vmatpush1.bf16.msra.mxu0 %v12191
    %12709 = vmatprep.mubr.bf16.mxu0 %v10908
    %12710 = vmatmul.mubr.bf16.gmra.mrb[0].mxu0 %v10907
    %v12711 = vpop.f32.mrb[0].mxu0
    %v12712 = vadd.f32 %v11210, %v12711
    %v12713 = vpop.f32.mrb[0].mxu0
    %v12714 = vadd.f32 %v11214, %v12713
    %v12715 = vpop.f32.mrb[0].mxu0
    %v12716 = vpop.f32.mrb[0].mxu0
    %12717 = vdwg.mxu0
    %12718 = vmatprep.subr.bf16.mxu0 %v12198
    %12719 = vmatpush1.bf16.msra.mxu0 %v12197
    %12720 = vmatprep.subr.bf16.mxu0 %v12204
    %12721 = vmatpush1.bf16.msra.mxu0 %v12203
    %12722 = vmatprep.subr.bf16.mxu0 %v12210
    %12723 = vmatpush1.bf16.msra.mxu0 %v12209
    %12724 = vmatprep.subr.bf16.mxu0 %v12216
    %12725 = vmatpush1.bf16.msra.mxu0 %v12215
    %12726 = vmatprep.subr.bf16.mxu0 %v12222
    %12727 = vmatpush1.bf16.msra.mxu0 %v12221
    %12728 = vmatprep.subr.bf16.mxu0 %v12228
    %12729 = vmatpush1.bf16.msra.mxu0 %v12227
    %12730 = vmatprep.subr.bf16.mxu0 %v12234
    %12731 = vmatpush1.bf16.msra.mxu0 %v12233
    %12732 = vmatprep.subr.bf16.mxu0 %v12240
    %12733 = vmatpush1.bf16.msra.mxu0 %v12239
    %12734 = vmatprep.subr.bf16.mxu0 %v12246
    %12735 = vmatpush1.bf16.msra.mxu0 %v12245
    %12736 = vmatprep.subr.bf16.mxu0 %v12252
    %12737 = vmatpush1.bf16.msra.mxu0 %v12251
    %12738 = vmatprep.subr.bf16.mxu0 %v12258
    %12739 = vmatpush1.bf16.msra.mxu0 %v12257
    %12740 = vmatprep.subr.bf16.mxu0 %v12264
    %12741 = vmatpush1.bf16.msra.mxu0 %v12263
    %12742 = vmatprep.subr.bf16.mxu0 %v12270
    %12743 = vmatpush1.bf16.msra.mxu0 %v12269
    %12744 = vmatprep.subr.bf16.mxu0 %v12276
    %12745 = vmatpush1.bf16.msra.mxu0 %v12275
    %12746 = vmatprep.subr.bf16.mxu0 %v12282
    %12747 = vmatpush1.bf16.msra.mxu0 %v12281
    %12748 = vmatprep.subr.bf16.mxu0 %v12288
    %12749 = vmatpush1.bf16.msra.mxu0 %v12287
    %12750 = vmatprep.mubr.bf16.mxu0 %v10910
    %12751 = vmatmul.mubr.bf16.gmra.mrb[0].mxu0 %v10909
    %v12752 = vpop.f32.mrb[0].mxu0
    %v12753 = vadd.f32 %v12712, %v12752
    %v12754 = vpop.f32.mrb[0].mxu0
    %v12755 = vadd.f32 %v12714, %v12754
    %v12756 = vpop.f32.mrb[0].mxu0
    %v12757 = vpop.f32.mrb[0].mxu0
    %12758 = vdwg.mxu0
    %12759 = vmatprep.subr.bf16.mxu0 %v12294
    %12760 = vmatpush1.bf16.msra.mxu0 %v12293
    %12761 = vmatprep.subr.bf16.mxu0 %v12300
    %12762 = vmatpush1.bf16.msra.mxu0 %v12299
    %12763 = vmatprep.subr.bf16.mxu0 %v12306
    %12764 = vmatpush1.bf16.msra.mxu0 %v12305
    %12765 = vmatprep.subr.bf16.mxu0 %v12312
    %12766 = vmatpush1.bf16.msra.mxu0 %v12311
    %12767 = vmatprep.subr.bf16.mxu0 %v12318
    %12768 = vmatpush1.bf16.msra.mxu0 %v12317
    %12769 = vmatprep.subr.bf16.mxu0 %v12324
    %12770 = vmatpush1.bf16.msra.mxu0 %v12323
    %12771 = vmatprep.subr.bf16.mxu0 %v12330
    %12772 = vmatpush1.bf16.msra.mxu0 %v12329
    %12773 = vmatprep.subr.bf16.mxu0 %v12336
    %12774 = vmatpush1.bf16.msra.mxu0 %v12335
    %12775 = vmatprep.subr.bf16.mxu0 %v12342
    %12776 = vmatpush1.bf16.msra.mxu0 %v12341
    %12777 = vmatprep.subr.bf16.mxu0 %v12348
    %12778 = vmatpush1.bf16.msra.mxu0 %v12347
    %12779 = vmatprep.subr.bf16.mxu0 %v12354
    %12780 = vmatpush1.bf16.msra.mxu0 %v12353
    %12781 = vmatprep.subr.bf16.mxu0 %v12360
    %12782 = vmatpush1.bf16.msra.mxu0 %v12359
    %12783 = vmatprep.subr.bf16.mxu0 %v12366
    %12784 = vmatpush1.bf16.msra.mxu0 %v12365
    %12785 = vmatprep.subr.bf16.mxu0 %v12372
    %12786 = vmatpush1.bf16.msra.mxu0 %v12371
    %12787 = vmatprep.subr.bf16.mxu0 %v12378
    %12788 = vmatpush1.bf16.msra.mxu0 %v12377
    %12789 = vmatprep.subr.bf16.mxu0 %v12384
    %12790 = vmatpush1.bf16.msra.mxu0 %v12383
    %12791 = vmatprep.mubr.bf16.mxu0 %v10912
    %12792 = vmatmul.mubr.bf16.gmra.mrb[0].mxu0 %v10911
    %v12793 = vpop.f32.mrb[0].mxu0
    %v12794 = vadd.f32 %v12753, %v12793
    %v12795 = vpop.f32.mrb[0].mxu0
    %v12796 = vadd.f32 %v12755, %v12795
    %v12797 = vpop.f32.mrb[0].mxu0
    %v12798 = vpop.f32.mrb[0].mxu0
    %12799 = vdwg.mxu0
    %12800 = vmatprep.subr.bf16.mxu0 %v12104
    %12801 = vmatpush1.bf16.msra.mxu0 %v12103
    %12802 = vmatprep.subr.bf16.mxu0 %v12110
    %12803 = vmatpush1.bf16.msra.mxu0 %v12109
    %12804 = vmatprep.subr.bf16.mxu0 %v12116
    %12805 = vmatpush1.bf16.msra.mxu0 %v12115
    %12806 = vmatprep.subr.bf16.mxu0 %v12122
    %12807 = vmatpush1.bf16.msra.mxu0 %v12121
    %12808 = vmatprep.subr.bf16.mxu0 %v12128
    %12809 = vmatpush1.bf16.msra.mxu0 %v12127
    %12810 = vmatprep.subr.bf16.mxu0 %v12134
    %12811 = vmatpush1.bf16.msra.mxu0 %v12133
    %12812 = vmatprep.subr.bf16.mxu0 %v12140
    %12813 = vmatpush1.bf16.msra.mxu0 %v12139
    %12814 = vmatprep.subr.bf16.mxu0 %v12146
    %12815 = vmatpush1.bf16.msra.mxu0 %v12145
    %12816 = vmatprep.subr.bf16.mxu0 %v12152
    %12817 = vmatpush1.bf16.msra.mxu0 %v12151
    %12818 = vmatprep.subr.bf16.mxu0 %v12158
    %12819 = vmatpush1.bf16.msra.mxu0 %v12157
    %12820 = vmatprep.subr.bf16.mxu0 %v12164
    %12821 = vmatpush1.bf16.msra.mxu0 %v12163
    %12822 = vmatprep.subr.bf16.mxu0 %v12170
    %12823 = vmatpush1.bf16.msra.mxu0 %v12169
    %12824 = vmatprep.subr.bf16.mxu0 %v12176
    %12825 = vmatpush1.bf16.msra.mxu0 %v12175
    %12826 = vmatprep.subr.bf16.mxu0 %v12182
    %12827 = vmatpush1.bf16.msra.mxu0 %v12181
    %12828 = vmatprep.subr.bf16.mxu0 %v12188
    %12829 = vmatpush1.bf16.msra.mxu0 %v12187
    %12830 = vmatprep.subr.bf16.mxu0 %v12194
    %12831 = vmatpush1.bf16.msra.mxu0 %v12193
    %12832 = vmatprep.mubr.bf16.mxu0 %v10908
    %12833 = vmatmul.mubr.bf16.gmra.mrb[0].mxu0 %v10907
    %v12834 = vpop.f32.mrb[0].mxu0
    %v12835 = vadd.f32 %v11218, %v12834
    %v12836 = vpop.f32.mrb[0].mxu0
    %v12837 = vadd.f32 %v11222, %v12836
    %v12838 = vpop.f32.mrb[0].mxu0
    %v12839 = vpop.f32.mrb[0].mxu0
    %12840 = vdwg.mxu0
    %12841 = vmatprep.subr.bf16.mxu0 %v12200
    %12842 = vmatpush1.bf16.msra.mxu0 %v12199
    %12843 = vmatprep.subr.bf16.mxu0 %v12206
    %12844 = vmatpush1.bf16.msra.mxu0 %v12205
    %12845 = vmatprep.subr.bf16.mxu0 %v12212
    %12846 = vmatpush1.bf16.msra.mxu0 %v12211
    %12847 = vmatprep.subr.bf16.mxu0 %v12218
    %12848 = vmatpush1.bf16.msra.mxu0 %v12217
    %12849 = vmatprep.subr.bf16.mxu0 %v12224
    %12850 = vmatpush1.bf16.msra.mxu0 %v12223
    %12851 = vmatprep.subr.bf16.mxu0 %v12230
    %12852 = vmatpush1.bf16.msra.mxu0 %v12229
    %12853 = vmatprep.subr.bf16.mxu0 %v12236
    %12854 = vmatpush1.bf16.msra.mxu0 %v12235
    %12855 = vmatprep.subr.bf16.mxu0 %v12242
    %12856 = vmatpush1.bf16.msra.mxu0 %v12241
    %12857 = vmatprep.subr.bf16.mxu0 %v12248
    %12858 = vmatpush1.bf16.msra.mxu0 %v12247
    %12859 = vmatprep.subr.bf16.mxu0 %v12254
    %12860 = vmatpush1.bf16.msra.mxu0 %v12253
    %12861 = vmatprep.subr.bf16.mxu0 %v12260
    %12862 = vmatpush1.bf16.msra.mxu0 %v12259
    %12863 = vmatprep.subr.bf16.mxu0 %v12266
    %12864 = vmatpush1.bf16.msra.mxu0 %v12265
    %12865 = vmatprep.subr.bf16.mxu0 %v12272
    %12866 = vmatpush1.bf16.msra.mxu0 %v12271
    %12867 = vmatprep.subr.bf16.mxu0 %v12278
    %12868 = vmatpush1.bf16.msra.mxu0 %v12277
    %12869 = vmatprep.subr.bf16.mxu0 %v12284
    %12870 = vmatpush1.bf16.msra.mxu0 %v12283
    %12871 = vmatprep.subr.bf16.mxu0 %v12290
    %12872 = vmatpush1.bf16.msra.mxu0 %v12289
    %12873 = vmatprep.mubr.bf16.mxu0 %v10910
    %12874 = vmatmul.mubr.bf16.gmra.mrb[0].mxu0 %v10909
    %v12875 = vpop.f32.mrb[0].mxu0
    %v12876 = vadd.f32 %v12835, %v12875
    %v12877 = vpop.f32.mrb[0].mxu0
    %v12878 = vadd.f32 %v12837, %v12877
    %v12879 = vpop.f32.mrb[0].mxu0
    %v12880 = vpop.f32.mrb[0].mxu0
    %12881 = vdwg.mxu0
    %12882 = vmatprep.subr.bf16.mxu0 %v12296
    %12883 = vmatpush1.bf16.msra.mxu0 %v12295
    %12884 = vmatprep.subr.bf16.mxu0 %v12302
    %12885 = vmatpush1.bf16.msra.mxu0 %v12301
    %12886 = vmatprep.subr.bf16.mxu0 %v12308
    %12887 = vmatpush1.bf16.msra.mxu0 %v12307
    %12888 = vmatprep.subr.bf16.mxu0 %v12314
    %12889 = vmatpush1.bf16.msra.mxu0 %v12313
    %12890 = vmatprep.subr.bf16.mxu0 %v12320
    %12891 = vmatpush1.bf16.msra.mxu0 %v12319
    %12892 = vmatprep.subr.bf16.mxu0 %v12326
    %12893 = vmatpush1.bf16.msra.mxu0 %v12325
    %12894 = vmatprep.subr.bf16.mxu0 %v12332
    %12895 = vmatpush1.bf16.msra.mxu0 %v12331
    %12896 = vmatprep.subr.bf16.mxu0 %v12338
    %12897 = vmatpush1.bf16.msra.mxu0 %v12337
    %12898 = vmatprep.subr.bf16.mxu0 %v12344
    %12899 = vmatpush1.bf16.msra.mxu0 %v12343
    %12900 = vmatprep.subr.bf16.mxu0 %v12350
    %12901 = vmatpush1.bf16.msra.mxu0 %v12349
    %12902 = vmatprep.subr.bf16.mxu0 %v12356
    %12903 = vmatpush1.bf16.msra.mxu0 %v12355
    %12904 = vmatprep.subr.bf16.mxu0 %v12362
    %12905 = vmatpush1.bf16.msra.mxu0 %v12361
    %12906 = vmatprep.subr.bf16.mxu0 %v12368
    %12907 = vmatpush1.bf16.msra.mxu0 %v12367
    %12908 = vmatprep.subr.bf16.mxu0 %v12374
    %12909 = vmatpush1.bf16.msra.mxu0 %v12373
    %12910 = vmatprep.subr.bf16.mxu0 %v12380
    %12911 = vmatpush1.bf16.msra.mxu0 %v12379
    %12912 = vmatprep.subr.bf16.mxu0 %v12386
    %12913 = vmatpush1.bf16.msra.mxu0 %v12385
    %12914 = vmatprep.mubr.bf16.mxu0 %v10912
    %12915 = vmatmul.mubr.bf16.gmra.mrb[0].mxu0 %v10911
    %v12916 = vpop.f32.mrb[0].mxu0
    %v12917 = vadd.f32 %v12876, %v12916
    %v12918 = vpop.f32.mrb[0].mxu0
    %v12919 = vadd.f32 %v12878, %v12918
    %v12920 = vpop.f32.mrb[0].mxu0
    %v12921 = vpop.f32.mrb[0].mxu0
    %12922 = vdwg.mxu0
    %12923 = vmatprep.subr.bf16.mxu0 %v12106
    %12924 = vmatpush1.bf16.msra.mxu0 %v12105
    %12925 = vmatprep.subr.bf16.mxu0 %v12112
    %12926 = vmatpush1.bf16.msra.mxu0 %v12111
    %12927 = vmatprep.subr.bf16.mxu0 %v12118
    %12928 = vmatpush1.bf16.msra.mxu0 %v12117
    %12929 = vmatprep.subr.bf16.mxu0 %v12124
    %12930 = vmatpush1.bf16.msra.mxu0 %v12123
    %12931 = vmatprep.subr.bf16.mxu0 %v12130
    %12932 = vmatpush1.bf16.msra.mxu0 %v12129
    %12933 = vmatprep.subr.bf16.mxu0 %v12136
    %12934 = vmatpush1.bf16.msra.mxu0 %v12135
    %12935 = vmatprep.subr.bf16.mxu0 %v12142
    %12936 = vmatpush1.bf16.msra.mxu0 %v12141
    %12937 = vmatprep.subr.bf16.mxu0 %v12148
    %12938 = vmatpush1.bf16.msra.mxu0 %v12147
    %12939 = vmatprep.subr.bf16.mxu0 %v12154
    %12940 = vmatpush1.bf16.msra.mxu0 %v12153
    %12941 = vmatprep.subr.bf16.mxu0 %v12160
    %12942 = vmatpush1.bf16.msra.mxu0 %v12159
    %12943 = vmatprep.subr.bf16.mxu0 %v12166
    %12944 = vmatpush1.bf16.msra.mxu0 %v12165
    %12945 = vmatprep.subr.bf16.mxu0 %v12172
    %12946 = vmatpush1.bf16.msra.mxu0 %v12171
    %12947 = vmatprep.subr.bf16.mxu0 %v12178
    %12948 = vmatpush1.bf16.msra.mxu0 %v12177
    %12949 = vmatprep.subr.bf16.mxu0 %v12184
    %12950 = vmatpush1.bf16.msra.mxu0 %v12183
    %12951 = vmatprep.subr.bf16.mxu0 %v12190
    %12952 = vmatpush1.bf16.msra.mxu0 %v12189
    %12953 = vmatprep.subr.bf16.mxu0 %v12196
    %12954 = vmatpush1.bf16.msra.mxu0 %v12195
    %12955 = vmatprep.mubr.bf16.mxu0 %v10908
    %12956 = vmatmul.mubr.bf16.gmra.mrb[0].mxu0 %v10907
    %v12957 = vpop.f32.mrb[0].mxu0
    %v12958 = vadd.f32 %v11226, %v12957
    %v12959 = vpop.f32.mrb[0].mxu0
    %v12960 = vadd.f32 %v11230, %v12959
    %v12961 = vpop.f32.mrb[0].mxu0
    %v12962 = vpop.f32.mrb[0].mxu0
    %12963 = vdwg.mxu0
    %12964 = vmatprep.subr.bf16.mxu0 %v12202
    %12965 = vmatpush1.bf16.msra.mxu0 %v12201
    %12966 = vmatprep.subr.bf16.mxu0 %v12208
    %12967 = vmatpush1.bf16.msra.mxu0 %v12207
    %12968 = vmatprep.subr.bf16.mxu0 %v12214
    %12969 = vmatpush1.bf16.msra.mxu0 %v12213
    %12970 = vmatprep.subr.bf16.mxu0 %v12220
    %12971 = vmatpush1.bf16.msra.mxu0 %v12219
    %12972 = vmatprep.subr.bf16.mxu0 %v12226
    %12973 = vmatpush1.bf16.msra.mxu0 %v12225
    %12974 = vmatprep.subr.bf16.mxu0 %v12232
    %12975 = vmatpush1.bf16.msra.mxu0 %v12231
    %12976 = vmatprep.subr.bf16.mxu0 %v12238
    %12977 = vmatpush1.bf16.msra.mxu0 %v12237
    %12978 = vmatprep.subr.bf16.mxu0 %v12244
    %12979 = vmatpush1.bf16.msra.mxu0 %v12243
    %12980 = vmatprep.subr.bf16.mxu0 %v12250
    %12981 = vmatpush1.bf16.msra.mxu0 %v12249
    %12982 = vmatprep.subr.bf16.mxu0 %v12256
    %12983 = vmatpush1.bf16.msra.mxu0 %v12255
    %12984 = vmatprep.subr.bf16.mxu0 %v12262
    %12985 = vmatpush1.bf16.msra.mxu0 %v12261
    %12986 = vmatprep.subr.bf16.mxu0 %v12268
    %12987 = vmatpush1.bf16.msra.mxu0 %v12267
    %12988 = vmatprep.subr.bf16.mxu0 %v12274
    %12989 = vmatpush1.bf16.msra.mxu0 %v12273
    %12990 = vmatprep.subr.bf16.mxu0 %v12280
    %12991 = vmatpush1.bf16.msra.mxu0 %v12279
    %12992 = vmatprep.subr.bf16.mxu0 %v12286
    %12993 = vmatpush1.bf16.msra.mxu0 %v12285
    %12994 = vmatprep.subr.bf16.mxu0 %v12292
    %12995 = vmatpush1.bf16.msra.mxu0 %v12291
    %12996 = vmatprep.mubr.bf16.mxu0 %v10910
    %12997 = vmatmul.mubr.bf16.gmra.mrb[0].mxu0 %v10909
    %v12998 = vpop.f32.mrb[0].mxu0
    %v12999 = vadd.f32 %v12958, %v12998
    %v13000 = vpop.f32.mrb[0].mxu0
    %v13001 = vadd.f32 %v12960, %v13000
    %v13002 = vpop.f32.mrb[0].mxu0
    %v13003 = vpop.f32.mrb[0].mxu0
    %13004 = vdwg.mxu0
    %13005 = vmatprep.subr.bf16.mxu0 %v12298
    %13006 = vmatpush1.bf16.msra.mxu0 %v12297
    %13007 = vmatprep.subr.bf16.mxu0 %v12304
    %13008 = vmatpush1.bf16.msra.mxu0 %v12303
    %13009 = vmatprep.subr.bf16.mxu0 %v12310
    %13010 = vmatpush1.bf16.msra.mxu0 %v12309
    %13011 = vmatprep.subr.bf16.mxu0 %v12316
    %13012 = vmatpush1.bf16.msra.mxu0 %v12315
    %13013 = vmatprep.subr.bf16.mxu0 %v12322
    %13014 = vmatpush1.bf16.msra.mxu0 %v12321
    %13015 = vmatprep.subr.bf16.mxu0 %v12328
    %13016 = vmatpush1.bf16.msra.mxu0 %v12327
    %13017 = vmatprep.subr.bf16.mxu0 %v12334
    %13018 = vmatpush1.bf16.msra.mxu0 %v12333
    %13019 = vmatprep.subr.bf16.mxu0 %v12340
    %13020 = vmatpush1.bf16.msra.mxu0 %v12339
    %13021 = vmatprep.subr.bf16.mxu0 %v12346
    %13022 = vmatpush1.bf16.msra.mxu0 %v12345
    %13023 = vmatprep.subr.bf16.mxu0 %v12352
    %13024 = vmatpush1.bf16.msra.mxu0 %v12351
    %13025 = vmatprep.subr.bf16.mxu0 %v12358
    %13026 = vmatpush1.bf16.msra.mxu0 %v12357
    %13027 = vmatprep.subr.bf16.mxu0 %v12364
    %13028 = vmatpush1.bf16.msra.mxu0 %v12363
    %13029 = vmatprep.subr.bf16.mxu0 %v12370
    %13030 = vmatpush1.bf16.msra.mxu0 %v12369
    %13031 = vmatprep.subr.bf16.mxu0 %v12376
    %13032 = vmatpush1.bf16.msra.mxu0 %v12375
    %13033 = vmatprep.subr.bf16.mxu0 %v12382
    %13034 = vmatpush1.bf16.msra.mxu0 %v12381
    %13035 = vmatprep.subr.bf16.mxu0 %v12388
    %13036 = vmatpush1.bf16.msra.mxu0 %v12387
    %13037 = vmatprep.mubr.bf16.mxu0 %v10912
    %13038 = vmatmul.mubr.bf16.gmra.mrb[0].mxu0 %v10911
    %v13039 = vpop.f32.mrb[0].mxu0
    %v13040 = vadd.f32 %v12999, %v13039
    %v13041 = vpop.f32.mrb[0].mxu0
    %v13042 = vadd.f32 %v13001, %v13041
    %v13043 = vpop.f32.mrb[0].mxu0
    %v13044 = vpop.f32.mrb[0].mxu0
    %13045 = vdwg.mxu0
    %v13046 = vstv %s10905
    %v13047 = vmul.f32 %v13046, %v10899
    %v13048 = vmul.f32 %v13046, %v10900
    %v13049 = vmul.f32 %v13046, %v10901
    %v13050 = vmul.f32 %v13046, %v10902
    %v13051 = vmul.f32 %v13046, %v10903
    %v13052 = vmul.f32 %v13046, %v10904
    %v13053 = vadd.f32 %v12794, %v13047
    %v13054 = vadd.f32 %v12796, %v13048
    %v13055 = vadd.f32 %v12917, %v13049
    %v13056 = vadd.f32 %v12919, %v13050
    %v13057 = vadd.f32 %v13040, %v13051
    %v13058 = vadd.f32 %v13042, %v13052
    %v13059 = vstv %s10906
    %v13060 = vmul.f32 %v13059, %v13053
    %v13061 = vmul.f32 %v13059, %v13054
    %v13062 = vmul.f32 %v13059, %v13055
    %v13063 = vmul.f32 %v13059, %v13056
    %v13064 = vmul.f32 %v13059, %v13057
    %v13065 = vmul.f32 %v13059, %v13058
    %v13066 = vmax.f32 %v13053, %v13060
    %v13067 = vmax.f32 %v13054, %v13061
    %v13068 = vmax.f32 %v13055, %v13062
    %v13069 = vmax.f32 %v13056, %v13063
    %v13070 = vmax.f32 %v13057, %v13064
    %v13071 = vmax.f32 %v13058, %v13065
    %13072 = vst [vmem:[#allocation10] sm:$0xff] %v13066
    %13073 = vst [vmem:[#allocation10 + $0x8] sm:$0xff] %v13067
    %13074 = vst [vmem:[#allocation10 + $0x10] sm:$0xff] %v13068
    %13075 = vst [vmem:[#allocation10 + $0x18] sm:$0xff] %v13069
    %13076 = vst [vmem:[#allocation10 + $0x20] sm:$0xff] %v13070
    %13077 = vst [vmem:[#allocation10 + $0x28] sm:$0xff] %v13071
    // Predicated region
    $region34: #{prune_model_forward.1} parent=1 // pred_check
      _
    $region35: #{prune_model_forward.1} parent=1 // pred_check_branch
      %13079 = sbr.rel (0) target = $region37
    $region36: #{prune_model_forward.1} parent=1 // pred_region
      %s13081 = ssub.s32 768, 768
      %13082 = vsyncadd [#allocation4], %s13081
      %s13084 = sshll.u32 [#allocation10], 4
      %s13085 = int_to_ptr.vmem [resolvable:$true] %s13084
      %13087 = dma.vmem_to_hbm [thread:$0]  %s13085, 768, %s4, [#allocation4]
    $region37: #{prune_model_forward.1} parent=1 // pred_fallthru
      _
    // Predicated region
    $region38: #{prune_model_forward.1} parent=1 // pred_check
      _
    $region39: #{prune_model_forward.1} parent=1 // pred_check_branch
      %13089 = sbr.rel (0) target = $region41
    $region40: #{prune_model_forward.1} parent=1 // pred_region
      %13090 = dma.done [#allocation4], 768
    $region41: #{prune_model_forward.1} parent=1 // pred_fallthru
      _
    %13091 = vsyncpa [#allocation3], 1
    %13092 = vsyncpa [#allocation8], 1
    %13093 = vsyncpa [#allocation4], 1
    %13094 = vsyncpa [#allocation5], 1

</llo_original>
